<compile_context>
chip_gen: v5e
topology: v5e:2x2
jax: 0.10.0
libtpu: 0.0.40
codegen_flags: <defaults>
</compile_context>

<pallas_src>
import functools

import numpy as np
import jax
import jax.numpy as jnp
from jax.experimental import pallas as pl
from jax.experimental.pallas import tpu as pltpu


# tap order matches PyTorch weight layout: (sy, sx) with ky = sy + 1, kx = sx + 1
_TAPS = tuple((sy, sx) for sy in (-1, 0, 1) for sx in (-1, 0, 1))
_LANE_TARGET = 512   # measured lane-width sweet spot


def _round_up(v, m):
    return ((v + m - 1) // m) * m


def _build_tap_masks(H, W, n_img, c_pad):
    """Pre-broadcast (9*c_pad, n_img*H*W) {0,1} border masks, one block per tap.

    The masks also zero the positions where a flat lane-roll would wrap across
    adjacent images when the batch is folded into the lane dimension.
    """
    L = H * W
    row = np.repeat(np.arange(H), W)
    col = np.tile(np.arange(W), H)
    blocks = []
    for sy, sx in _TAPS:
        valid = ((row + sy >= 0) & (row + sy < H) &
                 (col + sx >= 0) & (col + sx < W)).astype(np.float32)   # (L,)
        per_img = np.tile(valid, n_img)                                 # (n_img*L,)
        blocks.append(np.broadcast_to(per_img, (c_pad, n_img * L)))
    return np.concatenate(blocks, axis=0)                               # (9*c_pad, n_img*L)


# ----------------------------------------------------------------------------
# Fused whole-network Pallas kernel (NB images per grid step, folded in lanes)
# ----------------------------------------------------------------------------
def _dncnn_fused_kernel(x_ref, masks_ref, *args, W, c_pad, layer_cfg):
    # x_ref:     (1, c_pad, NB*L) activation, L = H*W, lanes = folded batch*pixels
    # masks_ref: (9*c_pad, NB*L)  bf16 pre-broadcast tap validity masks (0/1)
    # args:      w0, b0, ..., w_{n-1}, b_{n-1}, o_ref, patch_scratch
    #   w_i: (c_pad, 9*c_pad) bf16 (BN scale folded), b_i: (c_pad, 1) f32
    #   patch_scratch: VMEM (9*c_pad, NB*L) bf16
    n_layers = len(layer_cfg)
    w_refs = args[0:2 * n_layers:2]
    b_refs = args[1:2 * n_layers:2]
    o_ref = args[2 * n_layers]
    patch_ref = args[2 * n_layers + 1]

    act = x_ref[0].astype(jnp.float32)                   # (c_pad, NB*L) f32
    resid = act

    for li, (relu, block_end) in enumerate(layer_cfg):
        # im2col in bf16: 9 lane-rolled, border-masked copies stored directly
        # into the VMEM scratch at tile-aligned sublane offsets.
        # (On v5e, an f32 tap loop + single bulk bf16 cast would be preferable
        #  since its VPU has no native bf16 VALU; bf16 still compiles there.)
        act_bf = act.astype(jnp.bfloat16)
        for t, (sy, sx) in enumerate(_TAPS):
            s = sy * W + sx                               # flat lane shift of this tap
            shifted = act_bf if s == 0 else jnp.roll(act_bf, -s, axis=1)
            rows = pl.ds(t * c_pad, c_pad)
            patch_ref[rows, :] = shifted * masks_ref[rows, :]

        y = jnp.dot(w_refs[li][...], patch_ref[...],
                    preferred_element_type=jnp.float32)   # (c_pad, NB*L) f32
        y = y + b_refs[li][...]                           # folded BN shift / bias
        if relu:
            y = jnp.maximum(y, 0.0)
        if block_end:                                     # x = input_ - block(x)
            y = resid - y
            resid = y
        act = y

    o_ref[0] = act.astype(o_ref.dtype)


# ----------------------------------------------------------------------------
# Wrapper: NCHW in/out, batch folded into lanes, one pallas_call total
# ----------------------------------------------------------------------------
def dncnn_multiblock_forward(x_nchw, layer_params, layer_cfg, c_pad, nb=None):
    N, C, H, W = x_nchw.shape
    L = H * W
    if nb is None:
        nb = max(1, min(N, _LANE_TARGET // L)) if L <= _LANE_TARGET else 1
    G = -(-N // nb)                      # grid steps
    n_pad = G * nb
    nbl = nb * L

    # Host-side: pad batch/channels with zeros, fold nb images into the lane dim.
    x_p = jnp.zeros((n_pad, c_pad, H, W), jnp.float32).at[:N, :C].set(
        x_nchw.astype(jnp.float32))
    x_g = x_p.reshape(G, nb, c_pad, L).transpose(0, 2, 1, 3).reshape(G, c_pad, nbl)

    masks = jnp.asarray(_build_tap_masks(H, W, nb, c_pad), dtype=jnp.bfloat16)

    n_layers = len(layer_params)
    in_specs = [
        pl.BlockSpec((1, c_pad, nbl), lambda g: (g, 0, 0)),   # per-step activations
        pl.BlockSpec((9 * c_pad, nbl), lambda g: (0, 0)),     # masks (resident)
    ]
    args = [x_g, masks]
    for w_mat, bias in layer_params:
        in_specs.append(pl.BlockSpec(w_mat.shape, lambda g: (0, 0)))  # resident
        in_specs.append(pl.BlockSpec(bias.shape, lambda g: (0, 0)))   # resident
        args.append(w_mat)
        args.append(bias)

    flops = 2 * n_layers * c_pad * (9 * c_pad) * nbl * G
    bytes_accessed = (int(x_g.size) * 4 + G * c_pad * nbl * 4 + int(masks.size) * 2
                      + sum(int(w.size) * 2 + int(b.size) * 4
                            for w, b in layer_params))

    kernel = functools.partial(_dncnn_fused_kernel, W=W, c_pad=c_pad,
                               layer_cfg=tuple(layer_cfg))
    out = pl.pallas_call(
        kernel,
        out_shape=jax.ShapeDtypeStruct((G, c_pad, nbl), jnp.float32),
        grid=(G,),
        in_specs=in_specs,
        out_specs=pl.BlockSpec((1, c_pad, nbl), lambda g: (g, 0, 0)),
        scratch_shapes=[pltpu.VMEM((9 * c_pad, nbl), jnp.bfloat16)],
        compiler_params=pltpu.CompilerParams(
            dimension_semantics=("parallel",)),
        cost_estimate=pl.CostEstimate(flops=flops, transcendentals=0,
                                      bytes_accessed=bytes_accessed),
    )(*args)

    out = out.reshape(G, c_pad, nb, H, W).transpose(0, 2, 1, 3, 4)
    out = out.reshape(n_pad, c_pad, H, W)
    return out[:N, :C]


# ----------------------------------------------------------------------------
# Deterministic parameter construction (mirrors DnCNN_MultiBlock_ds.__init__)
# BN (eval mode) folded: w_fold[co] = scale[co] * w[co], bias[co] = shift[co].
# All channel dims zero-padded to c_pad (padding is transparent: zero weight
# rows/cols, zero bias).
# ----------------------------------------------------------------------------
def init_params(key, *, block, depth, image_channels, filters, use_bnorm,
                c_pad, bn_eps=1e-5):
    layer_params = []   # (w_mat bf16 (c_pad, 9*c_pad), bias f32 (c_pad, 1))
    layer_cfg = []      # (relu, block_end)
    for _ in range(block):
        for i in range(depth):
            last = (i == depth - 1)
            cin = image_channels if i == 0 else filters
            cout = image_channels if last else filters
            key, kw, kg, kb, km, kv = jax.random.split(key, 6)
            # PyTorch conv weight layout (Cout, Cin, 3, 3), bias=False
            w_torch = jax.random.normal(kw, (cout, cin, 3, 3), jnp.float32) * 0.05
            if use_bnorm and not last:
                gamma = 1.0 + 0.1 * jax.random.normal(kg, (cout,), jnp.float32)
                beta = 0.1 * jax.random.normal(kb, (cout,), jnp.float32)
                rmean = 0.1 * jax.random.normal(km, (cout,), jnp.float32)
                rvar = 1.0 + 0.1 * jax.random.uniform(kv, (cout,), jnp.float32)
                scale = gamma / jnp.sqrt(rvar + bn_eps)
                shift = beta - rmean * scale
            else:
                scale = jnp.ones((cout,), jnp.float32)
                shift = jnp.zeros((cout,), jnp.float32)
            w_fold = w_torch * scale.reshape(cout, 1, 1, 1)
            # zero-pad to (c_pad, c_pad, 3, 3): free on the MXU, tile-aligned im2col
            w_pad = jnp.zeros((c_pad, c_pad, 3, 3), jnp.float32)
            w_pad = w_pad.at[:cout, :cin].set(w_fold)
            # (Cp, Cp, 3, 3) -> (Cp, 3, 3, Cp) -> (Cp, 9*Cp);
            # column index = (ky*3+kx)*c_pad + ci  (matches in-kernel patch rows)
            w_mat = jnp.transpose(w_pad, (0, 2, 3, 1)).reshape(c_pad, 9 * c_pad)
            b_pad = jnp.zeros((c_pad, 1), jnp.float32).at[:cout, 0].set(shift)
            layer_params.append((w_mat.astype(jnp.bfloat16), b_pad))
            layer_cfg.append((not last, last))
    return layer_params, tuple(layer_cfg)


# ----------------------------------------------------------------------------
# Pure-JAX reference (same folded, padded weights) for a correctness cross-check
# ----------------------------------------------------------------------------
def reference_forward(x_nchw, layer_params, layer_cfg, c_pad):
    N, C, H, W = x_nchw.shape
    act = jnp.zeros((N, c_pad, H, W), jnp.float32).at[:, :C].set(
        x_nchw.astype(jnp.float32))
    resid = act
    for (w_mat, bias), (relu, block_end) in zip(layer_params, layer_cfg):
        w4 = (w_mat.astype(jnp.float32)
              .reshape(c_pad, 3, 3, c_pad)
              .transpose(0, 3, 1, 2))                    # OIHW
        y = jax.lax.conv_general_dilated(
            act, w4, window_strides=(1, 1), padding=((1, 1), (1, 1)),
            dimension_numbers=("NCHW", "OIHW", "NCHW"))
        y = y + bias.reshape(1, c_pad, 1, 1)
        if relu:
            y = jnp.maximum(y, 0.0)
        if block_end:
            y = resid - y
            resid = y
        act = y
    return act[:, :C]


if __name__ == "__main__":
    # Configuration consistent with the module:
    #   block=2, depth=3, image_channels=4, filters=32, input (2, 4, 16, 16)
    BLOCK, DEPTH, IMG_C, FILTERS = 2, 3, 4, 32
    N, H, W = 2, 16, 16
    C_PAD = max(_round_up(FILTERS, 16), _round_up(IMG_C, 16))   # 32

    key = jax.random.PRNGKey(0)
    k_x, k_p = jax.random.split(key)
    x = jax.random.normal(k_x, (N, IMG_C, H, W), jnp.float32)
    layer_params, layer_cfg = init_params(
        k_p, block=BLOCK, depth=DEPTH, image_channels=IMG_C,
        filters=FILTERS, use_bnorm=True, c_pad=C_PAD)

    out = dncnn_multiblock_forward(x, layer_params, layer_cfg, C_PAD)
    out = jax.block_until_ready(out)
    assert out.shape == (N, IMG_C, H, W), out.shape
    assert bool(jnp.all(jnp.isfinite(out)))

    # cross-check against XLA conv reference (bf16 activation rounding only)
    ref = reference_forward(x, layer_params, layer_cfg, C_PAD)
    err = float(jnp.max(jnp.abs(out - ref)))
    assert err < 0.1, f"max abs error vs reference: {err}"

    print("KERNEL_OK")
</pallas_src>

<mosaic_0001>
module attributes {stable_mosaic.version = 11 : i64} {
  func.func @_dncnn_fused_kernel(%arg0: i32, %arg1: memref<1x32x512xf32, #tpu.memory_space<vmem>>, %arg2: memref<288x512xbf16, #tpu.memory_space<vmem>>, %arg3: memref<32x288xbf16, #tpu.memory_space<vmem>>, %arg4: memref<32x1xf32, #tpu.memory_space<vmem>>, %arg5: memref<32x288xbf16, #tpu.memory_space<vmem>>, %arg6: memref<32x1xf32, #tpu.memory_space<vmem>>, %arg7: memref<32x288xbf16, #tpu.memory_space<vmem>>, %arg8: memref<32x1xf32, #tpu.memory_space<vmem>>, %arg9: memref<32x288xbf16, #tpu.memory_space<vmem>>, %arg10: memref<32x1xf32, #tpu.memory_space<vmem>>, %arg11: memref<32x288xbf16, #tpu.memory_space<vmem>>, %arg12: memref<32x1xf32, #tpu.memory_space<vmem>>, %arg13: memref<32x288xbf16, #tpu.memory_space<vmem>>, %arg14: memref<32x1xf32, #tpu.memory_space<vmem>>, %arg15: memref<1x32x512xf32, #tpu.memory_space<vmem>>, %arg16: memref<288x512xbf16, #tpu.memory_space<vmem>>) attributes {dimension_semantics = [#tpu.dimension_semantics<parallel>], iteration_bounds = array<i64: 1>, scalar_prefetch = 0 : i64, scratch_operands = 1 : i64, tpu.core_type = #tpu.core_type<tc>, window_params = [{transform_indices = @transform_0, window_bounds = array<i64: 1, 32, 512>}, {pipeline_mode = #tpu.pipeline_mode<synchronous>, transform_indices = @transform_1, window_bounds = array<i64: 288, 512>}, {pipeline_mode = #tpu.pipeline_mode<synchronous>, transform_indices = @transform_2, window_bounds = array<i64: 32, 288>}, {pipeline_mode = #tpu.pipeline_mode<synchronous>, transform_indices = @transform_3, window_bounds = array<i64: 32, 1>}, {pipeline_mode = #tpu.pipeline_mode<synchronous>, transform_indices = @transform_4, window_bounds = array<i64: 32, 288>}, {pipeline_mode = #tpu.pipeline_mode<synchronous>, transform_indices = @transform_5, window_bounds = array<i64: 32, 1>}, {pipeline_mode = #tpu.pipeline_mode<synchronous>, transform_indices = @transform_6, window_bounds = array<i64: 32, 288>}, {pipeline_mode = #tpu.pipeline_mode<synchronous>, transform_indices = @transform_7, window_bounds = array<i64: 32, 1>}, {pipeline_mode = #tpu.pipeline_mode<synchronous>, transform_indices = @transform_8, window_bounds = array<i64: 32, 288>}, {pipeline_mode = #tpu.pipeline_mode<synchronous>, transform_indices = @transform_9, window_bounds = array<i64: 32, 1>}, {pipeline_mode = #tpu.pipeline_mode<synchronous>, transform_indices = @transform_10, window_bounds = array<i64: 32, 288>}, {pipeline_mode = #tpu.pipeline_mode<synchronous>, transform_indices = @transform_11, window_bounds = array<i64: 32, 1>}, {pipeline_mode = #tpu.pipeline_mode<synchronous>, transform_indices = @transform_12, window_bounds = array<i64: 32, 288>}, {pipeline_mode = #tpu.pipeline_mode<synchronous>, transform_indices = @transform_13, window_bounds = array<i64: 32, 1>}, {transform_indices = @transform_14, window_bounds = array<i64: 1, 32, 512>}]} {
    %c0 = arith.constant 0 : index
    %c0_0 = arith.constant 0 : index
    %c0_1 = arith.constant 0 : index
    %0 = vector.load %arg1[%c0, %c0_0, %c0_1] : memref<1x32x512xf32, #tpu.memory_space<vmem>>, vector<1x32x512xf32>
    %1 = vector.shape_cast %0 : vector<1x32x512xf32> to vector<32x512xf32>
    %2 = arith.truncf %1 : vector<32x512xf32> to vector<32x512xbf16>
    %3 = vector.extract_strided_slice %2 {offsets = [0, 495], sizes = [32, 17], strides = [1, 1]} : vector<32x512xbf16> to vector<32x17xbf16>
    %4 = vector.extract_strided_slice %2 {offsets = [0, 0], sizes = [32, 495], strides = [1, 1]} : vector<32x512xbf16> to vector<32x495xbf16>
    %5 = tpu.concatenate %3, %4 in 1 : vector<32x17xbf16>, vector<32x495xbf16> -> vector<32x512xbf16>
    %c0_2 = arith.constant 0 : index
    %c0_3 = arith.constant 0 : index
    %6 = vector.load %arg2[%c0_2, %c0_3] : memref<288x512xbf16, #tpu.memory_space<vmem>>, vector<32x512xbf16>
    %7 = arith.mulf %5, %6 : vector<32x512xbf16>
    %c0_4 = arith.constant 0 : index
    %c0_5 = arith.constant 0 : index
    %8 = vector.load %arg16[%c0_4, %c0_5] : memref<288x512xbf16, #tpu.memory_space<vmem>>, vector<32x512xbf16>
    tpu.vector_store %arg16[%c0_4, %c0_5], %7 {strides = array<i32>} : memref<288x512xbf16, #tpu.memory_space<vmem>>, vector<32x512xbf16>,
    %9 = vector.extract_strided_slice %2 {offsets = [0, 496], sizes = [32, 16], strides = [1, 1]} : vector<32x512xbf16> to vector<32x16xbf16>
    %10 = vector.extract_strided_slice %2 {offsets = [0, 0], sizes = [32, 496], strides = [1, 1]} : vector<32x512xbf16> to vector<32x496xbf16>
    %11 = tpu.concatenate %9, %10 in 1 : vector<32x16xbf16>, vector<32x496xbf16> -> vector<32x512xbf16>
    %c32 = arith.constant 32 : index
    %c0_6 = arith.constant 0 : index
    %12 = vector.load %arg2[%c32, %c0_6] : memref<288x512xbf16, #tpu.memory_space<vmem>>, vector<32x512xbf16>
    %13 = arith.mulf %11, %12 : vector<32x512xbf16>
    %c32_7 = arith.constant 32 : index
    %c0_8 = arith.constant 0 : index
    %14 = vector.load %arg16[%c32_7, %c0_8] : memref<288x512xbf16, #tpu.memory_space<vmem>>, vector<32x512xbf16>
    tpu.vector_store %arg16[%c32_7, %c0_8], %13 {strides = array<i32>} : memref<288x512xbf16, #tpu.memory_space<vmem>>, vector<32x512xbf16>,
    %15 = vector.extract_strided_slice %2 {offsets = [0, 497], sizes = [32, 15], strides = [1, 1]} : vector<32x512xbf16> to vector<32x15xbf16>
    %16 = vector.extract_strided_slice %2 {offsets = [0, 0], sizes = [32, 497], strides = [1, 1]} : vector<32x512xbf16> to vector<32x497xbf16>
    %17 = tpu.concatenate %15, %16 in 1 : vector<32x15xbf16>, vector<32x497xbf16> -> vector<32x512xbf16>
    %c64 = arith.constant 64 : index
    %c0_9 = arith.constant 0 : index
    %18 = vector.load %arg2[%c64, %c0_9] : memref<288x512xbf16, #tpu.memory_space<vmem>>, vector<32x512xbf16>
    %19 = arith.mulf %17, %18 : vector<32x512xbf16>
    %c64_10 = arith.constant 64 : index
    %c0_11 = arith.constant 0 : index
    %20 = vector.load %arg16[%c64_10, %c0_11] : memref<288x512xbf16, #tpu.memory_space<vmem>>, vector<32x512xbf16>
    tpu.vector_store %arg16[%c64_10, %c0_11], %19 {strides = array<i32>} : memref<288x512xbf16, #tpu.memory_space<vmem>>, vector<32x512xbf16>,
    %21 = vector.extract_strided_slice %2 {offsets = [0, 511], sizes = [32, 1], strides = [1, 1]} : vector<32x512xbf16> to vector<32x1xbf16>
    %22 = vector.extract_strided_slice %2 {offsets = [0, 0], sizes = [32, 511], strides = [1, 1]} : vector<32x512xbf16> to vector<32x511xbf16>
    %23 = tpu.concatenate %21, %22 in 1 : vector<32x1xbf16>, vector<32x511xbf16> -> vector<32x512xbf16>
    %c96 = arith.constant 96 : index
    %c0_12 = arith.constant 0 : index
    %24 = vector.load %arg2[%c96, %c0_12] : memref<288x512xbf16, #tpu.memory_space<vmem>>, vector<32x512xbf16>
    %25 = arith.mulf %23, %24 : vector<32x512xbf16>
    %c96_13 = arith.constant 96 : index
    %c0_14 = arith.constant 0 : index
    %26 = vector.load %arg16[%c96_13, %c0_14] : memref<288x512xbf16, #tpu.memory_space<vmem>>, vector<32x512xbf16>
    tpu.vector_store %arg16[%c96_13, %c0_14], %25 {strides = array<i32>} : memref<288x512xbf16, #tpu.memory_space<vmem>>, vector<32x512xbf16>,
    %c128 = arith.constant 128 : index
    %c0_15 = arith.constant 0 : index
    %27 = vector.load %arg2[%c128, %c0_15] : memref<288x512xbf16, #tpu.memory_space<vmem>>, vector<32x512xbf16>
    %28 = arith.mulf %2, %27 : vector<32x512xbf16>
    %c128_16 = arith.constant 128 : index
    %c0_17 = arith.constant 0 : index
    %29 = vector.load %arg16[%c128_16, %c0_17] : memref<288x512xbf16, #tpu.memory_space<vmem>>, vector<32x512xbf16>
    tpu.vector_store %arg16[%c128_16, %c0_17], %28 {strides = array<i32>} : memref<288x512xbf16, #tpu.memory_space<vmem>>, vector<32x512xbf16>,
    %30 = vector.extract_strided_slice %2 {offsets = [0, 1], sizes = [32, 511], strides = [1, 1]} : vector<32x512xbf16> to vector<32x511xbf16>
    %31 = vector.extract_strided_slice %2 {offsets = [0, 0], sizes = [32, 1], strides = [1, 1]} : vector<32x512xbf16> to vector<32x1xbf16>
    %32 = tpu.concatenate %30, %31 in 1 : vector<32x511xbf16>, vector<32x1xbf16> -> vector<32x512xbf16>
    %c160 = arith.constant 160 : index
    %c0_18 = arith.constant 0 : index
    %33 = vector.load %arg2[%c160, %c0_18] : memref<288x512xbf16, #tpu.memory_space<vmem>>, vector<32x512xbf16>
    %34 = arith.mulf %32, %33 : vector<32x512xbf16>
    %c160_19 = arith.constant 160 : index
    %c0_20 = arith.constant 0 : index
    %35 = vector.load %arg16[%c160_19, %c0_20] : memref<288x512xbf16, #tpu.memory_space<vmem>>, vector<32x512xbf16>
    tpu.vector_store %arg16[%c160_19, %c0_20], %34 {strides = array<i32>} : memref<288x512xbf16, #tpu.memory_space<vmem>>, vector<32x512xbf16>,
    %36 = vector.extract_strided_slice %2 {offsets = [0, 15], sizes = [32, 497], strides = [1, 1]} : vector<32x512xbf16> to vector<32x497xbf16>
    %37 = vector.extract_strided_slice %2 {offsets = [0, 0], sizes = [32, 15], strides = [1, 1]} : vector<32x512xbf16> to vector<32x15xbf16>
    %38 = tpu.concatenate %36, %37 in 1 : vector<32x497xbf16>, vector<32x15xbf16> -> vector<32x512xbf16>
    %c192 = arith.constant 192 : index
    %c0_21 = arith.constant 0 : index
    %39 = vector.load %arg2[%c192, %c0_21] : memref<288x512xbf16, #tpu.memory_space<vmem>>, vector<32x512xbf16>
    %40 = arith.mulf %38, %39 : vector<32x512xbf16>
    %c192_22 = arith.constant 192 : index
    %c0_23 = arith.constant 0 : index
    %41 = vector.load %arg16[%c192_22, %c0_23] : memref<288x512xbf16, #tpu.memory_space<vmem>>, vector<32x512xbf16>
    tpu.vector_store %arg16[%c192_22, %c0_23], %40 {strides = array<i32>} : memref<288x512xbf16, #tpu.memory_space<vmem>>, vector<32x512xbf16>,
    %42 = vector.extract_strided_slice %2 {offsets = [0, 16], sizes = [32, 496], strides = [1, 1]} : vector<32x512xbf16> to vector<32x496xbf16>
    %43 = vector.extract_strided_slice %2 {offsets = [0, 0], sizes = [32, 16], strides = [1, 1]} : vector<32x512xbf16> to vector<32x16xbf16>
    %44 = tpu.concatenate %42, %43 in 1 : vector<32x496xbf16>, vector<32x16xbf16> -> vector<32x512xbf16>
    %c224 = arith.constant 224 : index
    %c0_24 = arith.constant 0 : index
    %45 = vector.load %arg2[%c224, %c0_24] : memref<288x512xbf16, #tpu.memory_space<vmem>>, vector<32x512xbf16>
    %46 = arith.mulf %44, %45 : vector<32x512xbf16>
    %c224_25 = arith.constant 224 : index
    %c0_26 = arith.constant 0 : index
    %47 = vector.load %arg16[%c224_25, %c0_26] : memref<288x512xbf16, #tpu.memory_space<vmem>>, vector<32x512xbf16>
    tpu.vector_store %arg16[%c224_25, %c0_26], %46 {strides = array<i32>} : memref<288x512xbf16, #tpu.memory_space<vmem>>, vector<32x512xbf16>,
    %48 = vector.extract_strided_slice %2 {offsets = [0, 17], sizes = [32, 495], strides = [1, 1]} : vector<32x512xbf16> to vector<32x495xbf16>
    %49 = vector.extract_strided_slice %2 {offsets = [0, 0], sizes = [32, 17], strides = [1, 1]} : vector<32x512xbf16> to vector<32x17xbf16>
    %50 = tpu.concatenate %48, %49 in 1 : vector<32x495xbf16>, vector<32x17xbf16> -> vector<32x512xbf16>
    %c256 = arith.constant 256 : index
    %c0_27 = arith.constant 0 : index
    %51 = vector.load %arg2[%c256, %c0_27] : memref<288x512xbf16, #tpu.memory_space<vmem>>, vector<32x512xbf16>
    %52 = arith.mulf %50, %51 : vector<32x512xbf16>
    %c256_28 = arith.constant 256 : index
    %c0_29 = arith.constant 0 : index
    %53 = vector.load %arg16[%c256_28, %c0_29] : memref<288x512xbf16, #tpu.memory_space<vmem>>, vector<32x512xbf16>
    tpu.vector_store %arg16[%c256_28, %c0_29], %52 {strides = array<i32>} : memref<288x512xbf16, #tpu.memory_space<vmem>>, vector<32x512xbf16>,
    %c0_30 = arith.constant 0 : index
    %c0_31 = arith.constant 0 : index
    %54 = vector.load %arg3[%c0_30, %c0_31] : memref<32x288xbf16, #tpu.memory_space<vmem>>, vector<32x288xbf16>
    %c0_32 = arith.constant 0 : index
    %c0_33 = arith.constant 0 : index
    %55 = vector.load %arg16[%c0_32, %c0_33] : memref<288x512xbf16, #tpu.memory_space<vmem>>, vector<288x512xbf16>
    %cst = arith.constant dense<0.000000e+00> : vector<32x512xf32>
    %56 = tpu.matmul %54, %55, %cst {dimension_numbers = #tpu.dot_dimension_numbers<[1], [0], [0], [1], [0, 0, 1, 1], [], []>} : vector<32x288xbf16>, vector<288x512xbf16>, vector<32x512xf32> -> vector<32x512xf32>
    %c0_34 = arith.constant 0 : index
    %c0_35 = arith.constant 0 : index
    %57 = vector.load %arg4[%c0_34, %c0_35] : memref<32x1xf32, #tpu.memory_space<vmem>>, vector<32x1xf32>
    %58 = vector.broadcast %57 : vector<32x1xf32> to vector<32x512xf32>
    %59 = arith.addf %56, %58 : vector<32x512xf32>
    %cst_36 = arith.constant 0.000000e+00 : f32
    %60 = vector.broadcast %cst_36 : f32 to vector<32x512xf32>
    %61 = arith.maximumf %59, %60 : vector<32x512xf32>
    %62 = arith.truncf %61 : vector<32x512xf32> to vector<32x512xbf16>
    %63 = vector.extract_strided_slice %62 {offsets = [0, 495], sizes = [32, 17], strides = [1, 1]} : vector<32x512xbf16> to vector<32x17xbf16>
    %64 = vector.extract_strided_slice %62 {offsets = [0, 0], sizes = [32, 495], strides = [1, 1]} : vector<32x512xbf16> to vector<32x495xbf16>
    %65 = tpu.concatenate %63, %64 in 1 : vector<32x17xbf16>, vector<32x495xbf16> -> vector<32x512xbf16>
    %c0_37 = arith.constant 0 : index
    %c0_38 = arith.constant 0 : index
    %66 = vector.load %arg2[%c0_37, %c0_38] : memref<288x512xbf16, #tpu.memory_space<vmem>>, vector<32x512xbf16>
    %67 = arith.mulf %65, %66 : vector<32x512xbf16>
    %c0_39 = arith.constant 0 : index
    %c0_40 = arith.constant 0 : index
    %68 = vector.load %arg16[%c0_39, %c0_40] : memref<288x512xbf16, #tpu.memory_space<vmem>>, vector<32x512xbf16>
    tpu.vector_store %arg16[%c0_39, %c0_40], %67 {strides = array<i32>} : memref<288x512xbf16, #tpu.memory_space<vmem>>, vector<32x512xbf16>,
    %69 = vector.extract_strided_slice %62 {offsets = [0, 496], sizes = [32, 16], strides = [1, 1]} : vector<32x512xbf16> to vector<32x16xbf16>
    %70 = vector.extract_strided_slice %62 {offsets = [0, 0], sizes = [32, 496], strides = [1, 1]} : vector<32x512xbf16> to vector<32x496xbf16>
    %71 = tpu.concatenate %69, %70 in 1 : vector<32x16xbf16>, vector<32x496xbf16> -> vector<32x512xbf16>
    %c32_41 = arith.constant 32 : index
    %c0_42 = arith.constant 0 : index
    %72 = vector.load %arg2[%c32_41, %c0_42] : memref<288x512xbf16, #tpu.memory_space<vmem>>, vector<32x512xbf16>
    %73 = arith.mulf %71, %72 : vector<32x512xbf16>
    %c32_43 = arith.constant 32 : index
    %c0_44 = arith.constant 0 : index
    %74 = vector.load %arg16[%c32_43, %c0_44] : memref<288x512xbf16, #tpu.memory_space<vmem>>, vector<32x512xbf16>
    tpu.vector_store %arg16[%c32_43, %c0_44], %73 {strides = array<i32>} : memref<288x512xbf16, #tpu.memory_space<vmem>>, vector<32x512xbf16>,
    %75 = vector.extract_strided_slice %62 {offsets = [0, 497], sizes = [32, 15], strides = [1, 1]} : vector<32x512xbf16> to vector<32x15xbf16>
    %76 = vector.extract_strided_slice %62 {offsets = [0, 0], sizes = [32, 497], strides = [1, 1]} : vector<32x512xbf16> to vector<32x497xbf16>
    %77 = tpu.concatenate %75, %76 in 1 : vector<32x15xbf16>, vector<32x497xbf16> -> vector<32x512xbf16>
    %c64_45 = arith.constant 64 : index
    %c0_46 = arith.constant 0 : index
    %78 = vector.load %arg2[%c64_45, %c0_46] : memref<288x512xbf16, #tpu.memory_space<vmem>>, vector<32x512xbf16>
    %79 = arith.mulf %77, %78 : vector<32x512xbf16>
    %c64_47 = arith.constant 64 : index
    %c0_48 = arith.constant 0 : index
    %80 = vector.load %arg16[%c64_47, %c0_48] : memref<288x512xbf16, #tpu.memory_space<vmem>>, vector<32x512xbf16>
    tpu.vector_store %arg16[%c64_47, %c0_48], %79 {strides = array<i32>} : memref<288x512xbf16, #tpu.memory_space<vmem>>, vector<32x512xbf16>,
    %81 = vector.extract_strided_slice %62 {offsets = [0, 511], sizes = [32, 1], strides = [1, 1]} : vector<32x512xbf16> to vector<32x1xbf16>
    %82 = vector.extract_strided_slice %62 {offsets = [0, 0], sizes = [32, 511], strides = [1, 1]} : vector<32x512xbf16> to vector<32x511xbf16>
    %83 = tpu.concatenate %81, %82 in 1 : vector<32x1xbf16>, vector<32x511xbf16> -> vector<32x512xbf16>
    %c96_49 = arith.constant 96 : index
    %c0_50 = arith.constant 0 : index
    %84 = vector.load %arg2[%c96_49, %c0_50] : memref<288x512xbf16, #tpu.memory_space<vmem>>, vector<32x512xbf16>
    %85 = arith.mulf %83, %84 : vector<32x512xbf16>
    %c96_51 = arith.constant 96 : index
    %c0_52 = arith.constant 0 : index
    %86 = vector.load %arg16[%c96_51, %c0_52] : memref<288x512xbf16, #tpu.memory_space<vmem>>, vector<32x512xbf16>
    tpu.vector_store %arg16[%c96_51, %c0_52], %85 {strides = array<i32>} : memref<288x512xbf16, #tpu.memory_space<vmem>>, vector<32x512xbf16>,
    %c128_53 = arith.constant 128 : index
    %c0_54 = arith.constant 0 : index
    %87 = vector.load %arg2[%c128_53, %c0_54] : memref<288x512xbf16, #tpu.memory_space<vmem>>, vector<32x512xbf16>
    %88 = arith.mulf %62, %87 : vector<32x512xbf16>
    %c128_55 = arith.constant 128 : index
    %c0_56 = arith.constant 0 : index
    %89 = vector.load %arg16[%c128_55, %c0_56] : memref<288x512xbf16, #tpu.memory_space<vmem>>, vector<32x512xbf16>
    tpu.vector_store %arg16[%c128_55, %c0_56], %88 {strides = array<i32>} : memref<288x512xbf16, #tpu.memory_space<vmem>>, vector<32x512xbf16>,
    %90 = vector.extract_strided_slice %62 {offsets = [0, 1], sizes = [32, 511], strides = [1, 1]} : vector<32x512xbf16> to vector<32x511xbf16>
    %91 = vector.extract_strided_slice %62 {offsets = [0, 0], sizes = [32, 1], strides = [1, 1]} : vector<32x512xbf16> to vector<32x1xbf16>
    %92 = tpu.concatenate %90, %91 in 1 : vector<32x511xbf16>, vector<32x1xbf16> -> vector<32x512xbf16>
    %c160_57 = arith.constant 160 : index
    %c0_58 = arith.constant 0 : index
    %93 = vector.load %arg2[%c160_57, %c0_58] : memref<288x512xbf16, #tpu.memory_space<vmem>>, vector<32x512xbf16>
    %94 = arith.mulf %92, %93 : vector<32x512xbf16>
    %c160_59 = arith.constant 160 : index
    %c0_60 = arith.constant 0 : index
    %95 = vector.load %arg16[%c160_59, %c0_60] : memref<288x512xbf16, #tpu.memory_space<vmem>>, vector<32x512xbf16>
    tpu.vector_store %arg16[%c160_59, %c0_60], %94 {strides = array<i32>} : memref<288x512xbf16, #tpu.memory_space<vmem>>, vector<32x512xbf16>,
    %96 = vector.extract_strided_slice %62 {offsets = [0, 15], sizes = [32, 497], strides = [1, 1]} : vector<32x512xbf16> to vector<32x497xbf16>
    %97 = vector.extract_strided_slice %62 {offsets = [0, 0], sizes = [32, 15], strides = [1, 1]} : vector<32x512xbf16> to vector<32x15xbf16>
    %98 = tpu.concatenate %96, %97 in 1 : vector<32x497xbf16>, vector<32x15xbf16> -> vector<32x512xbf16>
    %c192_61 = arith.constant 192 : index
    %c0_62 = arith.constant 0 : index
    %99 = vector.load %arg2[%c192_61, %c0_62] : memref<288x512xbf16, #tpu.memory_space<vmem>>, vector<32x512xbf16>
    %100 = arith.mulf %98, %99 : vector<32x512xbf16>
    %c192_63 = arith.constant 192 : index
    %c0_64 = arith.constant 0 : index
    %101 = vector.load %arg16[%c192_63, %c0_64] : memref<288x512xbf16, #tpu.memory_space<vmem>>, vector<32x512xbf16>
    tpu.vector_store %arg16[%c192_63, %c0_64], %100 {strides = array<i32>} : memref<288x512xbf16, #tpu.memory_space<vmem>>, vector<32x512xbf16>,
    %102 = vector.extract_strided_slice %62 {offsets = [0, 16], sizes = [32, 496], strides = [1, 1]} : vector<32x512xbf16> to vector<32x496xbf16>
    %103 = vector.extract_strided_slice %62 {offsets = [0, 0], sizes = [32, 16], strides = [1, 1]} : vector<32x512xbf16> to vector<32x16xbf16>
    %104 = tpu.concatenate %102, %103 in 1 : vector<32x496xbf16>, vector<32x16xbf16> -> vector<32x512xbf16>
    %c224_65 = arith.constant 224 : index
    %c0_66 = arith.constant 0 : index
    %105 = vector.load %arg2[%c224_65, %c0_66] : memref<288x512xbf16, #tpu.memory_space<vmem>>, vector<32x512xbf16>
    %106 = arith.mulf %104, %105 : vector<32x512xbf16>
    %c224_67 = arith.constant 224 : index
    %c0_68 = arith.constant 0 : index
    %107 = vector.load %arg16[%c224_67, %c0_68] : memref<288x512xbf16, #tpu.memory_space<vmem>>, vector<32x512xbf16>
    tpu.vector_store %arg16[%c224_67, %c0_68], %106 {strides = array<i32>} : memref<288x512xbf16, #tpu.memory_space<vmem>>, vector<32x512xbf16>,
    %108 = vector.extract_strided_slice %62 {offsets = [0, 17], sizes = [32, 495], strides = [1, 1]} : vector<32x512xbf16> to vector<32x495xbf16>
    %109 = vector.extract_strided_slice %62 {offsets = [0, 0], sizes = [32, 17], strides = [1, 1]} : vector<32x512xbf16> to vector<32x17xbf16>
    %110 = tpu.concatenate %108, %109 in 1 : vector<32x495xbf16>, vector<32x17xbf16> -> vector<32x512xbf16>
    %c256_69 = arith.constant 256 : index
    %c0_70 = arith.constant 0 : index
    %111 = vector.load %arg2[%c256_69, %c0_70] : memref<288x512xbf16, #tpu.memory_space<vmem>>, vector<32x512xbf16>
    %112 = arith.mulf %110, %111 : vector<32x512xbf16>
    %c256_71 = arith.constant 256 : index
    %c0_72 = arith.constant 0 : index
    %113 = vector.load %arg16[%c256_71, %c0_72] : memref<288x512xbf16, #tpu.memory_space<vmem>>, vector<32x512xbf16>
    tpu.vector_store %arg16[%c256_71, %c0_72], %112 {strides = array<i32>} : memref<288x512xbf16, #tpu.memory_space<vmem>>, vector<32x512xbf16>,
    %c0_73 = arith.constant 0 : index
    %c0_74 = arith.constant 0 : index
    %114 = vector.load %arg5[%c0_73, %c0_74] : memref<32x288xbf16, #tpu.memory_space<vmem>>, vector<32x288xbf16>
    %c0_75 = arith.constant 0 : index
    %c0_76 = arith.constant 0 : index
    %115 = vector.load %arg16[%c0_75, %c0_76] : memref<288x512xbf16, #tpu.memory_space<vmem>>, vector<288x512xbf16>
    %cst_77 = arith.constant dense<0.000000e+00> : vector<32x512xf32>
    %116 = tpu.matmul %114, %115, %cst_77 {dimension_numbers = #tpu.dot_dimension_numbers<[1], [0], [0], [1], [0, 0, 1, 1], [], []>} : vector<32x288xbf16>, vector<288x512xbf16>, vector<32x512xf32> -> vector<32x512xf32>
    %c0_78 = arith.constant 0 : index
    %c0_79 = arith.constant 0 : index
    %117 = vector.load %arg6[%c0_78, %c0_79] : memref<32x1xf32, #tpu.memory_space<vmem>>, vector<32x1xf32>
    %118 = vector.broadcast %117 : vector<32x1xf32> to vector<32x512xf32>
    %119 = arith.addf %116, %118 : vector<32x512xf32>
    %cst_80 = arith.constant 0.000000e+00 : f32
    %120 = vector.broadcast %cst_80 : f32 to vector<32x512xf32>
    %121 = arith.maximumf %119, %120 : vector<32x512xf32>
    %122 = arith.truncf %121 : vector<32x512xf32> to vector<32x512xbf16>
    %123 = vector.extract_strided_slice %122 {offsets = [0, 495], sizes = [32, 17], strides = [1, 1]} : vector<32x512xbf16> to vector<32x17xbf16>
    %124 = vector.extract_strided_slice %122 {offsets = [0, 0], sizes = [32, 495], strides = [1, 1]} : vector<32x512xbf16> to vector<32x495xbf16>
    %125 = tpu.concatenate %123, %124 in 1 : vector<32x17xbf16>, vector<32x495xbf16> -> vector<32x512xbf16>
    %c0_81 = arith.constant 0 : index
    %c0_82 = arith.constant 0 : index
    %126 = vector.load %arg2[%c0_81, %c0_82] : memref<288x512xbf16, #tpu.memory_space<vmem>>, vector<32x512xbf16>
    %127 = arith.mulf %125, %126 : vector<32x512xbf16>
    %c0_83 = arith.constant 0 : index
    %c0_84 = arith.constant 0 : index
    %128 = vector.load %arg16[%c0_83, %c0_84] : memref<288x512xbf16, #tpu.memory_space<vmem>>, vector<32x512xbf16>
    tpu.vector_store %arg16[%c0_83, %c0_84], %127 {strides = array<i32>} : memref<288x512xbf16, #tpu.memory_space<vmem>>, vector<32x512xbf16>,
    %129 = vector.extract_strided_slice %122 {offsets = [0, 496], sizes = [32, 16], strides = [1, 1]} : vector<32x512xbf16> to vector<32x16xbf16>
    %130 = vector.extract_strided_slice %122 {offsets = [0, 0], sizes = [32, 496], strides = [1, 1]} : vector<32x512xbf16> to vector<32x496xbf16>
    %131 = tpu.concatenate %129, %130 in 1 : vector<32x16xbf16>, vector<32x496xbf16> -> vector<32x512xbf16>
    %c32_85 = arith.constant 32 : index
    %c0_86 = arith.constant 0 : index
    %132 = vector.load %arg2[%c32_85, %c0_86] : memref<288x512xbf16, #tpu.memory_space<vmem>>, vector<32x512xbf16>
    %133 = arith.mulf %131, %132 : vector<32x512xbf16>
    %c32_87 = arith.constant 32 : index
    %c0_88 = arith.constant 0 : index
    %134 = vector.load %arg16[%c32_87, %c0_88] : memref<288x512xbf16, #tpu.memory_space<vmem>>, vector<32x512xbf16>
    tpu.vector_store %arg16[%c32_87, %c0_88], %133 {strides = array<i32>} : memref<288x512xbf16, #tpu.memory_space<vmem>>, vector<32x512xbf16>,
    %135 = vector.extract_strided_slice %122 {offsets = [0, 497], sizes = [32, 15], strides = [1, 1]} : vector<32x512xbf16> to vector<32x15xbf16>
    %136 = vector.extract_strided_slice %122 {offsets = [0, 0], sizes = [32, 497], strides = [1, 1]} : vector<32x512xbf16> to vector<32x497xbf16>
    %137 = tpu.concatenate %135, %136 in 1 : vector<32x15xbf16>, vector<32x497xbf16> -> vector<32x512xbf16>
    %c64_89 = arith.constant 64 : index
    %c0_90 = arith.constant 0 : index
    %138 = vector.load %arg2[%c64_89, %c0_90] : memref<288x512xbf16, #tpu.memory_space<vmem>>, vector<32x512xbf16>
    %139 = arith.mulf %137, %138 : vector<32x512xbf16>
    %c64_91 = arith.constant 64 : index
    %c0_92 = arith.constant 0 : index
    %140 = vector.load %arg16[%c64_91, %c0_92] : memref<288x512xbf16, #tpu.memory_space<vmem>>, vector<32x512xbf16>
    tpu.vector_store %arg16[%c64_91, %c0_92], %139 {strides = array<i32>} : memref<288x512xbf16, #tpu.memory_space<vmem>>, vector<32x512xbf16>,
    %141 = vector.extract_strided_slice %122 {offsets = [0, 511], sizes = [32, 1], strides = [1, 1]} : vector<32x512xbf16> to vector<32x1xbf16>
    %142 = vector.extract_strided_slice %122 {offsets = [0, 0], sizes = [32, 511], strides = [1, 1]} : vector<32x512xbf16> to vector<32x511xbf16>
    %143 = tpu.concatenate %141, %142 in 1 : vector<32x1xbf16>, vector<32x511xbf16> -> vector<32x512xbf16>
    %c96_93 = arith.constant 96 : index
    %c0_94 = arith.constant 0 : index
    %144 = vector.load %arg2[%c96_93, %c0_94] : memref<288x512xbf16, #tpu.memory_space<vmem>>, vector<32x512xbf16>
    %145 = arith.mulf %143, %144 : vector<32x512xbf16>
    %c96_95 = arith.constant 96 : index
    %c0_96 = arith.constant 0 : index
    %146 = vector.load %arg16[%c96_95, %c0_96] : memref<288x512xbf16, #tpu.memory_space<vmem>>, vector<32x512xbf16>
    tpu.vector_store %arg16[%c96_95, %c0_96], %145 {strides = array<i32>} : memref<288x512xbf16, #tpu.memory_space<vmem>>, vector<32x512xbf16>,
    %c128_97 = arith.constant 128 : index
    %c0_98 = arith.constant 0 : index
    %147 = vector.load %arg2[%c128_97, %c0_98] : memref<288x512xbf16, #tpu.memory_space<vmem>>, vector<32x512xbf16>
    %148 = arith.mulf %122, %147 : vector<32x512xbf16>
    %c128_99 = arith.constant 128 : index
    %c0_100 = arith.constant 0 : index
    %149 = vector.load %arg16[%c128_99, %c0_100] : memref<288x512xbf16, #tpu.memory_space<vmem>>, vector<32x512xbf16>
    tpu.vector_store %arg16[%c128_99, %c0_100], %148 {strides = array<i32>} : memref<288x512xbf16, #tpu.memory_space<vmem>>, vector<32x512xbf16>,
    %150 = vector.extract_strided_slice %122 {offsets = [0, 1], sizes = [32, 511], strides = [1, 1]} : vector<32x512xbf16> to vector<32x511xbf16>
    %151 = vector.extract_strided_slice %122 {offsets = [0, 0], sizes = [32, 1], strides = [1, 1]} : vector<32x512xbf16> to vector<32x1xbf16>
    %152 = tpu.concatenate %150, %151 in 1 : vector<32x511xbf16>, vector<32x1xbf16> -> vector<32x512xbf16>
    %c160_101 = arith.constant 160 : index
    %c0_102 = arith.constant 0 : index
    %153 = vector.load %arg2[%c160_101, %c0_102] : memref<288x512xbf16, #tpu.memory_space<vmem>>, vector<32x512xbf16>
    %154 = arith.mulf %152, %153 : vector<32x512xbf16>
    %c160_103 = arith.constant 160 : index
    %c0_104 = arith.constant 0 : index
    %155 = vector.load %arg16[%c160_103, %c0_104] : memref<288x512xbf16, #tpu.memory_space<vmem>>, vector<32x512xbf16>
    tpu.vector_store %arg16[%c160_103, %c0_104], %154 {strides = array<i32>} : memref<288x512xbf16, #tpu.memory_space<vmem>>, vector<32x512xbf16>,
    %156 = vector.extract_strided_slice %122 {offsets = [0, 15], sizes = [32, 497], strides = [1, 1]} : vector<32x512xbf16> to vector<32x497xbf16>
    %157 = vector.extract_strided_slice %122 {offsets = [0, 0], sizes = [32, 15], strides = [1, 1]} : vector<32x512xbf16> to vector<32x15xbf16>
    %158 = tpu.concatenate %156, %157 in 1 : vector<32x497xbf16>, vector<32x15xbf16> -> vector<32x512xbf16>
    %c192_105 = arith.constant 192 : index
    %c0_106 = arith.constant 0 : index
    %159 = vector.load %arg2[%c192_105, %c0_106] : memref<288x512xbf16, #tpu.memory_space<vmem>>, vector<32x512xbf16>
    %160 = arith.mulf %158, %159 : vector<32x512xbf16>
    %c192_107 = arith.constant 192 : index
    %c0_108 = arith.constant 0 : index
    %161 = vector.load %arg16[%c192_107, %c0_108] : memref<288x512xbf16, #tpu.memory_space<vmem>>, vector<32x512xbf16>
    tpu.vector_store %arg16[%c192_107, %c0_108], %160 {strides = array<i32>} : memref<288x512xbf16, #tpu.memory_space<vmem>>, vector<32x512xbf16>,
    %162 = vector.extract_strided_slice %122 {offsets = [0, 16], sizes = [32, 496], strides = [1, 1]} : vector<32x512xbf16> to vector<32x496xbf16>
    %163 = vector.extract_strided_slice %122 {offsets = [0, 0], sizes = [32, 16], strides = [1, 1]} : vector<32x512xbf16> to vector<32x16xbf16>
    %164 = tpu.concatenate %162, %163 in 1 : vector<32x496xbf16>, vector<32x16xbf16> -> vector<32x512xbf16>
    %c224_109 = arith.constant 224 : index
    %c0_110 = arith.constant 0 : index
    %165 = vector.load %arg2[%c224_109, %c0_110] : memref<288x512xbf16, #tpu.memory_space<vmem>>, vector<32x512xbf16>
    %166 = arith.mulf %164, %165 : vector<32x512xbf16>
    %c224_111 = arith.constant 224 : index
    %c0_112 = arith.constant 0 : index
    %167 = vector.load %arg16[%c224_111, %c0_112] : memref<288x512xbf16, #tpu.memory_space<vmem>>, vector<32x512xbf16>
    tpu.vector_store %arg16[%c224_111, %c0_112], %166 {strides = array<i32>} : memref<288x512xbf16, #tpu.memory_space<vmem>>, vector<32x512xbf16>,
    %168 = vector.extract_strided_slice %122 {offsets = [0, 17], sizes = [32, 495], strides = [1, 1]} : vector<32x512xbf16> to vector<32x495xbf16>
    %169 = vector.extract_strided_slice %122 {offsets = [0, 0], sizes = [32, 17], strides = [1, 1]} : vector<32x512xbf16> to vector<32x17xbf16>
    %170 = tpu.concatenate %168, %169 in 1 : vector<32x495xbf16>, vector<32x17xbf16> -> vector<32x512xbf16>
    %c256_113 = arith.constant 256 : index
    %c0_114 = arith.constant 0 : index
    %171 = vector.load %arg2[%c256_113, %c0_114] : memref<288x512xbf16, #tpu.memory_space<vmem>>, vector<32x512xbf16>
    %172 = arith.mulf %170, %171 : vector<32x512xbf16>
    %c256_115 = arith.constant 256 : index
    %c0_116 = arith.constant 0 : index
    %173 = vector.load %arg16[%c256_115, %c0_116] : memref<288x512xbf16, #tpu.memory_space<vmem>>, vector<32x512xbf16>
    tpu.vector_store %arg16[%c256_115, %c0_116], %172 {strides = array<i32>} : memref<288x512xbf16, #tpu.memory_space<vmem>>, vector<32x512xbf16>,
    %c0_117 = arith.constant 0 : index
    %c0_118 = arith.constant 0 : index
    %174 = vector.load %arg7[%c0_117, %c0_118] : memref<32x288xbf16, #tpu.memory_space<vmem>>, vector<32x288xbf16>
    %c0_119 = arith.constant 0 : index
    %c0_120 = arith.constant 0 : index
    %175 = vector.load %arg16[%c0_119, %c0_120] : memref<288x512xbf16, #tpu.memory_space<vmem>>, vector<288x512xbf16>
    %cst_121 = arith.constant dense<0.000000e+00> : vector<32x512xf32>
    %176 = tpu.matmul %174, %175, %cst_121 {dimension_numbers = #tpu.dot_dimension_numbers<[1], [0], [0], [1], [0, 0, 1, 1], [], []>} : vector<32x288xbf16>, vector<288x512xbf16>, vector<32x512xf32> -> vector<32x512xf32>
    %c0_122 = arith.constant 0 : index
    %c0_123 = arith.constant 0 : index
    %177 = vector.load %arg8[%c0_122, %c0_123] : memref<32x1xf32, #tpu.memory_space<vmem>>, vector<32x1xf32>
    %178 = vector.broadcast %177 : vector<32x1xf32> to vector<32x512xf32>
    %179 = arith.addf %176, %178 : vector<32x512xf32>
    %180 = arith.subf %1, %179 : vector<32x512xf32>
    %181 = arith.truncf %180 : vector<32x512xf32> to vector<32x512xbf16>
    %182 = vector.extract_strided_slice %181 {offsets = [0, 495], sizes = [32, 17], strides = [1, 1]} : vector<32x512xbf16> to vector<32x17xbf16>
    %183 = vector.extract_strided_slice %181 {offsets = [0, 0], sizes = [32, 495], strides = [1, 1]} : vector<32x512xbf16> to vector<32x495xbf16>
    %184 = tpu.concatenate %182, %183 in 1 : vector<32x17xbf16>, vector<32x495xbf16> -> vector<32x512xbf16>
    %c0_124 = arith.constant 0 : index
    %c0_125 = arith.constant 0 : index
    %185 = vector.load %arg2[%c0_124, %c0_125] : memref<288x512xbf16, #tpu.memory_space<vmem>>, vector<32x512xbf16>
    %186 = arith.mulf %184, %185 : vector<32x512xbf16>
    %c0_126 = arith.constant 0 : index
    %c0_127 = arith.constant 0 : index
    %187 = vector.load %arg16[%c0_126, %c0_127] : memref<288x512xbf16, #tpu.memory_space<vmem>>, vector<32x512xbf16>
    tpu.vector_store %arg16[%c0_126, %c0_127], %186 {strides = array<i32>} : memref<288x512xbf16, #tpu.memory_space<vmem>>, vector<32x512xbf16>,
    %188 = vector.extract_strided_slice %181 {offsets = [0, 496], sizes = [32, 16], strides = [1, 1]} : vector<32x512xbf16> to vector<32x16xbf16>
    %189 = vector.extract_strided_slice %181 {offsets = [0, 0], sizes = [32, 496], strides = [1, 1]} : vector<32x512xbf16> to vector<32x496xbf16>
    %190 = tpu.concatenate %188, %189 in 1 : vector<32x16xbf16>, vector<32x496xbf16> -> vector<32x512xbf16>
    %c32_128 = arith.constant 32 : index
    %c0_129 = arith.constant 0 : index
    %191 = vector.load %arg2[%c32_128, %c0_129] : memref<288x512xbf16, #tpu.memory_space<vmem>>, vector<32x512xbf16>
    %192 = arith.mulf %190, %191 : vector<32x512xbf16>
    %c32_130 = arith.constant 32 : index
    %c0_131 = arith.constant 0 : index
    %193 = vector.load %arg16[%c32_130, %c0_131] : memref<288x512xbf16, #tpu.memory_space<vmem>>, vector<32x512xbf16>
    tpu.vector_store %arg16[%c32_130, %c0_131], %192 {strides = array<i32>} : memref<288x512xbf16, #tpu.memory_space<vmem>>, vector<32x512xbf16>,
    %194 = vector.extract_strided_slice %181 {offsets = [0, 497], sizes = [32, 15], strides = [1, 1]} : vector<32x512xbf16> to vector<32x15xbf16>
    %195 = vector.extract_strided_slice %181 {offsets = [0, 0], sizes = [32, 497], strides = [1, 1]} : vector<32x512xbf16> to vector<32x497xbf16>
    %196 = tpu.concatenate %194, %195 in 1 : vector<32x15xbf16>, vector<32x497xbf16> -> vector<32x512xbf16>
    %c64_132 = arith.constant 64 : index
    %c0_133 = arith.constant 0 : index
    %197 = vector.load %arg2[%c64_132, %c0_133] : memref<288x512xbf16, #tpu.memory_space<vmem>>, vector<32x512xbf16>
    %198 = arith.mulf %196, %197 : vector<32x512xbf16>
    %c64_134 = arith.constant 64 : index
    %c0_135 = arith.constant 0 : index
    %199 = vector.load %arg16[%c64_134, %c0_135] : memref<288x512xbf16, #tpu.memory_space<vmem>>, vector<32x512xbf16>
    tpu.vector_store %arg16[%c64_134, %c0_135], %198 {strides = array<i32>} : memref<288x512xbf16, #tpu.memory_space<vmem>>, vector<32x512xbf16>,
    %200 = vector.extract_strided_slice %181 {offsets = [0, 511], sizes = [32, 1], strides = [1, 1]} : vector<32x512xbf16> to vector<32x1xbf16>
    %201 = vector.extract_strided_slice %181 {offsets = [0, 0], sizes = [32, 511], strides = [1, 1]} : vector<32x512xbf16> to vector<32x511xbf16>
    %202 = tpu.concatenate %200, %201 in 1 : vector<32x1xbf16>, vector<32x511xbf16> -> vector<32x512xbf16>
    %c96_136 = arith.constant 96 : index
    %c0_137 = arith.constant 0 : index
    %203 = vector.load %arg2[%c96_136, %c0_137] : memref<288x512xbf16, #tpu.memory_space<vmem>>, vector<32x512xbf16>
    %204 = arith.mulf %202, %203 : vector<32x512xbf16>
    %c96_138 = arith.constant 96 : index
    %c0_139 = arith.constant 0 : index
    %205 = vector.load %arg16[%c96_138, %c0_139] : memref<288x512xbf16, #tpu.memory_space<vmem>>, vector<32x512xbf16>
    tpu.vector_store %arg16[%c96_138, %c0_139], %204 {strides = array<i32>} : memref<288x512xbf16, #tpu.memory_space<vmem>>, vector<32x512xbf16>,
    %c128_140 = arith.constant 128 : index
    %c0_141 = arith.constant 0 : index
    %206 = vector.load %arg2[%c128_140, %c0_141] : memref<288x512xbf16, #tpu.memory_space<vmem>>, vector<32x512xbf16>
    %207 = arith.mulf %181, %206 : vector<32x512xbf16>
    %c128_142 = arith.constant 128 : index
    %c0_143 = arith.constant 0 : index
    %208 = vector.load %arg16[%c128_142, %c0_143] : memref<288x512xbf16, #tpu.memory_space<vmem>>, vector<32x512xbf16>
    tpu.vector_store %arg16[%c128_142, %c0_143], %207 {strides = array<i32>} : memref<288x512xbf16, #tpu.memory_space<vmem>>, vector<32x512xbf16>,
    %209 = vector.extract_strided_slice %181 {offsets = [0, 1], sizes = [32, 511], strides = [1, 1]} : vector<32x512xbf16> to vector<32x511xbf16>
    %210 = vector.extract_strided_slice %181 {offsets = [0, 0], sizes = [32, 1], strides = [1, 1]} : vector<32x512xbf16> to vector<32x1xbf16>
    %211 = tpu.concatenate %209, %210 in 1 : vector<32x511xbf16>, vector<32x1xbf16> -> vector<32x512xbf16>
    %c160_144 = arith.constant 160 : index
    %c0_145 = arith.constant 0 : index
    %212 = vector.load %arg2[%c160_144, %c0_145] : memref<288x512xbf16, #tpu.memory_space<vmem>>, vector<32x512xbf16>
    %213 = arith.mulf %211, %212 : vector<32x512xbf16>
    %c160_146 = arith.constant 160 : index
    %c0_147 = arith.constant 0 : index
    %214 = vector.load %arg16[%c160_146, %c0_147] : memref<288x512xbf16, #tpu.memory_space<vmem>>, vector<32x512xbf16>
    tpu.vector_store %arg16[%c160_146, %c0_147], %213 {strides = array<i32>} : memref<288x512xbf16, #tpu.memory_space<vmem>>, vector<32x512xbf16>,
    %215 = vector.extract_strided_slice %181 {offsets = [0, 15], sizes = [32, 497], strides = [1, 1]} : vector<32x512xbf16> to vector<32x497xbf16>
    %216 = vector.extract_strided_slice %181 {offsets = [0, 0], sizes = [32, 15], strides = [1, 1]} : vector<32x512xbf16> to vector<32x15xbf16>
    %217 = tpu.concatenate %215, %216 in 1 : vector<32x497xbf16>, vector<32x15xbf16> -> vector<32x512xbf16>
    %c192_148 = arith.constant 192 : index
    %c0_149 = arith.constant 0 : index
    %218 = vector.load %arg2[%c192_148, %c0_149] : memref<288x512xbf16, #tpu.memory_space<vmem>>, vector<32x512xbf16>
    %219 = arith.mulf %217, %218 : vector<32x512xbf16>
    %c192_150 = arith.constant 192 : index
    %c0_151 = arith.constant 0 : index
    %220 = vector.load %arg16[%c192_150, %c0_151] : memref<288x512xbf16, #tpu.memory_space<vmem>>, vector<32x512xbf16>
    tpu.vector_store %arg16[%c192_150, %c0_151], %219 {strides = array<i32>} : memref<288x512xbf16, #tpu.memory_space<vmem>>, vector<32x512xbf16>,
    %221 = vector.extract_strided_slice %181 {offsets = [0, 16], sizes = [32, 496], strides = [1, 1]} : vector<32x512xbf16> to vector<32x496xbf16>
    %222 = vector.extract_strided_slice %181 {offsets = [0, 0], sizes = [32, 16], strides = [1, 1]} : vector<32x512xbf16> to vector<32x16xbf16>
    %223 = tpu.concatenate %221, %222 in 1 : vector<32x496xbf16>, vector<32x16xbf16> -> vector<32x512xbf16>
    %c224_152 = arith.constant 224 : index
    %c0_153 = arith.constant 0 : index
    %224 = vector.load %arg2[%c224_152, %c0_153] : memref<288x512xbf16, #tpu.memory_space<vmem>>, vector<32x512xbf16>
    %225 = arith.mulf %223, %224 : vector<32x512xbf16>
    %c224_154 = arith.constant 224 : index
    %c0_155 = arith.constant 0 : index
    %226 = vector.load %arg16[%c224_154, %c0_155] : memref<288x512xbf16, #tpu.memory_space<vmem>>, vector<32x512xbf16>
    tpu.vector_store %arg16[%c224_154, %c0_155], %225 {strides = array<i32>} : memref<288x512xbf16, #tpu.memory_space<vmem>>, vector<32x512xbf16>,
    %227 = vector.extract_strided_slice %181 {offsets = [0, 17], sizes = [32, 495], strides = [1, 1]} : vector<32x512xbf16> to vector<32x495xbf16>
    %228 = vector.extract_strided_slice %181 {offsets = [0, 0], sizes = [32, 17], strides = [1, 1]} : vector<32x512xbf16> to vector<32x17xbf16>
    %229 = tpu.concatenate %227, %228 in 1 : vector<32x495xbf16>, vector<32x17xbf16> -> vector<32x512xbf16>
    %c256_156 = arith.constant 256 : index
    %c0_157 = arith.constant 0 : index
    %230 = vector.load %arg2[%c256_156, %c0_157] : memref<288x512xbf16, #tpu.memory_space<vmem>>, vector<32x512xbf16>
    %231 = arith.mulf %229, %230 : vector<32x512xbf16>
    %c256_158 = arith.constant 256 : index
    %c0_159 = arith.constant 0 : index
    %232 = vector.load %arg16[%c256_158, %c0_159] : memref<288x512xbf16, #tpu.memory_space<vmem>>, vector<32x512xbf16>
    tpu.vector_store %arg16[%c256_158, %c0_159], %231 {strides = array<i32>} : memref<288x512xbf16, #tpu.memory_space<vmem>>, vector<32x512xbf16>,
    %c0_160 = arith.constant 0 : index
    %c0_161 = arith.constant 0 : index
    %233 = vector.load %arg9[%c0_160, %c0_161] : memref<32x288xbf16, #tpu.memory_space<vmem>>, vector<32x288xbf16>
    %c0_162 = arith.constant 0 : index
    %c0_163 = arith.constant 0 : index
    %234 = vector.load %arg16[%c0_162, %c0_163] : memref<288x512xbf16, #tpu.memory_space<vmem>>, vector<288x512xbf16>
    %cst_164 = arith.constant dense<0.000000e+00> : vector<32x512xf32>
    %235 = tpu.matmul %233, %234, %cst_164 {dimension_numbers = #tpu.dot_dimension_numbers<[1], [0], [0], [1], [0, 0, 1, 1], [], []>} : vector<32x288xbf16>, vector<288x512xbf16>, vector<32x512xf32> -> vector<32x512xf32>
    %c0_165 = arith.constant 0 : index
    %c0_166 = arith.constant 0 : index
    %236 = vector.load %arg10[%c0_165, %c0_166] : memref<32x1xf32, #tpu.memory_space<vmem>>, vector<32x1xf32>
    %237 = vector.broadcast %236 : vector<32x1xf32> to vector<32x512xf32>
    %238 = arith.addf %235, %237 : vector<32x512xf32>
    %cst_167 = arith.constant 0.000000e+00 : f32
    %239 = vector.broadcast %cst_167 : f32 to vector<32x512xf32>
    %240 = arith.maximumf %238, %239 : vector<32x512xf32>
    %241 = arith.truncf %240 : vector<32x512xf32> to vector<32x512xbf16>
    %242 = vector.extract_strided_slice %241 {offsets = [0, 495], sizes = [32, 17], strides = [1, 1]} : vector<32x512xbf16> to vector<32x17xbf16>
    %243 = vector.extract_strided_slice %241 {offsets = [0, 0], sizes = [32, 495], strides = [1, 1]} : vector<32x512xbf16> to vector<32x495xbf16>
    %244 = tpu.concatenate %242, %243 in 1 : vector<32x17xbf16>, vector<32x495xbf16> -> vector<32x512xbf16>
    %c0_168 = arith.constant 0 : index
    %c0_169 = arith.constant 0 : index
    %245 = vector.load %arg2[%c0_168, %c0_169] : memref<288x512xbf16, #tpu.memory_space<vmem>>, vector<32x512xbf16>
    %246 = arith.mulf %244, %245 : vector<32x512xbf16>
    %c0_170 = arith.constant 0 : index
    %c0_171 = arith.constant 0 : index
    %247 = vector.load %arg16[%c0_170, %c0_171] : memref<288x512xbf16, #tpu.memory_space<vmem>>, vector<32x512xbf16>
    tpu.vector_store %arg16[%c0_170, %c0_171], %246 {strides = array<i32>} : memref<288x512xbf16, #tpu.memory_space<vmem>>, vector<32x512xbf16>,
    %248 = vector.extract_strided_slice %241 {offsets = [0, 496], sizes = [32, 16], strides = [1, 1]} : vector<32x512xbf16> to vector<32x16xbf16>
    %249 = vector.extract_strided_slice %241 {offsets = [0, 0], sizes = [32, 496], strides = [1, 1]} : vector<32x512xbf16> to vector<32x496xbf16>
    %250 = tpu.concatenate %248, %249 in 1 : vector<32x16xbf16>, vector<32x496xbf16> -> vector<32x512xbf16>
    %c32_172 = arith.constant 32 : index
    %c0_173 = arith.constant 0 : index
    %251 = vector.load %arg2[%c32_172, %c0_173] : memref<288x512xbf16, #tpu.memory_space<vmem>>, vector<32x512xbf16>
    %252 = arith.mulf %250, %251 : vector<32x512xbf16>
    %c32_174 = arith.constant 32 : index
    %c0_175 = arith.constant 0 : index
    %253 = vector.load %arg16[%c32_174, %c0_175] : memref<288x512xbf16, #tpu.memory_space<vmem>>, vector<32x512xbf16>
    tpu.vector_store %arg16[%c32_174, %c0_175], %252 {strides = array<i32>} : memref<288x512xbf16, #tpu.memory_space<vmem>>, vector<32x512xbf16>,
    %254 = vector.extract_strided_slice %241 {offsets = [0, 497], sizes = [32, 15], strides = [1, 1]} : vector<32x512xbf16> to vector<32x15xbf16>
    %255 = vector.extract_strided_slice %241 {offsets = [0, 0], sizes = [32, 497], strides = [1, 1]} : vector<32x512xbf16> to vector<32x497xbf16>
    %256 = tpu.concatenate %254, %255 in 1 : vector<32x15xbf16>, vector<32x497xbf16> -> vector<32x512xbf16>
    %c64_176 = arith.constant 64 : index
    %c0_177 = arith.constant 0 : index
    %257 = vector.load %arg2[%c64_176, %c0_177] : memref<288x512xbf16, #tpu.memory_space<vmem>>, vector<32x512xbf16>
    %258 = arith.mulf %256, %257 : vector<32x512xbf16>
    %c64_178 = arith.constant 64 : index
    %c0_179 = arith.constant 0 : index
    %259 = vector.load %arg16[%c64_178, %c0_179] : memref<288x512xbf16, #tpu.memory_space<vmem>>, vector<32x512xbf16>
    tpu.vector_store %arg16[%c64_178, %c0_179], %258 {strides = array<i32>} : memref<288x512xbf16, #tpu.memory_space<vmem>>, vector<32x512xbf16>,
    %260 = vector.extract_strided_slice %241 {offsets = [0, 511], sizes = [32, 1], strides = [1, 1]} : vector<32x512xbf16> to vector<32x1xbf16>
    %261 = vector.extract_strided_slice %241 {offsets = [0, 0], sizes = [32, 511], strides = [1, 1]} : vector<32x512xbf16> to vector<32x511xbf16>
    %262 = tpu.concatenate %260, %261 in 1 : vector<32x1xbf16>, vector<32x511xbf16> -> vector<32x512xbf16>
    %c96_180 = arith.constant 96 : index
    %c0_181 = arith.constant 0 : index
    %263 = vector.load %arg2[%c96_180, %c0_181] : memref<288x512xbf16, #tpu.memory_space<vmem>>, vector<32x512xbf16>
    %264 = arith.mulf %262, %263 : vector<32x512xbf16>
    %c96_182 = arith.constant 96 : index
    %c0_183 = arith.constant 0 : index
    %265 = vector.load %arg16[%c96_182, %c0_183] : memref<288x512xbf16, #tpu.memory_space<vmem>>, vector<32x512xbf16>
    tpu.vector_store %arg16[%c96_182, %c0_183], %264 {strides = array<i32>} : memref<288x512xbf16, #tpu.memory_space<vmem>>, vector<32x512xbf16>,
    %c128_184 = arith.constant 128 : index
    %c0_185 = arith.constant 0 : index
    %266 = vector.load %arg2[%c128_184, %c0_185] : memref<288x512xbf16, #tpu.memory_space<vmem>>, vector<32x512xbf16>
    %267 = arith.mulf %241, %266 : vector<32x512xbf16>
    %c128_186 = arith.constant 128 : index
    %c0_187 = arith.constant 0 : index
    %268 = vector.load %arg16[%c128_186, %c0_187] : memref<288x512xbf16, #tpu.memory_space<vmem>>, vector<32x512xbf16>
    tpu.vector_store %arg16[%c128_186, %c0_187], %267 {strides = array<i32>} : memref<288x512xbf16, #tpu.memory_space<vmem>>, vector<32x512xbf16>,
    %269 = vector.extract_strided_slice %241 {offsets = [0, 1], sizes = [32, 511], strides = [1, 1]} : vector<32x512xbf16> to vector<32x511xbf16>
    %270 = vector.extract_strided_slice %241 {offsets = [0, 0], sizes = [32, 1], strides = [1, 1]} : vector<32x512xbf16> to vector<32x1xbf16>
    %271 = tpu.concatenate %269, %270 in 1 : vector<32x511xbf16>, vector<32x1xbf16> -> vector<32x512xbf16>
    %c160_188 = arith.constant 160 : index
    %c0_189 = arith.constant 0 : index
    %272 = vector.load %arg2[%c160_188, %c0_189] : memref<288x512xbf16, #tpu.memory_space<vmem>>, vector<32x512xbf16>
    %273 = arith.mulf %271, %272 : vector<32x512xbf16>
    %c160_190 = arith.constant 160 : index
    %c0_191 = arith.constant 0 : index
    %274 = vector.load %arg16[%c160_190, %c0_191] : memref<288x512xbf16, #tpu.memory_space<vmem>>, vector<32x512xbf16>
    tpu.vector_store %arg16[%c160_190, %c0_191], %273 {strides = array<i32>} : memref<288x512xbf16, #tpu.memory_space<vmem>>, vector<32x512xbf16>,
    %275 = vector.extract_strided_slice %241 {offsets = [0, 15], sizes = [32, 497], strides = [1, 1]} : vector<32x512xbf16> to vector<32x497xbf16>
    %276 = vector.extract_strided_slice %241 {offsets = [0, 0], sizes = [32, 15], strides = [1, 1]} : vector<32x512xbf16> to vector<32x15xbf16>
    %277 = tpu.concatenate %275, %276 in 1 : vector<32x497xbf16>, vector<32x15xbf16> -> vector<32x512xbf16>
    %c192_192 = arith.constant 192 : index
    %c0_193 = arith.constant 0 : index
    %278 = vector.load %arg2[%c192_192, %c0_193] : memref<288x512xbf16, #tpu.memory_space<vmem>>, vector<32x512xbf16>
    %279 = arith.mulf %277, %278 : vector<32x512xbf16>
    %c192_194 = arith.constant 192 : index
    %c0_195 = arith.constant 0 : index
    %280 = vector.load %arg16[%c192_194, %c0_195] : memref<288x512xbf16, #tpu.memory_space<vmem>>, vector<32x512xbf16>
    tpu.vector_store %arg16[%c192_194, %c0_195], %279 {strides = array<i32>} : memref<288x512xbf16, #tpu.memory_space<vmem>>, vector<32x512xbf16>,
    %281 = vector.extract_strided_slice %241 {offsets = [0, 16], sizes = [32, 496], strides = [1, 1]} : vector<32x512xbf16> to vector<32x496xbf16>
    %282 = vector.extract_strided_slice %241 {offsets = [0, 0], sizes = [32, 16], strides = [1, 1]} : vector<32x512xbf16> to vector<32x16xbf16>
    %283 = tpu.concatenate %281, %282 in 1 : vector<32x496xbf16>, vector<32x16xbf16> -> vector<32x512xbf16>
    %c224_196 = arith.constant 224 : index
    %c0_197 = arith.constant 0 : index
    %284 = vector.load %arg2[%c224_196, %c0_197] : memref<288x512xbf16, #tpu.memory_space<vmem>>, vector<32x512xbf16>
    %285 = arith.mulf %283, %284 : vector<32x512xbf16>
    %c224_198 = arith.constant 224 : index
    %c0_199 = arith.constant 0 : index
    %286 = vector.load %arg16[%c224_198, %c0_199] : memref<288x512xbf16, #tpu.memory_space<vmem>>, vector<32x512xbf16>
    tpu.vector_store %arg16[%c224_198, %c0_199], %285 {strides = array<i32>} : memref<288x512xbf16, #tpu.memory_space<vmem>>, vector<32x512xbf16>,
    %287 = vector.extract_strided_slice %241 {offsets = [0, 17], sizes = [32, 495], strides = [1, 1]} : vector<32x512xbf16> to vector<32x495xbf16>
    %288 = vector.extract_strided_slice %241 {offsets = [0, 0], sizes = [32, 17], strides = [1, 1]} : vector<32x512xbf16> to vector<32x17xbf16>
    %289 = tpu.concatenate %287, %288 in 1 : vector<32x495xbf16>, vector<32x17xbf16> -> vector<32x512xbf16>
    %c256_200 = arith.constant 256 : index
    %c0_201 = arith.constant 0 : index
    %290 = vector.load %arg2[%c256_200, %c0_201] : memref<288x512xbf16, #tpu.memory_space<vmem>>, vector<32x512xbf16>
    %291 = arith.mulf %289, %290 : vector<32x512xbf16>
    %c256_202 = arith.constant 256 : index
    %c0_203 = arith.constant 0 : index
    %292 = vector.load %arg16[%c256_202, %c0_203] : memref<288x512xbf16, #tpu.memory_space<vmem>>, vector<32x512xbf16>
    tpu.vector_store %arg16[%c256_202, %c0_203], %291 {strides = array<i32>} : memref<288x512xbf16, #tpu.memory_space<vmem>>, vector<32x512xbf16>,
    %c0_204 = arith.constant 0 : index
    %c0_205 = arith.constant 0 : index
    %293 = vector.load %arg11[%c0_204, %c0_205] : memref<32x288xbf16, #tpu.memory_space<vmem>>, vector<32x288xbf16>
    %c0_206 = arith.constant 0 : index
    %c0_207 = arith.constant 0 : index
    %294 = vector.load %arg16[%c0_206, %c0_207] : memref<288x512xbf16, #tpu.memory_space<vmem>>, vector<288x512xbf16>
    %cst_208 = arith.constant dense<0.000000e+00> : vector<32x512xf32>
    %295 = tpu.matmul %293, %294, %cst_208 {dimension_numbers = #tpu.dot_dimension_numbers<[1], [0], [0], [1], [0, 0, 1, 1], [], []>} : vector<32x288xbf16>, vector<288x512xbf16>, vector<32x512xf32> -> vector<32x512xf32>
    %c0_209 = arith.constant 0 : index
    %c0_210 = arith.constant 0 : index
    %296 = vector.load %arg12[%c0_209, %c0_210] : memref<32x1xf32, #tpu.memory_space<vmem>>, vector<32x1xf32>
    %297 = vector.broadcast %296 : vector<32x1xf32> to vector<32x512xf32>
    %298 = arith.addf %295, %297 : vector<32x512xf32>
    %cst_211 = arith.constant 0.000000e+00 : f32
    %299 = vector.broadcast %cst_211 : f32 to vector<32x512xf32>
    %300 = arith.maximumf %298, %299 : vector<32x512xf32>
    %301 = arith.truncf %300 : vector<32x512xf32> to vector<32x512xbf16>
    %302 = vector.extract_strided_slice %301 {offsets = [0, 495], sizes = [32, 17], strides = [1, 1]} : vector<32x512xbf16> to vector<32x17xbf16>
    %303 = vector.extract_strided_slice %301 {offsets = [0, 0], sizes = [32, 495], strides = [1, 1]} : vector<32x512xbf16> to vector<32x495xbf16>
    %304 = tpu.concatenate %302, %303 in 1 : vector<32x17xbf16>, vector<32x495xbf16> -> vector<32x512xbf16>
    %c0_212 = arith.constant 0 : index
    %c0_213 = arith.constant 0 : index
    %305 = vector.load %arg2[%c0_212, %c0_213] : memref<288x512xbf16, #tpu.memory_space<vmem>>, vector<32x512xbf16>
    %306 = arith.mulf %304, %305 : vector<32x512xbf16>
    %c0_214 = arith.constant 0 : index
    %c0_215 = arith.constant 0 : index
    %307 = vector.load %arg16[%c0_214, %c0_215] : memref<288x512xbf16, #tpu.memory_space<vmem>>, vector<32x512xbf16>
    tpu.vector_store %arg16[%c0_214, %c0_215], %306 {strides = array<i32>} : memref<288x512xbf16, #tpu.memory_space<vmem>>, vector<32x512xbf16>,
    %308 = vector.extract_strided_slice %301 {offsets = [0, 496], sizes = [32, 16], strides = [1, 1]} : vector<32x512xbf16> to vector<32x16xbf16>
    %309 = vector.extract_strided_slice %301 {offsets = [0, 0], sizes = [32, 496], strides = [1, 1]} : vector<32x512xbf16> to vector<32x496xbf16>
    %310 = tpu.concatenate %308, %309 in 1 : vector<32x16xbf16>, vector<32x496xbf16> -> vector<32x512xbf16>
    %c32_216 = arith.constant 32 : index
    %c0_217 = arith.constant 0 : index
    %311 = vector.load %arg2[%c32_216, %c0_217] : memref<288x512xbf16, #tpu.memory_space<vmem>>, vector<32x512xbf16>
    %312 = arith.mulf %310, %311 : vector<32x512xbf16>
    %c32_218 = arith.constant 32 : index
    %c0_219 = arith.constant 0 : index
    %313 = vector.load %arg16[%c32_218, %c0_219] : memref<288x512xbf16, #tpu.memory_space<vmem>>, vector<32x512xbf16>
    tpu.vector_store %arg16[%c32_218, %c0_219], %312 {strides = array<i32>} : memref<288x512xbf16, #tpu.memory_space<vmem>>, vector<32x512xbf16>,
    %314 = vector.extract_strided_slice %301 {offsets = [0, 497], sizes = [32, 15], strides = [1, 1]} : vector<32x512xbf16> to vector<32x15xbf16>
    %315 = vector.extract_strided_slice %301 {offsets = [0, 0], sizes = [32, 497], strides = [1, 1]} : vector<32x512xbf16> to vector<32x497xbf16>
    %316 = tpu.concatenate %314, %315 in 1 : vector<32x15xbf16>, vector<32x497xbf16> -> vector<32x512xbf16>
    %c64_220 = arith.constant 64 : index
    %c0_221 = arith.constant 0 : index
    %317 = vector.load %arg2[%c64_220, %c0_221] : memref<288x512xbf16, #tpu.memory_space<vmem>>, vector<32x512xbf16>
    %318 = arith.mulf %316, %317 : vector<32x512xbf16>
    %c64_222 = arith.constant 64 : index
    %c0_223 = arith.constant 0 : index
    %319 = vector.load %arg16[%c64_222, %c0_223] : memref<288x512xbf16, #tpu.memory_space<vmem>>, vector<32x512xbf16>
    tpu.vector_store %arg16[%c64_222, %c0_223], %318 {strides = array<i32>} : memref<288x512xbf16, #tpu.memory_space<vmem>>, vector<32x512xbf16>,
    %320 = vector.extract_strided_slice %301 {offsets = [0, 511], sizes = [32, 1], strides = [1, 1]} : vector<32x512xbf16> to vector<32x1xbf16>
    %321 = vector.extract_strided_slice %301 {offsets = [0, 0], sizes = [32, 511], strides = [1, 1]} : vector<32x512xbf16> to vector<32x511xbf16>
    %322 = tpu.concatenate %320, %321 in 1 : vector<32x1xbf16>, vector<32x511xbf16> -> vector<32x512xbf16>
    %c96_224 = arith.constant 96 : index
    %c0_225 = arith.constant 0 : index
    %323 = vector.load %arg2[%c96_224, %c0_225] : memref<288x512xbf16, #tpu.memory_space<vmem>>, vector<32x512xbf16>
    %324 = arith.mulf %322, %323 : vector<32x512xbf16>
    %c96_226 = arith.constant 96 : index
    %c0_227 = arith.constant 0 : index
    %325 = vector.load %arg16[%c96_226, %c0_227] : memref<288x512xbf16, #tpu.memory_space<vmem>>, vector<32x512xbf16>
    tpu.vector_store %arg16[%c96_226, %c0_227], %324 {strides = array<i32>} : memref<288x512xbf16, #tpu.memory_space<vmem>>, vector<32x512xbf16>,
    %c128_228 = arith.constant 128 : index
    %c0_229 = arith.constant 0 : index
    %326 = vector.load %arg2[%c128_228, %c0_229] : memref<288x512xbf16, #tpu.memory_space<vmem>>, vector<32x512xbf16>
    %327 = arith.mulf %301, %326 : vector<32x512xbf16>
    %c128_230 = arith.constant 128 : index
    %c0_231 = arith.constant 0 : index
    %328 = vector.load %arg16[%c128_230, %c0_231] : memref<288x512xbf16, #tpu.memory_space<vmem>>, vector<32x512xbf16>
    tpu.vector_store %arg16[%c128_230, %c0_231], %327 {strides = array<i32>} : memref<288x512xbf16, #tpu.memory_space<vmem>>, vector<32x512xbf16>,
    %329 = vector.extract_strided_slice %301 {offsets = [0, 1], sizes = [32, 511], strides = [1, 1]} : vector<32x512xbf16> to vector<32x511xbf16>
    %330 = vector.extract_strided_slice %301 {offsets = [0, 0], sizes = [32, 1], strides = [1, 1]} : vector<32x512xbf16> to vector<32x1xbf16>
    %331 = tpu.concatenate %329, %330 in 1 : vector<32x511xbf16>, vector<32x1xbf16> -> vector<32x512xbf16>
    %c160_232 = arith.constant 160 : index
    %c0_233 = arith.constant 0 : index
    %332 = vector.load %arg2[%c160_232, %c0_233] : memref<288x512xbf16, #tpu.memory_space<vmem>>, vector<32x512xbf16>
    %333 = arith.mulf %331, %332 : vector<32x512xbf16>
    %c160_234 = arith.constant 160 : index
    %c0_235 = arith.constant 0 : index
    %334 = vector.load %arg16[%c160_234, %c0_235] : memref<288x512xbf16, #tpu.memory_space<vmem>>, vector<32x512xbf16>
    tpu.vector_store %arg16[%c160_234, %c0_235], %333 {strides = array<i32>} : memref<288x512xbf16, #tpu.memory_space<vmem>>, vector<32x512xbf16>,
    %335 = vector.extract_strided_slice %301 {offsets = [0, 15], sizes = [32, 497], strides = [1, 1]} : vector<32x512xbf16> to vector<32x497xbf16>
    %336 = vector.extract_strided_slice %301 {offsets = [0, 0], sizes = [32, 15], strides = [1, 1]} : vector<32x512xbf16> to vector<32x15xbf16>
    %337 = tpu.concatenate %335, %336 in 1 : vector<32x497xbf16>, vector<32x15xbf16> -> vector<32x512xbf16>
    %c192_236 = arith.constant 192 : index
    %c0_237 = arith.constant 0 : index
    %338 = vector.load %arg2[%c192_236, %c0_237] : memref<288x512xbf16, #tpu.memory_space<vmem>>, vector<32x512xbf16>
    %339 = arith.mulf %337, %338 : vector<32x512xbf16>
    %c192_238 = arith.constant 192 : index
    %c0_239 = arith.constant 0 : index
    %340 = vector.load %arg16[%c192_238, %c0_239] : memref<288x512xbf16, #tpu.memory_space<vmem>>, vector<32x512xbf16>
    tpu.vector_store %arg16[%c192_238, %c0_239], %339 {strides = array<i32>} : memref<288x512xbf16, #tpu.memory_space<vmem>>, vector<32x512xbf16>,
    %341 = vector.extract_strided_slice %301 {offsets = [0, 16], sizes = [32, 496], strides = [1, 1]} : vector<32x512xbf16> to vector<32x496xbf16>
    %342 = vector.extract_strided_slice %301 {offsets = [0, 0], sizes = [32, 16], strides = [1, 1]} : vector<32x512xbf16> to vector<32x16xbf16>
    %343 = tpu.concatenate %341, %342 in 1 : vector<32x496xbf16>, vector<32x16xbf16> -> vector<32x512xbf16>
    %c224_240 = arith.constant 224 : index
    %c0_241 = arith.constant 0 : index
    %344 = vector.load %arg2[%c224_240, %c0_241] : memref<288x512xbf16, #tpu.memory_space<vmem>>, vector<32x512xbf16>
    %345 = arith.mulf %343, %344 : vector<32x512xbf16>
    %c224_242 = arith.constant 224 : index
    %c0_243 = arith.constant 0 : index
    %346 = vector.load %arg16[%c224_242, %c0_243] : memref<288x512xbf16, #tpu.memory_space<vmem>>, vector<32x512xbf16>
    tpu.vector_store %arg16[%c224_242, %c0_243], %345 {strides = array<i32>} : memref<288x512xbf16, #tpu.memory_space<vmem>>, vector<32x512xbf16>,
    %347 = vector.extract_strided_slice %301 {offsets = [0, 17], sizes = [32, 495], strides = [1, 1]} : vector<32x512xbf16> to vector<32x495xbf16>
    %348 = vector.extract_strided_slice %301 {offsets = [0, 0], sizes = [32, 17], strides = [1, 1]} : vector<32x512xbf16> to vector<32x17xbf16>
    %349 = tpu.concatenate %347, %348 in 1 : vector<32x495xbf16>, vector<32x17xbf16> -> vector<32x512xbf16>
    %c256_244 = arith.constant 256 : index
    %c0_245 = arith.constant 0 : index
    %350 = vector.load %arg2[%c256_244, %c0_245] : memref<288x512xbf16, #tpu.memory_space<vmem>>, vector<32x512xbf16>
    %351 = arith.mulf %349, %350 : vector<32x512xbf16>
    %c256_246 = arith.constant 256 : index
    %c0_247 = arith.constant 0 : index
    %352 = vector.load %arg16[%c256_246, %c0_247] : memref<288x512xbf16, #tpu.memory_space<vmem>>, vector<32x512xbf16>
    tpu.vector_store %arg16[%c256_246, %c0_247], %351 {strides = array<i32>} : memref<288x512xbf16, #tpu.memory_space<vmem>>, vector<32x512xbf16>,
    %c0_248 = arith.constant 0 : index
    %c0_249 = arith.constant 0 : index
    %353 = vector.load %arg13[%c0_248, %c0_249] : memref<32x288xbf16, #tpu.memory_space<vmem>>, vector<32x288xbf16>
    %c0_250 = arith.constant 0 : index
    %c0_251 = arith.constant 0 : index
    %354 = vector.load %arg16[%c0_250, %c0_251] : memref<288x512xbf16, #tpu.memory_space<vmem>>, vector<288x512xbf16>
    %cst_252 = arith.constant dense<0.000000e+00> : vector<32x512xf32>
    %355 = tpu.matmul %353, %354, %cst_252 {dimension_numbers = #tpu.dot_dimension_numbers<[1], [0], [0], [1], [0, 0, 1, 1], [], []>} : vector<32x288xbf16>, vector<288x512xbf16>, vector<32x512xf32> -> vector<32x512xf32>
    %c0_253 = arith.constant 0 : index
    %c0_254 = arith.constant 0 : index
    %356 = vector.load %arg14[%c0_253, %c0_254] : memref<32x1xf32, #tpu.memory_space<vmem>>, vector<32x1xf32>
    %357 = vector.broadcast %356 : vector<32x1xf32> to vector<32x512xf32>
    %358 = arith.addf %355, %357 : vector<32x512xf32>
    %359 = arith.subf %180, %358 : vector<32x512xf32>
    %c0_255 = arith.constant 0 : index
    %c0_256 = arith.constant 0 : index
    %c0_257 = arith.constant 0 : index
    %360 = vector.load %arg15[%c0_255, %c0_256, %c0_257] : memref<1x32x512xf32, #tpu.memory_space<vmem>>, vector<1x32x512xf32>
    %361 = vector.shape_cast %360 : vector<1x32x512xf32> to vector<32x512xf32>
    %362 = vector.shape_cast %359 : vector<32x512xf32> to vector<1x32x512xf32>
    tpu.vector_store %arg15[%c0_255, %c0_256, %c0_257], %362 {strides = array<i32>} : memref<1x32x512xf32, #tpu.memory_space<vmem>>, vector<1x32x512xf32>,
    return
  }
  func.func @transform_0(%arg0: i32) -> (i32, i32, i32) {
    %c0_i32 = arith.constant 0 : i32
    %c0_i32_0 = arith.constant 0 : i32
    %c0_i32_1 = arith.constant 0 : i32
    return %arg0, %c0_i32, %c0_i32_0 : i32, i32, i32
  }
  func.func @transform_1(%arg0: i32) -> (i32, i32) {
    %c0_i32 = arith.constant 0 : i32
    %c0_i32_0 = arith.constant 0 : i32
    %c0_i32_1 = arith.constant 0 : i32
    return %c0_i32, %c0_i32_0 : i32, i32
  }
  func.func @transform_2(%arg0: i32) -> (i32, i32) {
    %c0_i32 = arith.constant 0 : i32
    %c0_i32_0 = arith.constant 0 : i32
    %c0_i32_1 = arith.constant 0 : i32
    return %c0_i32, %c0_i32_0 : i32, i32
  }
  func.func @transform_3(%arg0: i32) -> (i32, i32) {
    %c0_i32 = arith.constant 0 : i32
    %c0_i32_0 = arith.constant 0 : i32
    %c0_i32_1 = arith.constant 0 : i32
    return %c0_i32, %c0_i32_0 : i32, i32
  }
  func.func @transform_4(%arg0: i32) -> (i32, i32) {
    %c0_i32 = arith.constant 0 : i32
    %c0_i32_0 = arith.constant 0 : i32
    %c0_i32_1 = arith.constant 0 : i32
    return %c0_i32, %c0_i32_0 : i32, i32
  }
  func.func @transform_5(%arg0: i32) -> (i32, i32) {
    %c0_i32 = arith.constant 0 : i32
    %c0_i32_0 = arith.constant 0 : i32
    %c0_i32_1 = arith.constant 0 : i32
    return %c0_i32, %c0_i32_0 : i32, i32
  }
  func.func @transform_6(%arg0: i32) -> (i32, i32) {
    %c0_i32 = arith.constant 0 : i32
    %c0_i32_0 = arith.constant 0 : i32
    %c0_i32_1 = arith.constant 0 : i32
    return %c0_i32, %c0_i32_0 : i32, i32
  }
  func.func @transform_7(%arg0: i32) -> (i32, i32) {
    %c0_i32 = arith.constant 0 : i32
    %c0_i32_0 = arith.constant 0 : i32
    %c0_i32_1 = arith.constant 0 : i32
    return %c0_i32, %c0_i32_0 : i32, i32
  }
  func.func @transform_8(%arg0: i32) -> (i32, i32) {
    %c0_i32 = arith.constant 0 : i32
    %c0_i32_0 = arith.constant 0 : i32
    %c0_i32_1 = arith.constant 0 : i32
    return %c0_i32, %c0_i32_0 : i32, i32
  }
  func.func @transform_9(%arg0: i32) -> (i32, i32) {
    %c0_i32 = arith.constant 0 : i32
    %c0_i32_0 = arith.constant 0 : i32
    %c0_i32_1 = arith.constant 0 : i32
    return %c0_i32, %c0_i32_0 : i32, i32
  }
  func.func @transform_10(%arg0: i32) -> (i32, i32) {
    %c0_i32 = arith.constant 0 : i32
    %c0_i32_0 = arith.constant 0 : i32
    %c0_i32_1 = arith.constant 0 : i32
    return %c0_i32, %c0_i32_0 : i32, i32
  }
  func.func @transform_11(%arg0: i32) -> (i32, i32) {
    %c0_i32 = arith.constant 0 : i32
    %c0_i32_0 = arith.constant 0 : i32
    %c0_i32_1 = arith.constant 0 : i32
    return %c0_i32, %c0_i32_0 : i32, i32
  }
  func.func @transform_12(%arg0: i32) -> (i32, i32) {
    %c0_i32 = arith.constant 0 : i32
    %c0_i32_0 = arith.constant 0 : i32
    %c0_i32_1 = arith.constant 0 : i32
    return %c0_i32, %c0_i32_0 : i32, i32
  }
  func.func @transform_13(%arg0: i32) -> (i32, i32) {
    %c0_i32 = arith.constant 0 : i32
    %c0_i32_0 = arith.constant 0 : i32
    %c0_i32_1 = arith.constant 0 : i32
    return %c0_i32, %c0_i32_0 : i32, i32
  }
  func.func @transform_14(%arg0: i32) -> (i32, i32, i32) {
    %c0_i32 = arith.constant 0 : i32
    %c0_i32_0 = arith.constant 0 : i32
    %c0_i32_1 = arith.constant 0 : i32
    return %arg0, %c0_i32, %c0_i32_0 : i32, i32, i32
  }
}

</mosaic_0001>

<llo_original>
// kernel: tpu_custom_call.1
$region0: #{tpu_custom_call.1}
  #allocation0 [shape = 'u32[]', space=smem, size = 0x4, offset = 0x4, fixed_abs, tag = 'smem constant byte address 0x4 - core index']
  #allocation1 [shape = 'u32[72,128]{1,0:T(1,128)}', space=vmem, size = 0x9000, scoped, tag = 'internal scratch']
  #allocation2 [shape = 'bf16[288,512]{1,0:T(8,128)(2,1)}', space=vmem, size = 0x48000, scoped, tag = 'scratch operand']
  %s0 = inlined_call_operand.vmem [shape: f32[1,32,512], index: 0, kind: input, shape index: {}]
  %s1 = inlined_call_operand.hbm [shape: bf16[288,512], index: 1, kind: input, shape index: {}]
  %s2 = inlined_call_operand.vmem [shape: bf16[32,288], index: 2, kind: input, shape index: {}]
  %s3 = inlined_call_operand.vmem [shape: f32[32,1], index: 3, kind: input, shape index: {}]
  %s4 = inlined_call_operand.hbm [shape: bf16[32,288], index: 4, kind: input, shape index: {}]
  %s5 = inlined_call_operand.vmem [shape: f32[32,1], index: 5, kind: input, shape index: {}]
  %s6 = inlined_call_operand.hbm [shape: bf16[32,288], index: 6, kind: input, shape index: {}]
  %s7 = inlined_call_operand.vmem [shape: f32[32,1], index: 7, kind: input, shape index: {}]
  %s8 = inlined_call_operand.hbm [shape: bf16[32,288], index: 8, kind: input, shape index: {}]
  %s9 = inlined_call_operand.vmem [shape: f32[32,1], index: 9, kind: input, shape index: {}]
  %s10 = inlined_call_operand.hbm [shape: bf16[32,288], index: 10, kind: input, shape index: {}]
  %s11 = inlined_call_operand.vmem [shape: f32[32,1], index: 11, kind: input, shape index: {}]
  %s12 = inlined_call_operand.hbm [shape: bf16[32,288], index: 12, kind: input, shape index: {}]
  %s13 = inlined_call_operand.vmem [shape: f32[32,1], index: 13, kind: input, shape index: {}]
  %s14 = inlined_call_operand.hbm [shape: f32[1,32,512], index: 14, kind: output, shape index: {}]
  %s15 = sld [smem:[#allocation0]]
  $region90: #{tpu_custom_call.1} parent=0
    _
  %s17 = ssub.s32 1, %s15
  %s18 = scalar_select 0, %s17, %s15
  $region1: #{tpu_custom_call.1} parent=0
    #allocation3 [shape = 'u8[294912]{0}', space=vmem, size = 0x48000, scoped, tag = 'input window, operand 1, single buffered']
    #allocation4 [shape = 's32[1]{0}', space=sflag, size = 0x4, scoped, tag = 'scoped memory for tpu_custom_call.1']
    #allocation5 [shape = 's32[1]{0}', space=sflag, size = 0x4, scoped, tag = 'scoped memory for tpu_custom_call.1']
    #allocation6 [shape = 'u8[24576]{0}', space=vmem, size = 0x6000, scoped, tag = 'input window, operand 4, single buffered']
    #allocation7 [shape = 's32[1]{0}', space=sflag, size = 0x4, scoped, tag = 'scoped memory for tpu_custom_call.1']
    #allocation8 [shape = 'u8[24576]{0}', space=vmem, size = 0x6000, scoped, tag = 'input window, operand 6, single buffered']
    #allocation9 [shape = 'u8[24576]{0}', space=vmem, size = 0x6000, scoped, tag = 'input window, operand 8, single buffered']
    #allocation10 [shape = 's32[1]{0}', space=sflag, size = 0x4, scoped, tag = 'scoped memory for tpu_custom_call.1']
    #allocation11 [shape = 'u8[24576]{0}', space=vmem, size = 0x6000, scoped, tag = 'input window, operand 10, single buffered']
    #allocation12 [shape = 'u8[24576]{0}', space=vmem, size = 0x6000, scoped, tag = 'input window, operand 12, single buffered']
    #allocation13 [shape = 's32[1]{0}', space=sflag, size = 0x4, scoped, tag = 'scoped memory for tpu_custom_call.1']
    #allocation14 [shape = 'u8[65536]{0}', space=vmem, size = 0x10000, scoped, tag = 'output window, operand 0, single buffered']
    %19 = vsyncpa [#allocation4], 0
    %20 = vsyncpa [#allocation7], 0
    %21 = vsyncpa [#allocation10], 0
    %22 = vsyncpa [#allocation13], 0
    %23 = vsyncpa [#allocation5], 0
    // Predicated region
    $region2: #{tpu_custom_call.1} parent=1 // pred_check
      _
    $region3: #{tpu_custom_call.1} parent=1 // pred_check_branch
      %25 = sbr.rel (0) target = $region5
    $region4: #{tpu_custom_call.1} parent=1 // pred_region
      _
    $region5: #{tpu_custom_call.1} parent=1 // pred_fallthru
      _
    // Predicated region
    $region6: #{tpu_custom_call.1} parent=1 // pred_check
      _
    $region7: #{tpu_custom_call.1} parent=1 // pred_check_branch
      %27 = sbr.rel (0) target = $region9
    $region8: #{tpu_custom_call.1} parent=1 // pred_region
      %29 = vsyncadd [#allocation4], 0
      %s30 = sshll.u32 %s1, 4
      %s31 = int_to_ptr.hbm [resolvable:$true] %s30
      %s32 = sshll.u32 [#allocation3], 4
      %s33 = int_to_ptr.vmem [resolvable:$true] %s32
      %38 = dma.hbm_to_vmem [thread:$0]  %s31, 9216, %s33, [#allocation4], 256, 256, 16
    $region9: #{tpu_custom_call.1} parent=1 // pred_fallthru
      _
    // Predicated region
    $region10: #{tpu_custom_call.1} parent=1 // pred_check
      _
    $region11: #{tpu_custom_call.1} parent=1 // pred_check_branch
      %40 = sbr.rel (0) target = $region13
    $region12: #{tpu_custom_call.1} parent=1 // pred_region
      _
    $region13: #{tpu_custom_call.1} parent=1 // pred_fallthru
      _
    // Predicated region
    $region14: #{tpu_custom_call.1} parent=1 // pred_check
      _
    $region15: #{tpu_custom_call.1} parent=1 // pred_check_branch
      %42 = sbr.rel (0) target = $region17
    $region16: #{tpu_custom_call.1} parent=1 // pred_region
      _
    $region17: #{tpu_custom_call.1} parent=1 // pred_fallthru
      _
    // Predicated region
    $region18: #{tpu_custom_call.1} parent=1 // pred_check
      _
    $region19: #{tpu_custom_call.1} parent=1 // pred_check_branch
      %44 = sbr.rel (0) target = $region21
    $region20: #{tpu_custom_call.1} parent=1 // pred_region
      %46 = vsyncadd [#allocation7], 0
      %s47 = sshll.u32 %s4, 4
      %s48 = int_to_ptr.hbm [resolvable:$true] %s47
      %s49 = sshll.u32 [#allocation6], 4
      %s50 = int_to_ptr.vmem [resolvable:$true] %s49
      %55 = dma.hbm_to_vmem [thread:$0]  %s48, 768, %s50, [#allocation7], 192, 192, 12
    $region21: #{tpu_custom_call.1} parent=1 // pred_fallthru
      _
    // Predicated region
    $region22: #{tpu_custom_call.1} parent=1 // pred_check
      _
    $region23: #{tpu_custom_call.1} parent=1 // pred_check_branch
      %57 = sbr.rel (0) target = $region25
    $region24: #{tpu_custom_call.1} parent=1 // pred_region
      _
    $region25: #{tpu_custom_call.1} parent=1 // pred_fallthru
      _
    // Predicated region
    $region26: #{tpu_custom_call.1} parent=1 // pred_check
      _
    $region27: #{tpu_custom_call.1} parent=1 // pred_check_branch
      %59 = sbr.rel (0) target = $region29
    $region28: #{tpu_custom_call.1} parent=1 // pred_region
      %61 = vsyncadd [#allocation7], 0
      %s62 = sshll.u32 %s6, 4
      %s63 = int_to_ptr.hbm [resolvable:$true] %s62
      %s64 = sshll.u32 [#allocation8], 4
      %s65 = int_to_ptr.vmem [resolvable:$true] %s64
      %70 = dma.hbm_to_vmem [thread:$0]  %s63, 768, %s65, [#allocation7], 192, 192, 12
    $region29: #{tpu_custom_call.1} parent=1 // pred_fallthru
      _
    // Predicated region
    $region30: #{tpu_custom_call.1} parent=1 // pred_check
      _
    $region31: #{tpu_custom_call.1} parent=1 // pred_check_branch
      %72 = sbr.rel (0) target = $region33
    $region32: #{tpu_custom_call.1} parent=1 // pred_region
      _
    $region33: #{tpu_custom_call.1} parent=1 // pred_fallthru
      _
    // Predicated region
    $region34: #{tpu_custom_call.1} parent=1 // pred_check
      _
    $region35: #{tpu_custom_call.1} parent=1 // pred_check_branch
      %74 = sbr.rel (0) target = $region37
    $region36: #{tpu_custom_call.1} parent=1 // pred_region
      %76 = vsyncadd [#allocation10], 0
      %s77 = sshll.u32 %s8, 4
      %s78 = int_to_ptr.hbm [resolvable:$true] %s77
      %s79 = sshll.u32 [#allocation9], 4
      %s80 = int_to_ptr.vmem [resolvable:$true] %s79
      %85 = dma.hbm_to_vmem [thread:$0]  %s78, 768, %s80, [#allocation10], 192, 192, 12
    $region37: #{tpu_custom_call.1} parent=1 // pred_fallthru
      _
    // Predicated region
    $region38: #{tpu_custom_call.1} parent=1 // pred_check
      _
    $region39: #{tpu_custom_call.1} parent=1 // pred_check_branch
      %87 = sbr.rel (0) target = $region41
    $region40: #{tpu_custom_call.1} parent=1 // pred_region
      _
    $region41: #{tpu_custom_call.1} parent=1 // pred_fallthru
      _
    // Predicated region
    $region42: #{tpu_custom_call.1} parent=1 // pred_check
      _
    $region43: #{tpu_custom_call.1} parent=1 // pred_check_branch
      %89 = sbr.rel (0) target = $region45
    $region44: #{tpu_custom_call.1} parent=1 // pred_region
      %91 = vsyncadd [#allocation10], 0
      %s92 = sshll.u32 %s10, 4
      %s93 = int_to_ptr.hbm [resolvable:$true] %s92
      %s94 = sshll.u32 [#allocation11], 4
      %s95 = int_to_ptr.vmem [resolvable:$true] %s94
      %100 = dma.hbm_to_vmem [thread:$0]  %s93, 768, %s95, [#allocation10], 192, 192, 12
    $region45: #{tpu_custom_call.1} parent=1 // pred_fallthru
      _
    // Predicated region
    $region46: #{tpu_custom_call.1} parent=1 // pred_check
      _
    $region47: #{tpu_custom_call.1} parent=1 // pred_check_branch
      %102 = sbr.rel (0) target = $region49
    $region48: #{tpu_custom_call.1} parent=1 // pred_region
      _
    $region49: #{tpu_custom_call.1} parent=1 // pred_fallthru
      _
    // Predicated region
    $region50: #{tpu_custom_call.1} parent=1 // pred_check
      _
    $region51: #{tpu_custom_call.1} parent=1 // pred_check_branch
      %104 = sbr.rel (0) target = $region53
    $region52: #{tpu_custom_call.1} parent=1 // pred_region
      %106 = vsyncadd [#allocation13], 0
      %s107 = sshll.u32 %s12, 4
      %s108 = int_to_ptr.hbm [resolvable:$true] %s107
      %s109 = sshll.u32 [#allocation12], 4
      %s110 = int_to_ptr.vmem [resolvable:$true] %s109
      %115 = dma.hbm_to_vmem [thread:$0]  %s108, 768, %s110, [#allocation13], 192, 192, 12
    $region53: #{tpu_custom_call.1} parent=1 // pred_fallthru
      _
    // Predicated region
    $region54: #{tpu_custom_call.1} parent=1 // pred_check
      _
    $region55: #{tpu_custom_call.1} parent=1 // pred_check_branch
      %117 = sbr.rel (0) target = $region57
    $region56: #{tpu_custom_call.1} parent=1 // pred_region
      _
    $region57: #{tpu_custom_call.1} parent=1 // pred_fallthru
      _
    // Predicated region
    $region58: #{tpu_custom_call.1} parent=1 // pred_check
      _
    $region59: #{tpu_custom_call.1} parent=1 // pred_check_branch
      %119 = sbr.rel (0) target = $region61
    $region60: #{tpu_custom_call.1} parent=1 // pred_region
      %121 = dma.done [#allocation4], 9216
    $region61: #{tpu_custom_call.1} parent=1 // pred_fallthru
      _
    // Predicated region
    $region62: #{tpu_custom_call.1} parent=1 // pred_check
      _
    $region63: #{tpu_custom_call.1} parent=1 // pred_check_branch
      %123 = sbr.rel (0) target = $region65
    $region64: #{tpu_custom_call.1} parent=1 // pred_region
      %125 = dma.done [#allocation7], 768
    $region65: #{tpu_custom_call.1} parent=1 // pred_fallthru
      _
    // Predicated region
    $region66: #{tpu_custom_call.1} parent=1 // pred_check
      _
    $region67: #{tpu_custom_call.1} parent=1 // pred_check_branch
      %127 = sbr.rel (0) target = $region69
    $region68: #{tpu_custom_call.1} parent=1 // pred_region
      %129 = dma.done [#allocation7], 768
    $region69: #{tpu_custom_call.1} parent=1 // pred_fallthru
      _
    // Predicated region
    $region70: #{tpu_custom_call.1} parent=1 // pred_check
      _
    $region71: #{tpu_custom_call.1} parent=1 // pred_check_branch
      %131 = sbr.rel (0) target = $region73
    $region72: #{tpu_custom_call.1} parent=1 // pred_region
      %133 = dma.done [#allocation10], 768
    $region73: #{tpu_custom_call.1} parent=1 // pred_fallthru
      _
    // Predicated region
    $region74: #{tpu_custom_call.1} parent=1 // pred_check
      _
    $region75: #{tpu_custom_call.1} parent=1 // pred_check_branch
      %135 = sbr.rel (0) target = $region77
    $region76: #{tpu_custom_call.1} parent=1 // pred_region
      %137 = dma.done [#allocation10], 768
    $region77: #{tpu_custom_call.1} parent=1 // pred_fallthru
      _
    // Predicated region
    $region78: #{tpu_custom_call.1} parent=1 // pred_check
      _
    $region79: #{tpu_custom_call.1} parent=1 // pred_check_branch
      %139 = sbr.rel (0) target = $region81
    $region80: #{tpu_custom_call.1} parent=1 // pred_region
      %141 = dma.done [#allocation13], 768
    $region81: #{tpu_custom_call.1} parent=1 // pred_fallthru
      _
    %v143 = vld [vmem:[%s0] sm:$0xff]
    %v144 = vld [vmem:[%s0 + $0x8] sm:$0xff]
    %v145 = vld [vmem:[%s0 + $0x10] sm:$0xff]
    %v146 = vld [vmem:[%s0 + $0x18] sm:$0xff]
    %v147 = vld [vmem:[%s0 + $0x20] sm:$0xff]
    %v148 = vld [vmem:[%s0 + $0x28] sm:$0xff]
    %v149 = vld [vmem:[%s0 + $0x30] sm:$0xff]
    %v150 = vld [vmem:[%s0 + $0x38] sm:$0xff]
    %v151 = vld [vmem:[%s0 + $0x40] sm:$0xff]
    %v152 = vld [vmem:[%s0 + $0x48] sm:$0xff]
    %v153 = vld [vmem:[%s0 + $0x50] sm:$0xff]
    %v154 = vld [vmem:[%s0 + $0x58] sm:$0xff]
    %v155 = vld [vmem:[%s0 + $0x60] sm:$0xff]
    %v156 = vld [vmem:[%s0 + $0x68] sm:$0xff]
    %v157 = vld [vmem:[%s0 + $0x70] sm:$0xff]
    %v158 = vld [vmem:[%s0 + $0x78] sm:$0xff]
    %v159 = vpack.c.bf16 %v144, %v143
    %v160 = vpack.c.bf16 %v146, %v145
    %v161 = vpack.c.bf16 %v148, %v147
    %v162 = vpack.c.bf16 %v150, %v149
    %v163 = vpack.c.bf16 %v152, %v151
    %v164 = vpack.c.bf16 %v154, %v153
    %v165 = vpack.c.bf16 %v156, %v155
    %v166 = vpack.c.bf16 %v158, %v157
    %v171 = vunpack.c.h.b16 %v160
    %v172 = vunpack.c.h.b16 %v162
    %v173 = vunpack.c.h.b16 %v164
    %v174 = vunpack.c.h.b16 %v166
    %v175 = vpack.c.b16 %v172, %v171
    %v176 = vpack.c.b16 %v174, %v173
    %177 = vrot.lane.b32.xlu0 %v175, 17
    %v178 = vpop.permute.xlu0 %177
    %179 = vrot.lane.b32.xlu0 %v176, 17
    %v180 = vpop.permute.xlu0 %179
    %v185 = vunpack.c.l.b16 %v159
    %v186 = vunpack.c.h.b16 %v159
    %v187 = vunpack.c.l.b16 %v160
    %v188 = vunpack.c.l.b16 %v161
    %v189 = vunpack.c.h.b16 %v161
    %v190 = vunpack.c.l.b16 %v162
    %v191 = vunpack.c.l.b16 %v163
    %v192 = vunpack.c.h.b16 %v163
    %v193 = vunpack.c.l.b16 %v164
    %v194 = vunpack.c.l.b16 %v165
    %v195 = vunpack.c.h.b16 %v165
    %v196 = vunpack.c.l.b16 %v166
    %v197 = vpack.c.b16 %v188, %v185
    %v198 = vpack.c.b16 %v189, %v186
    %v199 = vpack.c.b16 %v190, %v187
    %v200 = vpack.c.b16 %v194, %v191
    %v201 = vpack.c.b16 %v195, %v192
    %v202 = vpack.c.b16 %v196, %v193
    %203 = vrot.lane.b32.xlu0 %v197, 17
    %v204 = vpop.permute.xlu0 %203
    %205 = vrot.lane.b32.xlu0 %v198, 17
    %v206 = vpop.permute.xlu0 %205
    %207 = vrot.lane.b32.xlu0 %v199, 17
    %v208 = vpop.permute.xlu0 %207
    %209 = vrot.lane.b32.xlu0 %v200, 17
    %v210 = vpop.permute.xlu0 %209
    %211 = vrot.lane.b32.xlu0 %v201, 17
    %v212 = vpop.permute.xlu0 %211
    %213 = vrot.lane.b32.xlu0 %v202, 17
    %v214 = vpop.permute.xlu0 %213
    %vm215 = vcmask 138240
    %v216 = vsel %vm215, %v204, %v206
    %v217 = vsel %vm215, %v206, %v208
    %v218 = vsel %vm215, %v208, %v178
    %v219 = vsel %vm215, %v210, %v212
    %v220 = vsel %vm215, %v212, %v214
    %v221 = vsel %vm215, %v214, %v180
    %vm228 = vcmask 138240
    %v231 = vsel %vm228, %v178, %v204
    %v235 = vsel %vm228, %v180, %v210
    %v237 = vld [vmem:[#allocation3] sm:$0xff]
    %v238 = vld [vmem:[#allocation3 + $0x8] sm:$0xff]
    %v239 = vld [vmem:[#allocation3 + $0x10] sm:$0xff]
    %v240 = vld [vmem:[#allocation3 + $0x18] sm:$0xff]
    %v241 = vld [vmem:[#allocation3 + $0x20] sm:$0xff]
    %v242 = vld [vmem:[#allocation3 + $0x28] sm:$0xff]
    %v243 = vld [vmem:[#allocation3 + $0x30] sm:$0xff]
    %v244 = vld [vmem:[#allocation3 + $0x38] sm:$0xff]
    %v245 = vunpack.c.l.bf16 %v231
    %v246 = vunpack.c.l.bf16 %v216
    %v247 = vunpack.c.l.bf16 %v217
    %v248 = vunpack.c.l.bf16 %v218
    %v249 = vunpack.c.h.bf16 %v231
    %v250 = vunpack.c.h.bf16 %v216
    %v251 = vunpack.c.h.bf16 %v217
    %v252 = vunpack.c.h.bf16 %v218
    %v253 = vunpack.c.l.bf16 %v235
    %v254 = vunpack.c.l.bf16 %v219
    %v255 = vunpack.c.l.bf16 %v220
    %v256 = vunpack.c.l.bf16 %v221
    %v257 = vunpack.c.h.bf16 %v235
    %v258 = vunpack.c.h.bf16 %v219
    %v259 = vunpack.c.h.bf16 %v220
    %v260 = vunpack.c.h.bf16 %v221
    %v261 = vunpack.c.l.bf16 %v237
    %v262 = vunpack.c.h.bf16 %v237
    %v263 = vunpack.c.l.bf16 %v238
    %v264 = vunpack.c.h.bf16 %v238
    %v265 = vunpack.c.l.bf16 %v239
    %v266 = vunpack.c.h.bf16 %v239
    %v267 = vunpack.c.l.bf16 %v240
    %v268 = vunpack.c.h.bf16 %v240
    %v269 = vunpack.c.l.bf16 %v241
    %v270 = vunpack.c.h.bf16 %v241
    %v271 = vunpack.c.l.bf16 %v242
    %v272 = vunpack.c.h.bf16 %v242
    %v273 = vunpack.c.l.bf16 %v243
    %v274 = vunpack.c.h.bf16 %v243
    %v275 = vunpack.c.l.bf16 %v244
    %v276 = vunpack.c.h.bf16 %v244
    %v277 = vmul.f32 %v245, %v261
    %v278 = vmul.f32 %v246, %v262
    %v279 = vmul.f32 %v247, %v263
    %v280 = vmul.f32 %v248, %v264
    %v281 = vmul.f32 %v249, %v265
    %v282 = vmul.f32 %v250, %v266
    %v283 = vmul.f32 %v251, %v267
    %v284 = vmul.f32 %v252, %v268
    %v285 = vmul.f32 %v253, %v269
    %v286 = vmul.f32 %v254, %v270
    %v287 = vmul.f32 %v255, %v271
    %v288 = vmul.f32 %v256, %v272
    %v289 = vmul.f32 %v257, %v273
    %v290 = vmul.f32 %v258, %v274
    %v291 = vmul.f32 %v259, %v275
    %v292 = vmul.f32 %v260, %v276
    %v293 = vpack.c.bf16 %v278, %v277
    %v294 = vpack.c.bf16 %v280, %v279
    %v295 = vpack.c.bf16 %v282, %v281
    %v296 = vpack.c.bf16 %v284, %v283
    %v297 = vpack.c.bf16 %v286, %v285
    %v298 = vpack.c.bf16 %v288, %v287
    %v299 = vpack.c.bf16 %v290, %v289
    %v300 = vpack.c.bf16 %v292, %v291
    %301 = vst [vmem:[#allocation2] sm:$0xff] %v293
    %302 = vst [vmem:[#allocation2 + $0x8] sm:$0xff] %v294
    %303 = vst [vmem:[#allocation2 + $0x10] sm:$0xff] %v295
    %304 = vst [vmem:[#allocation2 + $0x18] sm:$0xff] %v296
    %305 = vst [vmem:[#allocation2 + $0x20] sm:$0xff] %v297
    %306 = vst [vmem:[#allocation2 + $0x28] sm:$0xff] %v298
    %307 = vst [vmem:[#allocation2 + $0x30] sm:$0xff] %v299
    %308 = vst [vmem:[#allocation2 + $0x38] sm:$0xff] %v300
    %309 = vrot.lane.b32.xlu0 %v175, 16
    %v310 = vpop.permute.xlu0 %309
    %311 = vrot.lane.b32.xlu0 %v176, 16
    %v312 = vpop.permute.xlu0 %311
    %313 = vrot.lane.b32.xlu0 %v197, 16
    %v314 = vpop.permute.xlu0 %313
    %315 = vrot.lane.b32.xlu0 %v198, 16
    %v316 = vpop.permute.xlu0 %315
    %317 = vrot.lane.b32.xlu0 %v199, 16
    %v318 = vpop.permute.xlu0 %317
    %319 = vrot.lane.b32.xlu0 %v200, 16
    %v320 = vpop.permute.xlu0 %319
    %321 = vrot.lane.b32.xlu0 %v201, 16
    %v322 = vpop.permute.xlu0 %321
    %323 = vrot.lane.b32.xlu0 %v202, 16
    %v324 = vpop.permute.xlu0 %323
    %vm325 = vcmask 130048
    %v326 = vsel %vm325, %v314, %v316
    %v327 = vsel %vm325, %v316, %v318
    %v328 = vsel %vm325, %v318, %v310
    %v329 = vsel %vm325, %v320, %v322
    %v330 = vsel %vm325, %v322, %v324
    %v331 = vsel %vm325, %v324, %v312
    %vm338 = vcmask 130048
    %v341 = vsel %vm338, %v310, %v314
    %v345 = vsel %vm338, %v312, %v320
    %v347 = vld [vmem:[#allocation3 + $0x40] sm:$0xff]
    %v348 = vld [vmem:[#allocation3 + $0x48] sm:$0xff]
    %v349 = vld [vmem:[#allocation3 + $0x50] sm:$0xff]
    %v350 = vld [vmem:[#allocation3 + $0x58] sm:$0xff]
    %v351 = vld [vmem:[#allocation3 + $0x60] sm:$0xff]
    %v352 = vld [vmem:[#allocation3 + $0x68] sm:$0xff]
    %v353 = vld [vmem:[#allocation3 + $0x70] sm:$0xff]
    %v354 = vld [vmem:[#allocation3 + $0x78] sm:$0xff]
    %v355 = vunpack.c.l.bf16 %v341
    %v356 = vunpack.c.l.bf16 %v326
    %v357 = vunpack.c.l.bf16 %v327
    %v358 = vunpack.c.l.bf16 %v328
    %v359 = vunpack.c.h.bf16 %v341
    %v360 = vunpack.c.h.bf16 %v326
    %v361 = vunpack.c.h.bf16 %v327
    %v362 = vunpack.c.h.bf16 %v328
    %v363 = vunpack.c.l.bf16 %v345
    %v364 = vunpack.c.l.bf16 %v329
    %v365 = vunpack.c.l.bf16 %v330
    %v366 = vunpack.c.l.bf16 %v331
    %v367 = vunpack.c.h.bf16 %v345
    %v368 = vunpack.c.h.bf16 %v329
    %v369 = vunpack.c.h.bf16 %v330
    %v370 = vunpack.c.h.bf16 %v331
    %v371 = vunpack.c.l.bf16 %v347
    %v372 = vunpack.c.h.bf16 %v347
    %v373 = vunpack.c.l.bf16 %v348
    %v374 = vunpack.c.h.bf16 %v348
    %v375 = vunpack.c.l.bf16 %v349
    %v376 = vunpack.c.h.bf16 %v349
    %v377 = vunpack.c.l.bf16 %v350
    %v378 = vunpack.c.h.bf16 %v350
    %v379 = vunpack.c.l.bf16 %v351
    %v380 = vunpack.c.h.bf16 %v351
    %v381 = vunpack.c.l.bf16 %v352
    %v382 = vunpack.c.h.bf16 %v352
    %v383 = vunpack.c.l.bf16 %v353
    %v384 = vunpack.c.h.bf16 %v353
    %v385 = vunpack.c.l.bf16 %v354
    %v386 = vunpack.c.h.bf16 %v354
    %v387 = vmul.f32 %v355, %v371
    %v388 = vmul.f32 %v356, %v372
    %v389 = vmul.f32 %v357, %v373
    %v390 = vmul.f32 %v358, %v374
    %v391 = vmul.f32 %v359, %v375
    %v392 = vmul.f32 %v360, %v376
    %v393 = vmul.f32 %v361, %v377
    %v394 = vmul.f32 %v362, %v378
    %v395 = vmul.f32 %v363, %v379
    %v396 = vmul.f32 %v364, %v380
    %v397 = vmul.f32 %v365, %v381
    %v398 = vmul.f32 %v366, %v382
    %v399 = vmul.f32 %v367, %v383
    %v400 = vmul.f32 %v368, %v384
    %v401 = vmul.f32 %v369, %v385
    %v402 = vmul.f32 %v370, %v386
    %v403 = vpack.c.bf16 %v388, %v387
    %v404 = vpack.c.bf16 %v390, %v389
    %v405 = vpack.c.bf16 %v392, %v391
    %v406 = vpack.c.bf16 %v394, %v393
    %v407 = vpack.c.bf16 %v396, %v395
    %v408 = vpack.c.bf16 %v398, %v397
    %v409 = vpack.c.bf16 %v400, %v399
    %v410 = vpack.c.bf16 %v402, %v401
    %411 = vst [vmem:[#allocation2 + $0x40] sm:$0xff] %v403
    %412 = vst [vmem:[#allocation2 + $0x48] sm:$0xff] %v404
    %413 = vst [vmem:[#allocation2 + $0x50] sm:$0xff] %v405
    %414 = vst [vmem:[#allocation2 + $0x58] sm:$0xff] %v406
    %415 = vst [vmem:[#allocation2 + $0x60] sm:$0xff] %v407
    %416 = vst [vmem:[#allocation2 + $0x68] sm:$0xff] %v408
    %417 = vst [vmem:[#allocation2 + $0x70] sm:$0xff] %v409
    %418 = vst [vmem:[#allocation2 + $0x78] sm:$0xff] %v410
    %419 = vrot.lane.b32.xlu0 %v175, 15
    %v420 = vpop.permute.xlu0 %419
    %421 = vrot.lane.b32.xlu0 %v176, 15
    %v422 = vpop.permute.xlu0 %421
    %423 = vrot.lane.b32.xlu0 %v197, 15
    %v424 = vpop.permute.xlu0 %423
    %425 = vrot.lane.b32.xlu0 %v198, 15
    %v426 = vpop.permute.xlu0 %425
    %427 = vrot.lane.b32.xlu0 %v199, 15
    %v428 = vpop.permute.xlu0 %427
    %429 = vrot.lane.b32.xlu0 %v200, 15
    %v430 = vpop.permute.xlu0 %429
    %431 = vrot.lane.b32.xlu0 %v201, 15
    %v432 = vpop.permute.xlu0 %431
    %433 = vrot.lane.b32.xlu0 %v202, 15
    %v434 = vpop.permute.xlu0 %433
    %vm435 = vcmask 121856
    %v436 = vsel %vm435, %v424, %v426
    %v437 = vsel %vm435, %v426, %v428
    %v438 = vsel %vm435, %v428, %v420
    %v439 = vsel %vm435, %v430, %v432
    %v440 = vsel %vm435, %v432, %v434
    %v441 = vsel %vm435, %v434, %v422
    %vm448 = vcmask 121856
    %v451 = vsel %vm448, %v420, %v424
    %v455 = vsel %vm448, %v422, %v430
    %v457 = vld [vmem:[#allocation3 + $0x80] sm:$0xff]
    %v458 = vld [vmem:[#allocation3 + $0x88] sm:$0xff]
    %v459 = vld [vmem:[#allocation3 + $0x90] sm:$0xff]
    %v460 = vld [vmem:[#allocation3 + $0x98] sm:$0xff]
    %v461 = vld [vmem:[#allocation3 + $0xa0] sm:$0xff]
    %v462 = vld [vmem:[#allocation3 + $0xa8] sm:$0xff]
    %v463 = vld [vmem:[#allocation3 + $0xb0] sm:$0xff]
    %v464 = vld [vmem:[#allocation3 + $0xb8] sm:$0xff]
    %v465 = vunpack.c.l.bf16 %v451
    %v466 = vunpack.c.l.bf16 %v436
    %v467 = vunpack.c.l.bf16 %v437
    %v468 = vunpack.c.l.bf16 %v438
    %v469 = vunpack.c.h.bf16 %v451
    %v470 = vunpack.c.h.bf16 %v436
    %v471 = vunpack.c.h.bf16 %v437
    %v472 = vunpack.c.h.bf16 %v438
    %v473 = vunpack.c.l.bf16 %v455
    %v474 = vunpack.c.l.bf16 %v439
    %v475 = vunpack.c.l.bf16 %v440
    %v476 = vunpack.c.l.bf16 %v441
    %v477 = vunpack.c.h.bf16 %v455
    %v478 = vunpack.c.h.bf16 %v439
    %v479 = vunpack.c.h.bf16 %v440
    %v480 = vunpack.c.h.bf16 %v441
    %v481 = vunpack.c.l.bf16 %v457
    %v482 = vunpack.c.h.bf16 %v457
    %v483 = vunpack.c.l.bf16 %v458
    %v484 = vunpack.c.h.bf16 %v458
    %v485 = vunpack.c.l.bf16 %v459
    %v486 = vunpack.c.h.bf16 %v459
    %v487 = vunpack.c.l.bf16 %v460
    %v488 = vunpack.c.h.bf16 %v460
    %v489 = vunpack.c.l.bf16 %v461
    %v490 = vunpack.c.h.bf16 %v461
    %v491 = vunpack.c.l.bf16 %v462
    %v492 = vunpack.c.h.bf16 %v462
    %v493 = vunpack.c.l.bf16 %v463
    %v494 = vunpack.c.h.bf16 %v463
    %v495 = vunpack.c.l.bf16 %v464
    %v496 = vunpack.c.h.bf16 %v464
    %v497 = vmul.f32 %v465, %v481
    %v498 = vmul.f32 %v466, %v482
    %v499 = vmul.f32 %v467, %v483
    %v500 = vmul.f32 %v468, %v484
    %v501 = vmul.f32 %v469, %v485
    %v502 = vmul.f32 %v470, %v486
    %v503 = vmul.f32 %v471, %v487
    %v504 = vmul.f32 %v472, %v488
    %v505 = vmul.f32 %v473, %v489
    %v506 = vmul.f32 %v474, %v490
    %v507 = vmul.f32 %v475, %v491
    %v508 = vmul.f32 %v476, %v492
    %v509 = vmul.f32 %v477, %v493
    %v510 = vmul.f32 %v478, %v494
    %v511 = vmul.f32 %v479, %v495
    %v512 = vmul.f32 %v480, %v496
    %v513 = vpack.c.bf16 %v498, %v497
    %v514 = vpack.c.bf16 %v500, %v499
    %v515 = vpack.c.bf16 %v502, %v501
    %v516 = vpack.c.bf16 %v504, %v503
    %v517 = vpack.c.bf16 %v506, %v505
    %v518 = vpack.c.bf16 %v508, %v507
    %v519 = vpack.c.bf16 %v510, %v509
    %v520 = vpack.c.bf16 %v512, %v511
    %521 = vst [vmem:[#allocation2 + $0x80] sm:$0xff] %v513
    %522 = vst [vmem:[#allocation2 + $0x88] sm:$0xff] %v514
    %523 = vst [vmem:[#allocation2 + $0x90] sm:$0xff] %v515
    %524 = vst [vmem:[#allocation2 + $0x98] sm:$0xff] %v516
    %525 = vst [vmem:[#allocation2 + $0xa0] sm:$0xff] %v517
    %526 = vst [vmem:[#allocation2 + $0xa8] sm:$0xff] %v518
    %527 = vst [vmem:[#allocation2 + $0xb0] sm:$0xff] %v519
    %528 = vst [vmem:[#allocation2 + $0xb8] sm:$0xff] %v520
    %529 = vrot.lane.b32.xlu0 %v175, 1
    %v530 = vpop.permute.xlu0 %529
    %531 = vrot.lane.b32.xlu0 %v176, 1
    %v532 = vpop.permute.xlu0 %531
    %533 = vrot.lane.b32.xlu0 %v197, 1
    %v534 = vpop.permute.xlu0 %533
    %535 = vrot.lane.b32.xlu0 %v198, 1
    %v536 = vpop.permute.xlu0 %535
    %537 = vrot.lane.b32.xlu0 %v199, 1
    %v538 = vpop.permute.xlu0 %537
    %539 = vrot.lane.b32.xlu0 %v200, 1
    %v540 = vpop.permute.xlu0 %539
    %541 = vrot.lane.b32.xlu0 %v201, 1
    %v542 = vpop.permute.xlu0 %541
    %543 = vrot.lane.b32.xlu0 %v202, 1
    %v544 = vpop.permute.xlu0 %543
    %vm545 = vcmask 7168
    %v546 = vsel %vm545, %v534, %v536
    %v547 = vsel %vm545, %v536, %v538
    %v548 = vsel %vm545, %v538, %v530
    %v549 = vsel %vm545, %v540, %v542
    %v550 = vsel %vm545, %v542, %v544
    %v551 = vsel %vm545, %v544, %v532
    %vm558 = vcmask 7168
    %v561 = vsel %vm558, %v530, %v534
    %v565 = vsel %vm558, %v532, %v540
    %v567 = vld [vmem:[#allocation3 + $0xc0] sm:$0xff]
    %v568 = vld [vmem:[#allocation3 + $0xc8] sm:$0xff]
    %v569 = vld [vmem:[#allocation3 + $0xd0] sm:$0xff]
    %v570 = vld [vmem:[#allocation3 + $0xd8] sm:$0xff]
    %v571 = vld [vmem:[#allocation3 + $0xe0] sm:$0xff]
    %v572 = vld [vmem:[#allocation3 + $0xe8] sm:$0xff]
    %v573 = vld [vmem:[#allocation3 + $0xf0] sm:$0xff]
    %v574 = vld [vmem:[#allocation3 + $0xf8] sm:$0xff]
    %v575 = vunpack.c.l.bf16 %v561
    %v576 = vunpack.c.l.bf16 %v546
    %v577 = vunpack.c.l.bf16 %v547
    %v578 = vunpack.c.l.bf16 %v548
    %v579 = vunpack.c.h.bf16 %v561
    %v580 = vunpack.c.h.bf16 %v546
    %v581 = vunpack.c.h.bf16 %v547
    %v582 = vunpack.c.h.bf16 %v548
    %v583 = vunpack.c.l.bf16 %v565
    %v584 = vunpack.c.l.bf16 %v549
    %v585 = vunpack.c.l.bf16 %v550
    %v586 = vunpack.c.l.bf16 %v551
    %v587 = vunpack.c.h.bf16 %v565
    %v588 = vunpack.c.h.bf16 %v549
    %v589 = vunpack.c.h.bf16 %v550
    %v590 = vunpack.c.h.bf16 %v551
    %v591 = vunpack.c.l.bf16 %v567
    %v592 = vunpack.c.h.bf16 %v567
    %v593 = vunpack.c.l.bf16 %v568
    %v594 = vunpack.c.h.bf16 %v568
    %v595 = vunpack.c.l.bf16 %v569
    %v596 = vunpack.c.h.bf16 %v569
    %v597 = vunpack.c.l.bf16 %v570
    %v598 = vunpack.c.h.bf16 %v570
    %v599 = vunpack.c.l.bf16 %v571
    %v600 = vunpack.c.h.bf16 %v571
    %v601 = vunpack.c.l.bf16 %v572
    %v602 = vunpack.c.h.bf16 %v572
    %v603 = vunpack.c.l.bf16 %v573
    %v604 = vunpack.c.h.bf16 %v573
    %v605 = vunpack.c.l.bf16 %v574
    %v606 = vunpack.c.h.bf16 %v574
    %v607 = vmul.f32 %v575, %v591
    %v608 = vmul.f32 %v576, %v592
    %v609 = vmul.f32 %v577, %v593
    %v610 = vmul.f32 %v578, %v594
    %v611 = vmul.f32 %v579, %v595
    %v612 = vmul.f32 %v580, %v596
    %v613 = vmul.f32 %v581, %v597
    %v614 = vmul.f32 %v582, %v598
    %v615 = vmul.f32 %v583, %v599
    %v616 = vmul.f32 %v584, %v600
    %v617 = vmul.f32 %v585, %v601
    %v618 = vmul.f32 %v586, %v602
    %v619 = vmul.f32 %v587, %v603
    %v620 = vmul.f32 %v588, %v604
    %v621 = vmul.f32 %v589, %v605
    %v622 = vmul.f32 %v590, %v606
    %v623 = vpack.c.bf16 %v608, %v607
    %v624 = vpack.c.bf16 %v610, %v609
    %v625 = vpack.c.bf16 %v612, %v611
    %v626 = vpack.c.bf16 %v614, %v613
    %v627 = vpack.c.bf16 %v616, %v615
    %v628 = vpack.c.bf16 %v618, %v617
    %v629 = vpack.c.bf16 %v620, %v619
    %v630 = vpack.c.bf16 %v622, %v621
    %631 = vst [vmem:[#allocation2 + $0xc0] sm:$0xff] %v623
    %632 = vst [vmem:[#allocation2 + $0xc8] sm:$0xff] %v624
    %633 = vst [vmem:[#allocation2 + $0xd0] sm:$0xff] %v625
    %634 = vst [vmem:[#allocation2 + $0xd8] sm:$0xff] %v626
    %635 = vst [vmem:[#allocation2 + $0xe0] sm:$0xff] %v627
    %636 = vst [vmem:[#allocation2 + $0xe8] sm:$0xff] %v628
    %637 = vst [vmem:[#allocation2 + $0xf0] sm:$0xff] %v629
    %638 = vst [vmem:[#allocation2 + $0xf8] sm:$0xff] %v630
    %v639 = vld [vmem:[#allocation3 + $0x100] sm:$0xff]
    %v640 = vld [vmem:[#allocation3 + $0x108] sm:$0xff]
    %v641 = vld [vmem:[#allocation3 + $0x110] sm:$0xff]
    %v642 = vld [vmem:[#allocation3 + $0x118] sm:$0xff]
    %v643 = vld [vmem:[#allocation3 + $0x120] sm:$0xff]
    %v644 = vld [vmem:[#allocation3 + $0x128] sm:$0xff]
    %v645 = vld [vmem:[#allocation3 + $0x130] sm:$0xff]
    %v646 = vld [vmem:[#allocation3 + $0x138] sm:$0xff]
    %v647 = vunpack.c.l.bf16 %v159
    %v648 = vunpack.c.h.bf16 %v159
    %v649 = vunpack.c.l.bf16 %v160
    %v650 = vunpack.c.h.bf16 %v160
    %v651 = vunpack.c.l.bf16 %v161
    %v652 = vunpack.c.h.bf16 %v161
    %v653 = vunpack.c.l.bf16 %v162
    %v654 = vunpack.c.h.bf16 %v162
    %v655 = vunpack.c.l.bf16 %v163
    %v656 = vunpack.c.h.bf16 %v163
    %v657 = vunpack.c.l.bf16 %v164
    %v658 = vunpack.c.h.bf16 %v164
    %v659 = vunpack.c.l.bf16 %v165
    %v660 = vunpack.c.h.bf16 %v165
    %v661 = vunpack.c.l.bf16 %v166
    %v662 = vunpack.c.h.bf16 %v166
    %v663 = vunpack.c.l.bf16 %v639
    %v664 = vunpack.c.h.bf16 %v639
    %v665 = vunpack.c.l.bf16 %v640
    %v666 = vunpack.c.h.bf16 %v640
    %v667 = vunpack.c.l.bf16 %v641
    %v668 = vunpack.c.h.bf16 %v641
    %v669 = vunpack.c.l.bf16 %v642
    %v670 = vunpack.c.h.bf16 %v642
    %v671 = vunpack.c.l.bf16 %v643
    %v672 = vunpack.c.h.bf16 %v643
    %v673 = vunpack.c.l.bf16 %v644
    %v674 = vunpack.c.h.bf16 %v644
    %v675 = vunpack.c.l.bf16 %v645
    %v676 = vunpack.c.h.bf16 %v645
    %v677 = vunpack.c.l.bf16 %v646
    %v678 = vunpack.c.h.bf16 %v646
    %v679 = vmul.f32 %v647, %v663
    %v680 = vmul.f32 %v648, %v664
    %v681 = vmul.f32 %v649, %v665
    %v682 = vmul.f32 %v650, %v666
    %v683 = vmul.f32 %v651, %v667
    %v684 = vmul.f32 %v652, %v668
    %v685 = vmul.f32 %v653, %v669
    %v686 = vmul.f32 %v654, %v670
    %v687 = vmul.f32 %v655, %v671
    %v688 = vmul.f32 %v656, %v672
    %v689 = vmul.f32 %v657, %v673
    %v690 = vmul.f32 %v658, %v674
    %v691 = vmul.f32 %v659, %v675
    %v692 = vmul.f32 %v660, %v676
    %v693 = vmul.f32 %v661, %v677
    %v694 = vmul.f32 %v662, %v678
    %v695 = vpack.c.bf16 %v680, %v679
    %v696 = vpack.c.bf16 %v682, %v681
    %v697 = vpack.c.bf16 %v684, %v683
    %v698 = vpack.c.bf16 %v686, %v685
    %v699 = vpack.c.bf16 %v688, %v687
    %v700 = vpack.c.bf16 %v690, %v689
    %v701 = vpack.c.bf16 %v692, %v691
    %v702 = vpack.c.bf16 %v694, %v693
    %703 = vst [vmem:[#allocation2 + $0x100] sm:$0xff] %v695
    %704 = vst [vmem:[#allocation2 + $0x108] sm:$0xff] %v696
    %705 = vst [vmem:[#allocation2 + $0x110] sm:$0xff] %v697
    %706 = vst [vmem:[#allocation2 + $0x118] sm:$0xff] %v698
    %707 = vst [vmem:[#allocation2 + $0x120] sm:$0xff] %v699
    %708 = vst [vmem:[#allocation2 + $0x128] sm:$0xff] %v700
    %709 = vst [vmem:[#allocation2 + $0x130] sm:$0xff] %v701
    %710 = vst [vmem:[#allocation2 + $0x138] sm:$0xff] %v702
    %711 = vrot.lane.b32.xlu0 %v197, 127
    %v712 = vpop.permute.xlu0 %711
    %713 = vrot.lane.b32.xlu0 %v198, 127
    %v714 = vpop.permute.xlu0 %713
    %715 = vrot.lane.b32.xlu0 %v199, 127
    %v716 = vpop.permute.xlu0 %715
    %717 = vrot.lane.b32.xlu0 %v175, 127
    %v718 = vpop.permute.xlu0 %717
    %719 = vrot.lane.b32.xlu0 %v200, 127
    %v720 = vpop.permute.xlu0 %719
    %721 = vrot.lane.b32.xlu0 %v201, 127
    %v722 = vpop.permute.xlu0 %721
    %723 = vrot.lane.b32.xlu0 %v202, 127
    %v724 = vpop.permute.xlu0 %723
    %725 = vrot.lane.b32.xlu0 %v176, 127
    %v726 = vpop.permute.xlu0 %725
    %vm727 = vcmask 1039360
    %v728 = vsel %vm727, %v712, %v714
    %v729 = vsel %vm727, %v714, %v716
    %v730 = vsel %vm727, %v716, %v718
    %v731 = vsel %vm727, %v720, %v722
    %v732 = vsel %vm727, %v722, %v724
    %v733 = vsel %vm727, %v724, %v726
    %vm740 = vcmask 1039360
    %v743 = vsel %vm740, %v718, %v712
    %v747 = vsel %vm740, %v726, %v720
    %v749 = vld [vmem:[#allocation3 + $0x140] sm:$0xff]
    %v750 = vld [vmem:[#allocation3 + $0x148] sm:$0xff]
    %v751 = vld [vmem:[#allocation3 + $0x150] sm:$0xff]
    %v752 = vld [vmem:[#allocation3 + $0x158] sm:$0xff]
    %v753 = vld [vmem:[#allocation3 + $0x160] sm:$0xff]
    %v754 = vld [vmem:[#allocation3 + $0x168] sm:$0xff]
    %v755 = vld [vmem:[#allocation3 + $0x170] sm:$0xff]
    %v756 = vld [vmem:[#allocation3 + $0x178] sm:$0xff]
    %v757 = vunpack.c.l.bf16 %v728
    %v758 = vunpack.c.l.bf16 %v729
    %v759 = vunpack.c.l.bf16 %v730
    %v760 = vunpack.c.l.bf16 %v743
    %v761 = vunpack.c.h.bf16 %v728
    %v762 = vunpack.c.h.bf16 %v729
    %v763 = vunpack.c.h.bf16 %v730
    %v764 = vunpack.c.h.bf16 %v743
    %v765 = vunpack.c.l.bf16 %v731
    %v766 = vunpack.c.l.bf16 %v732
    %v767 = vunpack.c.l.bf16 %v733
    %v768 = vunpack.c.l.bf16 %v747
    %v769 = vunpack.c.h.bf16 %v731
    %v770 = vunpack.c.h.bf16 %v732
    %v771 = vunpack.c.h.bf16 %v733
    %v772 = vunpack.c.h.bf16 %v747
    %v773 = vunpack.c.l.bf16 %v749
    %v774 = vunpack.c.h.bf16 %v749
    %v775 = vunpack.c.l.bf16 %v750
    %v776 = vunpack.c.h.bf16 %v750
    %v777 = vunpack.c.l.bf16 %v751
    %v778 = vunpack.c.h.bf16 %v751
    %v779 = vunpack.c.l.bf16 %v752
    %v780 = vunpack.c.h.bf16 %v752
    %v781 = vunpack.c.l.bf16 %v753
    %v782 = vunpack.c.h.bf16 %v753
    %v783 = vunpack.c.l.bf16 %v754
    %v784 = vunpack.c.h.bf16 %v754
    %v785 = vunpack.c.l.bf16 %v755
    %v786 = vunpack.c.h.bf16 %v755
    %v787 = vunpack.c.l.bf16 %v756
    %v788 = vunpack.c.h.bf16 %v756
    %v789 = vmul.f32 %v757, %v773
    %v790 = vmul.f32 %v758, %v774
    %v791 = vmul.f32 %v759, %v775
    %v792 = vmul.f32 %v760, %v776
    %v793 = vmul.f32 %v761, %v777
    %v794 = vmul.f32 %v762, %v778
    %v795 = vmul.f32 %v763, %v779
    %v796 = vmul.f32 %v764, %v780
    %v797 = vmul.f32 %v765, %v781
    %v798 = vmul.f32 %v766, %v782
    %v799 = vmul.f32 %v767, %v783
    %v800 = vmul.f32 %v768, %v784
    %v801 = vmul.f32 %v769, %v785
    %v802 = vmul.f32 %v770, %v786
    %v803 = vmul.f32 %v771, %v787
    %v804 = vmul.f32 %v772, %v788
    %v805 = vpack.c.bf16 %v790, %v789
    %v806 = vpack.c.bf16 %v792, %v791
    %v807 = vpack.c.bf16 %v794, %v793
    %v808 = vpack.c.bf16 %v796, %v795
    %v809 = vpack.c.bf16 %v798, %v797
    %v810 = vpack.c.bf16 %v800, %v799
    %v811 = vpack.c.bf16 %v802, %v801
    %v812 = vpack.c.bf16 %v804, %v803
    %813 = vst [vmem:[#allocation2 + $0x140] sm:$0xff] %v805
    %814 = vst [vmem:[#allocation2 + $0x148] sm:$0xff] %v806
    %815 = vst [vmem:[#allocation2 + $0x150] sm:$0xff] %v807
    %816 = vst [vmem:[#allocation2 + $0x158] sm:$0xff] %v808
    %817 = vst [vmem:[#allocation2 + $0x160] sm:$0xff] %v809
    %818 = vst [vmem:[#allocation2 + $0x168] sm:$0xff] %v810
    %819 = vst [vmem:[#allocation2 + $0x170] sm:$0xff] %v811
    %820 = vst [vmem:[#allocation2 + $0x178] sm:$0xff] %v812
    %821 = vrot.lane.b32.xlu0 %v197, 113
    %v822 = vpop.permute.xlu0 %821
    %823 = vrot.lane.b32.xlu0 %v198, 113
    %v824 = vpop.permute.xlu0 %823
    %825 = vrot.lane.b32.xlu0 %v199, 113
    %v826 = vpop.permute.xlu0 %825
    %827 = vrot.lane.b32.xlu0 %v175, 113
    %v828 = vpop.permute.xlu0 %827
    %829 = vrot.lane.b32.xlu0 %v200, 113
    %v830 = vpop.permute.xlu0 %829
    %831 = vrot.lane.b32.xlu0 %v201, 113
    %v832 = vpop.permute.xlu0 %831
    %833 = vrot.lane.b32.xlu0 %v202, 113
    %v834 = vpop.permute.xlu0 %833
    %835 = vrot.lane.b32.xlu0 %v176, 113
    %v836 = vpop.permute.xlu0 %835
    %vm837 = vcmask 924672
    %v838 = vsel %vm837, %v822, %v824
    %v839 = vsel %vm837, %v824, %v826
    %v840 = vsel %vm837, %v826, %v828
    %v841 = vsel %vm837, %v830, %v832
    %v842 = vsel %vm837, %v832, %v834
    %v843 = vsel %vm837, %v834, %v836
    %vm850 = vcmask 924672
    %v853 = vsel %vm850, %v828, %v822
    %v857 = vsel %vm850, %v836, %v830
    %v859 = vld [vmem:[#allocation3 + $0x180] sm:$0xff]
    %v860 = vld [vmem:[#allocation3 + $0x188] sm:$0xff]
    %v861 = vld [vmem:[#allocation3 + $0x190] sm:$0xff]
    %v862 = vld [vmem:[#allocation3 + $0x198] sm:$0xff]
    %v863 = vld [vmem:[#allocation3 + $0x1a0] sm:$0xff]
    %v864 = vld [vmem:[#allocation3 + $0x1a8] sm:$0xff]
    %v865 = vld [vmem:[#allocation3 + $0x1b0] sm:$0xff]
    %v866 = vld [vmem:[#allocation3 + $0x1b8] sm:$0xff]
    %v867 = vunpack.c.l.bf16 %v838
    %v868 = vunpack.c.l.bf16 %v839
    %v869 = vunpack.c.l.bf16 %v840
    %v870 = vunpack.c.l.bf16 %v853
    %v871 = vunpack.c.h.bf16 %v838
    %v872 = vunpack.c.h.bf16 %v839
    %v873 = vunpack.c.h.bf16 %v840
    %v874 = vunpack.c.h.bf16 %v853
    %v875 = vunpack.c.l.bf16 %v841
    %v876 = vunpack.c.l.bf16 %v842
    %v877 = vunpack.c.l.bf16 %v843
    %v878 = vunpack.c.l.bf16 %v857
    %v879 = vunpack.c.h.bf16 %v841
    %v880 = vunpack.c.h.bf16 %v842
    %v881 = vunpack.c.h.bf16 %v843
    %v882 = vunpack.c.h.bf16 %v857
    %v883 = vunpack.c.l.bf16 %v859
    %v884 = vunpack.c.h.bf16 %v859
    %v885 = vunpack.c.l.bf16 %v860
    %v886 = vunpack.c.h.bf16 %v860
    %v887 = vunpack.c.l.bf16 %v861
    %v888 = vunpack.c.h.bf16 %v861
    %v889 = vunpack.c.l.bf16 %v862
    %v890 = vunpack.c.h.bf16 %v862
    %v891 = vunpack.c.l.bf16 %v863
    %v892 = vunpack.c.h.bf16 %v863
    %v893 = vunpack.c.l.bf16 %v864
    %v894 = vunpack.c.h.bf16 %v864
    %v895 = vunpack.c.l.bf16 %v865
    %v896 = vunpack.c.h.bf16 %v865
    %v897 = vunpack.c.l.bf16 %v866
    %v898 = vunpack.c.h.bf16 %v866
    %v899 = vmul.f32 %v867, %v883
    %v900 = vmul.f32 %v868, %v884
    %v901 = vmul.f32 %v869, %v885
    %v902 = vmul.f32 %v870, %v886
    %v903 = vmul.f32 %v871, %v887
    %v904 = vmul.f32 %v872, %v888
    %v905 = vmul.f32 %v873, %v889
    %v906 = vmul.f32 %v874, %v890
    %v907 = vmul.f32 %v875, %v891
    %v908 = vmul.f32 %v876, %v892
    %v909 = vmul.f32 %v877, %v893
    %v910 = vmul.f32 %v878, %v894
    %v911 = vmul.f32 %v879, %v895
    %v912 = vmul.f32 %v880, %v896
    %v913 = vmul.f32 %v881, %v897
    %v914 = vmul.f32 %v882, %v898
    %v915 = vpack.c.bf16 %v900, %v899
    %v916 = vpack.c.bf16 %v902, %v901
    %v917 = vpack.c.bf16 %v904, %v903
    %v918 = vpack.c.bf16 %v906, %v905
    %v919 = vpack.c.bf16 %v908, %v907
    %v920 = vpack.c.bf16 %v910, %v909
    %v921 = vpack.c.bf16 %v912, %v911
    %v922 = vpack.c.bf16 %v914, %v913
    %923 = vst [vmem:[#allocation2 + $0x180] sm:$0xff] %v915
    %924 = vst [vmem:[#allocation2 + $0x188] sm:$0xff] %v916
    %925 = vst [vmem:[#allocation2 + $0x190] sm:$0xff] %v917
    %926 = vst [vmem:[#allocation2 + $0x198] sm:$0xff] %v918
    %927 = vst [vmem:[#allocation2 + $0x1a0] sm:$0xff] %v919
    %928 = vst [vmem:[#allocation2 + $0x1a8] sm:$0xff] %v920
    %929 = vst [vmem:[#allocation2 + $0x1b0] sm:$0xff] %v921
    %930 = vst [vmem:[#allocation2 + $0x1b8] sm:$0xff] %v922
    %931 = vrot.lane.b32.xlu0 %v197, 112
    %v932 = vpop.permute.xlu0 %931
    %933 = vrot.lane.b32.xlu0 %v198, 112
    %v934 = vpop.permute.xlu0 %933
    %935 = vrot.lane.b32.xlu0 %v199, 112
    %v936 = vpop.permute.xlu0 %935
    %937 = vrot.lane.b32.xlu0 %v175, 112
    %v938 = vpop.permute.xlu0 %937
    %939 = vrot.lane.b32.xlu0 %v200, 112
    %v940 = vpop.permute.xlu0 %939
    %941 = vrot.lane.b32.xlu0 %v201, 112
    %v942 = vpop.permute.xlu0 %941
    %943 = vrot.lane.b32.xlu0 %v202, 112
    %v944 = vpop.permute.xlu0 %943
    %945 = vrot.lane.b32.xlu0 %v176, 112
    %v946 = vpop.permute.xlu0 %945
    %vm947 = vcmask 916480
    %v948 = vsel %vm947, %v932, %v934
    %v949 = vsel %vm947, %v934, %v936
    %v950 = vsel %vm947, %v936, %v938
    %v951 = vsel %vm947, %v940, %v942
    %v952 = vsel %vm947, %v942, %v944
    %v953 = vsel %vm947, %v944, %v946
    %vm960 = vcmask 916480
    %v963 = vsel %vm960, %v938, %v932
    %v967 = vsel %vm960, %v946, %v940
    %v969 = vld [vmem:[#allocation3 + $0x1c0] sm:$0xff]
    %v970 = vld [vmem:[#allocation3 + $0x1c8] sm:$0xff]
    %v971 = vld [vmem:[#allocation3 + $0x1d0] sm:$0xff]
    %v972 = vld [vmem:[#allocation3 + $0x1d8] sm:$0xff]
    %v973 = vld [vmem:[#allocation3 + $0x1e0] sm:$0xff]
    %v974 = vld [vmem:[#allocation3 + $0x1e8] sm:$0xff]
    %v975 = vld [vmem:[#allocation3 + $0x1f0] sm:$0xff]
    %v976 = vld [vmem:[#allocation3 + $0x1f8] sm:$0xff]
    %v977 = vunpack.c.l.bf16 %v948
    %v978 = vunpack.c.l.bf16 %v949
    %v979 = vunpack.c.l.bf16 %v950
    %v980 = vunpack.c.l.bf16 %v963
    %v981 = vunpack.c.h.bf16 %v948
    %v982 = vunpack.c.h.bf16 %v949
    %v983 = vunpack.c.h.bf16 %v950
    %v984 = vunpack.c.h.bf16 %v963
    %v985 = vunpack.c.l.bf16 %v951
    %v986 = vunpack.c.l.bf16 %v952
    %v987 = vunpack.c.l.bf16 %v953
    %v988 = vunpack.c.l.bf16 %v967
    %v989 = vunpack.c.h.bf16 %v951
    %v990 = vunpack.c.h.bf16 %v952
    %v991 = vunpack.c.h.bf16 %v953
    %v992 = vunpack.c.h.bf16 %v967
    %v993 = vunpack.c.l.bf16 %v969
    %v994 = vunpack.c.h.bf16 %v969
    %v995 = vunpack.c.l.bf16 %v970
    %v996 = vunpack.c.h.bf16 %v970
    %v997 = vunpack.c.l.bf16 %v971
    %v998 = vunpack.c.h.bf16 %v971
    %v999 = vunpack.c.l.bf16 %v972
    %v1000 = vunpack.c.h.bf16 %v972
    %v1001 = vunpack.c.l.bf16 %v973
    %v1002 = vunpack.c.h.bf16 %v973
    %v1003 = vunpack.c.l.bf16 %v974
    %v1004 = vunpack.c.h.bf16 %v974
    %v1005 = vunpack.c.l.bf16 %v975
    %v1006 = vunpack.c.h.bf16 %v975
    %v1007 = vunpack.c.l.bf16 %v976
    %v1008 = vunpack.c.h.bf16 %v976
    %v1009 = vmul.f32 %v977, %v993
    %v1010 = vmul.f32 %v978, %v994
    %v1011 = vmul.f32 %v979, %v995
    %v1012 = vmul.f32 %v980, %v996
    %v1013 = vmul.f32 %v981, %v997
    %v1014 = vmul.f32 %v982, %v998
    %v1015 = vmul.f32 %v983, %v999
    %v1016 = vmul.f32 %v984, %v1000
    %v1017 = vmul.f32 %v985, %v1001
    %v1018 = vmul.f32 %v986, %v1002
    %v1019 = vmul.f32 %v987, %v1003
    %v1020 = vmul.f32 %v988, %v1004
    %v1021 = vmul.f32 %v989, %v1005
    %v1022 = vmul.f32 %v990, %v1006
    %v1023 = vmul.f32 %v991, %v1007
    %v1024 = vmul.f32 %v992, %v1008
    %v1025 = vpack.c.bf16 %v1010, %v1009
    %v1026 = vpack.c.bf16 %v1012, %v1011
    %v1027 = vpack.c.bf16 %v1014, %v1013
    %v1028 = vpack.c.bf16 %v1016, %v1015
    %v1029 = vpack.c.bf16 %v1018, %v1017
    %v1030 = vpack.c.bf16 %v1020, %v1019
    %v1031 = vpack.c.bf16 %v1022, %v1021
    %v1032 = vpack.c.bf16 %v1024, %v1023
    %1033 = vst [vmem:[#allocation2 + $0x1c0] sm:$0xff] %v1025
    %1034 = vst [vmem:[#allocation2 + $0x1c8] sm:$0xff] %v1026
    %1035 = vst [vmem:[#allocation2 + $0x1d0] sm:$0xff] %v1027
    %1036 = vst [vmem:[#allocation2 + $0x1d8] sm:$0xff] %v1028
    %1037 = vst [vmem:[#allocation2 + $0x1e0] sm:$0xff] %v1029
    %1038 = vst [vmem:[#allocation2 + $0x1e8] sm:$0xff] %v1030
    %1039 = vst [vmem:[#allocation2 + $0x1f0] sm:$0xff] %v1031
    %1040 = vst [vmem:[#allocation2 + $0x1f8] sm:$0xff] %v1032
    %1041 = vrot.lane.b32.xlu0 %v197, 111
    %v1042 = vpop.permute.xlu0 %1041
    %1043 = vrot.lane.b32.xlu0 %v198, 111
    %v1044 = vpop.permute.xlu0 %1043
    %1045 = vrot.lane.b32.xlu0 %v199, 111
    %v1046 = vpop.permute.xlu0 %1045
    %1047 = vrot.lane.b32.xlu0 %v175, 111
    %v1048 = vpop.permute.xlu0 %1047
    %1049 = vrot.lane.b32.xlu0 %v200, 111
    %v1050 = vpop.permute.xlu0 %1049
    %1051 = vrot.lane.b32.xlu0 %v201, 111
    %v1052 = vpop.permute.xlu0 %1051
    %1053 = vrot.lane.b32.xlu0 %v202, 111
    %v1054 = vpop.permute.xlu0 %1053
    %1055 = vrot.lane.b32.xlu0 %v176, 111
    %v1056 = vpop.permute.xlu0 %1055
    %vm1057 = vcmask 908288
    %v1058 = vsel %vm1057, %v1042, %v1044
    %v1059 = vsel %vm1057, %v1044, %v1046
    %v1060 = vsel %vm1057, %v1046, %v1048
    %v1061 = vsel %vm1057, %v1050, %v1052
    %v1062 = vsel %vm1057, %v1052, %v1054
    %v1063 = vsel %vm1057, %v1054, %v1056
    %vm1070 = vcmask 908288
    %v1073 = vsel %vm1070, %v1048, %v1042
    %v1077 = vsel %vm1070, %v1056, %v1050
    %v1079 = vld [vmem:[#allocation3 + $0x200] sm:$0xff]
    %v1080 = vld [vmem:[#allocation3 + $0x208] sm:$0xff]
    %v1081 = vld [vmem:[#allocation3 + $0x210] sm:$0xff]
    %v1082 = vld [vmem:[#allocation3 + $0x218] sm:$0xff]
    %v1083 = vld [vmem:[#allocation3 + $0x220] sm:$0xff]
    %v1084 = vld [vmem:[#allocation3 + $0x228] sm:$0xff]
    %v1085 = vld [vmem:[#allocation3 + $0x230] sm:$0xff]
    %v1086 = vld [vmem:[#allocation3 + $0x238] sm:$0xff]
    %v1087 = vunpack.c.l.bf16 %v1058
    %v1088 = vunpack.c.l.bf16 %v1059
    %v1089 = vunpack.c.l.bf16 %v1060
    %v1090 = vunpack.c.l.bf16 %v1073
    %v1091 = vunpack.c.h.bf16 %v1058
    %v1092 = vunpack.c.h.bf16 %v1059
    %v1093 = vunpack.c.h.bf16 %v1060
    %v1094 = vunpack.c.h.bf16 %v1073
    %v1095 = vunpack.c.l.bf16 %v1061
    %v1096 = vunpack.c.l.bf16 %v1062
    %v1097 = vunpack.c.l.bf16 %v1063
    %v1098 = vunpack.c.l.bf16 %v1077
    %v1099 = vunpack.c.h.bf16 %v1061
    %v1100 = vunpack.c.h.bf16 %v1062
    %v1101 = vunpack.c.h.bf16 %v1063
    %v1102 = vunpack.c.h.bf16 %v1077
    %v1103 = vunpack.c.l.bf16 %v1079
    %v1104 = vunpack.c.h.bf16 %v1079
    %v1105 = vunpack.c.l.bf16 %v1080
    %v1106 = vunpack.c.h.bf16 %v1080
    %v1107 = vunpack.c.l.bf16 %v1081
    %v1108 = vunpack.c.h.bf16 %v1081
    %v1109 = vunpack.c.l.bf16 %v1082
    %v1110 = vunpack.c.h.bf16 %v1082
    %v1111 = vunpack.c.l.bf16 %v1083
    %v1112 = vunpack.c.h.bf16 %v1083
    %v1113 = vunpack.c.l.bf16 %v1084
    %v1114 = vunpack.c.h.bf16 %v1084
    %v1115 = vunpack.c.l.bf16 %v1085
    %v1116 = vunpack.c.h.bf16 %v1085
    %v1117 = vunpack.c.l.bf16 %v1086
    %v1118 = vunpack.c.h.bf16 %v1086
    %v1119 = vmul.f32 %v1087, %v1103
    %v1120 = vmul.f32 %v1088, %v1104
    %v1121 = vmul.f32 %v1089, %v1105
    %v1122 = vmul.f32 %v1090, %v1106
    %v1123 = vmul.f32 %v1091, %v1107
    %v1124 = vmul.f32 %v1092, %v1108
    %v1125 = vmul.f32 %v1093, %v1109
    %v1126 = vmul.f32 %v1094, %v1110
    %v1127 = vmul.f32 %v1095, %v1111
    %v1128 = vmul.f32 %v1096, %v1112
    %v1129 = vmul.f32 %v1097, %v1113
    %v1130 = vmul.f32 %v1098, %v1114
    %v1131 = vmul.f32 %v1099, %v1115
    %v1132 = vmul.f32 %v1100, %v1116
    %v1133 = vmul.f32 %v1101, %v1117
    %v1134 = vmul.f32 %v1102, %v1118
    %v1135 = vpack.c.bf16 %v1120, %v1119
    %v1136 = vpack.c.bf16 %v1122, %v1121
    %v1137 = vpack.c.bf16 %v1124, %v1123
    %v1138 = vpack.c.bf16 %v1126, %v1125
    %v1139 = vpack.c.bf16 %v1128, %v1127
    %v1140 = vpack.c.bf16 %v1130, %v1129
    %v1141 = vpack.c.bf16 %v1132, %v1131
    %v1142 = vpack.c.bf16 %v1134, %v1133
    %1143 = vst [vmem:[#allocation2 + $0x200] sm:$0xff] %v1135
    %1144 = vst [vmem:[#allocation2 + $0x208] sm:$0xff] %v1136
    %1145 = vst [vmem:[#allocation2 + $0x210] sm:$0xff] %v1137
    %1146 = vst [vmem:[#allocation2 + $0x218] sm:$0xff] %v1138
    %1147 = vst [vmem:[#allocation2 + $0x220] sm:$0xff] %v1139
    %1148 = vst [vmem:[#allocation2 + $0x228] sm:$0xff] %v1140
    %1149 = vst [vmem:[#allocation2 + $0x230] sm:$0xff] %v1141
    %1150 = vst [vmem:[#allocation2 + $0x238] sm:$0xff] %v1142
    %v1151 = vld [vmem:[%s2] sm:$0xff]
    %v1152 = vld [vmem:[%s2 + $0x8] sm:$0xf]
    %v1153 = vld [vmem:[%s2 + $0xc] sm:$0xff]
    %v1154 = vld [vmem:[%s2 + $0x14] sm:$0xf]
    %v1155 = vld [vmem:[%s2 + $0x18] sm:$0xff]
    %v1156 = vld [vmem:[%s2 + $0x20] sm:$0xf]
    %v1157 = vld [vmem:[%s2 + $0x24] sm:$0xff]
    %v1158 = vld [vmem:[%s2 + $0x2c] sm:$0xf]
    %v1159 = vld [vmem:[#allocation2] sm:$0xff]
    %v1160 = vld [vmem:[#allocation2 + $0x8] sm:$0xff]
    %v1161 = vld [vmem:[#allocation2 + $0x10] sm:$0xff]
    %v1162 = vld [vmem:[#allocation2 + $0x18] sm:$0xff]
    %v1163 = vld [vmem:[#allocation2 + $0x20] sm:$0xff]
    %v1164 = vld [vmem:[#allocation2 + $0x28] sm:$0xff]
    %v1165 = vld [vmem:[#allocation2 + $0x30] sm:$0xff]
    %v1166 = vld [vmem:[#allocation2 + $0x38] sm:$0xff]
    %v1167 = vld [vmem:[#allocation2 + $0x40] sm:$0xff]
    %v1168 = vld [vmem:[#allocation2 + $0x48] sm:$0xff]
    %v1169 = vld [vmem:[#allocation2 + $0x50] sm:$0xff]
    %v1170 = vld [vmem:[#allocation2 + $0x58] sm:$0xff]
    %v1171 = vld [vmem:[#allocation2 + $0x60] sm:$0xff]
    %v1172 = vld [vmem:[#allocation2 + $0x68] sm:$0xff]
    %v1173 = vld [vmem:[#allocation2 + $0x70] sm:$0xff]
    %v1174 = vld [vmem:[#allocation2 + $0x78] sm:$0xff]
    %v1175 = vld [vmem:[#allocation2 + $0x80] sm:$0xff]
    %v1176 = vld [vmem:[#allocation2 + $0x88] sm:$0xff]
    %v1177 = vld [vmem:[#allocation2 + $0x90] sm:$0xff]
    %v1178 = vld [vmem:[#allocation2 + $0x98] sm:$0xff]
    %v1179 = vld [vmem:[#allocation2 + $0xa0] sm:$0xff]
    %v1180 = vld [vmem:[#allocation2 + $0xa8] sm:$0xff]
    %v1181 = vld [vmem:[#allocation2 + $0xb0] sm:$0xff]
    %v1182 = vld [vmem:[#allocation2 + $0xb8] sm:$0xff]
    %v1183 = vld [vmem:[#allocation2 + $0xc0] sm:$0xff]
    %v1184 = vld [vmem:[#allocation2 + $0xc8] sm:$0xff]
    %v1185 = vld [vmem:[#allocation2 + $0xd0] sm:$0xff]
    %v1186 = vld [vmem:[#allocation2 + $0xd8] sm:$0xff]
    %v1187 = vld [vmem:[#allocation2 + $0xe0] sm:$0xff]
    %v1188 = vld [vmem:[#allocation2 + $0xe8] sm:$0xff]
    %v1189 = vld [vmem:[#allocation2 + $0xf0] sm:$0xff]
    %v1190 = vld [vmem:[#allocation2 + $0xf8] sm:$0xff]
    %v1191 = vld [vmem:[#allocation2 + $0x100] sm:$0xff]
    %v1192 = vld [vmem:[#allocation2 + $0x108] sm:$0xff]
    %v1193 = vld [vmem:[#allocation2 + $0x110] sm:$0xff]
    %v1194 = vld [vmem:[#allocation2 + $0x118] sm:$0xff]
    %v1195 = vld [vmem:[#allocation2 + $0x120] sm:$0xff]
    %v1196 = vld [vmem:[#allocation2 + $0x128] sm:$0xff]
    %v1197 = vld [vmem:[#allocation2 + $0x130] sm:$0xff]
    %v1198 = vld [vmem:[#allocation2 + $0x138] sm:$0xff]
    %v1199 = vld [vmem:[#allocation2 + $0x140] sm:$0xff]
    %v1200 = vld [vmem:[#allocation2 + $0x148] sm:$0xff]
    %v1201 = vld [vmem:[#allocation2 + $0x150] sm:$0xff]
    %v1202 = vld [vmem:[#allocation2 + $0x158] sm:$0xff]
    %v1203 = vld [vmem:[#allocation2 + $0x160] sm:$0xff]
    %v1204 = vld [vmem:[#allocation2 + $0x168] sm:$0xff]
    %v1205 = vld [vmem:[#allocation2 + $0x170] sm:$0xff]
    %v1206 = vld [vmem:[#allocation2 + $0x178] sm:$0xff]
    %v1207 = vld [vmem:[#allocation2 + $0x180] sm:$0xff]
    %v1208 = vld [vmem:[#allocation2 + $0x188] sm:$0xff]
    %v1209 = vld [vmem:[#allocation2 + $0x190] sm:$0xff]
    %v1210 = vld [vmem:[#allocation2 + $0x198] sm:$0xff]
    %v1211 = vld [vmem:[#allocation2 + $0x1a0] sm:$0xff]
    %v1212 = vld [vmem:[#allocation2 + $0x1a8] sm:$0xff]
    %v1213 = vld [vmem:[#allocation2 + $0x1b0] sm:$0xff]
    %v1214 = vld [vmem:[#allocation2 + $0x1b8] sm:$0xff]
    %v1215 = vld [vmem:[#allocation2 + $0x1c0] sm:$0xff]
    %v1216 = vld [vmem:[#allocation2 + $0x1c8] sm:$0xff]
    %v1217 = vld [vmem:[#allocation2 + $0x1d0] sm:$0xff]
    %v1218 = vld [vmem:[#allocation2 + $0x1d8] sm:$0xff]
    %v1219 = vld [vmem:[#allocation2 + $0x1e0] sm:$0xff]
    %v1220 = vld [vmem:[#allocation2 + $0x1e8] sm:$0xff]
    %v1221 = vld [vmem:[#allocation2 + $0x1f0] sm:$0xff]
    %v1222 = vld [vmem:[#allocation2 + $0x1f8] sm:$0xff]
    %v1223 = vld [vmem:[#allocation2 + $0x200] sm:$0xff]
    %v1224 = vld [vmem:[#allocation2 + $0x208] sm:$0xff]
    %v1225 = vld [vmem:[#allocation2 + $0x210] sm:$0xff]
    %v1226 = vld [vmem:[#allocation2 + $0x218] sm:$0xff]
    %v1227 = vld [vmem:[#allocation2 + $0x220] sm:$0xff]
    %v1228 = vld [vmem:[#allocation2 + $0x228] sm:$0xff]
    %v1229 = vld [vmem:[#allocation2 + $0x230] sm:$0xff]
    %v1230 = vld [vmem:[#allocation2 + $0x238] sm:$0xff]
    %v1231 = vld [vmem:[%s3] sm:$0xff]
    %v1232 = vld [vmem:[%s3 + $0x8] sm:$0xff]
    %v1233 = vld [vmem:[%s3 + $0x10] sm:$0xff]
    %v1234 = vld [vmem:[%s3 + $0x18] sm:$0xff]
    %1236 = vset.pattern.permute.xlu0 0
    %1237 = vperm.xlu0 %1236, %v1231
    %v1238 = vpop.permute.xlu0 %1237
    %1241 = vset.pattern.permute.xlu0 0
    %1242 = vperm.xlu0 %1241, %v1232
    %v1243 = vpop.permute.xlu0 %1242
    %1246 = vset.pattern.permute.xlu0 0
    %1247 = vperm.xlu0 %1246, %v1233
    %v1248 = vpop.permute.xlu0 %1247
    %1251 = vset.pattern.permute.xlu0 0
    %1252 = vperm.xlu0 %1251, %v1234
    %v1253 = vpop.permute.xlu0 %1252
    %v1263 = vunpack.c.l.b16 %v1151
    %v1264 = vunpack.c.h.b16 %v1151
    %v1265 = vunpack.c.l.b16 %v1152
    %v1266 = vunpack.c.l.b16 %v1153
    %v1267 = vunpack.c.h.b16 %v1153
    %v1268 = vunpack.c.l.b16 %v1154
    %v1269 = vunpack.c.l.b16 %v1155
    %v1270 = vunpack.c.h.b16 %v1155
    %v1271 = vunpack.c.l.b16 %v1156
    %v1272 = vunpack.c.l.b16 %v1157
    %v1273 = vunpack.c.h.b16 %v1157
    %v1274 = vunpack.c.l.b16 %v1158
    %v1275 = vpack.c.b16 %v1266, %v1263
    %v1276 = vpack.c.b16 %v1267, %v1264
    %v1277 = vpack.c.b16 %v1268, %v1265
    %v1278 = vpack.c.b16 %v1272, %v1269
    %v1279 = vpack.c.b16 %v1273, %v1270
    %v1280 = vpack.c.b16 %v1274, %v1271
    %v1357 = vunpack.c.l.b16 %v1159
    %v1358 = vunpack.c.h.b16 %v1159
    %v1359 = vunpack.c.l.b16 %v1160
    %v1360 = vunpack.c.h.b16 %v1160
    %v1361 = vunpack.c.l.b16 %v1161
    %v1362 = vunpack.c.h.b16 %v1161
    %v1363 = vunpack.c.l.b16 %v1162
    %v1364 = vunpack.c.h.b16 %v1162
    %v1365 = vunpack.c.l.b16 %v1163
    %v1366 = vunpack.c.h.b16 %v1163
    %v1367 = vunpack.c.l.b16 %v1164
    %v1368 = vunpack.c.h.b16 %v1164
    %v1369 = vunpack.c.l.b16 %v1165
    %v1370 = vunpack.c.h.b16 %v1165
    %v1371 = vunpack.c.l.b16 %v1166
    %v1372 = vunpack.c.h.b16 %v1166
    %v1373 = vunpack.c.l.b16 %v1167
    %v1374 = vunpack.c.h.b16 %v1167
    %v1375 = vunpack.c.l.b16 %v1168
    %v1376 = vunpack.c.h.b16 %v1168
    %v1377 = vunpack.c.l.b16 %v1169
    %v1378 = vunpack.c.h.b16 %v1169
    %v1379 = vunpack.c.l.b16 %v1170
    %v1380 = vunpack.c.h.b16 %v1170
    %v1381 = vunpack.c.l.b16 %v1171
    %v1382 = vunpack.c.h.b16 %v1171
    %v1383 = vunpack.c.l.b16 %v1172
    %v1384 = vunpack.c.h.b16 %v1172
    %v1385 = vunpack.c.l.b16 %v1173
    %v1386 = vunpack.c.h.b16 %v1173
    %v1387 = vunpack.c.l.b16 %v1174
    %v1388 = vunpack.c.h.b16 %v1174
    %v1389 = vunpack.c.l.b16 %v1175
    %v1390 = vunpack.c.h.b16 %v1175
    %v1391 = vunpack.c.l.b16 %v1176
    %v1392 = vunpack.c.h.b16 %v1176
    %v1393 = vunpack.c.l.b16 %v1177
    %v1394 = vunpack.c.h.b16 %v1177
    %v1395 = vunpack.c.l.b16 %v1178
    %v1396 = vunpack.c.h.b16 %v1178
    %v1397 = vunpack.c.l.b16 %v1179
    %v1398 = vunpack.c.h.b16 %v1179
    %v1399 = vunpack.c.l.b16 %v1180
    %v1400 = vunpack.c.h.b16 %v1180
    %v1401 = vunpack.c.l.b16 %v1181
    %v1402 = vunpack.c.h.b16 %v1181
    %v1403 = vunpack.c.l.b16 %v1182
    %v1404 = vunpack.c.h.b16 %v1182
    %v1405 = vunpack.c.l.b16 %v1183
    %v1406 = vunpack.c.h.b16 %v1183
    %v1407 = vunpack.c.l.b16 %v1184
    %v1408 = vunpack.c.h.b16 %v1184
    %v1409 = vunpack.c.l.b16 %v1185
    %v1410 = vunpack.c.h.b16 %v1185
    %v1411 = vunpack.c.l.b16 %v1186
    %v1412 = vunpack.c.h.b16 %v1186
    %v1413 = vunpack.c.l.b16 %v1187
    %v1414 = vunpack.c.h.b16 %v1187
    %v1415 = vunpack.c.l.b16 %v1188
    %v1416 = vunpack.c.h.b16 %v1188
    %v1417 = vunpack.c.l.b16 %v1189
    %v1418 = vunpack.c.h.b16 %v1189
    %v1419 = vunpack.c.l.b16 %v1190
    %v1420 = vunpack.c.h.b16 %v1190
    %v1421 = vunpack.c.l.b16 %v1191
    %v1422 = vunpack.c.h.b16 %v1191
    %v1423 = vunpack.c.l.b16 %v1192
    %v1424 = vunpack.c.h.b16 %v1192
    %v1425 = vunpack.c.l.b16 %v1193
    %v1426 = vunpack.c.h.b16 %v1193
    %v1427 = vunpack.c.l.b16 %v1194
    %v1428 = vunpack.c.h.b16 %v1194
    %v1429 = vunpack.c.l.b16 %v1195
    %v1430 = vunpack.c.h.b16 %v1195
    %v1431 = vunpack.c.l.b16 %v1196
    %v1432 = vunpack.c.h.b16 %v1196
    %v1433 = vunpack.c.l.b16 %v1197
    %v1434 = vunpack.c.h.b16 %v1197
    %v1435 = vunpack.c.l.b16 %v1198
    %v1436 = vunpack.c.h.b16 %v1198
    %v1437 = vunpack.c.l.b16 %v1199
    %v1438 = vunpack.c.h.b16 %v1199
    %v1439 = vunpack.c.l.b16 %v1200
    %v1440 = vunpack.c.h.b16 %v1200
    %v1441 = vunpack.c.l.b16 %v1201
    %v1442 = vunpack.c.h.b16 %v1201
    %v1443 = vunpack.c.l.b16 %v1202
    %v1444 = vunpack.c.h.b16 %v1202
    %v1445 = vunpack.c.l.b16 %v1203
    %v1446 = vunpack.c.h.b16 %v1203
    %v1447 = vunpack.c.l.b16 %v1204
    %v1448 = vunpack.c.h.b16 %v1204
    %v1449 = vunpack.c.l.b16 %v1205
    %v1450 = vunpack.c.h.b16 %v1205
    %v1451 = vunpack.c.l.b16 %v1206
    %v1452 = vunpack.c.h.b16 %v1206
    %v1453 = vunpack.c.l.b16 %v1207
    %v1454 = vunpack.c.h.b16 %v1207
    %v1455 = vunpack.c.l.b16 %v1208
    %v1456 = vunpack.c.h.b16 %v1208
    %v1457 = vunpack.c.l.b16 %v1209
    %v1458 = vunpack.c.h.b16 %v1209
    %v1459 = vunpack.c.l.b16 %v1210
    %v1460 = vunpack.c.h.b16 %v1210
    %v1461 = vunpack.c.l.b16 %v1211
    %v1462 = vunpack.c.h.b16 %v1211
    %v1463 = vunpack.c.l.b16 %v1212
    %v1464 = vunpack.c.h.b16 %v1212
    %v1465 = vunpack.c.l.b16 %v1213
    %v1466 = vunpack.c.h.b16 %v1213
    %v1467 = vunpack.c.l.b16 %v1214
    %v1468 = vunpack.c.h.b16 %v1214
    %v1469 = vunpack.c.l.b16 %v1215
    %v1470 = vunpack.c.h.b16 %v1215
    %v1471 = vunpack.c.l.b16 %v1216
    %v1472 = vunpack.c.h.b16 %v1216
    %v1473 = vunpack.c.l.b16 %v1217
    %v1474 = vunpack.c.h.b16 %v1217
    %v1475 = vunpack.c.l.b16 %v1218
    %v1476 = vunpack.c.h.b16 %v1218
    %v1477 = vunpack.c.l.b16 %v1219
    %v1478 = vunpack.c.h.b16 %v1219
    %v1479 = vunpack.c.l.b16 %v1220
    %v1480 = vunpack.c.h.b16 %v1220
    %v1481 = vunpack.c.l.b16 %v1221
    %v1482 = vunpack.c.h.b16 %v1221
    %v1483 = vunpack.c.l.b16 %v1222
    %v1484 = vunpack.c.h.b16 %v1222
    %v1485 = vunpack.c.l.b16 %v1223
    %v1486 = vunpack.c.h.b16 %v1223
    %v1487 = vunpack.c.l.b16 %v1224
    %v1488 = vunpack.c.h.b16 %v1224
    %v1489 = vunpack.c.l.b16 %v1225
    %v1490 = vunpack.c.h.b16 %v1225
    %v1491 = vunpack.c.l.b16 %v1226
    %v1492 = vunpack.c.h.b16 %v1226
    %v1493 = vunpack.c.l.b16 %v1227
    %v1494 = vunpack.c.h.b16 %v1227
    %v1495 = vunpack.c.l.b16 %v1228
    %v1496 = vunpack.c.h.b16 %v1228
    %v1497 = vunpack.c.l.b16 %v1229
    %v1498 = vunpack.c.h.b16 %v1229
    %v1499 = vunpack.c.l.b16 %v1230
    %v1500 = vunpack.c.h.b16 %v1230
    %v1501 = vpack.c.b16 %v1361, %v1357
    %v1502 = vpack.c.b16 %v1362, %v1358
    %v1503 = vpack.c.b16 %v1363, %v1359
    %v1504 = vpack.c.b16 %v1364, %v1360
    %v1505 = vpack.c.b16 %v1369, %v1365
    %v1506 = vpack.c.b16 %v1370, %v1366
    %v1507 = vpack.c.b16 %v1371, %v1367
    %v1508 = vpack.c.b16 %v1372, %v1368
    %v1509 = vpack.c.b16 %v1377, %v1373
    %v1510 = vpack.c.b16 %v1378, %v1374
    %v1511 = vpack.c.b16 %v1379, %v1375
    %v1512 = vpack.c.b16 %v1380, %v1376
    %v1513 = vpack.c.b16 %v1385, %v1381
    %v1514 = vpack.c.b16 %v1386, %v1382
    %v1515 = vpack.c.b16 %v1387, %v1383
    %v1516 = vpack.c.b16 %v1388, %v1384
    %v1517 = vpack.c.b16 %v1393, %v1389
    %v1518 = vpack.c.b16 %v1394, %v1390
    %v1519 = vpack.c.b16 %v1395, %v1391
    %v1520 = vpack.c.b16 %v1396, %v1392
    %v1521 = vpack.c.b16 %v1401, %v1397
    %v1522 = vpack.c.b16 %v1402, %v1398
    %v1523 = vpack.c.b16 %v1403, %v1399
    %v1524 = vpack.c.b16 %v1404, %v1400
    %v1525 = vpack.c.b16 %v1409, %v1405
    %v1526 = vpack.c.b16 %v1410, %v1406
    %v1527 = vpack.c.b16 %v1411, %v1407
    %v1528 = vpack.c.b16 %v1412, %v1408
    %v1529 = vpack.c.b16 %v1417, %v1413
    %v1530 = vpack.c.b16 %v1418, %v1414
    %v1531 = vpack.c.b16 %v1419, %v1415
    %v1532 = vpack.c.b16 %v1420, %v1416
    %v1533 = vpack.c.b16 %v1425, %v1421
    %v1534 = vpack.c.b16 %v1426, %v1422
    %v1535 = vpack.c.b16 %v1427, %v1423
    %v1536 = vpack.c.b16 %v1428, %v1424
    %v1537 = vpack.c.b16 %v1433, %v1429
    %v1538 = vpack.c.b16 %v1434, %v1430
    %v1539 = vpack.c.b16 %v1435, %v1431
    %v1540 = vpack.c.b16 %v1436, %v1432
    %v1541 = vpack.c.b16 %v1441, %v1437
    %v1542 = vpack.c.b16 %v1442, %v1438
    %v1543 = vpack.c.b16 %v1443, %v1439
    %v1544 = vpack.c.b16 %v1444, %v1440
    %v1545 = vpack.c.b16 %v1449, %v1445
    %v1546 = vpack.c.b16 %v1450, %v1446
    %v1547 = vpack.c.b16 %v1451, %v1447
    %v1548 = vpack.c.b16 %v1452, %v1448
    %v1549 = vpack.c.b16 %v1457, %v1453
    %v1550 = vpack.c.b16 %v1458, %v1454
    %v1551 = vpack.c.b16 %v1459, %v1455
    %v1552 = vpack.c.b16 %v1460, %v1456
    %v1553 = vpack.c.b16 %v1465, %v1461
    %v1554 = vpack.c.b16 %v1466, %v1462
    %v1555 = vpack.c.b16 %v1467, %v1463
    %v1556 = vpack.c.b16 %v1468, %v1464
    %v1557 = vpack.c.b16 %v1473, %v1469
    %v1558 = vpack.c.b16 %v1474, %v1470
    %v1559 = vpack.c.b16 %v1475, %v1471
    %v1560 = vpack.c.b16 %v1476, %v1472
    %v1561 = vpack.c.b16 %v1481, %v1477
    %v1562 = vpack.c.b16 %v1482, %v1478
    %v1563 = vpack.c.b16 %v1483, %v1479
    %v1564 = vpack.c.b16 %v1484, %v1480
    %v1565 = vpack.c.b16 %v1489, %v1485
    %v1566 = vpack.c.b16 %v1490, %v1486
    %v1567 = vpack.c.b16 %v1491, %v1487
    %v1568 = vpack.c.b16 %v1492, %v1488
    %v1569 = vpack.c.b16 %v1497, %v1493
    %v1570 = vpack.c.b16 %v1498, %v1494
    %v1571 = vpack.c.b16 %v1499, %v1495
    %v1572 = vpack.c.b16 %v1500, %v1496
    %vm1645 = vcmask 261120
    %v1647 = vsel %vm1645, %v1277, 0
    %v1650 = vsel %vm1645, %v1280, 0
    %1652 = vmatpush.bf16.msra.mxu0 %v1529
    %1653 = vmatpush.bf16.msra.mxu0 %v1525
    %1654 = vmatpush.bf16.msra.mxu0 %v1521
    %1655 = vmatpush.bf16.msra.mxu0 %v1517
    %1656 = vmatpush.bf16.msra.mxu0 %v1513
    %1657 = vmatpush.bf16.msra.mxu0 %v1509
    %1658 = vmatpush.bf16.msra.mxu0 %v1505
    %1659 = vmatpush.bf16.msra.mxu0 %v1501
    %1660 = vmatmul.bf16.gmra.mxu0 %v1275
    %v1661 = vpop.f32.mrf.mxu0
    %v1662 = vadd.f32 %v1238, %v1661
    %v1663 = vpop.f32.mrf.mxu0
    %v1664 = vadd.f32 %v1243, %v1663
    %1665 = vmatmul.bf16.gmra.mxu0 %v1278
    %v1666 = vpop.f32.mrf.mxu0
    %v1667 = vadd.f32 %v1248, %v1666
    %v1668 = vpop.f32.mrf.mxu0
    %v1669 = vadd.f32 %v1253, %v1668
    %1670 = vdwg.mxu0
    %1671 = vmatpush.bf16.msra.mxu0 %v1561
    %1672 = vmatpush.bf16.msra.mxu0 %v1557
    %1673 = vmatpush.bf16.msra.mxu0 %v1553
    %1674 = vmatpush.bf16.msra.mxu0 %v1549
    %1675 = vmatpush.bf16.msra.mxu0 %v1545
    %1676 = vmatpush.bf16.msra.mxu0 %v1541
    %1677 = vmatpush.bf16.msra.mxu0 %v1537
    %1678 = vmatpush.bf16.msra.mxu0 %v1533
    %1679 = vmatmul.bf16.gmra.mxu0 %v1276
    %v1680 = vpop.f32.mrf.mxu0
    %v1681 = vadd.f32 %v1662, %v1680
    %v1682 = vpop.f32.mrf.mxu0
    %v1683 = vadd.f32 %v1664, %v1682
    %1684 = vmatmul.bf16.gmra.mxu0 %v1279
    %v1685 = vpop.f32.mrf.mxu0
    %v1686 = vadd.f32 %v1667, %v1685
    %v1687 = vpop.f32.mrf.mxu0
    %v1688 = vadd.f32 %v1669, %v1687
    %1689 = vdwg.mxu0
    %1690 = vmatpush.bf16.msra.mxu0 0
    %1691 = vmatpush.bf16.msra.mxu0 0
    %1692 = vmatpush.bf16.msra.mxu0 0
    %1693 = vmatpush.bf16.msra.mxu0 0
    %1694 = vmatpush.bf16.msra.mxu0 0
    %1695 = vmatpush.bf16.msra.mxu0 0
    %1696 = vmatpush.bf16.msra.mxu0 %v1569
    %1697 = vmatpush.bf16.msra.mxu0 %v1565
    %1698 = vmatmul.bf16.gmra.mxu0 %v1647
    %v1699 = vpop.f32.mrf.mxu0
    %v1700 = vadd.f32 %v1681, %v1699
    %v1701 = vpop.f32.mrf.mxu0
    %v1702 = vadd.f32 %v1683, %v1701
    %1703 = vmatmul.bf16.gmra.mxu0 %v1650
    %v1704 = vpop.f32.mrf.mxu0
    %v1705 = vadd.f32 %v1686, %v1704
    %v1706 = vpop.f32.mrf.mxu0
    %v1707 = vadd.f32 %v1688, %v1706
    %1708 = vdwg.mxu0
    %1709 = vmatpush.bf16.msra.mxu0 %v1530
    %1710 = vmatpush.bf16.msra.mxu0 %v1526
    %1711 = vmatpush.bf16.msra.mxu0 %v1522
    %1712 = vmatpush.bf16.msra.mxu0 %v1518
    %1713 = vmatpush.bf16.msra.mxu0 %v1514
    %1714 = vmatpush.bf16.msra.mxu0 %v1510
    %1715 = vmatpush.bf16.msra.mxu0 %v1506
    %1716 = vmatpush.bf16.msra.mxu0 %v1502
    %1717 = vmatmul.bf16.gmra.mxu0 %v1275
    %v1718 = vpop.f32.mrf.mxu0
    %v1719 = vadd.f32 %v1238, %v1718
    %v1720 = vpop.f32.mrf.mxu0
    %v1721 = vadd.f32 %v1243, %v1720
    %1722 = vmatmul.bf16.gmra.mxu0 %v1278
    %v1723 = vpop.f32.mrf.mxu0
    %v1724 = vadd.f32 %v1248, %v1723
    %v1725 = vpop.f32.mrf.mxu0
    %v1726 = vadd.f32 %v1253, %v1725
    %1727 = vdwg.mxu0
    %1728 = vmatpush.bf16.msra.mxu0 %v1562
    %1729 = vmatpush.bf16.msra.mxu0 %v1558
    %1730 = vmatpush.bf16.msra.mxu0 %v1554
    %1731 = vmatpush.bf16.msra.mxu0 %v1550
    %1732 = vmatpush.bf16.msra.mxu0 %v1546
    %1733 = vmatpush.bf16.msra.mxu0 %v1542
    %1734 = vmatpush.bf16.msra.mxu0 %v1538
    %1735 = vmatpush.bf16.msra.mxu0 %v1534
    %1736 = vmatmul.bf16.gmra.mxu0 %v1276
    %v1737 = vpop.f32.mrf.mxu0
    %v1738 = vadd.f32 %v1719, %v1737
    %v1739 = vpop.f32.mrf.mxu0
    %v1740 = vadd.f32 %v1721, %v1739
    %1741 = vmatmul.bf16.gmra.mxu0 %v1279
    %v1742 = vpop.f32.mrf.mxu0
    %v1743 = vadd.f32 %v1724, %v1742
    %v1744 = vpop.f32.mrf.mxu0
    %v1745 = vadd.f32 %v1726, %v1744
    %1746 = vdwg.mxu0
    %1747 = vmatpush.bf16.msra.mxu0 0
    %1748 = vmatpush.bf16.msra.mxu0 0
    %1749 = vmatpush.bf16.msra.mxu0 0
    %1750 = vmatpush.bf16.msra.mxu0 0
    %1751 = vmatpush.bf16.msra.mxu0 0
    %1752 = vmatpush.bf16.msra.mxu0 0
    %1753 = vmatpush.bf16.msra.mxu0 %v1570
    %1754 = vmatpush.bf16.msra.mxu0 %v1566
    %1755 = vmatmul.bf16.gmra.mxu0 %v1647
    %v1756 = vpop.f32.mrf.mxu0
    %v1757 = vadd.f32 %v1738, %v1756
    %v1758 = vpop.f32.mrf.mxu0
    %v1759 = vadd.f32 %v1740, %v1758
    %1760 = vmatmul.bf16.gmra.mxu0 %v1650
    %v1761 = vpop.f32.mrf.mxu0
    %v1762 = vadd.f32 %v1743, %v1761
    %v1763 = vpop.f32.mrf.mxu0
    %v1764 = vadd.f32 %v1745, %v1763
    %1765 = vdwg.mxu0
    %1766 = vmatpush.bf16.msra.mxu0 %v1531
    %1767 = vmatpush.bf16.msra.mxu0 %v1527
    %1768 = vmatpush.bf16.msra.mxu0 %v1523
    %1769 = vmatpush.bf16.msra.mxu0 %v1519
    %1770 = vmatpush.bf16.msra.mxu0 %v1515
    %1771 = vmatpush.bf16.msra.mxu0 %v1511
    %1772 = vmatpush.bf16.msra.mxu0 %v1507
    %1773 = vmatpush.bf16.msra.mxu0 %v1503
    %1774 = vmatmul.bf16.gmra.mxu0 %v1275
    %v1775 = vpop.f32.mrf.mxu0
    %v1776 = vadd.f32 %v1238, %v1775
    %v1777 = vpop.f32.mrf.mxu0
    %v1778 = vadd.f32 %v1243, %v1777
    %1779 = vmatmul.bf16.gmra.mxu0 %v1278
    %v1780 = vpop.f32.mrf.mxu0
    %v1781 = vadd.f32 %v1248, %v1780
    %v1782 = vpop.f32.mrf.mxu0
    %v1783 = vadd.f32 %v1253, %v1782
    %1784 = vdwg.mxu0
    %1785 = vmatpush.bf16.msra.mxu0 %v1563
    %1786 = vmatpush.bf16.msra.mxu0 %v1559
    %1787 = vmatpush.bf16.msra.mxu0 %v1555
    %1788 = vmatpush.bf16.msra.mxu0 %v1551
    %1789 = vmatpush.bf16.msra.mxu0 %v1547
    %1790 = vmatpush.bf16.msra.mxu0 %v1543
    %1791 = vmatpush.bf16.msra.mxu0 %v1539
    %1792 = vmatpush.bf16.msra.mxu0 %v1535
    %1793 = vmatmul.bf16.gmra.mxu0 %v1276
    %v1794 = vpop.f32.mrf.mxu0
    %v1795 = vadd.f32 %v1776, %v1794
    %v1796 = vpop.f32.mrf.mxu0
    %v1797 = vadd.f32 %v1778, %v1796
    %1798 = vmatmul.bf16.gmra.mxu0 %v1279
    %v1799 = vpop.f32.mrf.mxu0
    %v1800 = vadd.f32 %v1781, %v1799
    %v1801 = vpop.f32.mrf.mxu0
    %v1802 = vadd.f32 %v1783, %v1801
    %1803 = vdwg.mxu0
    %1804 = vmatpush.bf16.msra.mxu0 0
    %1805 = vmatpush.bf16.msra.mxu0 0
    %1806 = vmatpush.bf16.msra.mxu0 0
    %1807 = vmatpush.bf16.msra.mxu0 0
    %1808 = vmatpush.bf16.msra.mxu0 0
    %1809 = vmatpush.bf16.msra.mxu0 0
    %1810 = vmatpush.bf16.msra.mxu0 %v1571
    %1811 = vmatpush.bf16.msra.mxu0 %v1567
    %1812 = vmatmul.bf16.gmra.mxu0 %v1647
    %v1813 = vpop.f32.mrf.mxu0
    %v1814 = vadd.f32 %v1795, %v1813
    %v1815 = vpop.f32.mrf.mxu0
    %v1816 = vadd.f32 %v1797, %v1815
    %1817 = vmatmul.bf16.gmra.mxu0 %v1650
    %v1818 = vpop.f32.mrf.mxu0
    %v1819 = vadd.f32 %v1800, %v1818
    %v1820 = vpop.f32.mrf.mxu0
    %v1821 = vadd.f32 %v1802, %v1820
    %1822 = vdwg.mxu0
    %1823 = vmatpush.bf16.msra.mxu0 %v1532
    %1824 = vmatpush.bf16.msra.mxu0 %v1528
    %1825 = vmatpush.bf16.msra.mxu0 %v1524
    %1826 = vmatpush.bf16.msra.mxu0 %v1520
    %1827 = vmatpush.bf16.msra.mxu0 %v1516
    %1828 = vmatpush.bf16.msra.mxu0 %v1512
    %1829 = vmatpush.bf16.msra.mxu0 %v1508
    %1830 = vmatpush.bf16.msra.mxu0 %v1504
    %1831 = vmatmul.bf16.gmra.mxu0 %v1275
    %v1832 = vpop.f32.mrf.mxu0
    %v1833 = vadd.f32 %v1238, %v1832
    %v1834 = vpop.f32.mrf.mxu0
    %v1835 = vadd.f32 %v1243, %v1834
    %1836 = vmatmul.bf16.gmra.mxu0 %v1278
    %v1837 = vpop.f32.mrf.mxu0
    %v1838 = vadd.f32 %v1248, %v1837
    %v1839 = vpop.f32.mrf.mxu0
    %v1840 = vadd.f32 %v1253, %v1839
    %1841 = vdwg.mxu0
    %1842 = vmatpush.bf16.msra.mxu0 %v1564
    %1843 = vmatpush.bf16.msra.mxu0 %v1560
    %1844 = vmatpush.bf16.msra.mxu0 %v1556
    %1845 = vmatpush.bf16.msra.mxu0 %v1552
    %1846 = vmatpush.bf16.msra.mxu0 %v1548
    %1847 = vmatpush.bf16.msra.mxu0 %v1544
    %1848 = vmatpush.bf16.msra.mxu0 %v1540
    %1849 = vmatpush.bf16.msra.mxu0 %v1536
    %1850 = vmatmul.bf16.gmra.mxu0 %v1276
    %v1851 = vpop.f32.mrf.mxu0
    %v1852 = vadd.f32 %v1833, %v1851
    %v1853 = vpop.f32.mrf.mxu0
    %v1854 = vadd.f32 %v1835, %v1853
    %1855 = vmatmul.bf16.gmra.mxu0 %v1279
    %v1856 = vpop.f32.mrf.mxu0
    %v1857 = vadd.f32 %v1838, %v1856
    %v1858 = vpop.f32.mrf.mxu0
    %v1859 = vadd.f32 %v1840, %v1858
    %1860 = vdwg.mxu0
    %1861 = vmatpush.bf16.msra.mxu0 0
    %1862 = vmatpush.bf16.msra.mxu0 0
    %1863 = vmatpush.bf16.msra.mxu0 0
    %1864 = vmatpush.bf16.msra.mxu0 0
    %1865 = vmatpush.bf16.msra.mxu0 0
    %1866 = vmatpush.bf16.msra.mxu0 0
    %1867 = vmatpush.bf16.msra.mxu0 %v1572
    %1868 = vmatpush.bf16.msra.mxu0 %v1568
    %1869 = vmatmul.bf16.gmra.mxu0 %v1647
    %v1870 = vpop.f32.mrf.mxu0
    %v1871 = vadd.f32 %v1852, %v1870
    %v1872 = vpop.f32.mrf.mxu0
    %v1873 = vadd.f32 %v1854, %v1872
    %1874 = vmatmul.bf16.gmra.mxu0 %v1650
    %v1875 = vpop.f32.mrf.mxu0
    %v1876 = vadd.f32 %v1857, %v1875
    %v1877 = vpop.f32.mrf.mxu0
    %v1878 = vadd.f32 %v1859, %v1877
    %1879 = vdwg.mxu0
    %v1880 = vmax.f32 %v1700, 0.0
    %v1881 = vmax.f32 %v1757, 0.0
    %v1882 = vmax.f32 %v1814, 0.0
    %v1883 = vmax.f32 %v1871, 0.0
    %v1884 = vmax.f32 %v1702, 0.0
    %v1885 = vmax.f32 %v1759, 0.0
    %v1886 = vmax.f32 %v1816, 0.0
    %v1887 = vmax.f32 %v1873, 0.0
    %v1888 = vmax.f32 %v1705, 0.0
    %v1889 = vmax.f32 %v1762, 0.0
    %v1890 = vmax.f32 %v1819, 0.0
    %v1891 = vmax.f32 %v1876, 0.0
    %v1892 = vmax.f32 %v1707, 0.0
    %v1893 = vmax.f32 %v1764, 0.0
    %v1894 = vmax.f32 %v1821, 0.0
    %v1895 = vmax.f32 %v1878, 0.0
    %v1896 = vpack.c.bf16 %v1881, %v1880
    %v1897 = vpack.c.bf16 %v1883, %v1882
    %v1898 = vpack.c.bf16 %v1885, %v1884
    %v1899 = vpack.c.bf16 %v1887, %v1886
    %v1900 = vpack.c.bf16 %v1889, %v1888
    %v1901 = vpack.c.bf16 %v1891, %v1890
    %v1902 = vpack.c.bf16 %v1893, %v1892
    %v1903 = vpack.c.bf16 %v1895, %v1894
    %v1908 = vunpack.c.h.b16 %v1897
    %v1909 = vunpack.c.h.b16 %v1899
    %v1910 = vunpack.c.h.b16 %v1901
    %v1911 = vunpack.c.h.b16 %v1903
    %v1912 = vpack.c.b16 %v1909, %v1908
    %v1913 = vpack.c.b16 %v1911, %v1910
    %1914 = vrot.lane.b32.xlu0 %v1912, 17
    %v1915 = vpop.permute.xlu0 %1914
    %1916 = vrot.lane.b32.xlu0 %v1913, 17
    %v1917 = vpop.permute.xlu0 %1916
    %v1922 = vunpack.c.l.b16 %v1896
    %v1923 = vunpack.c.h.b16 %v1896
    %v1924 = vunpack.c.l.b16 %v1897
    %v1925 = vunpack.c.l.b16 %v1898
    %v1926 = vunpack.c.h.b16 %v1898
    %v1927 = vunpack.c.l.b16 %v1899
    %v1928 = vunpack.c.l.b16 %v1900
    %v1929 = vunpack.c.h.b16 %v1900
    %v1930 = vunpack.c.l.b16 %v1901
    %v1931 = vunpack.c.l.b16 %v1902
    %v1932 = vunpack.c.h.b16 %v1902
    %v1933 = vunpack.c.l.b16 %v1903
    %v1934 = vpack.c.b16 %v1925, %v1922
    %v1935 = vpack.c.b16 %v1926, %v1923
    %v1936 = vpack.c.b16 %v1927, %v1924
    %v1937 = vpack.c.b16 %v1931, %v1928
    %v1938 = vpack.c.b16 %v1932, %v1929
    %v1939 = vpack.c.b16 %v1933, %v1930
    %1940 = vrot.lane.b32.xlu0 %v1934, 17
    %v1941 = vpop.permute.xlu0 %1940
    %1942 = vrot.lane.b32.xlu0 %v1935, 17
    %v1943 = vpop.permute.xlu0 %1942
    %1944 = vrot.lane.b32.xlu0 %v1936, 17
    %v1945 = vpop.permute.xlu0 %1944
    %1946 = vrot.lane.b32.xlu0 %v1937, 17
    %v1947 = vpop.permute.xlu0 %1946
    %1948 = vrot.lane.b32.xlu0 %v1938, 17
    %v1949 = vpop.permute.xlu0 %1948
    %1950 = vrot.lane.b32.xlu0 %v1939, 17
    %v1951 = vpop.permute.xlu0 %1950
    %v1952 = vsel %vm215, %v1941, %v1943
    %v1953 = vsel %vm215, %v1943, %v1945
    %v1954 = vsel %vm215, %v1945, %v1915
    %v1955 = vsel %vm215, %v1947, %v1949
    %v1956 = vsel %vm215, %v1949, %v1951
    %v1957 = vsel %vm215, %v1951, %v1917
    %v1966 = vsel %vm228, %v1915, %v1941
    %v1970 = vsel %vm228, %v1917, %v1947
    %v1972 = vld [vmem:[#allocation3] sm:$0xff]
    %v1973 = vld [vmem:[#allocation3 + $0x8] sm:$0xff]
    %v1974 = vld [vmem:[#allocation3 + $0x10] sm:$0xff]
    %v1975 = vld [vmem:[#allocation3 + $0x18] sm:$0xff]
    %v1976 = vld [vmem:[#allocation3 + $0x20] sm:$0xff]
    %v1977 = vld [vmem:[#allocation3 + $0x28] sm:$0xff]
    %v1978 = vld [vmem:[#allocation3 + $0x30] sm:$0xff]
    %v1979 = vld [vmem:[#allocation3 + $0x38] sm:$0xff]
    %v1980 = vunpack.c.l.bf16 %v1966
    %v1981 = vunpack.c.l.bf16 %v1952
    %v1982 = vunpack.c.l.bf16 %v1953
    %v1983 = vunpack.c.l.bf16 %v1954
    %v1984 = vunpack.c.h.bf16 %v1966
    %v1985 = vunpack.c.h.bf16 %v1952
    %v1986 = vunpack.c.h.bf16 %v1953
    %v1987 = vunpack.c.h.bf16 %v1954
    %v1988 = vunpack.c.l.bf16 %v1970
    %v1989 = vunpack.c.l.bf16 %v1955
    %v1990 = vunpack.c.l.bf16 %v1956
    %v1991 = vunpack.c.l.bf16 %v1957
    %v1992 = vunpack.c.h.bf16 %v1970
    %v1993 = vunpack.c.h.bf16 %v1955
    %v1994 = vunpack.c.h.bf16 %v1956
    %v1995 = vunpack.c.h.bf16 %v1957
    %v1996 = vunpack.c.l.bf16 %v1972
    %v1997 = vunpack.c.h.bf16 %v1972
    %v1998 = vunpack.c.l.bf16 %v1973
    %v1999 = vunpack.c.h.bf16 %v1973
    %v2000 = vunpack.c.l.bf16 %v1974
    %v2001 = vunpack.c.h.bf16 %v1974
    %v2002 = vunpack.c.l.bf16 %v1975
    %v2003 = vunpack.c.h.bf16 %v1975
    %v2004 = vunpack.c.l.bf16 %v1976
    %v2005 = vunpack.c.h.bf16 %v1976
    %v2006 = vunpack.c.l.bf16 %v1977
    %v2007 = vunpack.c.h.bf16 %v1977
    %v2008 = vunpack.c.l.bf16 %v1978
    %v2009 = vunpack.c.h.bf16 %v1978
    %v2010 = vunpack.c.l.bf16 %v1979
    %v2011 = vunpack.c.h.bf16 %v1979
    %v2012 = vmul.f32 %v1980, %v1996
    %v2013 = vmul.f32 %v1981, %v1997
    %v2014 = vmul.f32 %v1982, %v1998
    %v2015 = vmul.f32 %v1983, %v1999
    %v2016 = vmul.f32 %v1984, %v2000
    %v2017 = vmul.f32 %v1985, %v2001
    %v2018 = vmul.f32 %v1986, %v2002
    %v2019 = vmul.f32 %v1987, %v2003
    %v2020 = vmul.f32 %v1988, %v2004
    %v2021 = vmul.f32 %v1989, %v2005
    %v2022 = vmul.f32 %v1990, %v2006
    %v2023 = vmul.f32 %v1991, %v2007
    %v2024 = vmul.f32 %v1992, %v2008
    %v2025 = vmul.f32 %v1993, %v2009
    %v2026 = vmul.f32 %v1994, %v2010
    %v2027 = vmul.f32 %v1995, %v2011
    %v2028 = vpack.c.bf16 %v2013, %v2012
    %v2029 = vpack.c.bf16 %v2015, %v2014
    %v2030 = vpack.c.bf16 %v2017, %v2016
    %v2031 = vpack.c.bf16 %v2019, %v2018
    %v2032 = vpack.c.bf16 %v2021, %v2020
    %v2033 = vpack.c.bf16 %v2023, %v2022
    %v2034 = vpack.c.bf16 %v2025, %v2024
    %v2035 = vpack.c.bf16 %v2027, %v2026
    %2036 = vst [vmem:[#allocation2] sm:$0xff] %v2028
    %2037 = vst [vmem:[#allocation2 + $0x8] sm:$0xff] %v2029
    %2038 = vst [vmem:[#allocation2 + $0x10] sm:$0xff] %v2030
    %2039 = vst [vmem:[#allocation2 + $0x18] sm:$0xff] %v2031
    %2040 = vst [vmem:[#allocation2 + $0x20] sm:$0xff] %v2032
    %2041 = vst [vmem:[#allocation2 + $0x28] sm:$0xff] %v2033
    %2042 = vst [vmem:[#allocation2 + $0x30] sm:$0xff] %v2034
    %2043 = vst [vmem:[#allocation2 + $0x38] sm:$0xff] %v2035
    %2044 = vrot.lane.b32.xlu0 %v1912, 16
    %v2045 = vpop.permute.xlu0 %2044
    %2046 = vrot.lane.b32.xlu0 %v1913, 16
    %v2047 = vpop.permute.xlu0 %2046
    %2048 = vrot.lane.b32.xlu0 %v1934, 16
    %v2049 = vpop.permute.xlu0 %2048
    %2050 = vrot.lane.b32.xlu0 %v1935, 16
    %v2051 = vpop.permute.xlu0 %2050
    %2052 = vrot.lane.b32.xlu0 %v1936, 16
    %v2053 = vpop.permute.xlu0 %2052
    %2054 = vrot.lane.b32.xlu0 %v1937, 16
    %v2055 = vpop.permute.xlu0 %2054
    %2056 = vrot.lane.b32.xlu0 %v1938, 16
    %v2057 = vpop.permute.xlu0 %2056
    %2058 = vrot.lane.b32.xlu0 %v1939, 16
    %v2059 = vpop.permute.xlu0 %2058
    %v2060 = vsel %vm325, %v2049, %v2051
    %v2061 = vsel %vm325, %v2051, %v2053
    %v2062 = vsel %vm325, %v2053, %v2045
    %v2063 = vsel %vm325, %v2055, %v2057
    %v2064 = vsel %vm325, %v2057, %v2059
    %v2065 = vsel %vm325, %v2059, %v2047
    %v2074 = vsel %vm338, %v2045, %v2049
    %v2078 = vsel %vm338, %v2047, %v2055
    %v2080 = vld [vmem:[#allocation3 + $0x40] sm:$0xff]
    %v2081 = vld [vmem:[#allocation3 + $0x48] sm:$0xff]
    %v2082 = vld [vmem:[#allocation3 + $0x50] sm:$0xff]
    %v2083 = vld [vmem:[#allocation3 + $0x58] sm:$0xff]
    %v2084 = vld [vmem:[#allocation3 + $0x60] sm:$0xff]
    %v2085 = vld [vmem:[#allocation3 + $0x68] sm:$0xff]
    %v2086 = vld [vmem:[#allocation3 + $0x70] sm:$0xff]
    %v2087 = vld [vmem:[#allocation3 + $0x78] sm:$0xff]
    %v2088 = vunpack.c.l.bf16 %v2074
    %v2089 = vunpack.c.l.bf16 %v2060
    %v2090 = vunpack.c.l.bf16 %v2061
    %v2091 = vunpack.c.l.bf16 %v2062
    %v2092 = vunpack.c.h.bf16 %v2074
    %v2093 = vunpack.c.h.bf16 %v2060
    %v2094 = vunpack.c.h.bf16 %v2061
    %v2095 = vunpack.c.h.bf16 %v2062
    %v2096 = vunpack.c.l.bf16 %v2078
    %v2097 = vunpack.c.l.bf16 %v2063
    %v2098 = vunpack.c.l.bf16 %v2064
    %v2099 = vunpack.c.l.bf16 %v2065
    %v2100 = vunpack.c.h.bf16 %v2078
    %v2101 = vunpack.c.h.bf16 %v2063
    %v2102 = vunpack.c.h.bf16 %v2064
    %v2103 = vunpack.c.h.bf16 %v2065
    %v2104 = vunpack.c.l.bf16 %v2080
    %v2105 = vunpack.c.h.bf16 %v2080
    %v2106 = vunpack.c.l.bf16 %v2081
    %v2107 = vunpack.c.h.bf16 %v2081
    %v2108 = vunpack.c.l.bf16 %v2082
    %v2109 = vunpack.c.h.bf16 %v2082
    %v2110 = vunpack.c.l.bf16 %v2083
    %v2111 = vunpack.c.h.bf16 %v2083
    %v2112 = vunpack.c.l.bf16 %v2084
    %v2113 = vunpack.c.h.bf16 %v2084
    %v2114 = vunpack.c.l.bf16 %v2085
    %v2115 = vunpack.c.h.bf16 %v2085
    %v2116 = vunpack.c.l.bf16 %v2086
    %v2117 = vunpack.c.h.bf16 %v2086
    %v2118 = vunpack.c.l.bf16 %v2087
    %v2119 = vunpack.c.h.bf16 %v2087
    %v2120 = vmul.f32 %v2088, %v2104
    %v2121 = vmul.f32 %v2089, %v2105
    %v2122 = vmul.f32 %v2090, %v2106
    %v2123 = vmul.f32 %v2091, %v2107
    %v2124 = vmul.f32 %v2092, %v2108
    %v2125 = vmul.f32 %v2093, %v2109
    %v2126 = vmul.f32 %v2094, %v2110
    %v2127 = vmul.f32 %v2095, %v2111
    %v2128 = vmul.f32 %v2096, %v2112
    %v2129 = vmul.f32 %v2097, %v2113
    %v2130 = vmul.f32 %v2098, %v2114
    %v2131 = vmul.f32 %v2099, %v2115
    %v2132 = vmul.f32 %v2100, %v2116
    %v2133 = vmul.f32 %v2101, %v2117
    %v2134 = vmul.f32 %v2102, %v2118
    %v2135 = vmul.f32 %v2103, %v2119
    %v2136 = vpack.c.bf16 %v2121, %v2120
    %v2137 = vpack.c.bf16 %v2123, %v2122
    %v2138 = vpack.c.bf16 %v2125, %v2124
    %v2139 = vpack.c.bf16 %v2127, %v2126
    %v2140 = vpack.c.bf16 %v2129, %v2128
    %v2141 = vpack.c.bf16 %v2131, %v2130
    %v2142 = vpack.c.bf16 %v2133, %v2132
    %v2143 = vpack.c.bf16 %v2135, %v2134
    %2144 = vst [vmem:[#allocation2 + $0x40] sm:$0xff] %v2136
    %2145 = vst [vmem:[#allocation2 + $0x48] sm:$0xff] %v2137
    %2146 = vst [vmem:[#allocation2 + $0x50] sm:$0xff] %v2138
    %2147 = vst [vmem:[#allocation2 + $0x58] sm:$0xff] %v2139
    %2148 = vst [vmem:[#allocation2 + $0x60] sm:$0xff] %v2140
    %2149 = vst [vmem:[#allocation2 + $0x68] sm:$0xff] %v2141
    %2150 = vst [vmem:[#allocation2 + $0x70] sm:$0xff] %v2142
    %2151 = vst [vmem:[#allocation2 + $0x78] sm:$0xff] %v2143
    %2152 = vrot.lane.b32.xlu0 %v1912, 15
    %v2153 = vpop.permute.xlu0 %2152
    %2154 = vrot.lane.b32.xlu0 %v1913, 15
    %v2155 = vpop.permute.xlu0 %2154
    %2156 = vrot.lane.b32.xlu0 %v1934, 15
    %v2157 = vpop.permute.xlu0 %2156
    %2158 = vrot.lane.b32.xlu0 %v1935, 15
    %v2159 = vpop.permute.xlu0 %2158
    %2160 = vrot.lane.b32.xlu0 %v1936, 15
    %v2161 = vpop.permute.xlu0 %2160
    %2162 = vrot.lane.b32.xlu0 %v1937, 15
    %v2163 = vpop.permute.xlu0 %2162
    %2164 = vrot.lane.b32.xlu0 %v1938, 15
    %v2165 = vpop.permute.xlu0 %2164
    %2166 = vrot.lane.b32.xlu0 %v1939, 15
    %v2167 = vpop.permute.xlu0 %2166
    %v2168 = vsel %vm435, %v2157, %v2159
    %v2169 = vsel %vm435, %v2159, %v2161
    %v2170 = vsel %vm435, %v2161, %v2153
    %v2171 = vsel %vm435, %v2163, %v2165
    %v2172 = vsel %vm435, %v2165, %v2167
    %v2173 = vsel %vm435, %v2167, %v2155
    %v2182 = vsel %vm448, %v2153, %v2157
    %v2186 = vsel %vm448, %v2155, %v2163
    %v2188 = vld [vmem:[#allocation3 + $0x80] sm:$0xff]
    %v2189 = vld [vmem:[#allocation3 + $0x88] sm:$0xff]
    %v2190 = vld [vmem:[#allocation3 + $0x90] sm:$0xff]
    %v2191 = vld [vmem:[#allocation3 + $0x98] sm:$0xff]
    %v2192 = vld [vmem:[#allocation3 + $0xa0] sm:$0xff]
    %v2193 = vld [vmem:[#allocation3 + $0xa8] sm:$0xff]
    %v2194 = vld [vmem:[#allocation3 + $0xb0] sm:$0xff]
    %v2195 = vld [vmem:[#allocation3 + $0xb8] sm:$0xff]
    %v2196 = vunpack.c.l.bf16 %v2182
    %v2197 = vunpack.c.l.bf16 %v2168
    %v2198 = vunpack.c.l.bf16 %v2169
    %v2199 = vunpack.c.l.bf16 %v2170
    %v2200 = vunpack.c.h.bf16 %v2182
    %v2201 = vunpack.c.h.bf16 %v2168
    %v2202 = vunpack.c.h.bf16 %v2169
    %v2203 = vunpack.c.h.bf16 %v2170
    %v2204 = vunpack.c.l.bf16 %v2186
    %v2205 = vunpack.c.l.bf16 %v2171
    %v2206 = vunpack.c.l.bf16 %v2172
    %v2207 = vunpack.c.l.bf16 %v2173
    %v2208 = vunpack.c.h.bf16 %v2186
    %v2209 = vunpack.c.h.bf16 %v2171
    %v2210 = vunpack.c.h.bf16 %v2172
    %v2211 = vunpack.c.h.bf16 %v2173
    %v2212 = vunpack.c.l.bf16 %v2188
    %v2213 = vunpack.c.h.bf16 %v2188
    %v2214 = vunpack.c.l.bf16 %v2189
    %v2215 = vunpack.c.h.bf16 %v2189
    %v2216 = vunpack.c.l.bf16 %v2190
    %v2217 = vunpack.c.h.bf16 %v2190
    %v2218 = vunpack.c.l.bf16 %v2191
    %v2219 = vunpack.c.h.bf16 %v2191
    %v2220 = vunpack.c.l.bf16 %v2192
    %v2221 = vunpack.c.h.bf16 %v2192
    %v2222 = vunpack.c.l.bf16 %v2193
    %v2223 = vunpack.c.h.bf16 %v2193
    %v2224 = vunpack.c.l.bf16 %v2194
    %v2225 = vunpack.c.h.bf16 %v2194
    %v2226 = vunpack.c.l.bf16 %v2195
    %v2227 = vunpack.c.h.bf16 %v2195
    %v2228 = vmul.f32 %v2196, %v2212
    %v2229 = vmul.f32 %v2197, %v2213
    %v2230 = vmul.f32 %v2198, %v2214
    %v2231 = vmul.f32 %v2199, %v2215
    %v2232 = vmul.f32 %v2200, %v2216
    %v2233 = vmul.f32 %v2201, %v2217
    %v2234 = vmul.f32 %v2202, %v2218
    %v2235 = vmul.f32 %v2203, %v2219
    %v2236 = vmul.f32 %v2204, %v2220
    %v2237 = vmul.f32 %v2205, %v2221
    %v2238 = vmul.f32 %v2206, %v2222
    %v2239 = vmul.f32 %v2207, %v2223
    %v2240 = vmul.f32 %v2208, %v2224
    %v2241 = vmul.f32 %v2209, %v2225
    %v2242 = vmul.f32 %v2210, %v2226
    %v2243 = vmul.f32 %v2211, %v2227
    %v2244 = vpack.c.bf16 %v2229, %v2228
    %v2245 = vpack.c.bf16 %v2231, %v2230
    %v2246 = vpack.c.bf16 %v2233, %v2232
    %v2247 = vpack.c.bf16 %v2235, %v2234
    %v2248 = vpack.c.bf16 %v2237, %v2236
    %v2249 = vpack.c.bf16 %v2239, %v2238
    %v2250 = vpack.c.bf16 %v2241, %v2240
    %v2251 = vpack.c.bf16 %v2243, %v2242
    %2252 = vst [vmem:[#allocation2 + $0x80] sm:$0xff] %v2244
    %2253 = vst [vmem:[#allocation2 + $0x88] sm:$0xff] %v2245
    %2254 = vst [vmem:[#allocation2 + $0x90] sm:$0xff] %v2246
    %2255 = vst [vmem:[#allocation2 + $0x98] sm:$0xff] %v2247
    %2256 = vst [vmem:[#allocation2 + $0xa0] sm:$0xff] %v2248
    %2257 = vst [vmem:[#allocation2 + $0xa8] sm:$0xff] %v2249
    %2258 = vst [vmem:[#allocation2 + $0xb0] sm:$0xff] %v2250
    %2259 = vst [vmem:[#allocation2 + $0xb8] sm:$0xff] %v2251
    %2260 = vrot.lane.b32.xlu0 %v1912, 1
    %v2261 = vpop.permute.xlu0 %2260
    %2262 = vrot.lane.b32.xlu0 %v1913, 1
    %v2263 = vpop.permute.xlu0 %2262
    %2264 = vrot.lane.b32.xlu0 %v1934, 1
    %v2265 = vpop.permute.xlu0 %2264
    %2266 = vrot.lane.b32.xlu0 %v1935, 1
    %v2267 = vpop.permute.xlu0 %2266
    %2268 = vrot.lane.b32.xlu0 %v1936, 1
    %v2269 = vpop.permute.xlu0 %2268
    %2270 = vrot.lane.b32.xlu0 %v1937, 1
    %v2271 = vpop.permute.xlu0 %2270
    %2272 = vrot.lane.b32.xlu0 %v1938, 1
    %v2273 = vpop.permute.xlu0 %2272
    %2274 = vrot.lane.b32.xlu0 %v1939, 1
    %v2275 = vpop.permute.xlu0 %2274
    %v2276 = vsel %vm545, %v2265, %v2267
    %v2277 = vsel %vm545, %v2267, %v2269
    %v2278 = vsel %vm545, %v2269, %v2261
    %v2279 = vsel %vm545, %v2271, %v2273
    %v2280 = vsel %vm545, %v2273, %v2275
    %v2281 = vsel %vm545, %v2275, %v2263
    %v2290 = vsel %vm558, %v2261, %v2265
    %v2294 = vsel %vm558, %v2263, %v2271
    %v2296 = vld [vmem:[#allocation3 + $0xc0] sm:$0xff]
    %v2297 = vld [vmem:[#allocation3 + $0xc8] sm:$0xff]
    %v2298 = vld [vmem:[#allocation3 + $0xd0] sm:$0xff]
    %v2299 = vld [vmem:[#allocation3 + $0xd8] sm:$0xff]
    %v2300 = vld [vmem:[#allocation3 + $0xe0] sm:$0xff]
    %v2301 = vld [vmem:[#allocation3 + $0xe8] sm:$0xff]
    %v2302 = vld [vmem:[#allocation3 + $0xf0] sm:$0xff]
    %v2303 = vld [vmem:[#allocation3 + $0xf8] sm:$0xff]
    %v2304 = vunpack.c.l.bf16 %v2290
    %v2305 = vunpack.c.l.bf16 %v2276
    %v2306 = vunpack.c.l.bf16 %v2277
    %v2307 = vunpack.c.l.bf16 %v2278
    %v2308 = vunpack.c.h.bf16 %v2290
    %v2309 = vunpack.c.h.bf16 %v2276
    %v2310 = vunpack.c.h.bf16 %v2277
    %v2311 = vunpack.c.h.bf16 %v2278
    %v2312 = vunpack.c.l.bf16 %v2294
    %v2313 = vunpack.c.l.bf16 %v2279
    %v2314 = vunpack.c.l.bf16 %v2280
    %v2315 = vunpack.c.l.bf16 %v2281
    %v2316 = vunpack.c.h.bf16 %v2294
    %v2317 = vunpack.c.h.bf16 %v2279
    %v2318 = vunpack.c.h.bf16 %v2280
    %v2319 = vunpack.c.h.bf16 %v2281
    %v2320 = vunpack.c.l.bf16 %v2296
    %v2321 = vunpack.c.h.bf16 %v2296
    %v2322 = vunpack.c.l.bf16 %v2297
    %v2323 = vunpack.c.h.bf16 %v2297
    %v2324 = vunpack.c.l.bf16 %v2298
    %v2325 = vunpack.c.h.bf16 %v2298
    %v2326 = vunpack.c.l.bf16 %v2299
    %v2327 = vunpack.c.h.bf16 %v2299
    %v2328 = vunpack.c.l.bf16 %v2300
    %v2329 = vunpack.c.h.bf16 %v2300
    %v2330 = vunpack.c.l.bf16 %v2301
    %v2331 = vunpack.c.h.bf16 %v2301
    %v2332 = vunpack.c.l.bf16 %v2302
    %v2333 = vunpack.c.h.bf16 %v2302
    %v2334 = vunpack.c.l.bf16 %v2303
    %v2335 = vunpack.c.h.bf16 %v2303
    %v2336 = vmul.f32 %v2304, %v2320
    %v2337 = vmul.f32 %v2305, %v2321
    %v2338 = vmul.f32 %v2306, %v2322
    %v2339 = vmul.f32 %v2307, %v2323
    %v2340 = vmul.f32 %v2308, %v2324
    %v2341 = vmul.f32 %v2309, %v2325
    %v2342 = vmul.f32 %v2310, %v2326
    %v2343 = vmul.f32 %v2311, %v2327
    %v2344 = vmul.f32 %v2312, %v2328
    %v2345 = vmul.f32 %v2313, %v2329
    %v2346 = vmul.f32 %v2314, %v2330
    %v2347 = vmul.f32 %v2315, %v2331
    %v2348 = vmul.f32 %v2316, %v2332
    %v2349 = vmul.f32 %v2317, %v2333
    %v2350 = vmul.f32 %v2318, %v2334
    %v2351 = vmul.f32 %v2319, %v2335
    %v2352 = vpack.c.bf16 %v2337, %v2336
    %v2353 = vpack.c.bf16 %v2339, %v2338
    %v2354 = vpack.c.bf16 %v2341, %v2340
    %v2355 = vpack.c.bf16 %v2343, %v2342
    %v2356 = vpack.c.bf16 %v2345, %v2344
    %v2357 = vpack.c.bf16 %v2347, %v2346
    %v2358 = vpack.c.bf16 %v2349, %v2348
    %v2359 = vpack.c.bf16 %v2351, %v2350
    %2360 = vst [vmem:[#allocation2 + $0xc0] sm:$0xff] %v2352
    %2361 = vst [vmem:[#allocation2 + $0xc8] sm:$0xff] %v2353
    %2362 = vst [vmem:[#allocation2 + $0xd0] sm:$0xff] %v2354
    %2363 = vst [vmem:[#allocation2 + $0xd8] sm:$0xff] %v2355
    %2364 = vst [vmem:[#allocation2 + $0xe0] sm:$0xff] %v2356
    %2365 = vst [vmem:[#allocation2 + $0xe8] sm:$0xff] %v2357
    %2366 = vst [vmem:[#allocation2 + $0xf0] sm:$0xff] %v2358
    %2367 = vst [vmem:[#allocation2 + $0xf8] sm:$0xff] %v2359
    %v2368 = vld [vmem:[#allocation3 + $0x100] sm:$0xff]
    %v2369 = vld [vmem:[#allocation3 + $0x108] sm:$0xff]
    %v2370 = vld [vmem:[#allocation3 + $0x110] sm:$0xff]
    %v2371 = vld [vmem:[#allocation3 + $0x118] sm:$0xff]
    %v2372 = vld [vmem:[#allocation3 + $0x120] sm:$0xff]
    %v2373 = vld [vmem:[#allocation3 + $0x128] sm:$0xff]
    %v2374 = vld [vmem:[#allocation3 + $0x130] sm:$0xff]
    %v2375 = vld [vmem:[#allocation3 + $0x138] sm:$0xff]
    %v2376 = vunpack.c.l.bf16 %v1896
    %v2377 = vunpack.c.h.bf16 %v1896
    %v2378 = vunpack.c.l.bf16 %v1897
    %v2379 = vunpack.c.h.bf16 %v1897
    %v2380 = vunpack.c.l.bf16 %v1898
    %v2381 = vunpack.c.h.bf16 %v1898
    %v2382 = vunpack.c.l.bf16 %v1899
    %v2383 = vunpack.c.h.bf16 %v1899
    %v2384 = vunpack.c.l.bf16 %v1900
    %v2385 = vunpack.c.h.bf16 %v1900
    %v2386 = vunpack.c.l.bf16 %v1901
    %v2387 = vunpack.c.h.bf16 %v1901
    %v2388 = vunpack.c.l.bf16 %v1902
    %v2389 = vunpack.c.h.bf16 %v1902
    %v2390 = vunpack.c.l.bf16 %v1903
    %v2391 = vunpack.c.h.bf16 %v1903
    %v2392 = vunpack.c.l.bf16 %v2368
    %v2393 = vunpack.c.h.bf16 %v2368
    %v2394 = vunpack.c.l.bf16 %v2369
    %v2395 = vunpack.c.h.bf16 %v2369
    %v2396 = vunpack.c.l.bf16 %v2370
    %v2397 = vunpack.c.h.bf16 %v2370
    %v2398 = vunpack.c.l.bf16 %v2371
    %v2399 = vunpack.c.h.bf16 %v2371
    %v2400 = vunpack.c.l.bf16 %v2372
    %v2401 = vunpack.c.h.bf16 %v2372
    %v2402 = vunpack.c.l.bf16 %v2373
    %v2403 = vunpack.c.h.bf16 %v2373
    %v2404 = vunpack.c.l.bf16 %v2374
    %v2405 = vunpack.c.h.bf16 %v2374
    %v2406 = vunpack.c.l.bf16 %v2375
    %v2407 = vunpack.c.h.bf16 %v2375
    %v2408 = vmul.f32 %v2376, %v2392
    %v2409 = vmul.f32 %v2377, %v2393
    %v2410 = vmul.f32 %v2378, %v2394
    %v2411 = vmul.f32 %v2379, %v2395
    %v2412 = vmul.f32 %v2380, %v2396
    %v2413 = vmul.f32 %v2381, %v2397
    %v2414 = vmul.f32 %v2382, %v2398
    %v2415 = vmul.f32 %v2383, %v2399
    %v2416 = vmul.f32 %v2384, %v2400
    %v2417 = vmul.f32 %v2385, %v2401
    %v2418 = vmul.f32 %v2386, %v2402
    %v2419 = vmul.f32 %v2387, %v2403
    %v2420 = vmul.f32 %v2388, %v2404
    %v2421 = vmul.f32 %v2389, %v2405
    %v2422 = vmul.f32 %v2390, %v2406
    %v2423 = vmul.f32 %v2391, %v2407
    %v2424 = vpack.c.bf16 %v2409, %v2408
    %v2425 = vpack.c.bf16 %v2411, %v2410
    %v2426 = vpack.c.bf16 %v2413, %v2412
    %v2427 = vpack.c.bf16 %v2415, %v2414
    %v2428 = vpack.c.bf16 %v2417, %v2416
    %v2429 = vpack.c.bf16 %v2419, %v2418
    %v2430 = vpack.c.bf16 %v2421, %v2420
    %v2431 = vpack.c.bf16 %v2423, %v2422
    %2432 = vst [vmem:[#allocation2 + $0x100] sm:$0xff] %v2424
    %2433 = vst [vmem:[#allocation2 + $0x108] sm:$0xff] %v2425
    %2434 = vst [vmem:[#allocation2 + $0x110] sm:$0xff] %v2426
    %2435 = vst [vmem:[#allocation2 + $0x118] sm:$0xff] %v2427
    %2436 = vst [vmem:[#allocation2 + $0x120] sm:$0xff] %v2428
    %2437 = vst [vmem:[#allocation2 + $0x128] sm:$0xff] %v2429
    %2438 = vst [vmem:[#allocation2 + $0x130] sm:$0xff] %v2430
    %2439 = vst [vmem:[#allocation2 + $0x138] sm:$0xff] %v2431
    %2440 = vrot.lane.b32.xlu0 %v1934, 127
    %v2441 = vpop.permute.xlu0 %2440
    %2442 = vrot.lane.b32.xlu0 %v1935, 127
    %v2443 = vpop.permute.xlu0 %2442
    %2444 = vrot.lane.b32.xlu0 %v1936, 127
    %v2445 = vpop.permute.xlu0 %2444
    %2446 = vrot.lane.b32.xlu0 %v1912, 127
    %v2447 = vpop.permute.xlu0 %2446
    %2448 = vrot.lane.b32.xlu0 %v1937, 127
    %v2449 = vpop.permute.xlu0 %2448
    %2450 = vrot.lane.b32.xlu0 %v1938, 127
    %v2451 = vpop.permute.xlu0 %2450
    %2452 = vrot.lane.b32.xlu0 %v1939, 127
    %v2453 = vpop.permute.xlu0 %2452
    %2454 = vrot.lane.b32.xlu0 %v1913, 127
    %v2455 = vpop.permute.xlu0 %2454
    %v2456 = vsel %vm727, %v2441, %v2443
    %v2457 = vsel %vm727, %v2443, %v2445
    %v2458 = vsel %vm727, %v2445, %v2447
    %v2459 = vsel %vm727, %v2449, %v2451
    %v2460 = vsel %vm727, %v2451, %v2453
    %v2461 = vsel %vm727, %v2453, %v2455
    %v2470 = vsel %vm740, %v2447, %v2441
    %v2474 = vsel %vm740, %v2455, %v2449
    %v2476 = vld [vmem:[#allocation3 + $0x140] sm:$0xff]
    %v2477 = vld [vmem:[#allocation3 + $0x148] sm:$0xff]
    %v2478 = vld [vmem:[#allocation3 + $0x150] sm:$0xff]
    %v2479 = vld [vmem:[#allocation3 + $0x158] sm:$0xff]
    %v2480 = vld [vmem:[#allocation3 + $0x160] sm:$0xff]
    %v2481 = vld [vmem:[#allocation3 + $0x168] sm:$0xff]
    %v2482 = vld [vmem:[#allocation3 + $0x170] sm:$0xff]
    %v2483 = vld [vmem:[#allocation3 + $0x178] sm:$0xff]
    %v2484 = vunpack.c.l.bf16 %v2456
    %v2485 = vunpack.c.l.bf16 %v2457
    %v2486 = vunpack.c.l.bf16 %v2458
    %v2487 = vunpack.c.l.bf16 %v2470
    %v2488 = vunpack.c.h.bf16 %v2456
    %v2489 = vunpack.c.h.bf16 %v2457
    %v2490 = vunpack.c.h.bf16 %v2458
    %v2491 = vunpack.c.h.bf16 %v2470
    %v2492 = vunpack.c.l.bf16 %v2459
    %v2493 = vunpack.c.l.bf16 %v2460
    %v2494 = vunpack.c.l.bf16 %v2461
    %v2495 = vunpack.c.l.bf16 %v2474
    %v2496 = vunpack.c.h.bf16 %v2459
    %v2497 = vunpack.c.h.bf16 %v2460
    %v2498 = vunpack.c.h.bf16 %v2461
    %v2499 = vunpack.c.h.bf16 %v2474
    %v2500 = vunpack.c.l.bf16 %v2476
    %v2501 = vunpack.c.h.bf16 %v2476
    %v2502 = vunpack.c.l.bf16 %v2477
    %v2503 = vunpack.c.h.bf16 %v2477
    %v2504 = vunpack.c.l.bf16 %v2478
    %v2505 = vunpack.c.h.bf16 %v2478
    %v2506 = vunpack.c.l.bf16 %v2479
    %v2507 = vunpack.c.h.bf16 %v2479
    %v2508 = vunpack.c.l.bf16 %v2480
    %v2509 = vunpack.c.h.bf16 %v2480
    %v2510 = vunpack.c.l.bf16 %v2481
    %v2511 = vunpack.c.h.bf16 %v2481
    %v2512 = vunpack.c.l.bf16 %v2482
    %v2513 = vunpack.c.h.bf16 %v2482
    %v2514 = vunpack.c.l.bf16 %v2483
    %v2515 = vunpack.c.h.bf16 %v2483
    %v2516 = vmul.f32 %v2484, %v2500
    %v2517 = vmul.f32 %v2485, %v2501
    %v2518 = vmul.f32 %v2486, %v2502
    %v2519 = vmul.f32 %v2487, %v2503
    %v2520 = vmul.f32 %v2488, %v2504
    %v2521 = vmul.f32 %v2489, %v2505
    %v2522 = vmul.f32 %v2490, %v2506
    %v2523 = vmul.f32 %v2491, %v2507
    %v2524 = vmul.f32 %v2492, %v2508
    %v2525 = vmul.f32 %v2493, %v2509
    %v2526 = vmul.f32 %v2494, %v2510
    %v2527 = vmul.f32 %v2495, %v2511
    %v2528 = vmul.f32 %v2496, %v2512
    %v2529 = vmul.f32 %v2497, %v2513
    %v2530 = vmul.f32 %v2498, %v2514
    %v2531 = vmul.f32 %v2499, %v2515
    %v2532 = vpack.c.bf16 %v2517, %v2516
    %v2533 = vpack.c.bf16 %v2519, %v2518
    %v2534 = vpack.c.bf16 %v2521, %v2520
    %v2535 = vpack.c.bf16 %v2523, %v2522
    %v2536 = vpack.c.bf16 %v2525, %v2524
    %v2537 = vpack.c.bf16 %v2527, %v2526
    %v2538 = vpack.c.bf16 %v2529, %v2528
    %v2539 = vpack.c.bf16 %v2531, %v2530
    %2540 = vst [vmem:[#allocation2 + $0x140] sm:$0xff] %v2532
    %2541 = vst [vmem:[#allocation2 + $0x148] sm:$0xff] %v2533
    %2542 = vst [vmem:[#allocation2 + $0x150] sm:$0xff] %v2534
    %2543 = vst [vmem:[#allocation2 + $0x158] sm:$0xff] %v2535
    %2544 = vst [vmem:[#allocation2 + $0x160] sm:$0xff] %v2536
    %2545 = vst [vmem:[#allocation2 + $0x168] sm:$0xff] %v2537
    %2546 = vst [vmem:[#allocation2 + $0x170] sm:$0xff] %v2538
    %2547 = vst [vmem:[#allocation2 + $0x178] sm:$0xff] %v2539
    %2548 = vrot.lane.b32.xlu0 %v1934, 113
    %v2549 = vpop.permute.xlu0 %2548
    %2550 = vrot.lane.b32.xlu0 %v1935, 113
    %v2551 = vpop.permute.xlu0 %2550
    %2552 = vrot.lane.b32.xlu0 %v1936, 113
    %v2553 = vpop.permute.xlu0 %2552
    %2554 = vrot.lane.b32.xlu0 %v1912, 113
    %v2555 = vpop.permute.xlu0 %2554
    %2556 = vrot.lane.b32.xlu0 %v1937, 113
    %v2557 = vpop.permute.xlu0 %2556
    %2558 = vrot.lane.b32.xlu0 %v1938, 113
    %v2559 = vpop.permute.xlu0 %2558
    %2560 = vrot.lane.b32.xlu0 %v1939, 113
    %v2561 = vpop.permute.xlu0 %2560
    %2562 = vrot.lane.b32.xlu0 %v1913, 113
    %v2563 = vpop.permute.xlu0 %2562
    %v2564 = vsel %vm837, %v2549, %v2551
    %v2565 = vsel %vm837, %v2551, %v2553
    %v2566 = vsel %vm837, %v2553, %v2555
    %v2567 = vsel %vm837, %v2557, %v2559
    %v2568 = vsel %vm837, %v2559, %v2561
    %v2569 = vsel %vm837, %v2561, %v2563
    %v2578 = vsel %vm850, %v2555, %v2549
    %v2582 = vsel %vm850, %v2563, %v2557
    %v2584 = vld [vmem:[#allocation3 + $0x180] sm:$0xff]
    %v2585 = vld [vmem:[#allocation3 + $0x188] sm:$0xff]
    %v2586 = vld [vmem:[#allocation3 + $0x190] sm:$0xff]
    %v2587 = vld [vmem:[#allocation3 + $0x198] sm:$0xff]
    %v2588 = vld [vmem:[#allocation3 + $0x1a0] sm:$0xff]
    %v2589 = vld [vmem:[#allocation3 + $0x1a8] sm:$0xff]
    %v2590 = vld [vmem:[#allocation3 + $0x1b0] sm:$0xff]
    %v2591 = vld [vmem:[#allocation3 + $0x1b8] sm:$0xff]
    %v2592 = vunpack.c.l.bf16 %v2564
    %v2593 = vunpack.c.l.bf16 %v2565
    %v2594 = vunpack.c.l.bf16 %v2566
    %v2595 = vunpack.c.l.bf16 %v2578
    %v2596 = vunpack.c.h.bf16 %v2564
    %v2597 = vunpack.c.h.bf16 %v2565
    %v2598 = vunpack.c.h.bf16 %v2566
    %v2599 = vunpack.c.h.bf16 %v2578
    %v2600 = vunpack.c.l.bf16 %v2567
    %v2601 = vunpack.c.l.bf16 %v2568
    %v2602 = vunpack.c.l.bf16 %v2569
    %v2603 = vunpack.c.l.bf16 %v2582
    %v2604 = vunpack.c.h.bf16 %v2567
    %v2605 = vunpack.c.h.bf16 %v2568
    %v2606 = vunpack.c.h.bf16 %v2569
    %v2607 = vunpack.c.h.bf16 %v2582
    %v2608 = vunpack.c.l.bf16 %v2584
    %v2609 = vunpack.c.h.bf16 %v2584
    %v2610 = vunpack.c.l.bf16 %v2585
    %v2611 = vunpack.c.h.bf16 %v2585
    %v2612 = vunpack.c.l.bf16 %v2586
    %v2613 = vunpack.c.h.bf16 %v2586
    %v2614 = vunpack.c.l.bf16 %v2587
    %v2615 = vunpack.c.h.bf16 %v2587
    %v2616 = vunpack.c.l.bf16 %v2588
    %v2617 = vunpack.c.h.bf16 %v2588
    %v2618 = vunpack.c.l.bf16 %v2589
    %v2619 = vunpack.c.h.bf16 %v2589
    %v2620 = vunpack.c.l.bf16 %v2590
    %v2621 = vunpack.c.h.bf16 %v2590
    %v2622 = vunpack.c.l.bf16 %v2591
    %v2623 = vunpack.c.h.bf16 %v2591
    %v2624 = vmul.f32 %v2592, %v2608
    %v2625 = vmul.f32 %v2593, %v2609
    %v2626 = vmul.f32 %v2594, %v2610
    %v2627 = vmul.f32 %v2595, %v2611
    %v2628 = vmul.f32 %v2596, %v2612
    %v2629 = vmul.f32 %v2597, %v2613
    %v2630 = vmul.f32 %v2598, %v2614
    %v2631 = vmul.f32 %v2599, %v2615
    %v2632 = vmul.f32 %v2600, %v2616
    %v2633 = vmul.f32 %v2601, %v2617
    %v2634 = vmul.f32 %v2602, %v2618
    %v2635 = vmul.f32 %v2603, %v2619
    %v2636 = vmul.f32 %v2604, %v2620
    %v2637 = vmul.f32 %v2605, %v2621
    %v2638 = vmul.f32 %v2606, %v2622
    %v2639 = vmul.f32 %v2607, %v2623
    %v2640 = vpack.c.bf16 %v2625, %v2624
    %v2641 = vpack.c.bf16 %v2627, %v2626
    %v2642 = vpack.c.bf16 %v2629, %v2628
    %v2643 = vpack.c.bf16 %v2631, %v2630
    %v2644 = vpack.c.bf16 %v2633, %v2632
    %v2645 = vpack.c.bf16 %v2635, %v2634
    %v2646 = vpack.c.bf16 %v2637, %v2636
    %v2647 = vpack.c.bf16 %v2639, %v2638
    %2648 = vst [vmem:[#allocation2 + $0x180] sm:$0xff] %v2640
    %2649 = vst [vmem:[#allocation2 + $0x188] sm:$0xff] %v2641
    %2650 = vst [vmem:[#allocation2 + $0x190] sm:$0xff] %v2642
    %2651 = vst [vmem:[#allocation2 + $0x198] sm:$0xff] %v2643
    %2652 = vst [vmem:[#allocation2 + $0x1a0] sm:$0xff] %v2644
    %2653 = vst [vmem:[#allocation2 + $0x1a8] sm:$0xff] %v2645
    %2654 = vst [vmem:[#allocation2 + $0x1b0] sm:$0xff] %v2646
    %2655 = vst [vmem:[#allocation2 + $0x1b8] sm:$0xff] %v2647
    %2656 = vrot.lane.b32.xlu0 %v1934, 112
    %v2657 = vpop.permute.xlu0 %2656
    %2658 = vrot.lane.b32.xlu0 %v1935, 112
    %v2659 = vpop.permute.xlu0 %2658
    %2660 = vrot.lane.b32.xlu0 %v1936, 112
    %v2661 = vpop.permute.xlu0 %2660
    %2662 = vrot.lane.b32.xlu0 %v1912, 112
    %v2663 = vpop.permute.xlu0 %2662
    %2664 = vrot.lane.b32.xlu0 %v1937, 112
    %v2665 = vpop.permute.xlu0 %2664
    %2666 = vrot.lane.b32.xlu0 %v1938, 112
    %v2667 = vpop.permute.xlu0 %2666
    %2668 = vrot.lane.b32.xlu0 %v1939, 112
    %v2669 = vpop.permute.xlu0 %2668
    %2670 = vrot.lane.b32.xlu0 %v1913, 112
    %v2671 = vpop.permute.xlu0 %2670
    %v2672 = vsel %vm947, %v2657, %v2659
    %v2673 = vsel %vm947, %v2659, %v2661
    %v2674 = vsel %vm947, %v2661, %v2663
    %v2675 = vsel %vm947, %v2665, %v2667
    %v2676 = vsel %vm947, %v2667, %v2669
    %v2677 = vsel %vm947, %v2669, %v2671
    %v2686 = vsel %vm960, %v2663, %v2657
    %v2690 = vsel %vm960, %v2671, %v2665
    %v2692 = vld [vmem:[#allocation3 + $0x1c0] sm:$0xff]
    %v2693 = vld [vmem:[#allocation3 + $0x1c8] sm:$0xff]
    %v2694 = vld [vmem:[#allocation3 + $0x1d0] sm:$0xff]
    %v2695 = vld [vmem:[#allocation3 + $0x1d8] sm:$0xff]
    %v2696 = vld [vmem:[#allocation3 + $0x1e0] sm:$0xff]
    %v2697 = vld [vmem:[#allocation3 + $0x1e8] sm:$0xff]
    %v2698 = vld [vmem:[#allocation3 + $0x1f0] sm:$0xff]
    %v2699 = vld [vmem:[#allocation3 + $0x1f8] sm:$0xff]
    %v2700 = vunpack.c.l.bf16 %v2672
    %v2701 = vunpack.c.l.bf16 %v2673
    %v2702 = vunpack.c.l.bf16 %v2674
    %v2703 = vunpack.c.l.bf16 %v2686
    %v2704 = vunpack.c.h.bf16 %v2672
    %v2705 = vunpack.c.h.bf16 %v2673
    %v2706 = vunpack.c.h.bf16 %v2674
    %v2707 = vunpack.c.h.bf16 %v2686
    %v2708 = vunpack.c.l.bf16 %v2675
    %v2709 = vunpack.c.l.bf16 %v2676
    %v2710 = vunpack.c.l.bf16 %v2677
    %v2711 = vunpack.c.l.bf16 %v2690
    %v2712 = vunpack.c.h.bf16 %v2675
    %v2713 = vunpack.c.h.bf16 %v2676
    %v2714 = vunpack.c.h.bf16 %v2677
    %v2715 = vunpack.c.h.bf16 %v2690
    %v2716 = vunpack.c.l.bf16 %v2692
    %v2717 = vunpack.c.h.bf16 %v2692
    %v2718 = vunpack.c.l.bf16 %v2693
    %v2719 = vunpack.c.h.bf16 %v2693
    %v2720 = vunpack.c.l.bf16 %v2694
    %v2721 = vunpack.c.h.bf16 %v2694
    %v2722 = vunpack.c.l.bf16 %v2695
    %v2723 = vunpack.c.h.bf16 %v2695
    %v2724 = vunpack.c.l.bf16 %v2696
    %v2725 = vunpack.c.h.bf16 %v2696
    %v2726 = vunpack.c.l.bf16 %v2697
    %v2727 = vunpack.c.h.bf16 %v2697
    %v2728 = vunpack.c.l.bf16 %v2698
    %v2729 = vunpack.c.h.bf16 %v2698
    %v2730 = vunpack.c.l.bf16 %v2699
    %v2731 = vunpack.c.h.bf16 %v2699
    %v2732 = vmul.f32 %v2700, %v2716
    %v2733 = vmul.f32 %v2701, %v2717
    %v2734 = vmul.f32 %v2702, %v2718
    %v2735 = vmul.f32 %v2703, %v2719
    %v2736 = vmul.f32 %v2704, %v2720
    %v2737 = vmul.f32 %v2705, %v2721
    %v2738 = vmul.f32 %v2706, %v2722
    %v2739 = vmul.f32 %v2707, %v2723
    %v2740 = vmul.f32 %v2708, %v2724
    %v2741 = vmul.f32 %v2709, %v2725
    %v2742 = vmul.f32 %v2710, %v2726
    %v2743 = vmul.f32 %v2711, %v2727
    %v2744 = vmul.f32 %v2712, %v2728
    %v2745 = vmul.f32 %v2713, %v2729
    %v2746 = vmul.f32 %v2714, %v2730
    %v2747 = vmul.f32 %v2715, %v2731
    %v2748 = vpack.c.bf16 %v2733, %v2732
    %v2749 = vpack.c.bf16 %v2735, %v2734
    %v2750 = vpack.c.bf16 %v2737, %v2736
    %v2751 = vpack.c.bf16 %v2739, %v2738
    %v2752 = vpack.c.bf16 %v2741, %v2740
    %v2753 = vpack.c.bf16 %v2743, %v2742
    %v2754 = vpack.c.bf16 %v2745, %v2744
    %v2755 = vpack.c.bf16 %v2747, %v2746
    %2756 = vst [vmem:[#allocation2 + $0x1c0] sm:$0xff] %v2748
    %2757 = vst [vmem:[#allocation2 + $0x1c8] sm:$0xff] %v2749
    %2758 = vst [vmem:[#allocation2 + $0x1d0] sm:$0xff] %v2750
    %2759 = vst [vmem:[#allocation2 + $0x1d8] sm:$0xff] %v2751
    %2760 = vst [vmem:[#allocation2 + $0x1e0] sm:$0xff] %v2752
    %2761 = vst [vmem:[#allocation2 + $0x1e8] sm:$0xff] %v2753
    %2762 = vst [vmem:[#allocation2 + $0x1f0] sm:$0xff] %v2754
    %2763 = vst [vmem:[#allocation2 + $0x1f8] sm:$0xff] %v2755
    %2764 = vrot.lane.b32.xlu0 %v1934, 111
    %v2765 = vpop.permute.xlu0 %2764
    %2766 = vrot.lane.b32.xlu0 %v1935, 111
    %v2767 = vpop.permute.xlu0 %2766
    %2768 = vrot.lane.b32.xlu0 %v1936, 111
    %v2769 = vpop.permute.xlu0 %2768
    %2770 = vrot.lane.b32.xlu0 %v1912, 111
    %v2771 = vpop.permute.xlu0 %2770
    %2772 = vrot.lane.b32.xlu0 %v1937, 111
    %v2773 = vpop.permute.xlu0 %2772
    %2774 = vrot.lane.b32.xlu0 %v1938, 111
    %v2775 = vpop.permute.xlu0 %2774
    %2776 = vrot.lane.b32.xlu0 %v1939, 111
    %v2777 = vpop.permute.xlu0 %2776
    %2778 = vrot.lane.b32.xlu0 %v1913, 111
    %v2779 = vpop.permute.xlu0 %2778
    %v2780 = vsel %vm1057, %v2765, %v2767
    %v2781 = vsel %vm1057, %v2767, %v2769
    %v2782 = vsel %vm1057, %v2769, %v2771
    %v2783 = vsel %vm1057, %v2773, %v2775
    %v2784 = vsel %vm1057, %v2775, %v2777
    %v2785 = vsel %vm1057, %v2777, %v2779
    %v2794 = vsel %vm1070, %v2771, %v2765
    %v2798 = vsel %vm1070, %v2779, %v2773
    %v2800 = vld [vmem:[#allocation3 + $0x200] sm:$0xff]
    %v2801 = vld [vmem:[#allocation3 + $0x208] sm:$0xff]
    %v2802 = vld [vmem:[#allocation3 + $0x210] sm:$0xff]
    %v2803 = vld [vmem:[#allocation3 + $0x218] sm:$0xff]
    %v2804 = vld [vmem:[#allocation3 + $0x220] sm:$0xff]
    %v2805 = vld [vmem:[#allocation3 + $0x228] sm:$0xff]
    %v2806 = vld [vmem:[#allocation3 + $0x230] sm:$0xff]
    %v2807 = vld [vmem:[#allocation3 + $0x238] sm:$0xff]
    %v2808 = vunpack.c.l.bf16 %v2780
    %v2809 = vunpack.c.l.bf16 %v2781
    %v2810 = vunpack.c.l.bf16 %v2782
    %v2811 = vunpack.c.l.bf16 %v2794
    %v2812 = vunpack.c.h.bf16 %v2780
    %v2813 = vunpack.c.h.bf16 %v2781
    %v2814 = vunpack.c.h.bf16 %v2782
    %v2815 = vunpack.c.h.bf16 %v2794
    %v2816 = vunpack.c.l.bf16 %v2783
    %v2817 = vunpack.c.l.bf16 %v2784
    %v2818 = vunpack.c.l.bf16 %v2785
    %v2819 = vunpack.c.l.bf16 %v2798
    %v2820 = vunpack.c.h.bf16 %v2783
    %v2821 = vunpack.c.h.bf16 %v2784
    %v2822 = vunpack.c.h.bf16 %v2785
    %v2823 = vunpack.c.h.bf16 %v2798
    %v2824 = vunpack.c.l.bf16 %v2800
    %v2825 = vunpack.c.h.bf16 %v2800
    %v2826 = vunpack.c.l.bf16 %v2801
    %v2827 = vunpack.c.h.bf16 %v2801
    %v2828 = vunpack.c.l.bf16 %v2802
    %v2829 = vunpack.c.h.bf16 %v2802
    %v2830 = vunpack.c.l.bf16 %v2803
    %v2831 = vunpack.c.h.bf16 %v2803
    %v2832 = vunpack.c.l.bf16 %v2804
    %v2833 = vunpack.c.h.bf16 %v2804
    %v2834 = vunpack.c.l.bf16 %v2805
    %v2835 = vunpack.c.h.bf16 %v2805
    %v2836 = vunpack.c.l.bf16 %v2806
    %v2837 = vunpack.c.h.bf16 %v2806
    %v2838 = vunpack.c.l.bf16 %v2807
    %v2839 = vunpack.c.h.bf16 %v2807
    %v2840 = vmul.f32 %v2808, %v2824
    %v2841 = vmul.f32 %v2809, %v2825
    %v2842 = vmul.f32 %v2810, %v2826
    %v2843 = vmul.f32 %v2811, %v2827
    %v2844 = vmul.f32 %v2812, %v2828
    %v2845 = vmul.f32 %v2813, %v2829
    %v2846 = vmul.f32 %v2814, %v2830
    %v2847 = vmul.f32 %v2815, %v2831
    %v2848 = vmul.f32 %v2816, %v2832
    %v2849 = vmul.f32 %v2817, %v2833
    %v2850 = vmul.f32 %v2818, %v2834
    %v2851 = vmul.f32 %v2819, %v2835
    %v2852 = vmul.f32 %v2820, %v2836
    %v2853 = vmul.f32 %v2821, %v2837
    %v2854 = vmul.f32 %v2822, %v2838
    %v2855 = vmul.f32 %v2823, %v2839
    %v2856 = vpack.c.bf16 %v2841, %v2840
    %v2857 = vpack.c.bf16 %v2843, %v2842
    %v2858 = vpack.c.bf16 %v2845, %v2844
    %v2859 = vpack.c.bf16 %v2847, %v2846
    %v2860 = vpack.c.bf16 %v2849, %v2848
    %v2861 = vpack.c.bf16 %v2851, %v2850
    %v2862 = vpack.c.bf16 %v2853, %v2852
    %v2863 = vpack.c.bf16 %v2855, %v2854
    %2864 = vst [vmem:[#allocation2 + $0x200] sm:$0xff] %v2856
    %2865 = vst [vmem:[#allocation2 + $0x208] sm:$0xff] %v2857
    %2866 = vst [vmem:[#allocation2 + $0x210] sm:$0xff] %v2858
    %2867 = vst [vmem:[#allocation2 + $0x218] sm:$0xff] %v2859
    %2868 = vst [vmem:[#allocation2 + $0x220] sm:$0xff] %v2860
    %2869 = vst [vmem:[#allocation2 + $0x228] sm:$0xff] %v2861
    %2870 = vst [vmem:[#allocation2 + $0x230] sm:$0xff] %v2862
    %2871 = vst [vmem:[#allocation2 + $0x238] sm:$0xff] %v2863
    %v2872 = vld [vmem:[#allocation6] sm:$0xff]
    %v2873 = vld [vmem:[#allocation6 + $0x8] sm:$0xf]
    %v2874 = vld [vmem:[#allocation6 + $0xc] sm:$0xff]
    %v2875 = vld [vmem:[#allocation6 + $0x14] sm:$0xf]
    %v2876 = vld [vmem:[#allocation6 + $0x18] sm:$0xff]
    %v2877 = vld [vmem:[#allocation6 + $0x20] sm:$0xf]
    %v2878 = vld [vmem:[#allocation6 + $0x24] sm:$0xff]
    %v2879 = vld [vmem:[#allocation6 + $0x2c] sm:$0xf]
    %v2880 = vld [vmem:[#allocation2] sm:$0xff]
    %v2881 = vld [vmem:[#allocation2 + $0x8] sm:$0xff]
    %v2882 = vld [vmem:[#allocation2 + $0x10] sm:$0xff]
    %v2883 = vld [vmem:[#allocation2 + $0x18] sm:$0xff]
    %v2884 = vld [vmem:[#allocation2 + $0x20] sm:$0xff]
    %v2885 = vld [vmem:[#allocation2 + $0x28] sm:$0xff]
    %v2886 = vld [vmem:[#allocation2 + $0x30] sm:$0xff]
    %v2887 = vld [vmem:[#allocation2 + $0x38] sm:$0xff]
    %v2888 = vld [vmem:[#allocation2 + $0x40] sm:$0xff]
    %v2889 = vld [vmem:[#allocation2 + $0x48] sm:$0xff]
    %v2890 = vld [vmem:[#allocation2 + $0x50] sm:$0xff]
    %v2891 = vld [vmem:[#allocation2 + $0x58] sm:$0xff]
    %v2892 = vld [vmem:[#allocation2 + $0x60] sm:$0xff]
    %v2893 = vld [vmem:[#allocation2 + $0x68] sm:$0xff]
    %v2894 = vld [vmem:[#allocation2 + $0x70] sm:$0xff]
    %v2895 = vld [vmem:[#allocation2 + $0x78] sm:$0xff]
    %v2896 = vld [vmem:[#allocation2 + $0x80] sm:$0xff]
    %v2897 = vld [vmem:[#allocation2 + $0x88] sm:$0xff]
    %v2898 = vld [vmem:[#allocation2 + $0x90] sm:$0xff]
    %v2899 = vld [vmem:[#allocation2 + $0x98] sm:$0xff]
    %v2900 = vld [vmem:[#allocation2 + $0xa0] sm:$0xff]
    %v2901 = vld [vmem:[#allocation2 + $0xa8] sm:$0xff]
    %v2902 = vld [vmem:[#allocation2 + $0xb0] sm:$0xff]
    %v2903 = vld [vmem:[#allocation2 + $0xb8] sm:$0xff]
    %v2904 = vld [vmem:[#allocation2 + $0xc0] sm:$0xff]
    %v2905 = vld [vmem:[#allocation2 + $0xc8] sm:$0xff]
    %v2906 = vld [vmem:[#allocation2 + $0xd0] sm:$0xff]
    %v2907 = vld [vmem:[#allocation2 + $0xd8] sm:$0xff]
    %v2908 = vld [vmem:[#allocation2 + $0xe0] sm:$0xff]
    %v2909 = vld [vmem:[#allocation2 + $0xe8] sm:$0xff]
    %v2910 = vld [vmem:[#allocation2 + $0xf0] sm:$0xff]
    %v2911 = vld [vmem:[#allocation2 + $0xf8] sm:$0xff]
    %v2912 = vld [vmem:[#allocation2 + $0x100] sm:$0xff]
    %v2913 = vld [vmem:[#allocation2 + $0x108] sm:$0xff]
    %v2914 = vld [vmem:[#allocation2 + $0x110] sm:$0xff]
    %v2915 = vld [vmem:[#allocation2 + $0x118] sm:$0xff]
    %v2916 = vld [vmem:[#allocation2 + $0x120] sm:$0xff]
    %v2917 = vld [vmem:[#allocation2 + $0x128] sm:$0xff]
    %v2918 = vld [vmem:[#allocation2 + $0x130] sm:$0xff]
    %v2919 = vld [vmem:[#allocation2 + $0x138] sm:$0xff]
    %v2920 = vld [vmem:[#allocation2 + $0x140] sm:$0xff]
    %v2921 = vld [vmem:[#allocation2 + $0x148] sm:$0xff]
    %v2922 = vld [vmem:[#allocation2 + $0x150] sm:$0xff]
    %v2923 = vld [vmem:[#allocation2 + $0x158] sm:$0xff]
    %v2924 = vld [vmem:[#allocation2 + $0x160] sm:$0xff]
    %v2925 = vld [vmem:[#allocation2 + $0x168] sm:$0xff]
    %v2926 = vld [vmem:[#allocation2 + $0x170] sm:$0xff]
    %v2927 = vld [vmem:[#allocation2 + $0x178] sm:$0xff]
    %v2928 = vld [vmem:[#allocation2 + $0x180] sm:$0xff]
    %v2929 = vld [vmem:[#allocation2 + $0x188] sm:$0xff]
    %v2930 = vld [vmem:[#allocation2 + $0x190] sm:$0xff]
    %v2931 = vld [vmem:[#allocation2 + $0x198] sm:$0xff]
    %v2932 = vld [vmem:[#allocation2 + $0x1a0] sm:$0xff]
    %v2933 = vld [vmem:[#allocation2 + $0x1a8] sm:$0xff]
    %v2934 = vld [vmem:[#allocation2 + $0x1b0] sm:$0xff]
    %v2935 = vld [vmem:[#allocation2 + $0x1b8] sm:$0xff]
    %v2936 = vld [vmem:[#allocation2 + $0x1c0] sm:$0xff]
    %v2937 = vld [vmem:[#allocation2 + $0x1c8] sm:$0xff]
    %v2938 = vld [vmem:[#allocation2 + $0x1d0] sm:$0xff]
    %v2939 = vld [vmem:[#allocation2 + $0x1d8] sm:$0xff]
    %v2940 = vld [vmem:[#allocation2 + $0x1e0] sm:$0xff]
    %v2941 = vld [vmem:[#allocation2 + $0x1e8] sm:$0xff]
    %v2942 = vld [vmem:[#allocation2 + $0x1f0] sm:$0xff]
    %v2943 = vld [vmem:[#allocation2 + $0x1f8] sm:$0xff]
    %v2944 = vld [vmem:[#allocation2 + $0x200] sm:$0xff]
    %v2945 = vld [vmem:[#allocation2 + $0x208] sm:$0xff]
    %v2946 = vld [vmem:[#allocation2 + $0x210] sm:$0xff]
    %v2947 = vld [vmem:[#allocation2 + $0x218] sm:$0xff]
    %v2948 = vld [vmem:[#allocation2 + $0x220] sm:$0xff]
    %v2949 = vld [vmem:[#allocation2 + $0x228] sm:$0xff]
    %v2950 = vld [vmem:[#allocation2 + $0x230] sm:$0xff]
    %v2951 = vld [vmem:[#allocation2 + $0x238] sm:$0xff]
    %v2952 = vld [vmem:[%s5] sm:$0xff]
    %v2953 = vld [vmem:[%s5 + $0x8] sm:$0xff]
    %v2954 = vld [vmem:[%s5 + $0x10] sm:$0xff]
    %v2955 = vld [vmem:[%s5 + $0x18] sm:$0xff]
    %2957 = vset.pattern.permute.xlu0 0
    %2958 = vperm.xlu0 %2957, %v2952
    %v2959 = vpop.permute.xlu0 %2958
    %2962 = vset.pattern.permute.xlu0 0
    %2963 = vperm.xlu0 %2962, %v2953
    %v2964 = vpop.permute.xlu0 %2963
    %2967 = vset.pattern.permute.xlu0 0
    %2968 = vperm.xlu0 %2967, %v2954
    %v2969 = vpop.permute.xlu0 %2968
    %2972 = vset.pattern.permute.xlu0 0
    %2973 = vperm.xlu0 %2972, %v2955
    %v2974 = vpop.permute.xlu0 %2973
    %v2984 = vunpack.c.l.b16 %v2872
    %v2985 = vunpack.c.h.b16 %v2872
    %v2986 = vunpack.c.l.b16 %v2873
    %v2987 = vunpack.c.l.b16 %v2874
    %v2988 = vunpack.c.h.b16 %v2874
    %v2989 = vunpack.c.l.b16 %v2875
    %v2990 = vunpack.c.l.b16 %v2876
    %v2991 = vunpack.c.h.b16 %v2876
    %v2992 = vunpack.c.l.b16 %v2877
    %v2993 = vunpack.c.l.b16 %v2878
    %v2994 = vunpack.c.h.b16 %v2878
    %v2995 = vunpack.c.l.b16 %v2879
    %v2996 = vpack.c.b16 %v2987, %v2984
    %v2997 = vpack.c.b16 %v2988, %v2985
    %v2998 = vpack.c.b16 %v2989, %v2986
    %v2999 = vpack.c.b16 %v2993, %v2990
    %v3000 = vpack.c.b16 %v2994, %v2991
    %v3001 = vpack.c.b16 %v2995, %v2992
    %v3078 = vunpack.c.l.b16 %v2880
    %v3079 = vunpack.c.h.b16 %v2880
    %v3080 = vunpack.c.l.b16 %v2881
    %v3081 = vunpack.c.h.b16 %v2881
    %v3082 = vunpack.c.l.b16 %v2882
    %v3083 = vunpack.c.h.b16 %v2882
    %v3084 = vunpack.c.l.b16 %v2883
    %v3085 = vunpack.c.h.b16 %v2883
    %v3086 = vunpack.c.l.b16 %v2884
    %v3087 = vunpack.c.h.b16 %v2884
    %v3088 = vunpack.c.l.b16 %v2885
    %v3089 = vunpack.c.h.b16 %v2885
    %v3090 = vunpack.c.l.b16 %v2886
    %v3091 = vunpack.c.h.b16 %v2886
    %v3092 = vunpack.c.l.b16 %v2887
    %v3093 = vunpack.c.h.b16 %v2887
    %v3094 = vunpack.c.l.b16 %v2888
    %v3095 = vunpack.c.h.b16 %v2888
    %v3096 = vunpack.c.l.b16 %v2889
    %v3097 = vunpack.c.h.b16 %v2889
    %v3098 = vunpack.c.l.b16 %v2890
    %v3099 = vunpack.c.h.b16 %v2890
    %v3100 = vunpack.c.l.b16 %v2891
    %v3101 = vunpack.c.h.b16 %v2891
    %v3102 = vunpack.c.l.b16 %v2892
    %v3103 = vunpack.c.h.b16 %v2892
    %v3104 = vunpack.c.l.b16 %v2893
    %v3105 = vunpack.c.h.b16 %v2893
    %v3106 = vunpack.c.l.b16 %v2894
    %v3107 = vunpack.c.h.b16 %v2894
    %v3108 = vunpack.c.l.b16 %v2895
    %v3109 = vunpack.c.h.b16 %v2895
    %v3110 = vunpack.c.l.b16 %v2896
    %v3111 = vunpack.c.h.b16 %v2896
    %v3112 = vunpack.c.l.b16 %v2897
    %v3113 = vunpack.c.h.b16 %v2897
    %v3114 = vunpack.c.l.b16 %v2898
    %v3115 = vunpack.c.h.b16 %v2898
    %v3116 = vunpack.c.l.b16 %v2899
    %v3117 = vunpack.c.h.b16 %v2899
    %v3118 = vunpack.c.l.b16 %v2900
    %v3119 = vunpack.c.h.b16 %v2900
    %v3120 = vunpack.c.l.b16 %v2901
    %v3121 = vunpack.c.h.b16 %v2901
    %v3122 = vunpack.c.l.b16 %v2902
    %v3123 = vunpack.c.h.b16 %v2902
    %v3124 = vunpack.c.l.b16 %v2903
    %v3125 = vunpack.c.h.b16 %v2903
    %v3126 = vunpack.c.l.b16 %v2904
    %v3127 = vunpack.c.h.b16 %v2904
    %v3128 = vunpack.c.l.b16 %v2905
    %v3129 = vunpack.c.h.b16 %v2905
    %v3130 = vunpack.c.l.b16 %v2906
    %v3131 = vunpack.c.h.b16 %v2906
    %v3132 = vunpack.c.l.b16 %v2907
    %v3133 = vunpack.c.h.b16 %v2907
    %v3134 = vunpack.c.l.b16 %v2908
    %v3135 = vunpack.c.h.b16 %v2908
    %v3136 = vunpack.c.l.b16 %v2909
    %v3137 = vunpack.c.h.b16 %v2909
    %v3138 = vunpack.c.l.b16 %v2910
    %v3139 = vunpack.c.h.b16 %v2910
    %v3140 = vunpack.c.l.b16 %v2911
    %v3141 = vunpack.c.h.b16 %v2911
    %v3142 = vunpack.c.l.b16 %v2912
    %v3143 = vunpack.c.h.b16 %v2912
    %v3144 = vunpack.c.l.b16 %v2913
    %v3145 = vunpack.c.h.b16 %v2913
    %v3146 = vunpack.c.l.b16 %v2914
    %v3147 = vunpack.c.h.b16 %v2914
    %v3148 = vunpack.c.l.b16 %v2915
    %v3149 = vunpack.c.h.b16 %v2915
    %v3150 = vunpack.c.l.b16 %v2916
    %v3151 = vunpack.c.h.b16 %v2916
    %v3152 = vunpack.c.l.b16 %v2917
    %v3153 = vunpack.c.h.b16 %v2917
    %v3154 = vunpack.c.l.b16 %v2918
    %v3155 = vunpack.c.h.b16 %v2918
    %v3156 = vunpack.c.l.b16 %v2919
    %v3157 = vunpack.c.h.b16 %v2919
    %v3158 = vunpack.c.l.b16 %v2920
    %v3159 = vunpack.c.h.b16 %v2920
    %v3160 = vunpack.c.l.b16 %v2921
    %v3161 = vunpack.c.h.b16 %v2921
    %v3162 = vunpack.c.l.b16 %v2922
    %v3163 = vunpack.c.h.b16 %v2922
    %v3164 = vunpack.c.l.b16 %v2923
    %v3165 = vunpack.c.h.b16 %v2923
    %v3166 = vunpack.c.l.b16 %v2924
    %v3167 = vunpack.c.h.b16 %v2924
    %v3168 = vunpack.c.l.b16 %v2925
    %v3169 = vunpack.c.h.b16 %v2925
    %v3170 = vunpack.c.l.b16 %v2926
    %v3171 = vunpack.c.h.b16 %v2926
    %v3172 = vunpack.c.l.b16 %v2927
    %v3173 = vunpack.c.h.b16 %v2927
    %v3174 = vunpack.c.l.b16 %v2928
    %v3175 = vunpack.c.h.b16 %v2928
    %v3176 = vunpack.c.l.b16 %v2929
    %v3177 = vunpack.c.h.b16 %v2929
    %v3178 = vunpack.c.l.b16 %v2930
    %v3179 = vunpack.c.h.b16 %v2930
    %v3180 = vunpack.c.l.b16 %v2931
    %v3181 = vunpack.c.h.b16 %v2931
    %v3182 = vunpack.c.l.b16 %v2932
    %v3183 = vunpack.c.h.b16 %v2932
    %v3184 = vunpack.c.l.b16 %v2933
    %v3185 = vunpack.c.h.b16 %v2933
    %v3186 = vunpack.c.l.b16 %v2934
    %v3187 = vunpack.c.h.b16 %v2934
    %v3188 = vunpack.c.l.b16 %v2935
    %v3189 = vunpack.c.h.b16 %v2935
    %v3190 = vunpack.c.l.b16 %v2936
    %v3191 = vunpack.c.h.b16 %v2936
    %v3192 = vunpack.c.l.b16 %v2937
    %v3193 = vunpack.c.h.b16 %v2937
    %v3194 = vunpack.c.l.b16 %v2938
    %v3195 = vunpack.c.h.b16 %v2938
    %v3196 = vunpack.c.l.b16 %v2939
    %v3197 = vunpack.c.h.b16 %v2939
    %v3198 = vunpack.c.l.b16 %v2940
    %v3199 = vunpack.c.h.b16 %v2940
    %v3200 = vunpack.c.l.b16 %v2941
    %v3201 = vunpack.c.h.b16 %v2941
    %v3202 = vunpack.c.l.b16 %v2942
    %v3203 = vunpack.c.h.b16 %v2942
    %v3204 = vunpack.c.l.b16 %v2943
    %v3205 = vunpack.c.h.b16 %v2943
    %v3206 = vunpack.c.l.b16 %v2944
    %v3207 = vunpack.c.h.b16 %v2944
    %v3208 = vunpack.c.l.b16 %v2945
    %v3209 = vunpack.c.h.b16 %v2945
    %v3210 = vunpack.c.l.b16 %v2946
    %v3211 = vunpack.c.h.b16 %v2946
    %v3212 = vunpack.c.l.b16 %v2947
    %v3213 = vunpack.c.h.b16 %v2947
    %v3214 = vunpack.c.l.b16 %v2948
    %v3215 = vunpack.c.h.b16 %v2948
    %v3216 = vunpack.c.l.b16 %v2949
    %v3217 = vunpack.c.h.b16 %v2949
    %v3218 = vunpack.c.l.b16 %v2950
    %v3219 = vunpack.c.h.b16 %v2950
    %v3220 = vunpack.c.l.b16 %v2951
    %v3221 = vunpack.c.h.b16 %v2951
    %v3222 = vpack.c.b16 %v3082, %v3078
    %v3223 = vpack.c.b16 %v3083, %v3079
    %v3224 = vpack.c.b16 %v3084, %v3080
    %v3225 = vpack.c.b16 %v3085, %v3081
    %v3226 = vpack.c.b16 %v3090, %v3086
    %v3227 = vpack.c.b16 %v3091, %v3087
    %v3228 = vpack.c.b16 %v3092, %v3088
    %v3229 = vpack.c.b16 %v3093, %v3089
    %v3230 = vpack.c.b16 %v3098, %v3094
    %v3231 = vpack.c.b16 %v3099, %v3095
    %v3232 = vpack.c.b16 %v3100, %v3096
    %v3233 = vpack.c.b16 %v3101, %v3097
    %v3234 = vpack.c.b16 %v3106, %v3102
    %v3235 = vpack.c.b16 %v3107, %v3103
    %v3236 = vpack.c.b16 %v3108, %v3104
    %v3237 = vpack.c.b16 %v3109, %v3105
    %v3238 = vpack.c.b16 %v3114, %v3110
    %v3239 = vpack.c.b16 %v3115, %v3111
    %v3240 = vpack.c.b16 %v3116, %v3112
    %v3241 = vpack.c.b16 %v3117, %v3113
    %v3242 = vpack.c.b16 %v3122, %v3118
    %v3243 = vpack.c.b16 %v3123, %v3119
    %v3244 = vpack.c.b16 %v3124, %v3120
    %v3245 = vpack.c.b16 %v3125, %v3121
    %v3246 = vpack.c.b16 %v3130, %v3126
    %v3247 = vpack.c.b16 %v3131, %v3127
    %v3248 = vpack.c.b16 %v3132, %v3128
    %v3249 = vpack.c.b16 %v3133, %v3129
    %v3250 = vpack.c.b16 %v3138, %v3134
    %v3251 = vpack.c.b16 %v3139, %v3135
    %v3252 = vpack.c.b16 %v3140, %v3136
    %v3253 = vpack.c.b16 %v3141, %v3137
    %v3254 = vpack.c.b16 %v3146, %v3142
    %v3255 = vpack.c.b16 %v3147, %v3143
    %v3256 = vpack.c.b16 %v3148, %v3144
    %v3257 = vpack.c.b16 %v3149, %v3145
    %v3258 = vpack.c.b16 %v3154, %v3150
    %v3259 = vpack.c.b16 %v3155, %v3151
    %v3260 = vpack.c.b16 %v3156, %v3152
    %v3261 = vpack.c.b16 %v3157, %v3153
    %v3262 = vpack.c.b16 %v3162, %v3158
    %v3263 = vpack.c.b16 %v3163, %v3159
    %v3264 = vpack.c.b16 %v3164, %v3160
    %v3265 = vpack.c.b16 %v3165, %v3161
    %v3266 = vpack.c.b16 %v3170, %v3166
    %v3267 = vpack.c.b16 %v3171, %v3167
    %v3268 = vpack.c.b16 %v3172, %v3168
    %v3269 = vpack.c.b16 %v3173, %v3169
    %v3270 = vpack.c.b16 %v3178, %v3174
    %v3271 = vpack.c.b16 %v3179, %v3175
    %v3272 = vpack.c.b16 %v3180, %v3176
    %v3273 = vpack.c.b16 %v3181, %v3177
    %v3274 = vpack.c.b16 %v3186, %v3182
    %v3275 = vpack.c.b16 %v3187, %v3183
    %v3276 = vpack.c.b16 %v3188, %v3184
    %v3277 = vpack.c.b16 %v3189, %v3185
    %v3278 = vpack.c.b16 %v3194, %v3190
    %v3279 = vpack.c.b16 %v3195, %v3191
    %v3280 = vpack.c.b16 %v3196, %v3192
    %v3281 = vpack.c.b16 %v3197, %v3193
    %v3282 = vpack.c.b16 %v3202, %v3198
    %v3283 = vpack.c.b16 %v3203, %v3199
    %v3284 = vpack.c.b16 %v3204, %v3200
    %v3285 = vpack.c.b16 %v3205, %v3201
    %v3286 = vpack.c.b16 %v3210, %v3206
    %v3287 = vpack.c.b16 %v3211, %v3207
    %v3288 = vpack.c.b16 %v3212, %v3208
    %v3289 = vpack.c.b16 %v3213, %v3209
    %v3290 = vpack.c.b16 %v3218, %v3214
    %v3291 = vpack.c.b16 %v3219, %v3215
    %v3292 = vpack.c.b16 %v3220, %v3216
    %v3293 = vpack.c.b16 %v3221, %v3217
    %v3367 = vsel %vm1645, %v2998, 0
    %v3370 = vsel %vm1645, %v3001, 0
    %3372 = vmatpush.bf16.msra.mxu0 %v3250
    %3373 = vmatpush.bf16.msra.mxu0 %v3246
    %3374 = vmatpush.bf16.msra.mxu0 %v3242
    %3375 = vmatpush.bf16.msra.mxu0 %v3238
    %3376 = vmatpush.bf16.msra.mxu0 %v3234
    %3377 = vmatpush.bf16.msra.mxu0 %v3230
    %3378 = vmatpush.bf16.msra.mxu0 %v3226
    %3379 = vmatpush.bf16.msra.mxu0 %v3222
    %3380 = vmatmul.bf16.gmra.mxu0 %v2996
    %v3381 = vpop.f32.mrf.mxu0
    %v3382 = vadd.f32 %v2959, %v3381
    %v3383 = vpop.f32.mrf.mxu0
    %v3384 = vadd.f32 %v2964, %v3383
    %3385 = vmatmul.bf16.gmra.mxu0 %v2999
    %v3386 = vpop.f32.mrf.mxu0
    %v3387 = vadd.f32 %v2969, %v3386
    %v3388 = vpop.f32.mrf.mxu0
    %v3389 = vadd.f32 %v2974, %v3388
    %3390 = vdwg.mxu0
    %3391 = vmatpush.bf16.msra.mxu0 %v3282
    %3392 = vmatpush.bf16.msra.mxu0 %v3278
    %3393 = vmatpush.bf16.msra.mxu0 %v3274
    %3394 = vmatpush.bf16.msra.mxu0 %v3270
    %3395 = vmatpush.bf16.msra.mxu0 %v3266
    %3396 = vmatpush.bf16.msra.mxu0 %v3262
    %3397 = vmatpush.bf16.msra.mxu0 %v3258
    %3398 = vmatpush.bf16.msra.mxu0 %v3254
    %3399 = vmatmul.bf16.gmra.mxu0 %v2997
    %v3400 = vpop.f32.mrf.mxu0
    %v3401 = vadd.f32 %v3382, %v3400
    %v3402 = vpop.f32.mrf.mxu0
    %v3403 = vadd.f32 %v3384, %v3402
    %3404 = vmatmul.bf16.gmra.mxu0 %v3000
    %v3405 = vpop.f32.mrf.mxu0
    %v3406 = vadd.f32 %v3387, %v3405
    %v3407 = vpop.f32.mrf.mxu0
    %v3408 = vadd.f32 %v3389, %v3407
    %3409 = vdwg.mxu0
    %3410 = vmatpush.bf16.msra.mxu0 0
    %3411 = vmatpush.bf16.msra.mxu0 0
    %3412 = vmatpush.bf16.msra.mxu0 0
    %3413 = vmatpush.bf16.msra.mxu0 0
    %3414 = vmatpush.bf16.msra.mxu0 0
    %3415 = vmatpush.bf16.msra.mxu0 0
    %3416 = vmatpush.bf16.msra.mxu0 %v3290
    %3417 = vmatpush.bf16.msra.mxu0 %v3286
    %3418 = vmatmul.bf16.gmra.mxu0 %v3367
    %v3419 = vpop.f32.mrf.mxu0
    %v3420 = vadd.f32 %v3401, %v3419
    %v3421 = vpop.f32.mrf.mxu0
    %v3422 = vadd.f32 %v3403, %v3421
    %3423 = vmatmul.bf16.gmra.mxu0 %v3370
    %v3424 = vpop.f32.mrf.mxu0
    %v3425 = vadd.f32 %v3406, %v3424
    %v3426 = vpop.f32.mrf.mxu0
    %v3427 = vadd.f32 %v3408, %v3426
    %3428 = vdwg.mxu0
    %3429 = vmatpush.bf16.msra.mxu0 %v3251
    %3430 = vmatpush.bf16.msra.mxu0 %v3247
    %3431 = vmatpush.bf16.msra.mxu0 %v3243
    %3432 = vmatpush.bf16.msra.mxu0 %v3239
    %3433 = vmatpush.bf16.msra.mxu0 %v3235
    %3434 = vmatpush.bf16.msra.mxu0 %v3231
    %3435 = vmatpush.bf16.msra.mxu0 %v3227
    %3436 = vmatpush.bf16.msra.mxu0 %v3223
    %3437 = vmatmul.bf16.gmra.mxu0 %v2996
    %v3438 = vpop.f32.mrf.mxu0
    %v3439 = vadd.f32 %v2959, %v3438
    %v3440 = vpop.f32.mrf.mxu0
    %v3441 = vadd.f32 %v2964, %v3440
    %3442 = vmatmul.bf16.gmra.mxu0 %v2999
    %v3443 = vpop.f32.mrf.mxu0
    %v3444 = vadd.f32 %v2969, %v3443
    %v3445 = vpop.f32.mrf.mxu0
    %v3446 = vadd.f32 %v2974, %v3445
    %3447 = vdwg.mxu0
    %3448 = vmatpush.bf16.msra.mxu0 %v3283
    %3449 = vmatpush.bf16.msra.mxu0 %v3279
    %3450 = vmatpush.bf16.msra.mxu0 %v3275
    %3451 = vmatpush.bf16.msra.mxu0 %v3271
    %3452 = vmatpush.bf16.msra.mxu0 %v3267
    %3453 = vmatpush.bf16.msra.mxu0 %v3263
    %3454 = vmatpush.bf16.msra.mxu0 %v3259
    %3455 = vmatpush.bf16.msra.mxu0 %v3255
    %3456 = vmatmul.bf16.gmra.mxu0 %v2997
    %v3457 = vpop.f32.mrf.mxu0
    %v3458 = vadd.f32 %v3439, %v3457
    %v3459 = vpop.f32.mrf.mxu0
    %v3460 = vadd.f32 %v3441, %v3459
    %3461 = vmatmul.bf16.gmra.mxu0 %v3000
    %v3462 = vpop.f32.mrf.mxu0
    %v3463 = vadd.f32 %v3444, %v3462
    %v3464 = vpop.f32.mrf.mxu0
    %v3465 = vadd.f32 %v3446, %v3464
    %3466 = vdwg.mxu0
    %3467 = vmatpush.bf16.msra.mxu0 0
    %3468 = vmatpush.bf16.msra.mxu0 0
    %3469 = vmatpush.bf16.msra.mxu0 0
    %3470 = vmatpush.bf16.msra.mxu0 0
    %3471 = vmatpush.bf16.msra.mxu0 0
    %3472 = vmatpush.bf16.msra.mxu0 0
    %3473 = vmatpush.bf16.msra.mxu0 %v3291
    %3474 = vmatpush.bf16.msra.mxu0 %v3287
    %3475 = vmatmul.bf16.gmra.mxu0 %v3367
    %v3476 = vpop.f32.mrf.mxu0
    %v3477 = vadd.f32 %v3458, %v3476
    %v3478 = vpop.f32.mrf.mxu0
    %v3479 = vadd.f32 %v3460, %v3478
    %3480 = vmatmul.bf16.gmra.mxu0 %v3370
    %v3481 = vpop.f32.mrf.mxu0
    %v3482 = vadd.f32 %v3463, %v3481
    %v3483 = vpop.f32.mrf.mxu0
    %v3484 = vadd.f32 %v3465, %v3483
    %3485 = vdwg.mxu0
    %3486 = vmatpush.bf16.msra.mxu0 %v3252
    %3487 = vmatpush.bf16.msra.mxu0 %v3248
    %3488 = vmatpush.bf16.msra.mxu0 %v3244
    %3489 = vmatpush.bf16.msra.mxu0 %v3240
    %3490 = vmatpush.bf16.msra.mxu0 %v3236
    %3491 = vmatpush.bf16.msra.mxu0 %v3232
    %3492 = vmatpush.bf16.msra.mxu0 %v3228
    %3493 = vmatpush.bf16.msra.mxu0 %v3224
    %3494 = vmatmul.bf16.gmra.mxu0 %v2996
    %v3495 = vpop.f32.mrf.mxu0
    %v3496 = vadd.f32 %v2959, %v3495
    %v3497 = vpop.f32.mrf.mxu0
    %v3498 = vadd.f32 %v2964, %v3497
    %3499 = vmatmul.bf16.gmra.mxu0 %v2999
    %v3500 = vpop.f32.mrf.mxu0
    %v3501 = vadd.f32 %v2969, %v3500
    %v3502 = vpop.f32.mrf.mxu0
    %v3503 = vadd.f32 %v2974, %v3502
    %3504 = vdwg.mxu0
    %3505 = vmatpush.bf16.msra.mxu0 %v3284
    %3506 = vmatpush.bf16.msra.mxu0 %v3280
    %3507 = vmatpush.bf16.msra.mxu0 %v3276
    %3508 = vmatpush.bf16.msra.mxu0 %v3272
    %3509 = vmatpush.bf16.msra.mxu0 %v3268
    %3510 = vmatpush.bf16.msra.mxu0 %v3264
    %3511 = vmatpush.bf16.msra.mxu0 %v3260
    %3512 = vmatpush.bf16.msra.mxu0 %v3256
    %3513 = vmatmul.bf16.gmra.mxu0 %v2997
    %v3514 = vpop.f32.mrf.mxu0
    %v3515 = vadd.f32 %v3496, %v3514
    %v3516 = vpop.f32.mrf.mxu0
    %v3517 = vadd.f32 %v3498, %v3516
    %3518 = vmatmul.bf16.gmra.mxu0 %v3000
    %v3519 = vpop.f32.mrf.mxu0
    %v3520 = vadd.f32 %v3501, %v3519
    %v3521 = vpop.f32.mrf.mxu0
    %v3522 = vadd.f32 %v3503, %v3521
    %3523 = vdwg.mxu0
    %3524 = vmatpush.bf16.msra.mxu0 0
    %3525 = vmatpush.bf16.msra.mxu0 0
    %3526 = vmatpush.bf16.msra.mxu0 0
    %3527 = vmatpush.bf16.msra.mxu0 0
    %3528 = vmatpush.bf16.msra.mxu0 0
    %3529 = vmatpush.bf16.msra.mxu0 0
    %3530 = vmatpush.bf16.msra.mxu0 %v3292
    %3531 = vmatpush.bf16.msra.mxu0 %v3288
    %3532 = vmatmul.bf16.gmra.mxu0 %v3367
    %v3533 = vpop.f32.mrf.mxu0
    %v3534 = vadd.f32 %v3515, %v3533
    %v3535 = vpop.f32.mrf.mxu0
    %v3536 = vadd.f32 %v3517, %v3535
    %3537 = vmatmul.bf16.gmra.mxu0 %v3370
    %v3538 = vpop.f32.mrf.mxu0
    %v3539 = vadd.f32 %v3520, %v3538
    %v3540 = vpop.f32.mrf.mxu0
    %v3541 = vadd.f32 %v3522, %v3540
    %3542 = vdwg.mxu0
    %3543 = vmatpush.bf16.msra.mxu0 %v3253
    %3544 = vmatpush.bf16.msra.mxu0 %v3249
    %3545 = vmatpush.bf16.msra.mxu0 %v3245
    %3546 = vmatpush.bf16.msra.mxu0 %v3241
    %3547 = vmatpush.bf16.msra.mxu0 %v3237
    %3548 = vmatpush.bf16.msra.mxu0 %v3233
    %3549 = vmatpush.bf16.msra.mxu0 %v3229
    %3550 = vmatpush.bf16.msra.mxu0 %v3225
    %3551 = vmatmul.bf16.gmra.mxu0 %v2996
    %v3552 = vpop.f32.mrf.mxu0
    %v3553 = vadd.f32 %v2959, %v3552
    %v3554 = vpop.f32.mrf.mxu0
    %v3555 = vadd.f32 %v2964, %v3554
    %3556 = vmatmul.bf16.gmra.mxu0 %v2999
    %v3557 = vpop.f32.mrf.mxu0
    %v3558 = vadd.f32 %v2969, %v3557
    %v3559 = vpop.f32.mrf.mxu0
    %v3560 = vadd.f32 %v2974, %v3559
    %3561 = vdwg.mxu0
    %3562 = vmatpush.bf16.msra.mxu0 %v3285
    %3563 = vmatpush.bf16.msra.mxu0 %v3281
    %3564 = vmatpush.bf16.msra.mxu0 %v3277
    %3565 = vmatpush.bf16.msra.mxu0 %v3273
    %3566 = vmatpush.bf16.msra.mxu0 %v3269
    %3567 = vmatpush.bf16.msra.mxu0 %v3265
    %3568 = vmatpush.bf16.msra.mxu0 %v3261
    %3569 = vmatpush.bf16.msra.mxu0 %v3257
    %3570 = vmatmul.bf16.gmra.mxu0 %v2997
    %v3571 = vpop.f32.mrf.mxu0
    %v3572 = vadd.f32 %v3553, %v3571
    %v3573 = vpop.f32.mrf.mxu0
    %v3574 = vadd.f32 %v3555, %v3573
    %3575 = vmatmul.bf16.gmra.mxu0 %v3000
    %v3576 = vpop.f32.mrf.mxu0
    %v3577 = vadd.f32 %v3558, %v3576
    %v3578 = vpop.f32.mrf.mxu0
    %v3579 = vadd.f32 %v3560, %v3578
    %3580 = vdwg.mxu0
    %3581 = vmatpush.bf16.msra.mxu0 0
    %3582 = vmatpush.bf16.msra.mxu0 0
    %3583 = vmatpush.bf16.msra.mxu0 0
    %3584 = vmatpush.bf16.msra.mxu0 0
    %3585 = vmatpush.bf16.msra.mxu0 0
    %3586 = vmatpush.bf16.msra.mxu0 0
    %3587 = vmatpush.bf16.msra.mxu0 %v3293
    %3588 = vmatpush.bf16.msra.mxu0 %v3289
    %3589 = vmatmul.bf16.gmra.mxu0 %v3367
    %v3590 = vpop.f32.mrf.mxu0
    %v3591 = vadd.f32 %v3572, %v3590
    %v3592 = vpop.f32.mrf.mxu0
    %v3593 = vadd.f32 %v3574, %v3592
    %3594 = vmatmul.bf16.gmra.mxu0 %v3370
    %v3595 = vpop.f32.mrf.mxu0
    %v3596 = vadd.f32 %v3577, %v3595
    %v3597 = vpop.f32.mrf.mxu0
    %v3598 = vadd.f32 %v3579, %v3597
    %3599 = vdwg.mxu0
    %v3600 = vmax.f32 %v3420, 0.0
    %v3601 = vmax.f32 %v3477, 0.0
    %v3602 = vmax.f32 %v3534, 0.0
    %v3603 = vmax.f32 %v3591, 0.0
    %v3604 = vmax.f32 %v3422, 0.0
    %v3605 = vmax.f32 %v3479, 0.0
    %v3606 = vmax.f32 %v3536, 0.0
    %v3607 = vmax.f32 %v3593, 0.0
    %v3608 = vmax.f32 %v3425, 0.0
    %v3609 = vmax.f32 %v3482, 0.0
    %v3610 = vmax.f32 %v3539, 0.0
    %v3611 = vmax.f32 %v3596, 0.0
    %v3612 = vmax.f32 %v3427, 0.0
    %v3613 = vmax.f32 %v3484, 0.0
    %v3614 = vmax.f32 %v3541, 0.0
    %v3615 = vmax.f32 %v3598, 0.0
    %v3616 = vpack.c.bf16 %v3601, %v3600
    %v3617 = vpack.c.bf16 %v3603, %v3602
    %v3618 = vpack.c.bf16 %v3605, %v3604
    %v3619 = vpack.c.bf16 %v3607, %v3606
    %v3620 = vpack.c.bf16 %v3609, %v3608
    %v3621 = vpack.c.bf16 %v3611, %v3610
    %v3622 = vpack.c.bf16 %v3613, %v3612
    %v3623 = vpack.c.bf16 %v3615, %v3614
    %v3628 = vunpack.c.h.b16 %v3617
    %v3629 = vunpack.c.h.b16 %v3619
    %v3630 = vunpack.c.h.b16 %v3621
    %v3631 = vunpack.c.h.b16 %v3623
    %v3632 = vpack.c.b16 %v3629, %v3628
    %v3633 = vpack.c.b16 %v3631, %v3630
    %3634 = vrot.lane.b32.xlu0 %v3632, 17
    %v3635 = vpop.permute.xlu0 %3634
    %3636 = vrot.lane.b32.xlu0 %v3633, 17
    %v3637 = vpop.permute.xlu0 %3636
    %v3642 = vunpack.c.l.b16 %v3616
    %v3643 = vunpack.c.h.b16 %v3616
    %v3644 = vunpack.c.l.b16 %v3617
    %v3645 = vunpack.c.l.b16 %v3618
    %v3646 = vunpack.c.h.b16 %v3618
    %v3647 = vunpack.c.l.b16 %v3619
    %v3648 = vunpack.c.l.b16 %v3620
    %v3649 = vunpack.c.h.b16 %v3620
    %v3650 = vunpack.c.l.b16 %v3621
    %v3651 = vunpack.c.l.b16 %v3622
    %v3652 = vunpack.c.h.b16 %v3622
    %v3653 = vunpack.c.l.b16 %v3623
    %v3654 = vpack.c.b16 %v3645, %v3642
    %v3655 = vpack.c.b16 %v3646, %v3643
    %v3656 = vpack.c.b16 %v3647, %v3644
    %v3657 = vpack.c.b16 %v3651, %v3648
    %v3658 = vpack.c.b16 %v3652, %v3649
    %v3659 = vpack.c.b16 %v3653, %v3650
    %3660 = vrot.lane.b32.xlu0 %v3654, 17
    %v3661 = vpop.permute.xlu0 %3660
    %3662 = vrot.lane.b32.xlu0 %v3655, 17
    %v3663 = vpop.permute.xlu0 %3662
    %3664 = vrot.lane.b32.xlu0 %v3656, 17
    %v3665 = vpop.permute.xlu0 %3664
    %3666 = vrot.lane.b32.xlu0 %v3657, 17
    %v3667 = vpop.permute.xlu0 %3666
    %3668 = vrot.lane.b32.xlu0 %v3658, 17
    %v3669 = vpop.permute.xlu0 %3668
    %3670 = vrot.lane.b32.xlu0 %v3659, 17
    %v3671 = vpop.permute.xlu0 %3670
    %v3672 = vsel %vm215, %v3661, %v3663
    %v3673 = vsel %vm215, %v3663, %v3665
    %v3674 = vsel %vm215, %v3665, %v3635
    %v3675 = vsel %vm215, %v3667, %v3669
    %v3676 = vsel %vm215, %v3669, %v3671
    %v3677 = vsel %vm215, %v3671, %v3637
    %v3686 = vsel %vm228, %v3635, %v3661
    %v3690 = vsel %vm228, %v3637, %v3667
    %v3692 = vld [vmem:[#allocation3] sm:$0xff]
    %v3693 = vld [vmem:[#allocation3 + $0x8] sm:$0xff]
    %v3694 = vld [vmem:[#allocation3 + $0x10] sm:$0xff]
    %v3695 = vld [vmem:[#allocation3 + $0x18] sm:$0xff]
    %v3696 = vld [vmem:[#allocation3 + $0x20] sm:$0xff]
    %v3697 = vld [vmem:[#allocation3 + $0x28] sm:$0xff]
    %v3698 = vld [vmem:[#allocation3 + $0x30] sm:$0xff]
    %v3699 = vld [vmem:[#allocation3 + $0x38] sm:$0xff]
    %v3700 = vunpack.c.l.bf16 %v3686
    %v3701 = vunpack.c.l.bf16 %v3672
    %v3702 = vunpack.c.l.bf16 %v3673
    %v3703 = vunpack.c.l.bf16 %v3674
    %v3704 = vunpack.c.h.bf16 %v3686
    %v3705 = vunpack.c.h.bf16 %v3672
    %v3706 = vunpack.c.h.bf16 %v3673
    %v3707 = vunpack.c.h.bf16 %v3674
    %v3708 = vunpack.c.l.bf16 %v3690
    %v3709 = vunpack.c.l.bf16 %v3675
    %v3710 = vunpack.c.l.bf16 %v3676
    %v3711 = vunpack.c.l.bf16 %v3677
    %v3712 = vunpack.c.h.bf16 %v3690
    %v3713 = vunpack.c.h.bf16 %v3675
    %v3714 = vunpack.c.h.bf16 %v3676
    %v3715 = vunpack.c.h.bf16 %v3677
    %v3716 = vunpack.c.l.bf16 %v3692
    %v3717 = vunpack.c.h.bf16 %v3692
    %v3718 = vunpack.c.l.bf16 %v3693
    %v3719 = vunpack.c.h.bf16 %v3693
    %v3720 = vunpack.c.l.bf16 %v3694
    %v3721 = vunpack.c.h.bf16 %v3694
    %v3722 = vunpack.c.l.bf16 %v3695
    %v3723 = vunpack.c.h.bf16 %v3695
    %v3724 = vunpack.c.l.bf16 %v3696
    %v3725 = vunpack.c.h.bf16 %v3696
    %v3726 = vunpack.c.l.bf16 %v3697
    %v3727 = vunpack.c.h.bf16 %v3697
    %v3728 = vunpack.c.l.bf16 %v3698
    %v3729 = vunpack.c.h.bf16 %v3698
    %v3730 = vunpack.c.l.bf16 %v3699
    %v3731 = vunpack.c.h.bf16 %v3699
    %v3732 = vmul.f32 %v3700, %v3716
    %v3733 = vmul.f32 %v3701, %v3717
    %v3734 = vmul.f32 %v3702, %v3718
    %v3735 = vmul.f32 %v3703, %v3719
    %v3736 = vmul.f32 %v3704, %v3720
    %v3737 = vmul.f32 %v3705, %v3721
    %v3738 = vmul.f32 %v3706, %v3722
    %v3739 = vmul.f32 %v3707, %v3723
    %v3740 = vmul.f32 %v3708, %v3724
    %v3741 = vmul.f32 %v3709, %v3725
    %v3742 = vmul.f32 %v3710, %v3726
    %v3743 = vmul.f32 %v3711, %v3727
    %v3744 = vmul.f32 %v3712, %v3728
    %v3745 = vmul.f32 %v3713, %v3729
    %v3746 = vmul.f32 %v3714, %v3730
    %v3747 = vmul.f32 %v3715, %v3731
    %v3748 = vpack.c.bf16 %v3733, %v3732
    %v3749 = vpack.c.bf16 %v3735, %v3734
    %v3750 = vpack.c.bf16 %v3737, %v3736
    %v3751 = vpack.c.bf16 %v3739, %v3738
    %v3752 = vpack.c.bf16 %v3741, %v3740
    %v3753 = vpack.c.bf16 %v3743, %v3742
    %v3754 = vpack.c.bf16 %v3745, %v3744
    %v3755 = vpack.c.bf16 %v3747, %v3746
    %3756 = vst [vmem:[#allocation2] sm:$0xff] %v3748
    %3757 = vst [vmem:[#allocation2 + $0x8] sm:$0xff] %v3749
    %3758 = vst [vmem:[#allocation2 + $0x10] sm:$0xff] %v3750
    %3759 = vst [vmem:[#allocation2 + $0x18] sm:$0xff] %v3751
    %3760 = vst [vmem:[#allocation2 + $0x20] sm:$0xff] %v3752
    %3761 = vst [vmem:[#allocation2 + $0x28] sm:$0xff] %v3753
    %3762 = vst [vmem:[#allocation2 + $0x30] sm:$0xff] %v3754
    %3763 = vst [vmem:[#allocation2 + $0x38] sm:$0xff] %v3755
    %3764 = vrot.lane.b32.xlu0 %v3632, 16
    %v3765 = vpop.permute.xlu0 %3764
    %3766 = vrot.lane.b32.xlu0 %v3633, 16
    %v3767 = vpop.permute.xlu0 %3766
    %3768 = vrot.lane.b32.xlu0 %v3654, 16
    %v3769 = vpop.permute.xlu0 %3768
    %3770 = vrot.lane.b32.xlu0 %v3655, 16
    %v3771 = vpop.permute.xlu0 %3770
    %3772 = vrot.lane.b32.xlu0 %v3656, 16
    %v3773 = vpop.permute.xlu0 %3772
    %3774 = vrot.lane.b32.xlu0 %v3657, 16
    %v3775 = vpop.permute.xlu0 %3774
    %3776 = vrot.lane.b32.xlu0 %v3658, 16
    %v3777 = vpop.permute.xlu0 %3776
    %3778 = vrot.lane.b32.xlu0 %v3659, 16
    %v3779 = vpop.permute.xlu0 %3778
    %v3780 = vsel %vm325, %v3769, %v3771
    %v3781 = vsel %vm325, %v3771, %v3773
    %v3782 = vsel %vm325, %v3773, %v3765
    %v3783 = vsel %vm325, %v3775, %v3777
    %v3784 = vsel %vm325, %v3777, %v3779
    %v3785 = vsel %vm325, %v3779, %v3767
    %v3794 = vsel %vm338, %v3765, %v3769
    %v3798 = vsel %vm338, %v3767, %v3775
    %v3800 = vld [vmem:[#allocation3 + $0x40] sm:$0xff]
    %v3801 = vld [vmem:[#allocation3 + $0x48] sm:$0xff]
    %v3802 = vld [vmem:[#allocation3 + $0x50] sm:$0xff]
    %v3803 = vld [vmem:[#allocation3 + $0x58] sm:$0xff]
    %v3804 = vld [vmem:[#allocation3 + $0x60] sm:$0xff]
    %v3805 = vld [vmem:[#allocation3 + $0x68] sm:$0xff]
    %v3806 = vld [vmem:[#allocation3 + $0x70] sm:$0xff]
    %v3807 = vld [vmem:[#allocation3 + $0x78] sm:$0xff]
    %v3808 = vunpack.c.l.bf16 %v3794
    %v3809 = vunpack.c.l.bf16 %v3780
    %v3810 = vunpack.c.l.bf16 %v3781
    %v3811 = vunpack.c.l.bf16 %v3782
    %v3812 = vunpack.c.h.bf16 %v3794
    %v3813 = vunpack.c.h.bf16 %v3780
    %v3814 = vunpack.c.h.bf16 %v3781
    %v3815 = vunpack.c.h.bf16 %v3782
    %v3816 = vunpack.c.l.bf16 %v3798
    %v3817 = vunpack.c.l.bf16 %v3783
    %v3818 = vunpack.c.l.bf16 %v3784
    %v3819 = vunpack.c.l.bf16 %v3785
    %v3820 = vunpack.c.h.bf16 %v3798
    %v3821 = vunpack.c.h.bf16 %v3783
    %v3822 = vunpack.c.h.bf16 %v3784
    %v3823 = vunpack.c.h.bf16 %v3785
    %v3824 = vunpack.c.l.bf16 %v3800
    %v3825 = vunpack.c.h.bf16 %v3800
    %v3826 = vunpack.c.l.bf16 %v3801
    %v3827 = vunpack.c.h.bf16 %v3801
    %v3828 = vunpack.c.l.bf16 %v3802
    %v3829 = vunpack.c.h.bf16 %v3802
    %v3830 = vunpack.c.l.bf16 %v3803
    %v3831 = vunpack.c.h.bf16 %v3803
    %v3832 = vunpack.c.l.bf16 %v3804
    %v3833 = vunpack.c.h.bf16 %v3804
    %v3834 = vunpack.c.l.bf16 %v3805
    %v3835 = vunpack.c.h.bf16 %v3805
    %v3836 = vunpack.c.l.bf16 %v3806
    %v3837 = vunpack.c.h.bf16 %v3806
    %v3838 = vunpack.c.l.bf16 %v3807
    %v3839 = vunpack.c.h.bf16 %v3807
    %v3840 = vmul.f32 %v3808, %v3824
    %v3841 = vmul.f32 %v3809, %v3825
    %v3842 = vmul.f32 %v3810, %v3826
    %v3843 = vmul.f32 %v3811, %v3827
    %v3844 = vmul.f32 %v3812, %v3828
    %v3845 = vmul.f32 %v3813, %v3829
    %v3846 = vmul.f32 %v3814, %v3830
    %v3847 = vmul.f32 %v3815, %v3831
    %v3848 = vmul.f32 %v3816, %v3832
    %v3849 = vmul.f32 %v3817, %v3833
    %v3850 = vmul.f32 %v3818, %v3834
    %v3851 = vmul.f32 %v3819, %v3835
    %v3852 = vmul.f32 %v3820, %v3836
    %v3853 = vmul.f32 %v3821, %v3837
    %v3854 = vmul.f32 %v3822, %v3838
    %v3855 = vmul.f32 %v3823, %v3839
    %v3856 = vpack.c.bf16 %v3841, %v3840
    %v3857 = vpack.c.bf16 %v3843, %v3842
    %v3858 = vpack.c.bf16 %v3845, %v3844
    %v3859 = vpack.c.bf16 %v3847, %v3846
    %v3860 = vpack.c.bf16 %v3849, %v3848
    %v3861 = vpack.c.bf16 %v3851, %v3850
    %v3862 = vpack.c.bf16 %v3853, %v3852
    %v3863 = vpack.c.bf16 %v3855, %v3854
    %3864 = vst [vmem:[#allocation2 + $0x40] sm:$0xff] %v3856
    %3865 = vst [vmem:[#allocation2 + $0x48] sm:$0xff] %v3857
    %3866 = vst [vmem:[#allocation2 + $0x50] sm:$0xff] %v3858
    %3867 = vst [vmem:[#allocation2 + $0x58] sm:$0xff] %v3859
    %3868 = vst [vmem:[#allocation2 + $0x60] sm:$0xff] %v3860
    %3869 = vst [vmem:[#allocation2 + $0x68] sm:$0xff] %v3861
    %3870 = vst [vmem:[#allocation2 + $0x70] sm:$0xff] %v3862
    %3871 = vst [vmem:[#allocation2 + $0x78] sm:$0xff] %v3863
    %3872 = vrot.lane.b32.xlu0 %v3632, 15
    %v3873 = vpop.permute.xlu0 %3872
    %3874 = vrot.lane.b32.xlu0 %v3633, 15
    %v3875 = vpop.permute.xlu0 %3874
    %3876 = vrot.lane.b32.xlu0 %v3654, 15
    %v3877 = vpop.permute.xlu0 %3876
    %3878 = vrot.lane.b32.xlu0 %v3655, 15
    %v3879 = vpop.permute.xlu0 %3878
    %3880 = vrot.lane.b32.xlu0 %v3656, 15
    %v3881 = vpop.permute.xlu0 %3880
    %3882 = vrot.lane.b32.xlu0 %v3657, 15
    %v3883 = vpop.permute.xlu0 %3882
    %3884 = vrot.lane.b32.xlu0 %v3658, 15
    %v3885 = vpop.permute.xlu0 %3884
    %3886 = vrot.lane.b32.xlu0 %v3659, 15
    %v3887 = vpop.permute.xlu0 %3886
    %v3888 = vsel %vm435, %v3877, %v3879
    %v3889 = vsel %vm435, %v3879, %v3881
    %v3890 = vsel %vm435, %v3881, %v3873
    %v3891 = vsel %vm435, %v3883, %v3885
    %v3892 = vsel %vm435, %v3885, %v3887
    %v3893 = vsel %vm435, %v3887, %v3875
    %v3902 = vsel %vm448, %v3873, %v3877
    %v3906 = vsel %vm448, %v3875, %v3883
    %v3908 = vld [vmem:[#allocation3 + $0x80] sm:$0xff]
    %v3909 = vld [vmem:[#allocation3 + $0x88] sm:$0xff]
    %v3910 = vld [vmem:[#allocation3 + $0x90] sm:$0xff]
    %v3911 = vld [vmem:[#allocation3 + $0x98] sm:$0xff]
    %v3912 = vld [vmem:[#allocation3 + $0xa0] sm:$0xff]
    %v3913 = vld [vmem:[#allocation3 + $0xa8] sm:$0xff]
    %v3914 = vld [vmem:[#allocation3 + $0xb0] sm:$0xff]
    %v3915 = vld [vmem:[#allocation3 + $0xb8] sm:$0xff]
    %v3916 = vunpack.c.l.bf16 %v3902
    %v3917 = vunpack.c.l.bf16 %v3888
    %v3918 = vunpack.c.l.bf16 %v3889
    %v3919 = vunpack.c.l.bf16 %v3890
    %v3920 = vunpack.c.h.bf16 %v3902
    %v3921 = vunpack.c.h.bf16 %v3888
    %v3922 = vunpack.c.h.bf16 %v3889
    %v3923 = vunpack.c.h.bf16 %v3890
    %v3924 = vunpack.c.l.bf16 %v3906
    %v3925 = vunpack.c.l.bf16 %v3891
    %v3926 = vunpack.c.l.bf16 %v3892
    %v3927 = vunpack.c.l.bf16 %v3893
    %v3928 = vunpack.c.h.bf16 %v3906
    %v3929 = vunpack.c.h.bf16 %v3891
    %v3930 = vunpack.c.h.bf16 %v3892
    %v3931 = vunpack.c.h.bf16 %v3893
    %v3932 = vunpack.c.l.bf16 %v3908
    %v3933 = vunpack.c.h.bf16 %v3908
    %v3934 = vunpack.c.l.bf16 %v3909
    %v3935 = vunpack.c.h.bf16 %v3909
    %v3936 = vunpack.c.l.bf16 %v3910
    %v3937 = vunpack.c.h.bf16 %v3910
    %v3938 = vunpack.c.l.bf16 %v3911
    %v3939 = vunpack.c.h.bf16 %v3911
    %v3940 = vunpack.c.l.bf16 %v3912
    %v3941 = vunpack.c.h.bf16 %v3912
    %v3942 = vunpack.c.l.bf16 %v3913
    %v3943 = vunpack.c.h.bf16 %v3913
    %v3944 = vunpack.c.l.bf16 %v3914
    %v3945 = vunpack.c.h.bf16 %v3914
    %v3946 = vunpack.c.l.bf16 %v3915
    %v3947 = vunpack.c.h.bf16 %v3915
    %v3948 = vmul.f32 %v3916, %v3932
    %v3949 = vmul.f32 %v3917, %v3933
    %v3950 = vmul.f32 %v3918, %v3934
    %v3951 = vmul.f32 %v3919, %v3935
    %v3952 = vmul.f32 %v3920, %v3936
    %v3953 = vmul.f32 %v3921, %v3937
    %v3954 = vmul.f32 %v3922, %v3938
    %v3955 = vmul.f32 %v3923, %v3939
    %v3956 = vmul.f32 %v3924, %v3940
    %v3957 = vmul.f32 %v3925, %v3941
    %v3958 = vmul.f32 %v3926, %v3942
    %v3959 = vmul.f32 %v3927, %v3943
    %v3960 = vmul.f32 %v3928, %v3944
    %v3961 = vmul.f32 %v3929, %v3945
    %v3962 = vmul.f32 %v3930, %v3946
    %v3963 = vmul.f32 %v3931, %v3947
    %v3964 = vpack.c.bf16 %v3949, %v3948
    %v3965 = vpack.c.bf16 %v3951, %v3950
    %v3966 = vpack.c.bf16 %v3953, %v3952
    %v3967 = vpack.c.bf16 %v3955, %v3954
    %v3968 = vpack.c.bf16 %v3957, %v3956
    %v3969 = vpack.c.bf16 %v3959, %v3958
    %v3970 = vpack.c.bf16 %v3961, %v3960
    %v3971 = vpack.c.bf16 %v3963, %v3962
    %3972 = vst [vmem:[#allocation2 + $0x80] sm:$0xff] %v3964
    %3973 = vst [vmem:[#allocation2 + $0x88] sm:$0xff] %v3965
    %3974 = vst [vmem:[#allocation2 + $0x90] sm:$0xff] %v3966
    %3975 = vst [vmem:[#allocation2 + $0x98] sm:$0xff] %v3967
    %3976 = vst [vmem:[#allocation2 + $0xa0] sm:$0xff] %v3968
    %3977 = vst [vmem:[#allocation2 + $0xa8] sm:$0xff] %v3969
    %3978 = vst [vmem:[#allocation2 + $0xb0] sm:$0xff] %v3970
    %3979 = vst [vmem:[#allocation2 + $0xb8] sm:$0xff] %v3971
    %3980 = vrot.lane.b32.xlu0 %v3632, 1
    %v3981 = vpop.permute.xlu0 %3980
    %3982 = vrot.lane.b32.xlu0 %v3633, 1
    %v3983 = vpop.permute.xlu0 %3982
    %3984 = vrot.lane.b32.xlu0 %v3654, 1
    %v3985 = vpop.permute.xlu0 %3984
    %3986 = vrot.lane.b32.xlu0 %v3655, 1
    %v3987 = vpop.permute.xlu0 %3986
    %3988 = vrot.lane.b32.xlu0 %v3656, 1
    %v3989 = vpop.permute.xlu0 %3988
    %3990 = vrot.lane.b32.xlu0 %v3657, 1
    %v3991 = vpop.permute.xlu0 %3990
    %3992 = vrot.lane.b32.xlu0 %v3658, 1
    %v3993 = vpop.permute.xlu0 %3992
    %3994 = vrot.lane.b32.xlu0 %v3659, 1
    %v3995 = vpop.permute.xlu0 %3994
    %v3996 = vsel %vm545, %v3985, %v3987
    %v3997 = vsel %vm545, %v3987, %v3989
    %v3998 = vsel %vm545, %v3989, %v3981
    %v3999 = vsel %vm545, %v3991, %v3993
    %v4000 = vsel %vm545, %v3993, %v3995
    %v4001 = vsel %vm545, %v3995, %v3983
    %v4010 = vsel %vm558, %v3981, %v3985
    %v4014 = vsel %vm558, %v3983, %v3991
    %v4016 = vld [vmem:[#allocation3 + $0xc0] sm:$0xff]
    %v4017 = vld [vmem:[#allocation3 + $0xc8] sm:$0xff]
    %v4018 = vld [vmem:[#allocation3 + $0xd0] sm:$0xff]
    %v4019 = vld [vmem:[#allocation3 + $0xd8] sm:$0xff]
    %v4020 = vld [vmem:[#allocation3 + $0xe0] sm:$0xff]
    %v4021 = vld [vmem:[#allocation3 + $0xe8] sm:$0xff]
    %v4022 = vld [vmem:[#allocation3 + $0xf0] sm:$0xff]
    %v4023 = vld [vmem:[#allocation3 + $0xf8] sm:$0xff]
    %v4024 = vunpack.c.l.bf16 %v4010
    %v4025 = vunpack.c.l.bf16 %v3996
    %v4026 = vunpack.c.l.bf16 %v3997
    %v4027 = vunpack.c.l.bf16 %v3998
    %v4028 = vunpack.c.h.bf16 %v4010
    %v4029 = vunpack.c.h.bf16 %v3996
    %v4030 = vunpack.c.h.bf16 %v3997
    %v4031 = vunpack.c.h.bf16 %v3998
    %v4032 = vunpack.c.l.bf16 %v4014
    %v4033 = vunpack.c.l.bf16 %v3999
    %v4034 = vunpack.c.l.bf16 %v4000
    %v4035 = vunpack.c.l.bf16 %v4001
    %v4036 = vunpack.c.h.bf16 %v4014
    %v4037 = vunpack.c.h.bf16 %v3999
    %v4038 = vunpack.c.h.bf16 %v4000
    %v4039 = vunpack.c.h.bf16 %v4001
    %v4040 = vunpack.c.l.bf16 %v4016
    %v4041 = vunpack.c.h.bf16 %v4016
    %v4042 = vunpack.c.l.bf16 %v4017
    %v4043 = vunpack.c.h.bf16 %v4017
    %v4044 = vunpack.c.l.bf16 %v4018
    %v4045 = vunpack.c.h.bf16 %v4018
    %v4046 = vunpack.c.l.bf16 %v4019
    %v4047 = vunpack.c.h.bf16 %v4019
    %v4048 = vunpack.c.l.bf16 %v4020
    %v4049 = vunpack.c.h.bf16 %v4020
    %v4050 = vunpack.c.l.bf16 %v4021
    %v4051 = vunpack.c.h.bf16 %v4021
    %v4052 = vunpack.c.l.bf16 %v4022
    %v4053 = vunpack.c.h.bf16 %v4022
    %v4054 = vunpack.c.l.bf16 %v4023
    %v4055 = vunpack.c.h.bf16 %v4023
    %v4056 = vmul.f32 %v4024, %v4040
    %v4057 = vmul.f32 %v4025, %v4041
    %v4058 = vmul.f32 %v4026, %v4042
    %v4059 = vmul.f32 %v4027, %v4043
    %v4060 = vmul.f32 %v4028, %v4044
    %v4061 = vmul.f32 %v4029, %v4045
    %v4062 = vmul.f32 %v4030, %v4046
    %v4063 = vmul.f32 %v4031, %v4047
    %v4064 = vmul.f32 %v4032, %v4048
    %v4065 = vmul.f32 %v4033, %v4049
    %v4066 = vmul.f32 %v4034, %v4050
    %v4067 = vmul.f32 %v4035, %v4051
    %v4068 = vmul.f32 %v4036, %v4052
    %v4069 = vmul.f32 %v4037, %v4053
    %v4070 = vmul.f32 %v4038, %v4054
    %v4071 = vmul.f32 %v4039, %v4055
    %v4072 = vpack.c.bf16 %v4057, %v4056
    %v4073 = vpack.c.bf16 %v4059, %v4058
    %v4074 = vpack.c.bf16 %v4061, %v4060
    %v4075 = vpack.c.bf16 %v4063, %v4062
    %v4076 = vpack.c.bf16 %v4065, %v4064
    %v4077 = vpack.c.bf16 %v4067, %v4066
    %v4078 = vpack.c.bf16 %v4069, %v4068
    %v4079 = vpack.c.bf16 %v4071, %v4070
    %4080 = vst [vmem:[#allocation2 + $0xc0] sm:$0xff] %v4072
    %4081 = vst [vmem:[#allocation2 + $0xc8] sm:$0xff] %v4073
    %4082 = vst [vmem:[#allocation2 + $0xd0] sm:$0xff] %v4074
    %4083 = vst [vmem:[#allocation2 + $0xd8] sm:$0xff] %v4075
    %4084 = vst [vmem:[#allocation2 + $0xe0] sm:$0xff] %v4076
    %4085 = vst [vmem:[#allocation2 + $0xe8] sm:$0xff] %v4077
    %4086 = vst [vmem:[#allocation2 + $0xf0] sm:$0xff] %v4078
    %4087 = vst [vmem:[#allocation2 + $0xf8] sm:$0xff] %v4079
    %v4088 = vld [vmem:[#allocation3 + $0x100] sm:$0xff]
    %v4089 = vld [vmem:[#allocation3 + $0x108] sm:$0xff]
    %v4090 = vld [vmem:[#allocation3 + $0x110] sm:$0xff]
    %v4091 = vld [vmem:[#allocation3 + $0x118] sm:$0xff]
    %v4092 = vld [vmem:[#allocation3 + $0x120] sm:$0xff]
    %v4093 = vld [vmem:[#allocation3 + $0x128] sm:$0xff]
    %v4094 = vld [vmem:[#allocation3 + $0x130] sm:$0xff]
    %v4095 = vld [vmem:[#allocation3 + $0x138] sm:$0xff]
    %v4096 = vunpack.c.l.bf16 %v3616
    %v4097 = vunpack.c.h.bf16 %v3616
    %v4098 = vunpack.c.l.bf16 %v3617
    %v4099 = vunpack.c.h.bf16 %v3617
    %v4100 = vunpack.c.l.bf16 %v3618
    %v4101 = vunpack.c.h.bf16 %v3618
    %v4102 = vunpack.c.l.bf16 %v3619
    %v4103 = vunpack.c.h.bf16 %v3619
    %v4104 = vunpack.c.l.bf16 %v3620
    %v4105 = vunpack.c.h.bf16 %v3620
    %v4106 = vunpack.c.l.bf16 %v3621
    %v4107 = vunpack.c.h.bf16 %v3621
    %v4108 = vunpack.c.l.bf16 %v3622
    %v4109 = vunpack.c.h.bf16 %v3622
    %v4110 = vunpack.c.l.bf16 %v3623
    %v4111 = vunpack.c.h.bf16 %v3623
    %v4112 = vunpack.c.l.bf16 %v4088
    %v4113 = vunpack.c.h.bf16 %v4088
    %v4114 = vunpack.c.l.bf16 %v4089
    %v4115 = vunpack.c.h.bf16 %v4089
    %v4116 = vunpack.c.l.bf16 %v4090
    %v4117 = vunpack.c.h.bf16 %v4090
    %v4118 = vunpack.c.l.bf16 %v4091
    %v4119 = vunpack.c.h.bf16 %v4091
    %v4120 = vunpack.c.l.bf16 %v4092
    %v4121 = vunpack.c.h.bf16 %v4092
    %v4122 = vunpack.c.l.bf16 %v4093
    %v4123 = vunpack.c.h.bf16 %v4093
    %v4124 = vunpack.c.l.bf16 %v4094
    %v4125 = vunpack.c.h.bf16 %v4094
    %v4126 = vunpack.c.l.bf16 %v4095
    %v4127 = vunpack.c.h.bf16 %v4095
    %v4128 = vmul.f32 %v4096, %v4112
    %v4129 = vmul.f32 %v4097, %v4113
    %v4130 = vmul.f32 %v4098, %v4114
    %v4131 = vmul.f32 %v4099, %v4115
    %v4132 = vmul.f32 %v4100, %v4116
    %v4133 = vmul.f32 %v4101, %v4117
    %v4134 = vmul.f32 %v4102, %v4118
    %v4135 = vmul.f32 %v4103, %v4119
    %v4136 = vmul.f32 %v4104, %v4120
    %v4137 = vmul.f32 %v4105, %v4121
    %v4138 = vmul.f32 %v4106, %v4122
    %v4139 = vmul.f32 %v4107, %v4123
    %v4140 = vmul.f32 %v4108, %v4124
    %v4141 = vmul.f32 %v4109, %v4125
    %v4142 = vmul.f32 %v4110, %v4126
    %v4143 = vmul.f32 %v4111, %v4127
    %v4144 = vpack.c.bf16 %v4129, %v4128
    %v4145 = vpack.c.bf16 %v4131, %v4130
    %v4146 = vpack.c.bf16 %v4133, %v4132
    %v4147 = vpack.c.bf16 %v4135, %v4134
    %v4148 = vpack.c.bf16 %v4137, %v4136
    %v4149 = vpack.c.bf16 %v4139, %v4138
    %v4150 = vpack.c.bf16 %v4141, %v4140
    %v4151 = vpack.c.bf16 %v4143, %v4142
    %4152 = vst [vmem:[#allocation2 + $0x100] sm:$0xff] %v4144
    %4153 = vst [vmem:[#allocation2 + $0x108] sm:$0xff] %v4145
    %4154 = vst [vmem:[#allocation2 + $0x110] sm:$0xff] %v4146
    %4155 = vst [vmem:[#allocation2 + $0x118] sm:$0xff] %v4147
    %4156 = vst [vmem:[#allocation2 + $0x120] sm:$0xff] %v4148
    %4157 = vst [vmem:[#allocation2 + $0x128] sm:$0xff] %v4149
    %4158 = vst [vmem:[#allocation2 + $0x130] sm:$0xff] %v4150
    %4159 = vst [vmem:[#allocation2 + $0x138] sm:$0xff] %v4151
    %4160 = vrot.lane.b32.xlu0 %v3654, 127
    %v4161 = vpop.permute.xlu0 %4160
    %4162 = vrot.lane.b32.xlu0 %v3655, 127
    %v4163 = vpop.permute.xlu0 %4162
    %4164 = vrot.lane.b32.xlu0 %v3656, 127
    %v4165 = vpop.permute.xlu0 %4164
    %4166 = vrot.lane.b32.xlu0 %v3632, 127
    %v4167 = vpop.permute.xlu0 %4166
    %4168 = vrot.lane.b32.xlu0 %v3657, 127
    %v4169 = vpop.permute.xlu0 %4168
    %4170 = vrot.lane.b32.xlu0 %v3658, 127
    %v4171 = vpop.permute.xlu0 %4170
    %4172 = vrot.lane.b32.xlu0 %v3659, 127
    %v4173 = vpop.permute.xlu0 %4172
    %4174 = vrot.lane.b32.xlu0 %v3633, 127
    %v4175 = vpop.permute.xlu0 %4174
    %v4176 = vsel %vm727, %v4161, %v4163
    %v4177 = vsel %vm727, %v4163, %v4165
    %v4178 = vsel %vm727, %v4165, %v4167
    %v4179 = vsel %vm727, %v4169, %v4171
    %v4180 = vsel %vm727, %v4171, %v4173
    %v4181 = vsel %vm727, %v4173, %v4175
    %v4190 = vsel %vm740, %v4167, %v4161
    %v4194 = vsel %vm740, %v4175, %v4169
    %v4196 = vld [vmem:[#allocation3 + $0x140] sm:$0xff]
    %v4197 = vld [vmem:[#allocation3 + $0x148] sm:$0xff]
    %v4198 = vld [vmem:[#allocation3 + $0x150] sm:$0xff]
    %v4199 = vld [vmem:[#allocation3 + $0x158] sm:$0xff]
    %v4200 = vld [vmem:[#allocation3 + $0x160] sm:$0xff]
    %v4201 = vld [vmem:[#allocation3 + $0x168] sm:$0xff]
    %v4202 = vld [vmem:[#allocation3 + $0x170] sm:$0xff]
    %v4203 = vld [vmem:[#allocation3 + $0x178] sm:$0xff]
    %v4204 = vunpack.c.l.bf16 %v4176
    %v4205 = vunpack.c.l.bf16 %v4177
    %v4206 = vunpack.c.l.bf16 %v4178
    %v4207 = vunpack.c.l.bf16 %v4190
    %v4208 = vunpack.c.h.bf16 %v4176
    %v4209 = vunpack.c.h.bf16 %v4177
    %v4210 = vunpack.c.h.bf16 %v4178
    %v4211 = vunpack.c.h.bf16 %v4190
    %v4212 = vunpack.c.l.bf16 %v4179
    %v4213 = vunpack.c.l.bf16 %v4180
    %v4214 = vunpack.c.l.bf16 %v4181
    %v4215 = vunpack.c.l.bf16 %v4194
    %v4216 = vunpack.c.h.bf16 %v4179
    %v4217 = vunpack.c.h.bf16 %v4180
    %v4218 = vunpack.c.h.bf16 %v4181
    %v4219 = vunpack.c.h.bf16 %v4194
    %v4220 = vunpack.c.l.bf16 %v4196
    %v4221 = vunpack.c.h.bf16 %v4196
    %v4222 = vunpack.c.l.bf16 %v4197
    %v4223 = vunpack.c.h.bf16 %v4197
    %v4224 = vunpack.c.l.bf16 %v4198
    %v4225 = vunpack.c.h.bf16 %v4198
    %v4226 = vunpack.c.l.bf16 %v4199
    %v4227 = vunpack.c.h.bf16 %v4199
    %v4228 = vunpack.c.l.bf16 %v4200
    %v4229 = vunpack.c.h.bf16 %v4200
    %v4230 = vunpack.c.l.bf16 %v4201
    %v4231 = vunpack.c.h.bf16 %v4201
    %v4232 = vunpack.c.l.bf16 %v4202
    %v4233 = vunpack.c.h.bf16 %v4202
    %v4234 = vunpack.c.l.bf16 %v4203
    %v4235 = vunpack.c.h.bf16 %v4203
    %v4236 = vmul.f32 %v4204, %v4220
    %v4237 = vmul.f32 %v4205, %v4221
    %v4238 = vmul.f32 %v4206, %v4222
    %v4239 = vmul.f32 %v4207, %v4223
    %v4240 = vmul.f32 %v4208, %v4224
    %v4241 = vmul.f32 %v4209, %v4225
    %v4242 = vmul.f32 %v4210, %v4226
    %v4243 = vmul.f32 %v4211, %v4227
    %v4244 = vmul.f32 %v4212, %v4228
    %v4245 = vmul.f32 %v4213, %v4229
    %v4246 = vmul.f32 %v4214, %v4230
    %v4247 = vmul.f32 %v4215, %v4231
    %v4248 = vmul.f32 %v4216, %v4232
    %v4249 = vmul.f32 %v4217, %v4233
    %v4250 = vmul.f32 %v4218, %v4234
    %v4251 = vmul.f32 %v4219, %v4235
    %v4252 = vpack.c.bf16 %v4237, %v4236
    %v4253 = vpack.c.bf16 %v4239, %v4238
    %v4254 = vpack.c.bf16 %v4241, %v4240
    %v4255 = vpack.c.bf16 %v4243, %v4242
    %v4256 = vpack.c.bf16 %v4245, %v4244
    %v4257 = vpack.c.bf16 %v4247, %v4246
    %v4258 = vpack.c.bf16 %v4249, %v4248
    %v4259 = vpack.c.bf16 %v4251, %v4250
    %4260 = vst [vmem:[#allocation2 + $0x140] sm:$0xff] %v4252
    %4261 = vst [vmem:[#allocation2 + $0x148] sm:$0xff] %v4253
    %4262 = vst [vmem:[#allocation2 + $0x150] sm:$0xff] %v4254
    %4263 = vst [vmem:[#allocation2 + $0x158] sm:$0xff] %v4255
    %4264 = vst [vmem:[#allocation2 + $0x160] sm:$0xff] %v4256
    %4265 = vst [vmem:[#allocation2 + $0x168] sm:$0xff] %v4257
    %4266 = vst [vmem:[#allocation2 + $0x170] sm:$0xff] %v4258
    %4267 = vst [vmem:[#allocation2 + $0x178] sm:$0xff] %v4259
    %4268 = vrot.lane.b32.xlu0 %v3654, 113
    %v4269 = vpop.permute.xlu0 %4268
    %4270 = vrot.lane.b32.xlu0 %v3655, 113
    %v4271 = vpop.permute.xlu0 %4270
    %4272 = vrot.lane.b32.xlu0 %v3656, 113
    %v4273 = vpop.permute.xlu0 %4272
    %4274 = vrot.lane.b32.xlu0 %v3632, 113
    %v4275 = vpop.permute.xlu0 %4274
    %4276 = vrot.lane.b32.xlu0 %v3657, 113
    %v4277 = vpop.permute.xlu0 %4276
    %4278 = vrot.lane.b32.xlu0 %v3658, 113
    %v4279 = vpop.permute.xlu0 %4278
    %4280 = vrot.lane.b32.xlu0 %v3659, 113
    %v4281 = vpop.permute.xlu0 %4280
    %4282 = vrot.lane.b32.xlu0 %v3633, 113
    %v4283 = vpop.permute.xlu0 %4282
    %v4284 = vsel %vm837, %v4269, %v4271
    %v4285 = vsel %vm837, %v4271, %v4273
    %v4286 = vsel %vm837, %v4273, %v4275
    %v4287 = vsel %vm837, %v4277, %v4279
    %v4288 = vsel %vm837, %v4279, %v4281
    %v4289 = vsel %vm837, %v4281, %v4283
    %v4298 = vsel %vm850, %v4275, %v4269
    %v4302 = vsel %vm850, %v4283, %v4277
    %v4304 = vld [vmem:[#allocation3 + $0x180] sm:$0xff]
    %v4305 = vld [vmem:[#allocation3 + $0x188] sm:$0xff]
    %v4306 = vld [vmem:[#allocation3 + $0x190] sm:$0xff]
    %v4307 = vld [vmem:[#allocation3 + $0x198] sm:$0xff]
    %v4308 = vld [vmem:[#allocation3 + $0x1a0] sm:$0xff]
    %v4309 = vld [vmem:[#allocation3 + $0x1a8] sm:$0xff]
    %v4310 = vld [vmem:[#allocation3 + $0x1b0] sm:$0xff]
    %v4311 = vld [vmem:[#allocation3 + $0x1b8] sm:$0xff]
    %v4312 = vunpack.c.l.bf16 %v4284
    %v4313 = vunpack.c.l.bf16 %v4285
    %v4314 = vunpack.c.l.bf16 %v4286
    %v4315 = vunpack.c.l.bf16 %v4298
    %v4316 = vunpack.c.h.bf16 %v4284
    %v4317 = vunpack.c.h.bf16 %v4285
    %v4318 = vunpack.c.h.bf16 %v4286
    %v4319 = vunpack.c.h.bf16 %v4298
    %v4320 = vunpack.c.l.bf16 %v4287
    %v4321 = vunpack.c.l.bf16 %v4288
    %v4322 = vunpack.c.l.bf16 %v4289
    %v4323 = vunpack.c.l.bf16 %v4302
    %v4324 = vunpack.c.h.bf16 %v4287
    %v4325 = vunpack.c.h.bf16 %v4288
    %v4326 = vunpack.c.h.bf16 %v4289
    %v4327 = vunpack.c.h.bf16 %v4302
    %v4328 = vunpack.c.l.bf16 %v4304
    %v4329 = vunpack.c.h.bf16 %v4304
    %v4330 = vunpack.c.l.bf16 %v4305
    %v4331 = vunpack.c.h.bf16 %v4305
    %v4332 = vunpack.c.l.bf16 %v4306
    %v4333 = vunpack.c.h.bf16 %v4306
    %v4334 = vunpack.c.l.bf16 %v4307
    %v4335 = vunpack.c.h.bf16 %v4307
    %v4336 = vunpack.c.l.bf16 %v4308
    %v4337 = vunpack.c.h.bf16 %v4308
    %v4338 = vunpack.c.l.bf16 %v4309
    %v4339 = vunpack.c.h.bf16 %v4309
    %v4340 = vunpack.c.l.bf16 %v4310
    %v4341 = vunpack.c.h.bf16 %v4310
    %v4342 = vunpack.c.l.bf16 %v4311
    %v4343 = vunpack.c.h.bf16 %v4311
    %v4344 = vmul.f32 %v4312, %v4328
    %v4345 = vmul.f32 %v4313, %v4329
    %v4346 = vmul.f32 %v4314, %v4330
    %v4347 = vmul.f32 %v4315, %v4331
    %v4348 = vmul.f32 %v4316, %v4332
    %v4349 = vmul.f32 %v4317, %v4333
    %v4350 = vmul.f32 %v4318, %v4334
    %v4351 = vmul.f32 %v4319, %v4335
    %v4352 = vmul.f32 %v4320, %v4336
    %v4353 = vmul.f32 %v4321, %v4337
    %v4354 = vmul.f32 %v4322, %v4338
    %v4355 = vmul.f32 %v4323, %v4339
    %v4356 = vmul.f32 %v4324, %v4340
    %v4357 = vmul.f32 %v4325, %v4341
    %v4358 = vmul.f32 %v4326, %v4342
    %v4359 = vmul.f32 %v4327, %v4343
    %v4360 = vpack.c.bf16 %v4345, %v4344
    %v4361 = vpack.c.bf16 %v4347, %v4346
    %v4362 = vpack.c.bf16 %v4349, %v4348
    %v4363 = vpack.c.bf16 %v4351, %v4350
    %v4364 = vpack.c.bf16 %v4353, %v4352
    %v4365 = vpack.c.bf16 %v4355, %v4354
    %v4366 = vpack.c.bf16 %v4357, %v4356
    %v4367 = vpack.c.bf16 %v4359, %v4358
    %4368 = vst [vmem:[#allocation2 + $0x180] sm:$0xff] %v4360
    %4369 = vst [vmem:[#allocation2 + $0x188] sm:$0xff] %v4361
    %4370 = vst [vmem:[#allocation2 + $0x190] sm:$0xff] %v4362
    %4371 = vst [vmem:[#allocation2 + $0x198] sm:$0xff] %v4363
    %4372 = vst [vmem:[#allocation2 + $0x1a0] sm:$0xff] %v4364
    %4373 = vst [vmem:[#allocation2 + $0x1a8] sm:$0xff] %v4365
    %4374 = vst [vmem:[#allocation2 + $0x1b0] sm:$0xff] %v4366
    %4375 = vst [vmem:[#allocation2 + $0x1b8] sm:$0xff] %v4367
    %4376 = vrot.lane.b32.xlu0 %v3654, 112
    %v4377 = vpop.permute.xlu0 %4376
    %4378 = vrot.lane.b32.xlu0 %v3655, 112
    %v4379 = vpop.permute.xlu0 %4378
    %4380 = vrot.lane.b32.xlu0 %v3656, 112
    %v4381 = vpop.permute.xlu0 %4380
    %4382 = vrot.lane.b32.xlu0 %v3632, 112
    %v4383 = vpop.permute.xlu0 %4382
    %4384 = vrot.lane.b32.xlu0 %v3657, 112
    %v4385 = vpop.permute.xlu0 %4384
    %4386 = vrot.lane.b32.xlu0 %v3658, 112
    %v4387 = vpop.permute.xlu0 %4386
    %4388 = vrot.lane.b32.xlu0 %v3659, 112
    %v4389 = vpop.permute.xlu0 %4388
    %4390 = vrot.lane.b32.xlu0 %v3633, 112
    %v4391 = vpop.permute.xlu0 %4390
    %v4392 = vsel %vm947, %v4377, %v4379
    %v4393 = vsel %vm947, %v4379, %v4381
    %v4394 = vsel %vm947, %v4381, %v4383
    %v4395 = vsel %vm947, %v4385, %v4387
    %v4396 = vsel %vm947, %v4387, %v4389
    %v4397 = vsel %vm947, %v4389, %v4391
    %v4406 = vsel %vm960, %v4383, %v4377
    %v4410 = vsel %vm960, %v4391, %v4385
    %v4412 = vld [vmem:[#allocation3 + $0x1c0] sm:$0xff]
    %v4413 = vld [vmem:[#allocation3 + $0x1c8] sm:$0xff]
    %v4414 = vld [vmem:[#allocation3 + $0x1d0] sm:$0xff]
    %v4415 = vld [vmem:[#allocation3 + $0x1d8] sm:$0xff]
    %v4416 = vld [vmem:[#allocation3 + $0x1e0] sm:$0xff]
    %v4417 = vld [vmem:[#allocation3 + $0x1e8] sm:$0xff]
    %v4418 = vld [vmem:[#allocation3 + $0x1f0] sm:$0xff]
    %v4419 = vld [vmem:[#allocation3 + $0x1f8] sm:$0xff]
    %v4420 = vunpack.c.l.bf16 %v4392
    %v4421 = vunpack.c.l.bf16 %v4393
    %v4422 = vunpack.c.l.bf16 %v4394
    %v4423 = vunpack.c.l.bf16 %v4406
    %v4424 = vunpack.c.h.bf16 %v4392
    %v4425 = vunpack.c.h.bf16 %v4393
    %v4426 = vunpack.c.h.bf16 %v4394
    %v4427 = vunpack.c.h.bf16 %v4406
    %v4428 = vunpack.c.l.bf16 %v4395
    %v4429 = vunpack.c.l.bf16 %v4396
    %v4430 = vunpack.c.l.bf16 %v4397
    %v4431 = vunpack.c.l.bf16 %v4410
    %v4432 = vunpack.c.h.bf16 %v4395
    %v4433 = vunpack.c.h.bf16 %v4396
    %v4434 = vunpack.c.h.bf16 %v4397
    %v4435 = vunpack.c.h.bf16 %v4410
    %v4436 = vunpack.c.l.bf16 %v4412
    %v4437 = vunpack.c.h.bf16 %v4412
    %v4438 = vunpack.c.l.bf16 %v4413
    %v4439 = vunpack.c.h.bf16 %v4413
    %v4440 = vunpack.c.l.bf16 %v4414
    %v4441 = vunpack.c.h.bf16 %v4414
    %v4442 = vunpack.c.l.bf16 %v4415
    %v4443 = vunpack.c.h.bf16 %v4415
    %v4444 = vunpack.c.l.bf16 %v4416
    %v4445 = vunpack.c.h.bf16 %v4416
    %v4446 = vunpack.c.l.bf16 %v4417
    %v4447 = vunpack.c.h.bf16 %v4417
    %v4448 = vunpack.c.l.bf16 %v4418
    %v4449 = vunpack.c.h.bf16 %v4418
    %v4450 = vunpack.c.l.bf16 %v4419
    %v4451 = vunpack.c.h.bf16 %v4419
    %v4452 = vmul.f32 %v4420, %v4436
    %v4453 = vmul.f32 %v4421, %v4437
    %v4454 = vmul.f32 %v4422, %v4438
    %v4455 = vmul.f32 %v4423, %v4439
    %v4456 = vmul.f32 %v4424, %v4440
    %v4457 = vmul.f32 %v4425, %v4441
    %v4458 = vmul.f32 %v4426, %v4442
    %v4459 = vmul.f32 %v4427, %v4443
    %v4460 = vmul.f32 %v4428, %v4444
    %v4461 = vmul.f32 %v4429, %v4445
    %v4462 = vmul.f32 %v4430, %v4446
    %v4463 = vmul.f32 %v4431, %v4447
    %v4464 = vmul.f32 %v4432, %v4448
    %v4465 = vmul.f32 %v4433, %v4449
    %v4466 = vmul.f32 %v4434, %v4450
    %v4467 = vmul.f32 %v4435, %v4451
    %v4468 = vpack.c.bf16 %v4453, %v4452
    %v4469 = vpack.c.bf16 %v4455, %v4454
    %v4470 = vpack.c.bf16 %v4457, %v4456
    %v4471 = vpack.c.bf16 %v4459, %v4458
    %v4472 = vpack.c.bf16 %v4461, %v4460
    %v4473 = vpack.c.bf16 %v4463, %v4462
    %v4474 = vpack.c.bf16 %v4465, %v4464
    %v4475 = vpack.c.bf16 %v4467, %v4466
    %4476 = vst [vmem:[#allocation2 + $0x1c0] sm:$0xff] %v4468
    %4477 = vst [vmem:[#allocation2 + $0x1c8] sm:$0xff] %v4469
    %4478 = vst [vmem:[#allocation2 + $0x1d0] sm:$0xff] %v4470
    %4479 = vst [vmem:[#allocation2 + $0x1d8] sm:$0xff] %v4471
    %4480 = vst [vmem:[#allocation2 + $0x1e0] sm:$0xff] %v4472
    %4481 = vst [vmem:[#allocation2 + $0x1e8] sm:$0xff] %v4473
    %4482 = vst [vmem:[#allocation2 + $0x1f0] sm:$0xff] %v4474
    %4483 = vst [vmem:[#allocation2 + $0x1f8] sm:$0xff] %v4475
    %4484 = vrot.lane.b32.xlu0 %v3654, 111
    %v4485 = vpop.permute.xlu0 %4484
    %4486 = vrot.lane.b32.xlu0 %v3655, 111
    %v4487 = vpop.permute.xlu0 %4486
    %4488 = vrot.lane.b32.xlu0 %v3656, 111
    %v4489 = vpop.permute.xlu0 %4488
    %4490 = vrot.lane.b32.xlu0 %v3632, 111
    %v4491 = vpop.permute.xlu0 %4490
    %4492 = vrot.lane.b32.xlu0 %v3657, 111
    %v4493 = vpop.permute.xlu0 %4492
    %4494 = vrot.lane.b32.xlu0 %v3658, 111
    %v4495 = vpop.permute.xlu0 %4494
    %4496 = vrot.lane.b32.xlu0 %v3659, 111
    %v4497 = vpop.permute.xlu0 %4496
    %4498 = vrot.lane.b32.xlu0 %v3633, 111
    %v4499 = vpop.permute.xlu0 %4498
    %v4500 = vsel %vm1057, %v4485, %v4487
    %v4501 = vsel %vm1057, %v4487, %v4489
    %v4502 = vsel %vm1057, %v4489, %v4491
    %v4503 = vsel %vm1057, %v4493, %v4495
    %v4504 = vsel %vm1057, %v4495, %v4497
    %v4505 = vsel %vm1057, %v4497, %v4499
    %v4514 = vsel %vm1070, %v4491, %v4485
    %v4518 = vsel %vm1070, %v4499, %v4493
    %v4520 = vld [vmem:[#allocation3 + $0x200] sm:$0xff]
    %v4521 = vld [vmem:[#allocation3 + $0x208] sm:$0xff]
    %v4522 = vld [vmem:[#allocation3 + $0x210] sm:$0xff]
    %v4523 = vld [vmem:[#allocation3 + $0x218] sm:$0xff]
    %v4524 = vld [vmem:[#allocation3 + $0x220] sm:$0xff]
    %v4525 = vld [vmem:[#allocation3 + $0x228] sm:$0xff]
    %v4526 = vld [vmem:[#allocation3 + $0x230] sm:$0xff]
    %v4527 = vld [vmem:[#allocation3 + $0x238] sm:$0xff]
    %v4528 = vunpack.c.l.bf16 %v4500
    %v4529 = vunpack.c.l.bf16 %v4501
    %v4530 = vunpack.c.l.bf16 %v4502
    %v4531 = vunpack.c.l.bf16 %v4514
    %v4532 = vunpack.c.h.bf16 %v4500
    %v4533 = vunpack.c.h.bf16 %v4501
    %v4534 = vunpack.c.h.bf16 %v4502
    %v4535 = vunpack.c.h.bf16 %v4514
    %v4536 = vunpack.c.l.bf16 %v4503
    %v4537 = vunpack.c.l.bf16 %v4504
    %v4538 = vunpack.c.l.bf16 %v4505
    %v4539 = vunpack.c.l.bf16 %v4518
    %v4540 = vunpack.c.h.bf16 %v4503
    %v4541 = vunpack.c.h.bf16 %v4504
    %v4542 = vunpack.c.h.bf16 %v4505
    %v4543 = vunpack.c.h.bf16 %v4518
    %v4544 = vunpack.c.l.bf16 %v4520
    %v4545 = vunpack.c.h.bf16 %v4520
    %v4546 = vunpack.c.l.bf16 %v4521
    %v4547 = vunpack.c.h.bf16 %v4521
    %v4548 = vunpack.c.l.bf16 %v4522
    %v4549 = vunpack.c.h.bf16 %v4522
    %v4550 = vunpack.c.l.bf16 %v4523
    %v4551 = vunpack.c.h.bf16 %v4523
    %v4552 = vunpack.c.l.bf16 %v4524
    %v4553 = vunpack.c.h.bf16 %v4524
    %v4554 = vunpack.c.l.bf16 %v4525
    %v4555 = vunpack.c.h.bf16 %v4525
    %v4556 = vunpack.c.l.bf16 %v4526
    %v4557 = vunpack.c.h.bf16 %v4526
    %v4558 = vunpack.c.l.bf16 %v4527
    %v4559 = vunpack.c.h.bf16 %v4527
    %v4560 = vmul.f32 %v4528, %v4544
    %v4561 = vmul.f32 %v4529, %v4545
    %v4562 = vmul.f32 %v4530, %v4546
    %v4563 = vmul.f32 %v4531, %v4547
    %v4564 = vmul.f32 %v4532, %v4548
    %v4565 = vmul.f32 %v4533, %v4549
    %v4566 = vmul.f32 %v4534, %v4550
    %v4567 = vmul.f32 %v4535, %v4551
    %v4568 = vmul.f32 %v4536, %v4552
    %v4569 = vmul.f32 %v4537, %v4553
    %v4570 = vmul.f32 %v4538, %v4554
    %v4571 = vmul.f32 %v4539, %v4555
    %v4572 = vmul.f32 %v4540, %v4556
    %v4573 = vmul.f32 %v4541, %v4557
    %v4574 = vmul.f32 %v4542, %v4558
    %v4575 = vmul.f32 %v4543, %v4559
    %v4576 = vpack.c.bf16 %v4561, %v4560
    %v4577 = vpack.c.bf16 %v4563, %v4562
    %v4578 = vpack.c.bf16 %v4565, %v4564
    %v4579 = vpack.c.bf16 %v4567, %v4566
    %v4580 = vpack.c.bf16 %v4569, %v4568
    %v4581 = vpack.c.bf16 %v4571, %v4570
    %v4582 = vpack.c.bf16 %v4573, %v4572
    %v4583 = vpack.c.bf16 %v4575, %v4574
    %4584 = vst [vmem:[#allocation2 + $0x200] sm:$0xff] %v4576
    %4585 = vst [vmem:[#allocation2 + $0x208] sm:$0xff] %v4577
    %4586 = vst [vmem:[#allocation2 + $0x210] sm:$0xff] %v4578
    %4587 = vst [vmem:[#allocation2 + $0x218] sm:$0xff] %v4579
    %4588 = vst [vmem:[#allocation2 + $0x220] sm:$0xff] %v4580
    %4589 = vst [vmem:[#allocation2 + $0x228] sm:$0xff] %v4581
    %4590 = vst [vmem:[#allocation2 + $0x230] sm:$0xff] %v4582
    %4591 = vst [vmem:[#allocation2 + $0x238] sm:$0xff] %v4583
    %v4592 = vld [vmem:[#allocation8] sm:$0xff]
    %v4593 = vld [vmem:[#allocation8 + $0x8] sm:$0xf]
    %v4594 = vld [vmem:[#allocation8 + $0xc] sm:$0xff]
    %v4595 = vld [vmem:[#allocation8 + $0x14] sm:$0xf]
    %v4596 = vld [vmem:[#allocation8 + $0x18] sm:$0xff]
    %v4597 = vld [vmem:[#allocation8 + $0x20] sm:$0xf]
    %v4598 = vld [vmem:[#allocation8 + $0x24] sm:$0xff]
    %v4599 = vld [vmem:[#allocation8 + $0x2c] sm:$0xf]
    %v4600 = vld [vmem:[#allocation2] sm:$0xff]
    %v4601 = vld [vmem:[#allocation2 + $0x8] sm:$0xff]
    %v4602 = vld [vmem:[#allocation2 + $0x10] sm:$0xff]
    %v4603 = vld [vmem:[#allocation2 + $0x18] sm:$0xff]
    %v4604 = vld [vmem:[#allocation2 + $0x20] sm:$0xff]
    %v4605 = vld [vmem:[#allocation2 + $0x28] sm:$0xff]
    %v4606 = vld [vmem:[#allocation2 + $0x30] sm:$0xff]
    %v4607 = vld [vmem:[#allocation2 + $0x38] sm:$0xff]
    %v4608 = vld [vmem:[#allocation2 + $0x40] sm:$0xff]
    %v4609 = vld [vmem:[#allocation2 + $0x48] sm:$0xff]
    %v4610 = vld [vmem:[#allocation2 + $0x50] sm:$0xff]
    %v4611 = vld [vmem:[#allocation2 + $0x58] sm:$0xff]
    %v4612 = vld [vmem:[#allocation2 + $0x60] sm:$0xff]
    %v4613 = vld [vmem:[#allocation2 + $0x68] sm:$0xff]
    %v4614 = vld [vmem:[#allocation2 + $0x70] sm:$0xff]
    %v4615 = vld [vmem:[#allocation2 + $0x78] sm:$0xff]
    %v4616 = vld [vmem:[#allocation2 + $0x80] sm:$0xff]
    %v4617 = vld [vmem:[#allocation2 + $0x88] sm:$0xff]
    %v4618 = vld [vmem:[#allocation2 + $0x90] sm:$0xff]
    %v4619 = vld [vmem:[#allocation2 + $0x98] sm:$0xff]
    %v4620 = vld [vmem:[#allocation2 + $0xa0] sm:$0xff]
    %v4621 = vld [vmem:[#allocation2 + $0xa8] sm:$0xff]
    %v4622 = vld [vmem:[#allocation2 + $0xb0] sm:$0xff]
    %v4623 = vld [vmem:[#allocation2 + $0xb8] sm:$0xff]
    %v4624 = vld [vmem:[#allocation2 + $0xc0] sm:$0xff]
    %v4625 = vld [vmem:[#allocation2 + $0xc8] sm:$0xff]
    %v4626 = vld [vmem:[#allocation2 + $0xd0] sm:$0xff]
    %v4627 = vld [vmem:[#allocation2 + $0xd8] sm:$0xff]
    %v4628 = vld [vmem:[#allocation2 + $0xe0] sm:$0xff]
    %v4629 = vld [vmem:[#allocation2 + $0xe8] sm:$0xff]
    %v4630 = vld [vmem:[#allocation2 + $0xf0] sm:$0xff]
    %v4631 = vld [vmem:[#allocation2 + $0xf8] sm:$0xff]
    %v4632 = vld [vmem:[#allocation2 + $0x100] sm:$0xff]
    %v4633 = vld [vmem:[#allocation2 + $0x108] sm:$0xff]
    %v4634 = vld [vmem:[#allocation2 + $0x110] sm:$0xff]
    %v4635 = vld [vmem:[#allocation2 + $0x118] sm:$0xff]
    %v4636 = vld [vmem:[#allocation2 + $0x120] sm:$0xff]
    %v4637 = vld [vmem:[#allocation2 + $0x128] sm:$0xff]
    %v4638 = vld [vmem:[#allocation2 + $0x130] sm:$0xff]
    %v4639 = vld [vmem:[#allocation2 + $0x138] sm:$0xff]
    %v4640 = vld [vmem:[#allocation2 + $0x140] sm:$0xff]
    %v4641 = vld [vmem:[#allocation2 + $0x148] sm:$0xff]
    %v4642 = vld [vmem:[#allocation2 + $0x150] sm:$0xff]
    %v4643 = vld [vmem:[#allocation2 + $0x158] sm:$0xff]
    %v4644 = vld [vmem:[#allocation2 + $0x160] sm:$0xff]
    %v4645 = vld [vmem:[#allocation2 + $0x168] sm:$0xff]
    %v4646 = vld [vmem:[#allocation2 + $0x170] sm:$0xff]
    %v4647 = vld [vmem:[#allocation2 + $0x178] sm:$0xff]
    %v4648 = vld [vmem:[#allocation2 + $0x180] sm:$0xff]
    %v4649 = vld [vmem:[#allocation2 + $0x188] sm:$0xff]
    %v4650 = vld [vmem:[#allocation2 + $0x190] sm:$0xff]
    %v4651 = vld [vmem:[#allocation2 + $0x198] sm:$0xff]
    %v4652 = vld [vmem:[#allocation2 + $0x1a0] sm:$0xff]
    %v4653 = vld [vmem:[#allocation2 + $0x1a8] sm:$0xff]
    %v4654 = vld [vmem:[#allocation2 + $0x1b0] sm:$0xff]
    %v4655 = vld [vmem:[#allocation2 + $0x1b8] sm:$0xff]
    %v4656 = vld [vmem:[#allocation2 + $0x1c0] sm:$0xff]
    %v4657 = vld [vmem:[#allocation2 + $0x1c8] sm:$0xff]
    %v4658 = vld [vmem:[#allocation2 + $0x1d0] sm:$0xff]
    %v4659 = vld [vmem:[#allocation2 + $0x1d8] sm:$0xff]
    %v4660 = vld [vmem:[#allocation2 + $0x1e0] sm:$0xff]
    %v4661 = vld [vmem:[#allocation2 + $0x1e8] sm:$0xff]
    %v4662 = vld [vmem:[#allocation2 + $0x1f0] sm:$0xff]
    %v4663 = vld [vmem:[#allocation2 + $0x1f8] sm:$0xff]
    %v4664 = vld [vmem:[#allocation2 + $0x200] sm:$0xff]
    %v4665 = vld [vmem:[#allocation2 + $0x208] sm:$0xff]
    %v4666 = vld [vmem:[#allocation2 + $0x210] sm:$0xff]
    %v4667 = vld [vmem:[#allocation2 + $0x218] sm:$0xff]
    %v4668 = vld [vmem:[#allocation2 + $0x220] sm:$0xff]
    %v4669 = vld [vmem:[#allocation2 + $0x228] sm:$0xff]
    %v4670 = vld [vmem:[#allocation2 + $0x230] sm:$0xff]
    %v4671 = vld [vmem:[#allocation2 + $0x238] sm:$0xff]
    %v4672 = vld [vmem:[%s7] sm:$0xff]
    %v4673 = vld [vmem:[%s7 + $0x8] sm:$0xff]
    %v4674 = vld [vmem:[%s7 + $0x10] sm:$0xff]
    %v4675 = vld [vmem:[%s7 + $0x18] sm:$0xff]
    %4677 = vset.pattern.permute.xlu0 0
    %4678 = vperm.xlu0 %4677, %v4672
    %v4679 = vpop.permute.xlu0 %4678
    %4682 = vset.pattern.permute.xlu0 0
    %4683 = vperm.xlu0 %4682, %v4673
    %v4684 = vpop.permute.xlu0 %4683
    %4687 = vset.pattern.permute.xlu0 0
    %4688 = vperm.xlu0 %4687, %v4674
    %v4689 = vpop.permute.xlu0 %4688
    %4692 = vset.pattern.permute.xlu0 0
    %4693 = vperm.xlu0 %4692, %v4675
    %v4694 = vpop.permute.xlu0 %4693
    %v4704 = vunpack.c.l.b16 %v4592
    %v4705 = vunpack.c.h.b16 %v4592
    %v4706 = vunpack.c.l.b16 %v4593
    %v4707 = vunpack.c.l.b16 %v4594
    %v4708 = vunpack.c.h.b16 %v4594
    %v4709 = vunpack.c.l.b16 %v4595
    %v4710 = vunpack.c.l.b16 %v4596
    %v4711 = vunpack.c.h.b16 %v4596
    %v4712 = vunpack.c.l.b16 %v4597
    %v4713 = vunpack.c.l.b16 %v4598
    %v4714 = vunpack.c.h.b16 %v4598
    %v4715 = vunpack.c.l.b16 %v4599
    %v4716 = vpack.c.b16 %v4707, %v4704
    %v4717 = vpack.c.b16 %v4708, %v4705
    %v4718 = vpack.c.b16 %v4709, %v4706
    %v4719 = vpack.c.b16 %v4713, %v4710
    %v4720 = vpack.c.b16 %v4714, %v4711
    %v4721 = vpack.c.b16 %v4715, %v4712
    %v4798 = vunpack.c.l.b16 %v4600
    %v4799 = vunpack.c.h.b16 %v4600
    %v4800 = vunpack.c.l.b16 %v4601
    %v4801 = vunpack.c.h.b16 %v4601
    %v4802 = vunpack.c.l.b16 %v4602
    %v4803 = vunpack.c.h.b16 %v4602
    %v4804 = vunpack.c.l.b16 %v4603
    %v4805 = vunpack.c.h.b16 %v4603
    %v4806 = vunpack.c.l.b16 %v4604
    %v4807 = vunpack.c.h.b16 %v4604
    %v4808 = vunpack.c.l.b16 %v4605
    %v4809 = vunpack.c.h.b16 %v4605
    %v4810 = vunpack.c.l.b16 %v4606
    %v4811 = vunpack.c.h.b16 %v4606
    %v4812 = vunpack.c.l.b16 %v4607
    %v4813 = vunpack.c.h.b16 %v4607
    %v4814 = vunpack.c.l.b16 %v4608
    %v4815 = vunpack.c.h.b16 %v4608
    %v4816 = vunpack.c.l.b16 %v4609
    %v4817 = vunpack.c.h.b16 %v4609
    %v4818 = vunpack.c.l.b16 %v4610
    %v4819 = vunpack.c.h.b16 %v4610
    %v4820 = vunpack.c.l.b16 %v4611
    %v4821 = vunpack.c.h.b16 %v4611
    %v4822 = vunpack.c.l.b16 %v4612
    %v4823 = vunpack.c.h.b16 %v4612
    %v4824 = vunpack.c.l.b16 %v4613
    %v4825 = vunpack.c.h.b16 %v4613
    %v4826 = vunpack.c.l.b16 %v4614
    %v4827 = vunpack.c.h.b16 %v4614
    %v4828 = vunpack.c.l.b16 %v4615
    %v4829 = vunpack.c.h.b16 %v4615
    %v4830 = vunpack.c.l.b16 %v4616
    %v4831 = vunpack.c.h.b16 %v4616
    %v4832 = vunpack.c.l.b16 %v4617
    %v4833 = vunpack.c.h.b16 %v4617
    %v4834 = vunpack.c.l.b16 %v4618
    %v4835 = vunpack.c.h.b16 %v4618
    %v4836 = vunpack.c.l.b16 %v4619
    %v4837 = vunpack.c.h.b16 %v4619
    %v4838 = vunpack.c.l.b16 %v4620
    %v4839 = vunpack.c.h.b16 %v4620
    %v4840 = vunpack.c.l.b16 %v4621
    %v4841 = vunpack.c.h.b16 %v4621
    %v4842 = vunpack.c.l.b16 %v4622
    %v4843 = vunpack.c.h.b16 %v4622
    %v4844 = vunpack.c.l.b16 %v4623
    %v4845 = vunpack.c.h.b16 %v4623
    %v4846 = vunpack.c.l.b16 %v4624
    %v4847 = vunpack.c.h.b16 %v4624
    %v4848 = vunpack.c.l.b16 %v4625
    %v4849 = vunpack.c.h.b16 %v4625
    %v4850 = vunpack.c.l.b16 %v4626
    %v4851 = vunpack.c.h.b16 %v4626
    %v4852 = vunpack.c.l.b16 %v4627
    %v4853 = vunpack.c.h.b16 %v4627
    %v4854 = vunpack.c.l.b16 %v4628
    %v4855 = vunpack.c.h.b16 %v4628
    %v4856 = vunpack.c.l.b16 %v4629
    %v4857 = vunpack.c.h.b16 %v4629
    %v4858 = vunpack.c.l.b16 %v4630
    %v4859 = vunpack.c.h.b16 %v4630
    %v4860 = vunpack.c.l.b16 %v4631
    %v4861 = vunpack.c.h.b16 %v4631
    %v4862 = vunpack.c.l.b16 %v4632
    %v4863 = vunpack.c.h.b16 %v4632
    %v4864 = vunpack.c.l.b16 %v4633
    %v4865 = vunpack.c.h.b16 %v4633
    %v4866 = vunpack.c.l.b16 %v4634
    %v4867 = vunpack.c.h.b16 %v4634
    %v4868 = vunpack.c.l.b16 %v4635
    %v4869 = vunpack.c.h.b16 %v4635
    %v4870 = vunpack.c.l.b16 %v4636
    %v4871 = vunpack.c.h.b16 %v4636
    %v4872 = vunpack.c.l.b16 %v4637
    %v4873 = vunpack.c.h.b16 %v4637
    %v4874 = vunpack.c.l.b16 %v4638
    %v4875 = vunpack.c.h.b16 %v4638
    %v4876 = vunpack.c.l.b16 %v4639
    %v4877 = vunpack.c.h.b16 %v4639
    %v4878 = vunpack.c.l.b16 %v4640
    %v4879 = vunpack.c.h.b16 %v4640
    %v4880 = vunpack.c.l.b16 %v4641
    %v4881 = vunpack.c.h.b16 %v4641
    %v4882 = vunpack.c.l.b16 %v4642
    %v4883 = vunpack.c.h.b16 %v4642
    %v4884 = vunpack.c.l.b16 %v4643
    %v4885 = vunpack.c.h.b16 %v4643
    %v4886 = vunpack.c.l.b16 %v4644
    %v4887 = vunpack.c.h.b16 %v4644
    %v4888 = vunpack.c.l.b16 %v4645
    %v4889 = vunpack.c.h.b16 %v4645
    %v4890 = vunpack.c.l.b16 %v4646
    %v4891 = vunpack.c.h.b16 %v4646
    %v4892 = vunpack.c.l.b16 %v4647
    %v4893 = vunpack.c.h.b16 %v4647
    %v4894 = vunpack.c.l.b16 %v4648
    %v4895 = vunpack.c.h.b16 %v4648
    %v4896 = vunpack.c.l.b16 %v4649
    %v4897 = vunpack.c.h.b16 %v4649
    %v4898 = vunpack.c.l.b16 %v4650
    %v4899 = vunpack.c.h.b16 %v4650
    %v4900 = vunpack.c.l.b16 %v4651
    %v4901 = vunpack.c.h.b16 %v4651
    %v4902 = vunpack.c.l.b16 %v4652
    %v4903 = vunpack.c.h.b16 %v4652
    %v4904 = vunpack.c.l.b16 %v4653
    %v4905 = vunpack.c.h.b16 %v4653
    %v4906 = vunpack.c.l.b16 %v4654
    %v4907 = vunpack.c.h.b16 %v4654
    %v4908 = vunpack.c.l.b16 %v4655
    %v4909 = vunpack.c.h.b16 %v4655
    %v4910 = vunpack.c.l.b16 %v4656
    %v4911 = vunpack.c.h.b16 %v4656
    %v4912 = vunpack.c.l.b16 %v4657
    %v4913 = vunpack.c.h.b16 %v4657
    %v4914 = vunpack.c.l.b16 %v4658
    %v4915 = vunpack.c.h.b16 %v4658
    %v4916 = vunpack.c.l.b16 %v4659
    %v4917 = vunpack.c.h.b16 %v4659
    %v4918 = vunpack.c.l.b16 %v4660
    %v4919 = vunpack.c.h.b16 %v4660
    %v4920 = vunpack.c.l.b16 %v4661
    %v4921 = vunpack.c.h.b16 %v4661
    %v4922 = vunpack.c.l.b16 %v4662
    %v4923 = vunpack.c.h.b16 %v4662
    %v4924 = vunpack.c.l.b16 %v4663
    %v4925 = vunpack.c.h.b16 %v4663
    %v4926 = vunpack.c.l.b16 %v4664
    %v4927 = vunpack.c.h.b16 %v4664
    %v4928 = vunpack.c.l.b16 %v4665
    %v4929 = vunpack.c.h.b16 %v4665
    %v4930 = vunpack.c.l.b16 %v4666
    %v4931 = vunpack.c.h.b16 %v4666
    %v4932 = vunpack.c.l.b16 %v4667
    %v4933 = vunpack.c.h.b16 %v4667
    %v4934 = vunpack.c.l.b16 %v4668
    %v4935 = vunpack.c.h.b16 %v4668
    %v4936 = vunpack.c.l.b16 %v4669
    %v4937 = vunpack.c.h.b16 %v4669
    %v4938 = vunpack.c.l.b16 %v4670
    %v4939 = vunpack.c.h.b16 %v4670
    %v4940 = vunpack.c.l.b16 %v4671
    %v4941 = vunpack.c.h.b16 %v4671
    %v4942 = vpack.c.b16 %v4802, %v4798
    %v4943 = vpack.c.b16 %v4803, %v4799
    %v4944 = vpack.c.b16 %v4804, %v4800
    %v4945 = vpack.c.b16 %v4805, %v4801
    %v4946 = vpack.c.b16 %v4810, %v4806
    %v4947 = vpack.c.b16 %v4811, %v4807
    %v4948 = vpack.c.b16 %v4812, %v4808
    %v4949 = vpack.c.b16 %v4813, %v4809
    %v4950 = vpack.c.b16 %v4818, %v4814
    %v4951 = vpack.c.b16 %v4819, %v4815
    %v4952 = vpack.c.b16 %v4820, %v4816
    %v4953 = vpack.c.b16 %v4821, %v4817
    %v4954 = vpack.c.b16 %v4826, %v4822
    %v4955 = vpack.c.b16 %v4827, %v4823
    %v4956 = vpack.c.b16 %v4828, %v4824
    %v4957 = vpack.c.b16 %v4829, %v4825
    %v4958 = vpack.c.b16 %v4834, %v4830
    %v4959 = vpack.c.b16 %v4835, %v4831
    %v4960 = vpack.c.b16 %v4836, %v4832
    %v4961 = vpack.c.b16 %v4837, %v4833
    %v4962 = vpack.c.b16 %v4842, %v4838
    %v4963 = vpack.c.b16 %v4843, %v4839
    %v4964 = vpack.c.b16 %v4844, %v4840
    %v4965 = vpack.c.b16 %v4845, %v4841
    %v4966 = vpack.c.b16 %v4850, %v4846
    %v4967 = vpack.c.b16 %v4851, %v4847
    %v4968 = vpack.c.b16 %v4852, %v4848
    %v4969 = vpack.c.b16 %v4853, %v4849
    %v4970 = vpack.c.b16 %v4858, %v4854
    %v4971 = vpack.c.b16 %v4859, %v4855
    %v4972 = vpack.c.b16 %v4860, %v4856
    %v4973 = vpack.c.b16 %v4861, %v4857
    %v4974 = vpack.c.b16 %v4866, %v4862
    %v4975 = vpack.c.b16 %v4867, %v4863
    %v4976 = vpack.c.b16 %v4868, %v4864
    %v4977 = vpack.c.b16 %v4869, %v4865
    %v4978 = vpack.c.b16 %v4874, %v4870
    %v4979 = vpack.c.b16 %v4875, %v4871
    %v4980 = vpack.c.b16 %v4876, %v4872
    %v4981 = vpack.c.b16 %v4877, %v4873
    %v4982 = vpack.c.b16 %v4882, %v4878
    %v4983 = vpack.c.b16 %v4883, %v4879
    %v4984 = vpack.c.b16 %v4884, %v4880
    %v4985 = vpack.c.b16 %v4885, %v4881
    %v4986 = vpack.c.b16 %v4890, %v4886
    %v4987 = vpack.c.b16 %v4891, %v4887
    %v4988 = vpack.c.b16 %v4892, %v4888
    %v4989 = vpack.c.b16 %v4893, %v4889
    %v4990 = vpack.c.b16 %v4898, %v4894
    %v4991 = vpack.c.b16 %v4899, %v4895
    %v4992 = vpack.c.b16 %v4900, %v4896
    %v4993 = vpack.c.b16 %v4901, %v4897
    %v4994 = vpack.c.b16 %v4906, %v4902
    %v4995 = vpack.c.b16 %v4907, %v4903
    %v4996 = vpack.c.b16 %v4908, %v4904
    %v4997 = vpack.c.b16 %v4909, %v4905
    %v4998 = vpack.c.b16 %v4914, %v4910
    %v4999 = vpack.c.b16 %v4915, %v4911
    %v5000 = vpack.c.b16 %v4916, %v4912
    %v5001 = vpack.c.b16 %v4917, %v4913
    %v5002 = vpack.c.b16 %v4922, %v4918
    %v5003 = vpack.c.b16 %v4923, %v4919
    %v5004 = vpack.c.b16 %v4924, %v4920
    %v5005 = vpack.c.b16 %v4925, %v4921
    %v5006 = vpack.c.b16 %v4930, %v4926
    %v5007 = vpack.c.b16 %v4931, %v4927
    %v5008 = vpack.c.b16 %v4932, %v4928
    %v5009 = vpack.c.b16 %v4933, %v4929
    %v5010 = vpack.c.b16 %v4938, %v4934
    %v5011 = vpack.c.b16 %v4939, %v4935
    %v5012 = vpack.c.b16 %v4940, %v4936
    %v5013 = vpack.c.b16 %v4941, %v4937
    %v5087 = vsel %vm1645, %v4718, 0
    %v5090 = vsel %vm1645, %v4721, 0
    %5092 = vmatpush.bf16.msra.mxu0 %v4970
    %5093 = vmatpush.bf16.msra.mxu0 %v4966
    %5094 = vmatpush.bf16.msra.mxu0 %v4962
    %5095 = vmatpush.bf16.msra.mxu0 %v4958
    %5096 = vmatpush.bf16.msra.mxu0 %v4954
    %5097 = vmatpush.bf16.msra.mxu0 %v4950
    %5098 = vmatpush.bf16.msra.mxu0 %v4946
    %5099 = vmatpush.bf16.msra.mxu0 %v4942
    %5100 = vmatmul.bf16.gmra.mxu0 %v4716
    %v5101 = vpop.f32.mrf.mxu0
    %v5102 = vadd.f32 %v4679, %v5101
    %v5103 = vpop.f32.mrf.mxu0
    %v5104 = vadd.f32 %v4684, %v5103
    %5105 = vmatmul.bf16.gmra.mxu0 %v4719
    %v5106 = vpop.f32.mrf.mxu0
    %v5107 = vadd.f32 %v4689, %v5106
    %v5108 = vpop.f32.mrf.mxu0
    %v5109 = vadd.f32 %v4694, %v5108
    %5110 = vdwg.mxu0
    %5111 = vmatpush.bf16.msra.mxu0 %v5002
    %5112 = vmatpush.bf16.msra.mxu0 %v4998
    %5113 = vmatpush.bf16.msra.mxu0 %v4994
    %5114 = vmatpush.bf16.msra.mxu0 %v4990
    %5115 = vmatpush.bf16.msra.mxu0 %v4986
    %5116 = vmatpush.bf16.msra.mxu0 %v4982
    %5117 = vmatpush.bf16.msra.mxu0 %v4978
    %5118 = vmatpush.bf16.msra.mxu0 %v4974
    %5119 = vmatmul.bf16.gmra.mxu0 %v4717
    %v5120 = vpop.f32.mrf.mxu0
    %v5121 = vadd.f32 %v5102, %v5120
    %v5122 = vpop.f32.mrf.mxu0
    %v5123 = vadd.f32 %v5104, %v5122
    %5124 = vmatmul.bf16.gmra.mxu0 %v4720
    %v5125 = vpop.f32.mrf.mxu0
    %v5126 = vadd.f32 %v5107, %v5125
    %v5127 = vpop.f32.mrf.mxu0
    %v5128 = vadd.f32 %v5109, %v5127
    %5129 = vdwg.mxu0
    %5130 = vmatpush.bf16.msra.mxu0 0
    %5131 = vmatpush.bf16.msra.mxu0 0
    %5132 = vmatpush.bf16.msra.mxu0 0
    %5133 = vmatpush.bf16.msra.mxu0 0
    %5134 = vmatpush.bf16.msra.mxu0 0
    %5135 = vmatpush.bf16.msra.mxu0 0
    %5136 = vmatpush.bf16.msra.mxu0 %v5010
    %5137 = vmatpush.bf16.msra.mxu0 %v5006
    %5138 = vmatmul.bf16.gmra.mxu0 %v5087
    %v5139 = vpop.f32.mrf.mxu0
    %v5140 = vadd.f32 %v5121, %v5139
    %v5141 = vpop.f32.mrf.mxu0
    %v5142 = vadd.f32 %v5123, %v5141
    %5143 = vmatmul.bf16.gmra.mxu0 %v5090
    %v5144 = vpop.f32.mrf.mxu0
    %v5145 = vadd.f32 %v5126, %v5144
    %v5146 = vpop.f32.mrf.mxu0
    %v5147 = vadd.f32 %v5128, %v5146
    %5148 = vdwg.mxu0
    %5149 = vmatpush.bf16.msra.mxu0 %v4971
    %5150 = vmatpush.bf16.msra.mxu0 %v4967
    %5151 = vmatpush.bf16.msra.mxu0 %v4963
    %5152 = vmatpush.bf16.msra.mxu0 %v4959
    %5153 = vmatpush.bf16.msra.mxu0 %v4955
    %5154 = vmatpush.bf16.msra.mxu0 %v4951
    %5155 = vmatpush.bf16.msra.mxu0 %v4947
    %5156 = vmatpush.bf16.msra.mxu0 %v4943
    %5157 = vmatmul.bf16.gmra.mxu0 %v4716
    %v5158 = vpop.f32.mrf.mxu0
    %v5159 = vadd.f32 %v4679, %v5158
    %v5160 = vpop.f32.mrf.mxu0
    %v5161 = vadd.f32 %v4684, %v5160
    %5162 = vmatmul.bf16.gmra.mxu0 %v4719
    %v5163 = vpop.f32.mrf.mxu0
    %v5164 = vadd.f32 %v4689, %v5163
    %v5165 = vpop.f32.mrf.mxu0
    %v5166 = vadd.f32 %v4694, %v5165
    %5167 = vdwg.mxu0
    %5168 = vmatpush.bf16.msra.mxu0 %v5003
    %5169 = vmatpush.bf16.msra.mxu0 %v4999
    %5170 = vmatpush.bf16.msra.mxu0 %v4995
    %5171 = vmatpush.bf16.msra.mxu0 %v4991
    %5172 = vmatpush.bf16.msra.mxu0 %v4987
    %5173 = vmatpush.bf16.msra.mxu0 %v4983
    %5174 = vmatpush.bf16.msra.mxu0 %v4979
    %5175 = vmatpush.bf16.msra.mxu0 %v4975
    %5176 = vmatmul.bf16.gmra.mxu0 %v4717
    %v5177 = vpop.f32.mrf.mxu0
    %v5178 = vadd.f32 %v5159, %v5177
    %v5179 = vpop.f32.mrf.mxu0
    %v5180 = vadd.f32 %v5161, %v5179
    %5181 = vmatmul.bf16.gmra.mxu0 %v4720
    %v5182 = vpop.f32.mrf.mxu0
    %v5183 = vadd.f32 %v5164, %v5182
    %v5184 = vpop.f32.mrf.mxu0
    %v5185 = vadd.f32 %v5166, %v5184
    %5186 = vdwg.mxu0
    %5187 = vmatpush.bf16.msra.mxu0 0
    %5188 = vmatpush.bf16.msra.mxu0 0
    %5189 = vmatpush.bf16.msra.mxu0 0
    %5190 = vmatpush.bf16.msra.mxu0 0
    %5191 = vmatpush.bf16.msra.mxu0 0
    %5192 = vmatpush.bf16.msra.mxu0 0
    %5193 = vmatpush.bf16.msra.mxu0 %v5011
    %5194 = vmatpush.bf16.msra.mxu0 %v5007
    %5195 = vmatmul.bf16.gmra.mxu0 %v5087
    %v5196 = vpop.f32.mrf.mxu0
    %v5197 = vadd.f32 %v5178, %v5196
    %v5198 = vpop.f32.mrf.mxu0
    %v5199 = vadd.f32 %v5180, %v5198
    %5200 = vmatmul.bf16.gmra.mxu0 %v5090
    %v5201 = vpop.f32.mrf.mxu0
    %v5202 = vadd.f32 %v5183, %v5201
    %v5203 = vpop.f32.mrf.mxu0
    %v5204 = vadd.f32 %v5185, %v5203
    %5205 = vdwg.mxu0
    %5206 = vmatpush.bf16.msra.mxu0 %v4972
    %5207 = vmatpush.bf16.msra.mxu0 %v4968
    %5208 = vmatpush.bf16.msra.mxu0 %v4964
    %5209 = vmatpush.bf16.msra.mxu0 %v4960
    %5210 = vmatpush.bf16.msra.mxu0 %v4956
    %5211 = vmatpush.bf16.msra.mxu0 %v4952
    %5212 = vmatpush.bf16.msra.mxu0 %v4948
    %5213 = vmatpush.bf16.msra.mxu0 %v4944
    %5214 = vmatmul.bf16.gmra.mxu0 %v4716
    %v5215 = vpop.f32.mrf.mxu0
    %v5216 = vadd.f32 %v4679, %v5215
    %v5217 = vpop.f32.mrf.mxu0
    %v5218 = vadd.f32 %v4684, %v5217
    %5219 = vmatmul.bf16.gmra.mxu0 %v4719
    %v5220 = vpop.f32.mrf.mxu0
    %v5221 = vadd.f32 %v4689, %v5220
    %v5222 = vpop.f32.mrf.mxu0
    %v5223 = vadd.f32 %v4694, %v5222
    %5224 = vdwg.mxu0
    %5225 = vmatpush.bf16.msra.mxu0 %v5004
    %5226 = vmatpush.bf16.msra.mxu0 %v5000
    %5227 = vmatpush.bf16.msra.mxu0 %v4996
    %5228 = vmatpush.bf16.msra.mxu0 %v4992
    %5229 = vmatpush.bf16.msra.mxu0 %v4988
    %5230 = vmatpush.bf16.msra.mxu0 %v4984
    %5231 = vmatpush.bf16.msra.mxu0 %v4980
    %5232 = vmatpush.bf16.msra.mxu0 %v4976
    %5233 = vmatmul.bf16.gmra.mxu0 %v4717
    %v5234 = vpop.f32.mrf.mxu0
    %v5235 = vadd.f32 %v5216, %v5234
    %v5236 = vpop.f32.mrf.mxu0
    %v5237 = vadd.f32 %v5218, %v5236
    %5238 = vmatmul.bf16.gmra.mxu0 %v4720
    %v5239 = vpop.f32.mrf.mxu0
    %v5240 = vadd.f32 %v5221, %v5239
    %v5241 = vpop.f32.mrf.mxu0
    %v5242 = vadd.f32 %v5223, %v5241
    %5243 = vdwg.mxu0
    %5244 = vmatpush.bf16.msra.mxu0 0
    %5245 = vmatpush.bf16.msra.mxu0 0
    %5246 = vmatpush.bf16.msra.mxu0 0
    %5247 = vmatpush.bf16.msra.mxu0 0
    %5248 = vmatpush.bf16.msra.mxu0 0
    %5249 = vmatpush.bf16.msra.mxu0 0
    %5250 = vmatpush.bf16.msra.mxu0 %v5012
    %5251 = vmatpush.bf16.msra.mxu0 %v5008
    %5252 = vmatmul.bf16.gmra.mxu0 %v5087
    %v5253 = vpop.f32.mrf.mxu0
    %v5254 = vadd.f32 %v5235, %v5253
    %v5255 = vpop.f32.mrf.mxu0
    %v5256 = vadd.f32 %v5237, %v5255
    %5257 = vmatmul.bf16.gmra.mxu0 %v5090
    %v5258 = vpop.f32.mrf.mxu0
    %v5259 = vadd.f32 %v5240, %v5258
    %v5260 = vpop.f32.mrf.mxu0
    %v5261 = vadd.f32 %v5242, %v5260
    %5262 = vdwg.mxu0
    %5263 = vmatpush.bf16.msra.mxu0 %v4973
    %5264 = vmatpush.bf16.msra.mxu0 %v4969
    %5265 = vmatpush.bf16.msra.mxu0 %v4965
    %5266 = vmatpush.bf16.msra.mxu0 %v4961
    %5267 = vmatpush.bf16.msra.mxu0 %v4957
    %5268 = vmatpush.bf16.msra.mxu0 %v4953
    %5269 = vmatpush.bf16.msra.mxu0 %v4949
    %5270 = vmatpush.bf16.msra.mxu0 %v4945
    %5271 = vmatmul.bf16.gmra.mxu0 %v4716
    %v5272 = vpop.f32.mrf.mxu0
    %v5273 = vadd.f32 %v4679, %v5272
    %v5274 = vpop.f32.mrf.mxu0
    %v5275 = vadd.f32 %v4684, %v5274
    %5276 = vmatmul.bf16.gmra.mxu0 %v4719
    %v5277 = vpop.f32.mrf.mxu0
    %v5278 = vadd.f32 %v4689, %v5277
    %v5279 = vpop.f32.mrf.mxu0
    %v5280 = vadd.f32 %v4694, %v5279
    %5281 = vdwg.mxu0
    %5282 = vmatpush.bf16.msra.mxu0 %v5005
    %5283 = vmatpush.bf16.msra.mxu0 %v5001
    %5284 = vmatpush.bf16.msra.mxu0 %v4997
    %5285 = vmatpush.bf16.msra.mxu0 %v4993
    %5286 = vmatpush.bf16.msra.mxu0 %v4989
    %5287 = vmatpush.bf16.msra.mxu0 %v4985
    %5288 = vmatpush.bf16.msra.mxu0 %v4981
    %5289 = vmatpush.bf16.msra.mxu0 %v4977
    %5290 = vmatmul.bf16.gmra.mxu0 %v4717
    %v5291 = vpop.f32.mrf.mxu0
    %v5292 = vadd.f32 %v5273, %v5291
    %v5293 = vpop.f32.mrf.mxu0
    %v5294 = vadd.f32 %v5275, %v5293
    %5295 = vmatmul.bf16.gmra.mxu0 %v4720
    %v5296 = vpop.f32.mrf.mxu0
    %v5297 = vadd.f32 %v5278, %v5296
    %v5298 = vpop.f32.mrf.mxu0
    %v5299 = vadd.f32 %v5280, %v5298
    %5300 = vdwg.mxu0
    %5301 = vmatpush.bf16.msra.mxu0 0
    %5302 = vmatpush.bf16.msra.mxu0 0
    %5303 = vmatpush.bf16.msra.mxu0 0
    %5304 = vmatpush.bf16.msra.mxu0 0
    %5305 = vmatpush.bf16.msra.mxu0 0
    %5306 = vmatpush.bf16.msra.mxu0 0
    %5307 = vmatpush.bf16.msra.mxu0 %v5013
    %5308 = vmatpush.bf16.msra.mxu0 %v5009
    %5309 = vmatmul.bf16.gmra.mxu0 %v5087
    %v5310 = vpop.f32.mrf.mxu0
    %v5311 = vadd.f32 %v5292, %v5310
    %v5312 = vpop.f32.mrf.mxu0
    %v5313 = vadd.f32 %v5294, %v5312
    %5314 = vmatmul.bf16.gmra.mxu0 %v5090
    %v5315 = vpop.f32.mrf.mxu0
    %v5316 = vadd.f32 %v5297, %v5315
    %v5317 = vpop.f32.mrf.mxu0
    %v5318 = vadd.f32 %v5299, %v5317
    %5319 = vdwg.mxu0
    %v5320 = vsub.f32 %v143, %v5140
    %v5321 = vsub.f32 %v144, %v5197
    %v5322 = vsub.f32 %v145, %v5254
    %v5323 = vsub.f32 %v146, %v5311
    %v5324 = vsub.f32 %v147, %v5142
    %v5325 = vsub.f32 %v148, %v5199
    %v5326 = vsub.f32 %v149, %v5256
    %v5327 = vsub.f32 %v150, %v5313
    %v5328 = vsub.f32 %v151, %v5145
    %v5329 = vsub.f32 %v152, %v5202
    %v5330 = vsub.f32 %v153, %v5259
    %v5331 = vsub.f32 %v154, %v5316
    %v5332 = vsub.f32 %v155, %v5147
    %v5333 = vsub.f32 %v156, %v5204
    %v5334 = vsub.f32 %v157, %v5261
    %v5335 = vsub.f32 %v158, %v5318
    %v5336 = vpack.c.bf16 %v5321, %v5320
    %v5337 = vpack.c.bf16 %v5323, %v5322
    %v5338 = vpack.c.bf16 %v5325, %v5324
    %v5339 = vpack.c.bf16 %v5327, %v5326
    %v5340 = vpack.c.bf16 %v5329, %v5328
    %v5341 = vpack.c.bf16 %v5331, %v5330
    %v5342 = vpack.c.bf16 %v5333, %v5332
    %v5343 = vpack.c.bf16 %v5335, %v5334
    %v5348 = vunpack.c.h.b16 %v5337
    %v5349 = vunpack.c.h.b16 %v5339
    %v5350 = vunpack.c.h.b16 %v5341
    %v5351 = vunpack.c.h.b16 %v5343
    %v5352 = vpack.c.b16 %v5349, %v5348
    %v5353 = vpack.c.b16 %v5351, %v5350
    %5354 = vrot.lane.b32.xlu0 %v5352, 17
    %v5355 = vpop.permute.xlu0 %5354
    %5356 = vrot.lane.b32.xlu0 %v5353, 17
    %v5357 = vpop.permute.xlu0 %5356
    %v5362 = vunpack.c.l.b16 %v5336
    %v5363 = vunpack.c.h.b16 %v5336
    %v5364 = vunpack.c.l.b16 %v5337
    %v5365 = vunpack.c.l.b16 %v5338
    %v5366 = vunpack.c.h.b16 %v5338
    %v5367 = vunpack.c.l.b16 %v5339
    %v5368 = vunpack.c.l.b16 %v5340
    %v5369 = vunpack.c.h.b16 %v5340
    %v5370 = vunpack.c.l.b16 %v5341
    %v5371 = vunpack.c.l.b16 %v5342
    %v5372 = vunpack.c.h.b16 %v5342
    %v5373 = vunpack.c.l.b16 %v5343
    %v5374 = vpack.c.b16 %v5365, %v5362
    %v5375 = vpack.c.b16 %v5366, %v5363
    %v5376 = vpack.c.b16 %v5367, %v5364
    %v5377 = vpack.c.b16 %v5371, %v5368
    %v5378 = vpack.c.b16 %v5372, %v5369
    %v5379 = vpack.c.b16 %v5373, %v5370
    %5380 = vrot.lane.b32.xlu0 %v5374, 17
    %v5381 = vpop.permute.xlu0 %5380
    %5382 = vrot.lane.b32.xlu0 %v5375, 17
    %v5383 = vpop.permute.xlu0 %5382
    %5384 = vrot.lane.b32.xlu0 %v5376, 17
    %v5385 = vpop.permute.xlu0 %5384
    %5386 = vrot.lane.b32.xlu0 %v5377, 17
    %v5387 = vpop.permute.xlu0 %5386
    %5388 = vrot.lane.b32.xlu0 %v5378, 17
    %v5389 = vpop.permute.xlu0 %5388
    %5390 = vrot.lane.b32.xlu0 %v5379, 17
    %v5391 = vpop.permute.xlu0 %5390
    %v5392 = vsel %vm215, %v5381, %v5383
    %v5393 = vsel %vm215, %v5383, %v5385
    %v5394 = vsel %vm215, %v5385, %v5355
    %v5395 = vsel %vm215, %v5387, %v5389
    %v5396 = vsel %vm215, %v5389, %v5391
    %v5397 = vsel %vm215, %v5391, %v5357
    %v5406 = vsel %vm228, %v5355, %v5381
    %v5410 = vsel %vm228, %v5357, %v5387
    %v5412 = vld [vmem:[#allocation3] sm:$0xff]
    %v5413 = vld [vmem:[#allocation3 + $0x8] sm:$0xff]
    %v5414 = vld [vmem:[#allocation3 + $0x10] sm:$0xff]
    %v5415 = vld [vmem:[#allocation3 + $0x18] sm:$0xff]
    %v5416 = vld [vmem:[#allocation3 + $0x20] sm:$0xff]
    %v5417 = vld [vmem:[#allocation3 + $0x28] sm:$0xff]
    %v5418 = vld [vmem:[#allocation3 + $0x30] sm:$0xff]
    %v5419 = vld [vmem:[#allocation3 + $0x38] sm:$0xff]
    %v5420 = vunpack.c.l.bf16 %v5406
    %v5421 = vunpack.c.l.bf16 %v5392
    %v5422 = vunpack.c.l.bf16 %v5393
    %v5423 = vunpack.c.l.bf16 %v5394
    %v5424 = vunpack.c.h.bf16 %v5406
    %v5425 = vunpack.c.h.bf16 %v5392
    %v5426 = vunpack.c.h.bf16 %v5393
    %v5427 = vunpack.c.h.bf16 %v5394
    %v5428 = vunpack.c.l.bf16 %v5410
    %v5429 = vunpack.c.l.bf16 %v5395
    %v5430 = vunpack.c.l.bf16 %v5396
    %v5431 = vunpack.c.l.bf16 %v5397
    %v5432 = vunpack.c.h.bf16 %v5410
    %v5433 = vunpack.c.h.bf16 %v5395
    %v5434 = vunpack.c.h.bf16 %v5396
    %v5435 = vunpack.c.h.bf16 %v5397
    %v5436 = vunpack.c.l.bf16 %v5412
    %v5437 = vunpack.c.h.bf16 %v5412
    %v5438 = vunpack.c.l.bf16 %v5413
    %v5439 = vunpack.c.h.bf16 %v5413
    %v5440 = vunpack.c.l.bf16 %v5414
    %v5441 = vunpack.c.h.bf16 %v5414
    %v5442 = vunpack.c.l.bf16 %v5415
    %v5443 = vunpack.c.h.bf16 %v5415
    %v5444 = vunpack.c.l.bf16 %v5416
    %v5445 = vunpack.c.h.bf16 %v5416
    %v5446 = vunpack.c.l.bf16 %v5417
    %v5447 = vunpack.c.h.bf16 %v5417
    %v5448 = vunpack.c.l.bf16 %v5418
    %v5449 = vunpack.c.h.bf16 %v5418
    %v5450 = vunpack.c.l.bf16 %v5419
    %v5451 = vunpack.c.h.bf16 %v5419
    %v5452 = vmul.f32 %v5420, %v5436
    %v5453 = vmul.f32 %v5421, %v5437
    %v5454 = vmul.f32 %v5422, %v5438
    %v5455 = vmul.f32 %v5423, %v5439
    %v5456 = vmul.f32 %v5424, %v5440
    %v5457 = vmul.f32 %v5425, %v5441
    %v5458 = vmul.f32 %v5426, %v5442
    %v5459 = vmul.f32 %v5427, %v5443
    %v5460 = vmul.f32 %v5428, %v5444
    %v5461 = vmul.f32 %v5429, %v5445
    %v5462 = vmul.f32 %v5430, %v5446
    %v5463 = vmul.f32 %v5431, %v5447
    %v5464 = vmul.f32 %v5432, %v5448
    %v5465 = vmul.f32 %v5433, %v5449
    %v5466 = vmul.f32 %v5434, %v5450
    %v5467 = vmul.f32 %v5435, %v5451
    %v5468 = vpack.c.bf16 %v5453, %v5452
    %v5469 = vpack.c.bf16 %v5455, %v5454
    %v5470 = vpack.c.bf16 %v5457, %v5456
    %v5471 = vpack.c.bf16 %v5459, %v5458
    %v5472 = vpack.c.bf16 %v5461, %v5460
    %v5473 = vpack.c.bf16 %v5463, %v5462
    %v5474 = vpack.c.bf16 %v5465, %v5464
    %v5475 = vpack.c.bf16 %v5467, %v5466
    %5476 = vst [vmem:[#allocation2] sm:$0xff] %v5468
    %5477 = vst [vmem:[#allocation2 + $0x8] sm:$0xff] %v5469
    %5478 = vst [vmem:[#allocation2 + $0x10] sm:$0xff] %v5470
    %5479 = vst [vmem:[#allocation2 + $0x18] sm:$0xff] %v5471
    %5480 = vst [vmem:[#allocation2 + $0x20] sm:$0xff] %v5472
    %5481 = vst [vmem:[#allocation2 + $0x28] sm:$0xff] %v5473
    %5482 = vst [vmem:[#allocation2 + $0x30] sm:$0xff] %v5474
    %5483 = vst [vmem:[#allocation2 + $0x38] sm:$0xff] %v5475
    %5484 = vrot.lane.b32.xlu0 %v5352, 16
    %v5485 = vpop.permute.xlu0 %5484
    %5486 = vrot.lane.b32.xlu0 %v5353, 16
    %v5487 = vpop.permute.xlu0 %5486
    %5488 = vrot.lane.b32.xlu0 %v5374, 16
    %v5489 = vpop.permute.xlu0 %5488
    %5490 = vrot.lane.b32.xlu0 %v5375, 16
    %v5491 = vpop.permute.xlu0 %5490
    %5492 = vrot.lane.b32.xlu0 %v5376, 16
    %v5493 = vpop.permute.xlu0 %5492
    %5494 = vrot.lane.b32.xlu0 %v5377, 16
    %v5495 = vpop.permute.xlu0 %5494
    %5496 = vrot.lane.b32.xlu0 %v5378, 16
    %v5497 = vpop.permute.xlu0 %5496
    %5498 = vrot.lane.b32.xlu0 %v5379, 16
    %v5499 = vpop.permute.xlu0 %5498
    %v5500 = vsel %vm325, %v5489, %v5491
    %v5501 = vsel %vm325, %v5491, %v5493
    %v5502 = vsel %vm325, %v5493, %v5485
    %v5503 = vsel %vm325, %v5495, %v5497
    %v5504 = vsel %vm325, %v5497, %v5499
    %v5505 = vsel %vm325, %v5499, %v5487
    %v5514 = vsel %vm338, %v5485, %v5489
    %v5518 = vsel %vm338, %v5487, %v5495
    %v5520 = vld [vmem:[#allocation3 + $0x40] sm:$0xff]
    %v5521 = vld [vmem:[#allocation3 + $0x48] sm:$0xff]
    %v5522 = vld [vmem:[#allocation3 + $0x50] sm:$0xff]
    %v5523 = vld [vmem:[#allocation3 + $0x58] sm:$0xff]
    %v5524 = vld [vmem:[#allocation3 + $0x60] sm:$0xff]
    %v5525 = vld [vmem:[#allocation3 + $0x68] sm:$0xff]
    %v5526 = vld [vmem:[#allocation3 + $0x70] sm:$0xff]
    %v5527 = vld [vmem:[#allocation3 + $0x78] sm:$0xff]
    %v5528 = vunpack.c.l.bf16 %v5514
    %v5529 = vunpack.c.l.bf16 %v5500
    %v5530 = vunpack.c.l.bf16 %v5501
    %v5531 = vunpack.c.l.bf16 %v5502
    %v5532 = vunpack.c.h.bf16 %v5514
    %v5533 = vunpack.c.h.bf16 %v5500
    %v5534 = vunpack.c.h.bf16 %v5501
    %v5535 = vunpack.c.h.bf16 %v5502
    %v5536 = vunpack.c.l.bf16 %v5518
    %v5537 = vunpack.c.l.bf16 %v5503
    %v5538 = vunpack.c.l.bf16 %v5504
    %v5539 = vunpack.c.l.bf16 %v5505
    %v5540 = vunpack.c.h.bf16 %v5518
    %v5541 = vunpack.c.h.bf16 %v5503
    %v5542 = vunpack.c.h.bf16 %v5504
    %v5543 = vunpack.c.h.bf16 %v5505
    %v5544 = vunpack.c.l.bf16 %v5520
    %v5545 = vunpack.c.h.bf16 %v5520
    %v5546 = vunpack.c.l.bf16 %v5521
    %v5547 = vunpack.c.h.bf16 %v5521
    %v5548 = vunpack.c.l.bf16 %v5522
    %v5549 = vunpack.c.h.bf16 %v5522
    %v5550 = vunpack.c.l.bf16 %v5523
    %v5551 = vunpack.c.h.bf16 %v5523
    %v5552 = vunpack.c.l.bf16 %v5524
    %v5553 = vunpack.c.h.bf16 %v5524
    %v5554 = vunpack.c.l.bf16 %v5525
    %v5555 = vunpack.c.h.bf16 %v5525
    %v5556 = vunpack.c.l.bf16 %v5526
    %v5557 = vunpack.c.h.bf16 %v5526
    %v5558 = vunpack.c.l.bf16 %v5527
    %v5559 = vunpack.c.h.bf16 %v5527
    %v5560 = vmul.f32 %v5528, %v5544
    %v5561 = vmul.f32 %v5529, %v5545
    %v5562 = vmul.f32 %v5530, %v5546
    %v5563 = vmul.f32 %v5531, %v5547
    %v5564 = vmul.f32 %v5532, %v5548
    %v5565 = vmul.f32 %v5533, %v5549
    %v5566 = vmul.f32 %v5534, %v5550
    %v5567 = vmul.f32 %v5535, %v5551
    %v5568 = vmul.f32 %v5536, %v5552
    %v5569 = vmul.f32 %v5537, %v5553
    %v5570 = vmul.f32 %v5538, %v5554
    %v5571 = vmul.f32 %v5539, %v5555
    %v5572 = vmul.f32 %v5540, %v5556
    %v5573 = vmul.f32 %v5541, %v5557
    %v5574 = vmul.f32 %v5542, %v5558
    %v5575 = vmul.f32 %v5543, %v5559
    %v5576 = vpack.c.bf16 %v5561, %v5560
    %v5577 = vpack.c.bf16 %v5563, %v5562
    %v5578 = vpack.c.bf16 %v5565, %v5564
    %v5579 = vpack.c.bf16 %v5567, %v5566
    %v5580 = vpack.c.bf16 %v5569, %v5568
    %v5581 = vpack.c.bf16 %v5571, %v5570
    %v5582 = vpack.c.bf16 %v5573, %v5572
    %v5583 = vpack.c.bf16 %v5575, %v5574
    %5584 = vst [vmem:[#allocation2 + $0x40] sm:$0xff] %v5576
    %5585 = vst [vmem:[#allocation2 + $0x48] sm:$0xff] %v5577
    %5586 = vst [vmem:[#allocation2 + $0x50] sm:$0xff] %v5578
    %5587 = vst [vmem:[#allocation2 + $0x58] sm:$0xff] %v5579
    %5588 = vst [vmem:[#allocation2 + $0x60] sm:$0xff] %v5580
    %5589 = vst [vmem:[#allocation2 + $0x68] sm:$0xff] %v5581
    %5590 = vst [vmem:[#allocation2 + $0x70] sm:$0xff] %v5582
    %5591 = vst [vmem:[#allocation2 + $0x78] sm:$0xff] %v5583
    %5592 = vrot.lane.b32.xlu0 %v5352, 15
    %v5593 = vpop.permute.xlu0 %5592
    %5594 = vrot.lane.b32.xlu0 %v5353, 15
    %v5595 = vpop.permute.xlu0 %5594
    %5596 = vrot.lane.b32.xlu0 %v5374, 15
    %v5597 = vpop.permute.xlu0 %5596
    %5598 = vrot.lane.b32.xlu0 %v5375, 15
    %v5599 = vpop.permute.xlu0 %5598
    %5600 = vrot.lane.b32.xlu0 %v5376, 15
    %v5601 = vpop.permute.xlu0 %5600
    %5602 = vrot.lane.b32.xlu0 %v5377, 15
    %v5603 = vpop.permute.xlu0 %5602
    %5604 = vrot.lane.b32.xlu0 %v5378, 15
    %v5605 = vpop.permute.xlu0 %5604
    %5606 = vrot.lane.b32.xlu0 %v5379, 15
    %v5607 = vpop.permute.xlu0 %5606
    %v5608 = vsel %vm435, %v5597, %v5599
    %v5609 = vsel %vm435, %v5599, %v5601
    %v5610 = vsel %vm435, %v5601, %v5593
    %v5611 = vsel %vm435, %v5603, %v5605
    %v5612 = vsel %vm435, %v5605, %v5607
    %v5613 = vsel %vm435, %v5607, %v5595
    %v5622 = vsel %vm448, %v5593, %v5597
    %v5626 = vsel %vm448, %v5595, %v5603
    %v5628 = vld [vmem:[#allocation3 + $0x80] sm:$0xff]
    %v5629 = vld [vmem:[#allocation3 + $0x88] sm:$0xff]
    %v5630 = vld [vmem:[#allocation3 + $0x90] sm:$0xff]
    %v5631 = vld [vmem:[#allocation3 + $0x98] sm:$0xff]
    %v5632 = vld [vmem:[#allocation3 + $0xa0] sm:$0xff]
    %v5633 = vld [vmem:[#allocation3 + $0xa8] sm:$0xff]
    %v5634 = vld [vmem:[#allocation3 + $0xb0] sm:$0xff]
    %v5635 = vld [vmem:[#allocation3 + $0xb8] sm:$0xff]
    %v5636 = vunpack.c.l.bf16 %v5622
    %v5637 = vunpack.c.l.bf16 %v5608
    %v5638 = vunpack.c.l.bf16 %v5609
    %v5639 = vunpack.c.l.bf16 %v5610
    %v5640 = vunpack.c.h.bf16 %v5622
    %v5641 = vunpack.c.h.bf16 %v5608
    %v5642 = vunpack.c.h.bf16 %v5609
    %v5643 = vunpack.c.h.bf16 %v5610
    %v5644 = vunpack.c.l.bf16 %v5626
    %v5645 = vunpack.c.l.bf16 %v5611
    %v5646 = vunpack.c.l.bf16 %v5612
    %v5647 = vunpack.c.l.bf16 %v5613
    %v5648 = vunpack.c.h.bf16 %v5626
    %v5649 = vunpack.c.h.bf16 %v5611
    %v5650 = vunpack.c.h.bf16 %v5612
    %v5651 = vunpack.c.h.bf16 %v5613
    %v5652 = vunpack.c.l.bf16 %v5628
    %v5653 = vunpack.c.h.bf16 %v5628
    %v5654 = vunpack.c.l.bf16 %v5629
    %v5655 = vunpack.c.h.bf16 %v5629
    %v5656 = vunpack.c.l.bf16 %v5630
    %v5657 = vunpack.c.h.bf16 %v5630
    %v5658 = vunpack.c.l.bf16 %v5631
    %v5659 = vunpack.c.h.bf16 %v5631
    %v5660 = vunpack.c.l.bf16 %v5632
    %v5661 = vunpack.c.h.bf16 %v5632
    %v5662 = vunpack.c.l.bf16 %v5633
    %v5663 = vunpack.c.h.bf16 %v5633
    %v5664 = vunpack.c.l.bf16 %v5634
    %v5665 = vunpack.c.h.bf16 %v5634
    %v5666 = vunpack.c.l.bf16 %v5635
    %v5667 = vunpack.c.h.bf16 %v5635
    %v5668 = vmul.f32 %v5636, %v5652
    %v5669 = vmul.f32 %v5637, %v5653
    %v5670 = vmul.f32 %v5638, %v5654
    %v5671 = vmul.f32 %v5639, %v5655
    %v5672 = vmul.f32 %v5640, %v5656
    %v5673 = vmul.f32 %v5641, %v5657
    %v5674 = vmul.f32 %v5642, %v5658
    %v5675 = vmul.f32 %v5643, %v5659
    %v5676 = vmul.f32 %v5644, %v5660
    %v5677 = vmul.f32 %v5645, %v5661
    %v5678 = vmul.f32 %v5646, %v5662
    %v5679 = vmul.f32 %v5647, %v5663
    %v5680 = vmul.f32 %v5648, %v5664
    %v5681 = vmul.f32 %v5649, %v5665
    %v5682 = vmul.f32 %v5650, %v5666
    %v5683 = vmul.f32 %v5651, %v5667
    %v5684 = vpack.c.bf16 %v5669, %v5668
    %v5685 = vpack.c.bf16 %v5671, %v5670
    %v5686 = vpack.c.bf16 %v5673, %v5672
    %v5687 = vpack.c.bf16 %v5675, %v5674
    %v5688 = vpack.c.bf16 %v5677, %v5676
    %v5689 = vpack.c.bf16 %v5679, %v5678
    %v5690 = vpack.c.bf16 %v5681, %v5680
    %v5691 = vpack.c.bf16 %v5683, %v5682
    %5692 = vst [vmem:[#allocation2 + $0x80] sm:$0xff] %v5684
    %5693 = vst [vmem:[#allocation2 + $0x88] sm:$0xff] %v5685
    %5694 = vst [vmem:[#allocation2 + $0x90] sm:$0xff] %v5686
    %5695 = vst [vmem:[#allocation2 + $0x98] sm:$0xff] %v5687
    %5696 = vst [vmem:[#allocation2 + $0xa0] sm:$0xff] %v5688
    %5697 = vst [vmem:[#allocation2 + $0xa8] sm:$0xff] %v5689
    %5698 = vst [vmem:[#allocation2 + $0xb0] sm:$0xff] %v5690
    %5699 = vst [vmem:[#allocation2 + $0xb8] sm:$0xff] %v5691
    %5700 = vrot.lane.b32.xlu0 %v5352, 1
    %v5701 = vpop.permute.xlu0 %5700
    %5702 = vrot.lane.b32.xlu0 %v5353, 1
    %v5703 = vpop.permute.xlu0 %5702
    %5704 = vrot.lane.b32.xlu0 %v5374, 1
    %v5705 = vpop.permute.xlu0 %5704
    %5706 = vrot.lane.b32.xlu0 %v5375, 1
    %v5707 = vpop.permute.xlu0 %5706
    %5708 = vrot.lane.b32.xlu0 %v5376, 1
    %v5709 = vpop.permute.xlu0 %5708
    %5710 = vrot.lane.b32.xlu0 %v5377, 1
    %v5711 = vpop.permute.xlu0 %5710
    %5712 = vrot.lane.b32.xlu0 %v5378, 1
    %v5713 = vpop.permute.xlu0 %5712
    %5714 = vrot.lane.b32.xlu0 %v5379, 1
    %v5715 = vpop.permute.xlu0 %5714
    %v5716 = vsel %vm545, %v5705, %v5707
    %v5717 = vsel %vm545, %v5707, %v5709
    %v5718 = vsel %vm545, %v5709, %v5701
    %v5719 = vsel %vm545, %v5711, %v5713
    %v5720 = vsel %vm545, %v5713, %v5715
    %v5721 = vsel %vm545, %v5715, %v5703
    %v5730 = vsel %vm558, %v5701, %v5705
    %v5734 = vsel %vm558, %v5703, %v5711
    %v5736 = vld [vmem:[#allocation3 + $0xc0] sm:$0xff]
    %v5737 = vld [vmem:[#allocation3 + $0xc8] sm:$0xff]
    %v5738 = vld [vmem:[#allocation3 + $0xd0] sm:$0xff]
    %v5739 = vld [vmem:[#allocation3 + $0xd8] sm:$0xff]
    %v5740 = vld [vmem:[#allocation3 + $0xe0] sm:$0xff]
    %v5741 = vld [vmem:[#allocation3 + $0xe8] sm:$0xff]
    %v5742 = vld [vmem:[#allocation3 + $0xf0] sm:$0xff]
    %v5743 = vld [vmem:[#allocation3 + $0xf8] sm:$0xff]
    %v5744 = vunpack.c.l.bf16 %v5730
    %v5745 = vunpack.c.l.bf16 %v5716
    %v5746 = vunpack.c.l.bf16 %v5717
    %v5747 = vunpack.c.l.bf16 %v5718
    %v5748 = vunpack.c.h.bf16 %v5730
    %v5749 = vunpack.c.h.bf16 %v5716
    %v5750 = vunpack.c.h.bf16 %v5717
    %v5751 = vunpack.c.h.bf16 %v5718
    %v5752 = vunpack.c.l.bf16 %v5734
    %v5753 = vunpack.c.l.bf16 %v5719
    %v5754 = vunpack.c.l.bf16 %v5720
    %v5755 = vunpack.c.l.bf16 %v5721
    %v5756 = vunpack.c.h.bf16 %v5734
    %v5757 = vunpack.c.h.bf16 %v5719
    %v5758 = vunpack.c.h.bf16 %v5720
    %v5759 = vunpack.c.h.bf16 %v5721
    %v5760 = vunpack.c.l.bf16 %v5736
    %v5761 = vunpack.c.h.bf16 %v5736
    %v5762 = vunpack.c.l.bf16 %v5737
    %v5763 = vunpack.c.h.bf16 %v5737
    %v5764 = vunpack.c.l.bf16 %v5738
    %v5765 = vunpack.c.h.bf16 %v5738
    %v5766 = vunpack.c.l.bf16 %v5739
    %v5767 = vunpack.c.h.bf16 %v5739
    %v5768 = vunpack.c.l.bf16 %v5740
    %v5769 = vunpack.c.h.bf16 %v5740
    %v5770 = vunpack.c.l.bf16 %v5741
    %v5771 = vunpack.c.h.bf16 %v5741
    %v5772 = vunpack.c.l.bf16 %v5742
    %v5773 = vunpack.c.h.bf16 %v5742
    %v5774 = vunpack.c.l.bf16 %v5743
    %v5775 = vunpack.c.h.bf16 %v5743
    %v5776 = vmul.f32 %v5744, %v5760
    %v5777 = vmul.f32 %v5745, %v5761
    %v5778 = vmul.f32 %v5746, %v5762
    %v5779 = vmul.f32 %v5747, %v5763
    %v5780 = vmul.f32 %v5748, %v5764
    %v5781 = vmul.f32 %v5749, %v5765
    %v5782 = vmul.f32 %v5750, %v5766
    %v5783 = vmul.f32 %v5751, %v5767
    %v5784 = vmul.f32 %v5752, %v5768
    %v5785 = vmul.f32 %v5753, %v5769
    %v5786 = vmul.f32 %v5754, %v5770
    %v5787 = vmul.f32 %v5755, %v5771
    %v5788 = vmul.f32 %v5756, %v5772
    %v5789 = vmul.f32 %v5757, %v5773
    %v5790 = vmul.f32 %v5758, %v5774
    %v5791 = vmul.f32 %v5759, %v5775
    %v5792 = vpack.c.bf16 %v5777, %v5776
    %v5793 = vpack.c.bf16 %v5779, %v5778
    %v5794 = vpack.c.bf16 %v5781, %v5780
    %v5795 = vpack.c.bf16 %v5783, %v5782
    %v5796 = vpack.c.bf16 %v5785, %v5784
    %v5797 = vpack.c.bf16 %v5787, %v5786
    %v5798 = vpack.c.bf16 %v5789, %v5788
    %v5799 = vpack.c.bf16 %v5791, %v5790
    %5800 = vst [vmem:[#allocation2 + $0xc0] sm:$0xff] %v5792
    %5801 = vst [vmem:[#allocation2 + $0xc8] sm:$0xff] %v5793
    %5802 = vst [vmem:[#allocation2 + $0xd0] sm:$0xff] %v5794
    %5803 = vst [vmem:[#allocation2 + $0xd8] sm:$0xff] %v5795
    %5804 = vst [vmem:[#allocation2 + $0xe0] sm:$0xff] %v5796
    %5805 = vst [vmem:[#allocation2 + $0xe8] sm:$0xff] %v5797
    %5806 = vst [vmem:[#allocation2 + $0xf0] sm:$0xff] %v5798
    %5807 = vst [vmem:[#allocation2 + $0xf8] sm:$0xff] %v5799
    %v5808 = vld [vmem:[#allocation3 + $0x100] sm:$0xff]
    %v5809 = vld [vmem:[#allocation3 + $0x108] sm:$0xff]
    %v5810 = vld [vmem:[#allocation3 + $0x110] sm:$0xff]
    %v5811 = vld [vmem:[#allocation3 + $0x118] sm:$0xff]
    %v5812 = vld [vmem:[#allocation3 + $0x120] sm:$0xff]
    %v5813 = vld [vmem:[#allocation3 + $0x128] sm:$0xff]
    %v5814 = vld [vmem:[#allocation3 + $0x130] sm:$0xff]
    %v5815 = vld [vmem:[#allocation3 + $0x138] sm:$0xff]
    %v5816 = vunpack.c.l.bf16 %v5336
    %v5817 = vunpack.c.h.bf16 %v5336
    %v5818 = vunpack.c.l.bf16 %v5337
    %v5819 = vunpack.c.h.bf16 %v5337
    %v5820 = vunpack.c.l.bf16 %v5338
    %v5821 = vunpack.c.h.bf16 %v5338
    %v5822 = vunpack.c.l.bf16 %v5339
    %v5823 = vunpack.c.h.bf16 %v5339
    %v5824 = vunpack.c.l.bf16 %v5340
    %v5825 = vunpack.c.h.bf16 %v5340
    %v5826 = vunpack.c.l.bf16 %v5341
    %v5827 = vunpack.c.h.bf16 %v5341
    %v5828 = vunpack.c.l.bf16 %v5342
    %v5829 = vunpack.c.h.bf16 %v5342
    %v5830 = vunpack.c.l.bf16 %v5343
    %v5831 = vunpack.c.h.bf16 %v5343
    %v5832 = vunpack.c.l.bf16 %v5808
    %v5833 = vunpack.c.h.bf16 %v5808
    %v5834 = vunpack.c.l.bf16 %v5809
    %v5835 = vunpack.c.h.bf16 %v5809
    %v5836 = vunpack.c.l.bf16 %v5810
    %v5837 = vunpack.c.h.bf16 %v5810
    %v5838 = vunpack.c.l.bf16 %v5811
    %v5839 = vunpack.c.h.bf16 %v5811
    %v5840 = vunpack.c.l.bf16 %v5812
    %v5841 = vunpack.c.h.bf16 %v5812
    %v5842 = vunpack.c.l.bf16 %v5813
    %v5843 = vunpack.c.h.bf16 %v5813
    %v5844 = vunpack.c.l.bf16 %v5814
    %v5845 = vunpack.c.h.bf16 %v5814
    %v5846 = vunpack.c.l.bf16 %v5815
    %v5847 = vunpack.c.h.bf16 %v5815
    %v5848 = vmul.f32 %v5816, %v5832
    %v5849 = vmul.f32 %v5817, %v5833
    %v5850 = vmul.f32 %v5818, %v5834
    %v5851 = vmul.f32 %v5819, %v5835
    %v5852 = vmul.f32 %v5820, %v5836
    %v5853 = vmul.f32 %v5821, %v5837
    %v5854 = vmul.f32 %v5822, %v5838
    %v5855 = vmul.f32 %v5823, %v5839
    %v5856 = vmul.f32 %v5824, %v5840
    %v5857 = vmul.f32 %v5825, %v5841
    %v5858 = vmul.f32 %v5826, %v5842
    %v5859 = vmul.f32 %v5827, %v5843
    %v5860 = vmul.f32 %v5828, %v5844
    %v5861 = vmul.f32 %v5829, %v5845
    %v5862 = vmul.f32 %v5830, %v5846
    %v5863 = vmul.f32 %v5831, %v5847
    %v5864 = vpack.c.bf16 %v5849, %v5848
    %v5865 = vpack.c.bf16 %v5851, %v5850
    %v5866 = vpack.c.bf16 %v5853, %v5852
    %v5867 = vpack.c.bf16 %v5855, %v5854
    %v5868 = vpack.c.bf16 %v5857, %v5856
    %v5869 = vpack.c.bf16 %v5859, %v5858
    %v5870 = vpack.c.bf16 %v5861, %v5860
    %v5871 = vpack.c.bf16 %v5863, %v5862
    %5872 = vst [vmem:[#allocation2 + $0x100] sm:$0xff] %v5864
    %5873 = vst [vmem:[#allocation2 + $0x108] sm:$0xff] %v5865
    %5874 = vst [vmem:[#allocation2 + $0x110] sm:$0xff] %v5866
    %5875 = vst [vmem:[#allocation2 + $0x118] sm:$0xff] %v5867
    %5876 = vst [vmem:[#allocation2 + $0x120] sm:$0xff] %v5868
    %5877 = vst [vmem:[#allocation2 + $0x128] sm:$0xff] %v5869
    %5878 = vst [vmem:[#allocation2 + $0x130] sm:$0xff] %v5870
    %5879 = vst [vmem:[#allocation2 + $0x138] sm:$0xff] %v5871
    %5880 = vrot.lane.b32.xlu0 %v5374, 127
    %v5881 = vpop.permute.xlu0 %5880
    %5882 = vrot.lane.b32.xlu0 %v5375, 127
    %v5883 = vpop.permute.xlu0 %5882
    %5884 = vrot.lane.b32.xlu0 %v5376, 127
    %v5885 = vpop.permute.xlu0 %5884
    %5886 = vrot.lane.b32.xlu0 %v5352, 127
    %v5887 = vpop.permute.xlu0 %5886
    %5888 = vrot.lane.b32.xlu0 %v5377, 127
    %v5889 = vpop.permute.xlu0 %5888
    %5890 = vrot.lane.b32.xlu0 %v5378, 127
    %v5891 = vpop.permute.xlu0 %5890
    %5892 = vrot.lane.b32.xlu0 %v5379, 127
    %v5893 = vpop.permute.xlu0 %5892
    %5894 = vrot.lane.b32.xlu0 %v5353, 127
    %v5895 = vpop.permute.xlu0 %5894
    %v5896 = vsel %vm727, %v5881, %v5883
    %v5897 = vsel %vm727, %v5883, %v5885
    %v5898 = vsel %vm727, %v5885, %v5887
    %v5899 = vsel %vm727, %v5889, %v5891
    %v5900 = vsel %vm727, %v5891, %v5893
    %v5901 = vsel %vm727, %v5893, %v5895
    %v5910 = vsel %vm740, %v5887, %v5881
    %v5914 = vsel %vm740, %v5895, %v5889
    %v5916 = vld [vmem:[#allocation3 + $0x140] sm:$0xff]
    %v5917 = vld [vmem:[#allocation3 + $0x148] sm:$0xff]
    %v5918 = vld [vmem:[#allocation3 + $0x150] sm:$0xff]
    %v5919 = vld [vmem:[#allocation3 + $0x158] sm:$0xff]
    %v5920 = vld [vmem:[#allocation3 + $0x160] sm:$0xff]
    %v5921 = vld [vmem:[#allocation3 + $0x168] sm:$0xff]
    %v5922 = vld [vmem:[#allocation3 + $0x170] sm:$0xff]
    %v5923 = vld [vmem:[#allocation3 + $0x178] sm:$0xff]
    %v5924 = vunpack.c.l.bf16 %v5896
    %v5925 = vunpack.c.l.bf16 %v5897
    %v5926 = vunpack.c.l.bf16 %v5898
    %v5927 = vunpack.c.l.bf16 %v5910
    %v5928 = vunpack.c.h.bf16 %v5896
    %v5929 = vunpack.c.h.bf16 %v5897
    %v5930 = vunpack.c.h.bf16 %v5898
    %v5931 = vunpack.c.h.bf16 %v5910
    %v5932 = vunpack.c.l.bf16 %v5899
    %v5933 = vunpack.c.l.bf16 %v5900
    %v5934 = vunpack.c.l.bf16 %v5901
    %v5935 = vunpack.c.l.bf16 %v5914
    %v5936 = vunpack.c.h.bf16 %v5899
    %v5937 = vunpack.c.h.bf16 %v5900
    %v5938 = vunpack.c.h.bf16 %v5901
    %v5939 = vunpack.c.h.bf16 %v5914
    %v5940 = vunpack.c.l.bf16 %v5916
    %v5941 = vunpack.c.h.bf16 %v5916
    %v5942 = vunpack.c.l.bf16 %v5917
    %v5943 = vunpack.c.h.bf16 %v5917
    %v5944 = vunpack.c.l.bf16 %v5918
    %v5945 = vunpack.c.h.bf16 %v5918
    %v5946 = vunpack.c.l.bf16 %v5919
    %v5947 = vunpack.c.h.bf16 %v5919
    %v5948 = vunpack.c.l.bf16 %v5920
    %v5949 = vunpack.c.h.bf16 %v5920
    %v5950 = vunpack.c.l.bf16 %v5921
    %v5951 = vunpack.c.h.bf16 %v5921
    %v5952 = vunpack.c.l.bf16 %v5922
    %v5953 = vunpack.c.h.bf16 %v5922
    %v5954 = vunpack.c.l.bf16 %v5923
    %v5955 = vunpack.c.h.bf16 %v5923
    %v5956 = vmul.f32 %v5924, %v5940
    %v5957 = vmul.f32 %v5925, %v5941
    %v5958 = vmul.f32 %v5926, %v5942
    %v5959 = vmul.f32 %v5927, %v5943
    %v5960 = vmul.f32 %v5928, %v5944
    %v5961 = vmul.f32 %v5929, %v5945
    %v5962 = vmul.f32 %v5930, %v5946
    %v5963 = vmul.f32 %v5931, %v5947
    %v5964 = vmul.f32 %v5932, %v5948
    %v5965 = vmul.f32 %v5933, %v5949
    %v5966 = vmul.f32 %v5934, %v5950
    %v5967 = vmul.f32 %v5935, %v5951
    %v5968 = vmul.f32 %v5936, %v5952
    %v5969 = vmul.f32 %v5937, %v5953
    %v5970 = vmul.f32 %v5938, %v5954
    %v5971 = vmul.f32 %v5939, %v5955
    %v5972 = vpack.c.bf16 %v5957, %v5956
    %v5973 = vpack.c.bf16 %v5959, %v5958
    %v5974 = vpack.c.bf16 %v5961, %v5960
    %v5975 = vpack.c.bf16 %v5963, %v5962
    %v5976 = vpack.c.bf16 %v5965, %v5964
    %v5977 = vpack.c.bf16 %v5967, %v5966
    %v5978 = vpack.c.bf16 %v5969, %v5968
    %v5979 = vpack.c.bf16 %v5971, %v5970
    %5980 = vst [vmem:[#allocation2 + $0x140] sm:$0xff] %v5972
    %5981 = vst [vmem:[#allocation2 + $0x148] sm:$0xff] %v5973
    %5982 = vst [vmem:[#allocation2 + $0x150] sm:$0xff] %v5974
    %5983 = vst [vmem:[#allocation2 + $0x158] sm:$0xff] %v5975
    %5984 = vst [vmem:[#allocation2 + $0x160] sm:$0xff] %v5976
    %5985 = vst [vmem:[#allocation2 + $0x168] sm:$0xff] %v5977
    %5986 = vst [vmem:[#allocation2 + $0x170] sm:$0xff] %v5978
    %5987 = vst [vmem:[#allocation2 + $0x178] sm:$0xff] %v5979
    %5988 = vrot.lane.b32.xlu0 %v5374, 113
    %v5989 = vpop.permute.xlu0 %5988
    %5990 = vrot.lane.b32.xlu0 %v5375, 113
    %v5991 = vpop.permute.xlu0 %5990
    %5992 = vrot.lane.b32.xlu0 %v5376, 113
    %v5993 = vpop.permute.xlu0 %5992
    %5994 = vrot.lane.b32.xlu0 %v5352, 113
    %v5995 = vpop.permute.xlu0 %5994
    %5996 = vrot.lane.b32.xlu0 %v5377, 113
    %v5997 = vpop.permute.xlu0 %5996
    %5998 = vrot.lane.b32.xlu0 %v5378, 113
    %v5999 = vpop.permute.xlu0 %5998
    %6000 = vrot.lane.b32.xlu0 %v5379, 113
    %v6001 = vpop.permute.xlu0 %6000
    %6002 = vrot.lane.b32.xlu0 %v5353, 113
    %v6003 = vpop.permute.xlu0 %6002
    %v6004 = vsel %vm837, %v5989, %v5991
    %v6005 = vsel %vm837, %v5991, %v5993
    %v6006 = vsel %vm837, %v5993, %v5995
    %v6007 = vsel %vm837, %v5997, %v5999
    %v6008 = vsel %vm837, %v5999, %v6001
    %v6009 = vsel %vm837, %v6001, %v6003
    %v6018 = vsel %vm850, %v5995, %v5989
    %v6022 = vsel %vm850, %v6003, %v5997
    %v6024 = vld [vmem:[#allocation3 + $0x180] sm:$0xff]
    %v6025 = vld [vmem:[#allocation3 + $0x188] sm:$0xff]
    %v6026 = vld [vmem:[#allocation3 + $0x190] sm:$0xff]
    %v6027 = vld [vmem:[#allocation3 + $0x198] sm:$0xff]
    %v6028 = vld [vmem:[#allocation3 + $0x1a0] sm:$0xff]
    %v6029 = vld [vmem:[#allocation3 + $0x1a8] sm:$0xff]
    %v6030 = vld [vmem:[#allocation3 + $0x1b0] sm:$0xff]
    %v6031 = vld [vmem:[#allocation3 + $0x1b8] sm:$0xff]
    %v6032 = vunpack.c.l.bf16 %v6004
    %v6033 = vunpack.c.l.bf16 %v6005
    %v6034 = vunpack.c.l.bf16 %v6006
    %v6035 = vunpack.c.l.bf16 %v6018
    %v6036 = vunpack.c.h.bf16 %v6004
    %v6037 = vunpack.c.h.bf16 %v6005
    %v6038 = vunpack.c.h.bf16 %v6006
    %v6039 = vunpack.c.h.bf16 %v6018
    %v6040 = vunpack.c.l.bf16 %v6007
    %v6041 = vunpack.c.l.bf16 %v6008
    %v6042 = vunpack.c.l.bf16 %v6009
    %v6043 = vunpack.c.l.bf16 %v6022
    %v6044 = vunpack.c.h.bf16 %v6007
    %v6045 = vunpack.c.h.bf16 %v6008
    %v6046 = vunpack.c.h.bf16 %v6009
    %v6047 = vunpack.c.h.bf16 %v6022
    %v6048 = vunpack.c.l.bf16 %v6024
    %v6049 = vunpack.c.h.bf16 %v6024
    %v6050 = vunpack.c.l.bf16 %v6025
    %v6051 = vunpack.c.h.bf16 %v6025
    %v6052 = vunpack.c.l.bf16 %v6026
    %v6053 = vunpack.c.h.bf16 %v6026
    %v6054 = vunpack.c.l.bf16 %v6027
    %v6055 = vunpack.c.h.bf16 %v6027
    %v6056 = vunpack.c.l.bf16 %v6028
    %v6057 = vunpack.c.h.bf16 %v6028
    %v6058 = vunpack.c.l.bf16 %v6029
    %v6059 = vunpack.c.h.bf16 %v6029
    %v6060 = vunpack.c.l.bf16 %v6030
    %v6061 = vunpack.c.h.bf16 %v6030
    %v6062 = vunpack.c.l.bf16 %v6031
    %v6063 = vunpack.c.h.bf16 %v6031
    %v6064 = vmul.f32 %v6032, %v6048
    %v6065 = vmul.f32 %v6033, %v6049
    %v6066 = vmul.f32 %v6034, %v6050
    %v6067 = vmul.f32 %v6035, %v6051
    %v6068 = vmul.f32 %v6036, %v6052
    %v6069 = vmul.f32 %v6037, %v6053
    %v6070 = vmul.f32 %v6038, %v6054
    %v6071 = vmul.f32 %v6039, %v6055
    %v6072 = vmul.f32 %v6040, %v6056
    %v6073 = vmul.f32 %v6041, %v6057
    %v6074 = vmul.f32 %v6042, %v6058
    %v6075 = vmul.f32 %v6043, %v6059
    %v6076 = vmul.f32 %v6044, %v6060
    %v6077 = vmul.f32 %v6045, %v6061
    %v6078 = vmul.f32 %v6046, %v6062
    %v6079 = vmul.f32 %v6047, %v6063
    %v6080 = vpack.c.bf16 %v6065, %v6064
    %v6081 = vpack.c.bf16 %v6067, %v6066
    %v6082 = vpack.c.bf16 %v6069, %v6068
    %v6083 = vpack.c.bf16 %v6071, %v6070
    %v6084 = vpack.c.bf16 %v6073, %v6072
    %v6085 = vpack.c.bf16 %v6075, %v6074
    %v6086 = vpack.c.bf16 %v6077, %v6076
    %v6087 = vpack.c.bf16 %v6079, %v6078
    %6088 = vst [vmem:[#allocation2 + $0x180] sm:$0xff] %v6080
    %6089 = vst [vmem:[#allocation2 + $0x188] sm:$0xff] %v6081
    %6090 = vst [vmem:[#allocation2 + $0x190] sm:$0xff] %v6082
    %6091 = vst [vmem:[#allocation2 + $0x198] sm:$0xff] %v6083
    %6092 = vst [vmem:[#allocation2 + $0x1a0] sm:$0xff] %v6084
    %6093 = vst [vmem:[#allocation2 + $0x1a8] sm:$0xff] %v6085
    %6094 = vst [vmem:[#allocation2 + $0x1b0] sm:$0xff] %v6086
    %6095 = vst [vmem:[#allocation2 + $0x1b8] sm:$0xff] %v6087
    %6096 = vrot.lane.b32.xlu0 %v5374, 112
    %v6097 = vpop.permute.xlu0 %6096
    %6098 = vrot.lane.b32.xlu0 %v5375, 112
    %v6099 = vpop.permute.xlu0 %6098
    %6100 = vrot.lane.b32.xlu0 %v5376, 112
    %v6101 = vpop.permute.xlu0 %6100
    %6102 = vrot.lane.b32.xlu0 %v5352, 112
    %v6103 = vpop.permute.xlu0 %6102
    %6104 = vrot.lane.b32.xlu0 %v5377, 112
    %v6105 = vpop.permute.xlu0 %6104
    %6106 = vrot.lane.b32.xlu0 %v5378, 112
    %v6107 = vpop.permute.xlu0 %6106
    %6108 = vrot.lane.b32.xlu0 %v5379, 112
    %v6109 = vpop.permute.xlu0 %6108
    %6110 = vrot.lane.b32.xlu0 %v5353, 112
    %v6111 = vpop.permute.xlu0 %6110
    %v6112 = vsel %vm947, %v6097, %v6099
    %v6113 = vsel %vm947, %v6099, %v6101
    %v6114 = vsel %vm947, %v6101, %v6103
    %v6115 = vsel %vm947, %v6105, %v6107
    %v6116 = vsel %vm947, %v6107, %v6109
    %v6117 = vsel %vm947, %v6109, %v6111
    %v6126 = vsel %vm960, %v6103, %v6097
    %v6130 = vsel %vm960, %v6111, %v6105
    %v6132 = vld [vmem:[#allocation3 + $0x1c0] sm:$0xff]
    %v6133 = vld [vmem:[#allocation3 + $0x1c8] sm:$0xff]
    %v6134 = vld [vmem:[#allocation3 + $0x1d0] sm:$0xff]
    %v6135 = vld [vmem:[#allocation3 + $0x1d8] sm:$0xff]
    %v6136 = vld [vmem:[#allocation3 + $0x1e0] sm:$0xff]
    %v6137 = vld [vmem:[#allocation3 + $0x1e8] sm:$0xff]
    %v6138 = vld [vmem:[#allocation3 + $0x1f0] sm:$0xff]
    %v6139 = vld [vmem:[#allocation3 + $0x1f8] sm:$0xff]
    %v6140 = vunpack.c.l.bf16 %v6112
    %v6141 = vunpack.c.l.bf16 %v6113
    %v6142 = vunpack.c.l.bf16 %v6114
    %v6143 = vunpack.c.l.bf16 %v6126
    %v6144 = vunpack.c.h.bf16 %v6112
    %v6145 = vunpack.c.h.bf16 %v6113
    %v6146 = vunpack.c.h.bf16 %v6114
    %v6147 = vunpack.c.h.bf16 %v6126
    %v6148 = vunpack.c.l.bf16 %v6115
    %v6149 = vunpack.c.l.bf16 %v6116
    %v6150 = vunpack.c.l.bf16 %v6117
    %v6151 = vunpack.c.l.bf16 %v6130
    %v6152 = vunpack.c.h.bf16 %v6115
    %v6153 = vunpack.c.h.bf16 %v6116
    %v6154 = vunpack.c.h.bf16 %v6117
    %v6155 = vunpack.c.h.bf16 %v6130
    %v6156 = vunpack.c.l.bf16 %v6132
    %v6157 = vunpack.c.h.bf16 %v6132
    %v6158 = vunpack.c.l.bf16 %v6133
    %v6159 = vunpack.c.h.bf16 %v6133
    %v6160 = vunpack.c.l.bf16 %v6134
    %v6161 = vunpack.c.h.bf16 %v6134
    %v6162 = vunpack.c.l.bf16 %v6135
    %v6163 = vunpack.c.h.bf16 %v6135
    %v6164 = vunpack.c.l.bf16 %v6136
    %v6165 = vunpack.c.h.bf16 %v6136
    %v6166 = vunpack.c.l.bf16 %v6137
    %v6167 = vunpack.c.h.bf16 %v6137
    %v6168 = vunpack.c.l.bf16 %v6138
    %v6169 = vunpack.c.h.bf16 %v6138
    %v6170 = vunpack.c.l.bf16 %v6139
    %v6171 = vunpack.c.h.bf16 %v6139
    %v6172 = vmul.f32 %v6140, %v6156
    %v6173 = vmul.f32 %v6141, %v6157
    %v6174 = vmul.f32 %v6142, %v6158
    %v6175 = vmul.f32 %v6143, %v6159
    %v6176 = vmul.f32 %v6144, %v6160
    %v6177 = vmul.f32 %v6145, %v6161
    %v6178 = vmul.f32 %v6146, %v6162
    %v6179 = vmul.f32 %v6147, %v6163
    %v6180 = vmul.f32 %v6148, %v6164
    %v6181 = vmul.f32 %v6149, %v6165
    %v6182 = vmul.f32 %v6150, %v6166
    %v6183 = vmul.f32 %v6151, %v6167
    %v6184 = vmul.f32 %v6152, %v6168
    %v6185 = vmul.f32 %v6153, %v6169
    %v6186 = vmul.f32 %v6154, %v6170
    %v6187 = vmul.f32 %v6155, %v6171
    %v6188 = vpack.c.bf16 %v6173, %v6172
    %v6189 = vpack.c.bf16 %v6175, %v6174
    %v6190 = vpack.c.bf16 %v6177, %v6176
    %v6191 = vpack.c.bf16 %v6179, %v6178
    %v6192 = vpack.c.bf16 %v6181, %v6180
    %v6193 = vpack.c.bf16 %v6183, %v6182
    %v6194 = vpack.c.bf16 %v6185, %v6184
    %v6195 = vpack.c.bf16 %v6187, %v6186
    %6196 = vst [vmem:[#allocation2 + $0x1c0] sm:$0xff] %v6188
    %6197 = vst [vmem:[#allocation2 + $0x1c8] sm:$0xff] %v6189
    %6198 = vst [vmem:[#allocation2 + $0x1d0] sm:$0xff] %v6190
    %6199 = vst [vmem:[#allocation2 + $0x1d8] sm:$0xff] %v6191
    %6200 = vst [vmem:[#allocation2 + $0x1e0] sm:$0xff] %v6192
    %6201 = vst [vmem:[#allocation2 + $0x1e8] sm:$0xff] %v6193
    %6202 = vst [vmem:[#allocation2 + $0x1f0] sm:$0xff] %v6194
    %6203 = vst [vmem:[#allocation2 + $0x1f8] sm:$0xff] %v6195
    %6204 = vrot.lane.b32.xlu0 %v5374, 111
    %v6205 = vpop.permute.xlu0 %6204
    %6206 = vrot.lane.b32.xlu0 %v5375, 111
    %v6207 = vpop.permute.xlu0 %6206
    %6208 = vrot.lane.b32.xlu0 %v5376, 111
    %v6209 = vpop.permute.xlu0 %6208
    %6210 = vrot.lane.b32.xlu0 %v5352, 111
    %v6211 = vpop.permute.xlu0 %6210
    %6212 = vrot.lane.b32.xlu0 %v5377, 111
    %v6213 = vpop.permute.xlu0 %6212
    %6214 = vrot.lane.b32.xlu0 %v5378, 111
    %v6215 = vpop.permute.xlu0 %6214
    %6216 = vrot.lane.b32.xlu0 %v5379, 111
    %v6217 = vpop.permute.xlu0 %6216
    %6218 = vrot.lane.b32.xlu0 %v5353, 111
    %v6219 = vpop.permute.xlu0 %6218
    %v6220 = vsel %vm1057, %v6205, %v6207
    %v6221 = vsel %vm1057, %v6207, %v6209
    %v6222 = vsel %vm1057, %v6209, %v6211
    %v6223 = vsel %vm1057, %v6213, %v6215
    %v6224 = vsel %vm1057, %v6215, %v6217
    %v6225 = vsel %vm1057, %v6217, %v6219
    %v6234 = vsel %vm1070, %v6211, %v6205
    %v6238 = vsel %vm1070, %v6219, %v6213
    %v6240 = vld [vmem:[#allocation3 + $0x200] sm:$0xff]
    %v6241 = vld [vmem:[#allocation3 + $0x208] sm:$0xff]
    %v6242 = vld [vmem:[#allocation3 + $0x210] sm:$0xff]
    %v6243 = vld [vmem:[#allocation3 + $0x218] sm:$0xff]
    %v6244 = vld [vmem:[#allocation3 + $0x220] sm:$0xff]
    %v6245 = vld [vmem:[#allocation3 + $0x228] sm:$0xff]
    %v6246 = vld [vmem:[#allocation3 + $0x230] sm:$0xff]
    %v6247 = vld [vmem:[#allocation3 + $0x238] sm:$0xff]
    %v6248 = vunpack.c.l.bf16 %v6220
    %v6249 = vunpack.c.l.bf16 %v6221
    %v6250 = vunpack.c.l.bf16 %v6222
    %v6251 = vunpack.c.l.bf16 %v6234
    %v6252 = vunpack.c.h.bf16 %v6220
    %v6253 = vunpack.c.h.bf16 %v6221
    %v6254 = vunpack.c.h.bf16 %v6222
    %v6255 = vunpack.c.h.bf16 %v6234
    %v6256 = vunpack.c.l.bf16 %v6223
    %v6257 = vunpack.c.l.bf16 %v6224
    %v6258 = vunpack.c.l.bf16 %v6225
    %v6259 = vunpack.c.l.bf16 %v6238
    %v6260 = vunpack.c.h.bf16 %v6223
    %v6261 = vunpack.c.h.bf16 %v6224
    %v6262 = vunpack.c.h.bf16 %v6225
    %v6263 = vunpack.c.h.bf16 %v6238
    %v6264 = vunpack.c.l.bf16 %v6240
    %v6265 = vunpack.c.h.bf16 %v6240
    %v6266 = vunpack.c.l.bf16 %v6241
    %v6267 = vunpack.c.h.bf16 %v6241
    %v6268 = vunpack.c.l.bf16 %v6242
    %v6269 = vunpack.c.h.bf16 %v6242
    %v6270 = vunpack.c.l.bf16 %v6243
    %v6271 = vunpack.c.h.bf16 %v6243
    %v6272 = vunpack.c.l.bf16 %v6244
    %v6273 = vunpack.c.h.bf16 %v6244
    %v6274 = vunpack.c.l.bf16 %v6245
    %v6275 = vunpack.c.h.bf16 %v6245
    %v6276 = vunpack.c.l.bf16 %v6246
    %v6277 = vunpack.c.h.bf16 %v6246
    %v6278 = vunpack.c.l.bf16 %v6247
    %v6279 = vunpack.c.h.bf16 %v6247
    %v6280 = vmul.f32 %v6248, %v6264
    %v6281 = vmul.f32 %v6249, %v6265
    %v6282 = vmul.f32 %v6250, %v6266
    %v6283 = vmul.f32 %v6251, %v6267
    %v6284 = vmul.f32 %v6252, %v6268
    %v6285 = vmul.f32 %v6253, %v6269
    %v6286 = vmul.f32 %v6254, %v6270
    %v6287 = vmul.f32 %v6255, %v6271
    %v6288 = vmul.f32 %v6256, %v6272
    %v6289 = vmul.f32 %v6257, %v6273
    %v6290 = vmul.f32 %v6258, %v6274
    %v6291 = vmul.f32 %v6259, %v6275
    %v6292 = vmul.f32 %v6260, %v6276
    %v6293 = vmul.f32 %v6261, %v6277
    %v6294 = vmul.f32 %v6262, %v6278
    %v6295 = vmul.f32 %v6263, %v6279
    %v6296 = vpack.c.bf16 %v6281, %v6280
    %v6297 = vpack.c.bf16 %v6283, %v6282
    %v6298 = vpack.c.bf16 %v6285, %v6284
    %v6299 = vpack.c.bf16 %v6287, %v6286
    %v6300 = vpack.c.bf16 %v6289, %v6288
    %v6301 = vpack.c.bf16 %v6291, %v6290
    %v6302 = vpack.c.bf16 %v6293, %v6292
    %v6303 = vpack.c.bf16 %v6295, %v6294
    %6304 = vst [vmem:[#allocation2 + $0x200] sm:$0xff] %v6296
    %6305 = vst [vmem:[#allocation2 + $0x208] sm:$0xff] %v6297
    %6306 = vst [vmem:[#allocation2 + $0x210] sm:$0xff] %v6298
    %6307 = vst [vmem:[#allocation2 + $0x218] sm:$0xff] %v6299
    %6308 = vst [vmem:[#allocation2 + $0x220] sm:$0xff] %v6300
    %6309 = vst [vmem:[#allocation2 + $0x228] sm:$0xff] %v6301
    %6310 = vst [vmem:[#allocation2 + $0x230] sm:$0xff] %v6302
    %6311 = vst [vmem:[#allocation2 + $0x238] sm:$0xff] %v6303
    %v6312 = vld [vmem:[#allocation9] sm:$0xff]
    %v6313 = vld [vmem:[#allocation9 + $0x8] sm:$0xf]
    %v6314 = vld [vmem:[#allocation9 + $0xc] sm:$0xff]
    %v6315 = vld [vmem:[#allocation9 + $0x14] sm:$0xf]
    %v6316 = vld [vmem:[#allocation9 + $0x18] sm:$0xff]
    %v6317 = vld [vmem:[#allocation9 + $0x20] sm:$0xf]
    %v6318 = vld [vmem:[#allocation9 + $0x24] sm:$0xff]
    %v6319 = vld [vmem:[#allocation9 + $0x2c] sm:$0xf]
    %v6320 = vld [vmem:[#allocation2] sm:$0xff]
    %v6321 = vld [vmem:[#allocation2 + $0x8] sm:$0xff]
    %v6322 = vld [vmem:[#allocation2 + $0x10] sm:$0xff]
    %v6323 = vld [vmem:[#allocation2 + $0x18] sm:$0xff]
    %v6324 = vld [vmem:[#allocation2 + $0x20] sm:$0xff]
    %v6325 = vld [vmem:[#allocation2 + $0x28] sm:$0xff]
    %v6326 = vld [vmem:[#allocation2 + $0x30] sm:$0xff]
    %v6327 = vld [vmem:[#allocation2 + $0x38] sm:$0xff]
    %v6328 = vld [vmem:[#allocation2 + $0x40] sm:$0xff]
    %v6329 = vld [vmem:[#allocation2 + $0x48] sm:$0xff]
    %v6330 = vld [vmem:[#allocation2 + $0x50] sm:$0xff]
    %v6331 = vld [vmem:[#allocation2 + $0x58] sm:$0xff]
    %v6332 = vld [vmem:[#allocation2 + $0x60] sm:$0xff]
    %v6333 = vld [vmem:[#allocation2 + $0x68] sm:$0xff]
    %v6334 = vld [vmem:[#allocation2 + $0x70] sm:$0xff]
    %v6335 = vld [vmem:[#allocation2 + $0x78] sm:$0xff]
    %v6336 = vld [vmem:[#allocation2 + $0x80] sm:$0xff]
    %v6337 = vld [vmem:[#allocation2 + $0x88] sm:$0xff]
    %v6338 = vld [vmem:[#allocation2 + $0x90] sm:$0xff]
    %v6339 = vld [vmem:[#allocation2 + $0x98] sm:$0xff]
    %v6340 = vld [vmem:[#allocation2 + $0xa0] sm:$0xff]
    %v6341 = vld [vmem:[#allocation2 + $0xa8] sm:$0xff]
    %v6342 = vld [vmem:[#allocation2 + $0xb0] sm:$0xff]
    %v6343 = vld [vmem:[#allocation2 + $0xb8] sm:$0xff]
    %v6344 = vld [vmem:[#allocation2 + $0xc0] sm:$0xff]
    %v6345 = vld [vmem:[#allocation2 + $0xc8] sm:$0xff]
    %v6346 = vld [vmem:[#allocation2 + $0xd0] sm:$0xff]
    %v6347 = vld [vmem:[#allocation2 + $0xd8] sm:$0xff]
    %v6348 = vld [vmem:[#allocation2 + $0xe0] sm:$0xff]
    %v6349 = vld [vmem:[#allocation2 + $0xe8] sm:$0xff]
    %v6350 = vld [vmem:[#allocation2 + $0xf0] sm:$0xff]
    %v6351 = vld [vmem:[#allocation2 + $0xf8] sm:$0xff]
    %v6352 = vld [vmem:[#allocation2 + $0x100] sm:$0xff]
    %v6353 = vld [vmem:[#allocation2 + $0x108] sm:$0xff]
    %v6354 = vld [vmem:[#allocation2 + $0x110] sm:$0xff]
    %v6355 = vld [vmem:[#allocation2 + $0x118] sm:$0xff]
    %v6356 = vld [vmem:[#allocation2 + $0x120] sm:$0xff]
    %v6357 = vld [vmem:[#allocation2 + $0x128] sm:$0xff]
    %v6358 = vld [vmem:[#allocation2 + $0x130] sm:$0xff]
    %v6359 = vld [vmem:[#allocation2 + $0x138] sm:$0xff]
    %v6360 = vld [vmem:[#allocation2 + $0x140] sm:$0xff]
    %v6361 = vld [vmem:[#allocation2 + $0x148] sm:$0xff]
    %v6362 = vld [vmem:[#allocation2 + $0x150] sm:$0xff]
    %v6363 = vld [vmem:[#allocation2 + $0x158] sm:$0xff]
    %v6364 = vld [vmem:[#allocation2 + $0x160] sm:$0xff]
    %v6365 = vld [vmem:[#allocation2 + $0x168] sm:$0xff]
    %v6366 = vld [vmem:[#allocation2 + $0x170] sm:$0xff]
    %v6367 = vld [vmem:[#allocation2 + $0x178] sm:$0xff]
    %v6368 = vld [vmem:[#allocation2 + $0x180] sm:$0xff]
    %v6369 = vld [vmem:[#allocation2 + $0x188] sm:$0xff]
    %v6370 = vld [vmem:[#allocation2 + $0x190] sm:$0xff]
    %v6371 = vld [vmem:[#allocation2 + $0x198] sm:$0xff]
    %v6372 = vld [vmem:[#allocation2 + $0x1a0] sm:$0xff]
    %v6373 = vld [vmem:[#allocation2 + $0x1a8] sm:$0xff]
    %v6374 = vld [vmem:[#allocation2 + $0x1b0] sm:$0xff]
    %v6375 = vld [vmem:[#allocation2 + $0x1b8] sm:$0xff]
    %v6376 = vld [vmem:[#allocation2 + $0x1c0] sm:$0xff]
    %v6377 = vld [vmem:[#allocation2 + $0x1c8] sm:$0xff]
    %v6378 = vld [vmem:[#allocation2 + $0x1d0] sm:$0xff]
    %v6379 = vld [vmem:[#allocation2 + $0x1d8] sm:$0xff]
    %v6380 = vld [vmem:[#allocation2 + $0x1e0] sm:$0xff]
    %v6381 = vld [vmem:[#allocation2 + $0x1e8] sm:$0xff]
    %v6382 = vld [vmem:[#allocation2 + $0x1f0] sm:$0xff]
    %v6383 = vld [vmem:[#allocation2 + $0x1f8] sm:$0xff]
    %v6384 = vld [vmem:[#allocation2 + $0x200] sm:$0xff]
    %v6385 = vld [vmem:[#allocation2 + $0x208] sm:$0xff]
    %v6386 = vld [vmem:[#allocation2 + $0x210] sm:$0xff]
    %v6387 = vld [vmem:[#allocation2 + $0x218] sm:$0xff]
    %v6388 = vld [vmem:[#allocation2 + $0x220] sm:$0xff]
    %v6389 = vld [vmem:[#allocation2 + $0x228] sm:$0xff]
    %v6390 = vld [vmem:[#allocation2 + $0x230] sm:$0xff]
    %v6391 = vld [vmem:[#allocation2 + $0x238] sm:$0xff]
    %v6392 = vld [vmem:[%s9] sm:$0xff]
    %v6393 = vld [vmem:[%s9 + $0x8] sm:$0xff]
    %v6394 = vld [vmem:[%s9 + $0x10] sm:$0xff]
    %v6395 = vld [vmem:[%s9 + $0x18] sm:$0xff]
    %6397 = vset.pattern.permute.xlu0 0
    %6398 = vperm.xlu0 %6397, %v6392
    %v6399 = vpop.permute.xlu0 %6398
    %6402 = vset.pattern.permute.xlu0 0
    %6403 = vperm.xlu0 %6402, %v6393
    %v6404 = vpop.permute.xlu0 %6403
    %6407 = vset.pattern.permute.xlu0 0
    %6408 = vperm.xlu0 %6407, %v6394
    %v6409 = vpop.permute.xlu0 %6408
    %6412 = vset.pattern.permute.xlu0 0
    %6413 = vperm.xlu0 %6412, %v6395
    %v6414 = vpop.permute.xlu0 %6413
    %v6424 = vunpack.c.l.b16 %v6312
    %v6425 = vunpack.c.h.b16 %v6312
    %v6426 = vunpack.c.l.b16 %v6313
    %v6427 = vunpack.c.l.b16 %v6314
    %v6428 = vunpack.c.h.b16 %v6314
    %v6429 = vunpack.c.l.b16 %v6315
    %v6430 = vunpack.c.l.b16 %v6316
    %v6431 = vunpack.c.h.b16 %v6316
    %v6432 = vunpack.c.l.b16 %v6317
    %v6433 = vunpack.c.l.b16 %v6318
    %v6434 = vunpack.c.h.b16 %v6318
    %v6435 = vunpack.c.l.b16 %v6319
    %v6436 = vpack.c.b16 %v6427, %v6424
    %v6437 = vpack.c.b16 %v6428, %v6425
    %v6438 = vpack.c.b16 %v6429, %v6426
    %v6439 = vpack.c.b16 %v6433, %v6430
    %v6440 = vpack.c.b16 %v6434, %v6431
    %v6441 = vpack.c.b16 %v6435, %v6432
    %v6518 = vunpack.c.l.b16 %v6320
    %v6519 = vunpack.c.h.b16 %v6320
    %v6520 = vunpack.c.l.b16 %v6321
    %v6521 = vunpack.c.h.b16 %v6321
    %v6522 = vunpack.c.l.b16 %v6322
    %v6523 = vunpack.c.h.b16 %v6322
    %v6524 = vunpack.c.l.b16 %v6323
    %v6525 = vunpack.c.h.b16 %v6323
    %v6526 = vunpack.c.l.b16 %v6324
    %v6527 = vunpack.c.h.b16 %v6324
    %v6528 = vunpack.c.l.b16 %v6325
    %v6529 = vunpack.c.h.b16 %v6325
    %v6530 = vunpack.c.l.b16 %v6326
    %v6531 = vunpack.c.h.b16 %v6326
    %v6532 = vunpack.c.l.b16 %v6327
    %v6533 = vunpack.c.h.b16 %v6327
    %v6534 = vunpack.c.l.b16 %v6328
    %v6535 = vunpack.c.h.b16 %v6328
    %v6536 = vunpack.c.l.b16 %v6329
    %v6537 = vunpack.c.h.b16 %v6329
    %v6538 = vunpack.c.l.b16 %v6330
    %v6539 = vunpack.c.h.b16 %v6330
    %v6540 = vunpack.c.l.b16 %v6331
    %v6541 = vunpack.c.h.b16 %v6331
    %v6542 = vunpack.c.l.b16 %v6332
    %v6543 = vunpack.c.h.b16 %v6332
    %v6544 = vunpack.c.l.b16 %v6333
    %v6545 = vunpack.c.h.b16 %v6333
    %v6546 = vunpack.c.l.b16 %v6334
    %v6547 = vunpack.c.h.b16 %v6334
    %v6548 = vunpack.c.l.b16 %v6335
    %v6549 = vunpack.c.h.b16 %v6335
    %v6550 = vunpack.c.l.b16 %v6336
    %v6551 = vunpack.c.h.b16 %v6336
    %v6552 = vunpack.c.l.b16 %v6337
    %v6553 = vunpack.c.h.b16 %v6337
    %v6554 = vunpack.c.l.b16 %v6338
    %v6555 = vunpack.c.h.b16 %v6338
    %v6556 = vunpack.c.l.b16 %v6339
    %v6557 = vunpack.c.h.b16 %v6339
    %v6558 = vunpack.c.l.b16 %v6340
    %v6559 = vunpack.c.h.b16 %v6340
    %v6560 = vunpack.c.l.b16 %v6341
    %v6561 = vunpack.c.h.b16 %v6341
    %v6562 = vunpack.c.l.b16 %v6342
    %v6563 = vunpack.c.h.b16 %v6342
    %v6564 = vunpack.c.l.b16 %v6343
    %v6565 = vunpack.c.h.b16 %v6343
    %v6566 = vunpack.c.l.b16 %v6344
    %v6567 = vunpack.c.h.b16 %v6344
    %v6568 = vunpack.c.l.b16 %v6345
    %v6569 = vunpack.c.h.b16 %v6345
    %v6570 = vunpack.c.l.b16 %v6346
    %v6571 = vunpack.c.h.b16 %v6346
    %v6572 = vunpack.c.l.b16 %v6347
    %v6573 = vunpack.c.h.b16 %v6347
    %v6574 = vunpack.c.l.b16 %v6348
    %v6575 = vunpack.c.h.b16 %v6348
    %v6576 = vunpack.c.l.b16 %v6349
    %v6577 = vunpack.c.h.b16 %v6349
    %v6578 = vunpack.c.l.b16 %v6350
    %v6579 = vunpack.c.h.b16 %v6350
    %v6580 = vunpack.c.l.b16 %v6351
    %v6581 = vunpack.c.h.b16 %v6351
    %v6582 = vunpack.c.l.b16 %v6352
    %v6583 = vunpack.c.h.b16 %v6352
    %v6584 = vunpack.c.l.b16 %v6353
    %v6585 = vunpack.c.h.b16 %v6353
    %v6586 = vunpack.c.l.b16 %v6354
    %v6587 = vunpack.c.h.b16 %v6354
    %v6588 = vunpack.c.l.b16 %v6355
    %v6589 = vunpack.c.h.b16 %v6355
    %v6590 = vunpack.c.l.b16 %v6356
    %v6591 = vunpack.c.h.b16 %v6356
    %v6592 = vunpack.c.l.b16 %v6357
    %v6593 = vunpack.c.h.b16 %v6357
    %v6594 = vunpack.c.l.b16 %v6358
    %v6595 = vunpack.c.h.b16 %v6358
    %v6596 = vunpack.c.l.b16 %v6359
    %v6597 = vunpack.c.h.b16 %v6359
    %v6598 = vunpack.c.l.b16 %v6360
    %v6599 = vunpack.c.h.b16 %v6360
    %v6600 = vunpack.c.l.b16 %v6361
    %v6601 = vunpack.c.h.b16 %v6361
    %v6602 = vunpack.c.l.b16 %v6362
    %v6603 = vunpack.c.h.b16 %v6362
    %v6604 = vunpack.c.l.b16 %v6363
    %v6605 = vunpack.c.h.b16 %v6363
    %v6606 = vunpack.c.l.b16 %v6364
    %v6607 = vunpack.c.h.b16 %v6364
    %v6608 = vunpack.c.l.b16 %v6365
    %v6609 = vunpack.c.h.b16 %v6365
    %v6610 = vunpack.c.l.b16 %v6366
    %v6611 = vunpack.c.h.b16 %v6366
    %v6612 = vunpack.c.l.b16 %v6367
    %v6613 = vunpack.c.h.b16 %v6367
    %v6614 = vunpack.c.l.b16 %v6368
    %v6615 = vunpack.c.h.b16 %v6368
    %v6616 = vunpack.c.l.b16 %v6369
    %v6617 = vunpack.c.h.b16 %v6369
    %v6618 = vunpack.c.l.b16 %v6370
    %v6619 = vunpack.c.h.b16 %v6370
    %v6620 = vunpack.c.l.b16 %v6371
    %v6621 = vunpack.c.h.b16 %v6371
    %v6622 = vunpack.c.l.b16 %v6372
    %v6623 = vunpack.c.h.b16 %v6372
    %v6624 = vunpack.c.l.b16 %v6373
    %v6625 = vunpack.c.h.b16 %v6373
    %v6626 = vunpack.c.l.b16 %v6374
    %v6627 = vunpack.c.h.b16 %v6374
    %v6628 = vunpack.c.l.b16 %v6375
    %v6629 = vunpack.c.h.b16 %v6375
    %v6630 = vunpack.c.l.b16 %v6376
    %v6631 = vunpack.c.h.b16 %v6376
    %v6632 = vunpack.c.l.b16 %v6377
    %v6633 = vunpack.c.h.b16 %v6377
    %v6634 = vunpack.c.l.b16 %v6378
    %v6635 = vunpack.c.h.b16 %v6378
    %v6636 = vunpack.c.l.b16 %v6379
    %v6637 = vunpack.c.h.b16 %v6379
    %v6638 = vunpack.c.l.b16 %v6380
    %v6639 = vunpack.c.h.b16 %v6380
    %v6640 = vunpack.c.l.b16 %v6381
    %v6641 = vunpack.c.h.b16 %v6381
    %v6642 = vunpack.c.l.b16 %v6382
    %v6643 = vunpack.c.h.b16 %v6382
    %v6644 = vunpack.c.l.b16 %v6383
    %v6645 = vunpack.c.h.b16 %v6383
    %v6646 = vunpack.c.l.b16 %v6384
    %v6647 = vunpack.c.h.b16 %v6384
    %v6648 = vunpack.c.l.b16 %v6385
    %v6649 = vunpack.c.h.b16 %v6385
    %v6650 = vunpack.c.l.b16 %v6386
    %v6651 = vunpack.c.h.b16 %v6386
    %v6652 = vunpack.c.l.b16 %v6387
    %v6653 = vunpack.c.h.b16 %v6387
    %v6654 = vunpack.c.l.b16 %v6388
    %v6655 = vunpack.c.h.b16 %v6388
    %v6656 = vunpack.c.l.b16 %v6389
    %v6657 = vunpack.c.h.b16 %v6389
    %v6658 = vunpack.c.l.b16 %v6390
    %v6659 = vunpack.c.h.b16 %v6390
    %v6660 = vunpack.c.l.b16 %v6391
    %v6661 = vunpack.c.h.b16 %v6391
    %v6662 = vpack.c.b16 %v6522, %v6518
    %v6663 = vpack.c.b16 %v6523, %v6519
    %v6664 = vpack.c.b16 %v6524, %v6520
    %v6665 = vpack.c.b16 %v6525, %v6521
    %v6666 = vpack.c.b16 %v6530, %v6526
    %v6667 = vpack.c.b16 %v6531, %v6527
    %v6668 = vpack.c.b16 %v6532, %v6528
    %v6669 = vpack.c.b16 %v6533, %v6529
    %v6670 = vpack.c.b16 %v6538, %v6534
    %v6671 = vpack.c.b16 %v6539, %v6535
    %v6672 = vpack.c.b16 %v6540, %v6536
    %v6673 = vpack.c.b16 %v6541, %v6537
    %v6674 = vpack.c.b16 %v6546, %v6542
    %v6675 = vpack.c.b16 %v6547, %v6543
    %v6676 = vpack.c.b16 %v6548, %v6544
    %v6677 = vpack.c.b16 %v6549, %v6545
    %v6678 = vpack.c.b16 %v6554, %v6550
    %v6679 = vpack.c.b16 %v6555, %v6551
    %v6680 = vpack.c.b16 %v6556, %v6552
    %v6681 = vpack.c.b16 %v6557, %v6553
    %v6682 = vpack.c.b16 %v6562, %v6558
    %v6683 = vpack.c.b16 %v6563, %v6559
    %v6684 = vpack.c.b16 %v6564, %v6560
    %v6685 = vpack.c.b16 %v6565, %v6561
    %v6686 = vpack.c.b16 %v6570, %v6566
    %v6687 = vpack.c.b16 %v6571, %v6567
    %v6688 = vpack.c.b16 %v6572, %v6568
    %v6689 = vpack.c.b16 %v6573, %v6569
    %v6690 = vpack.c.b16 %v6578, %v6574
    %v6691 = vpack.c.b16 %v6579, %v6575
    %v6692 = vpack.c.b16 %v6580, %v6576
    %v6693 = vpack.c.b16 %v6581, %v6577
    %v6694 = vpack.c.b16 %v6586, %v6582
    %v6695 = vpack.c.b16 %v6587, %v6583
    %v6696 = vpack.c.b16 %v6588, %v6584
    %v6697 = vpack.c.b16 %v6589, %v6585
    %v6698 = vpack.c.b16 %v6594, %v6590
    %v6699 = vpack.c.b16 %v6595, %v6591
    %v6700 = vpack.c.b16 %v6596, %v6592
    %v6701 = vpack.c.b16 %v6597, %v6593
    %v6702 = vpack.c.b16 %v6602, %v6598
    %v6703 = vpack.c.b16 %v6603, %v6599
    %v6704 = vpack.c.b16 %v6604, %v6600
    %v6705 = vpack.c.b16 %v6605, %v6601
    %v6706 = vpack.c.b16 %v6610, %v6606
    %v6707 = vpack.c.b16 %v6611, %v6607
    %v6708 = vpack.c.b16 %v6612, %v6608
    %v6709 = vpack.c.b16 %v6613, %v6609
    %v6710 = vpack.c.b16 %v6618, %v6614
    %v6711 = vpack.c.b16 %v6619, %v6615
    %v6712 = vpack.c.b16 %v6620, %v6616
    %v6713 = vpack.c.b16 %v6621, %v6617
    %v6714 = vpack.c.b16 %v6626, %v6622
    %v6715 = vpack.c.b16 %v6627, %v6623
    %v6716 = vpack.c.b16 %v6628, %v6624
    %v6717 = vpack.c.b16 %v6629, %v6625
    %v6718 = vpack.c.b16 %v6634, %v6630
    %v6719 = vpack.c.b16 %v6635, %v6631
    %v6720 = vpack.c.b16 %v6636, %v6632
    %v6721 = vpack.c.b16 %v6637, %v6633
    %v6722 = vpack.c.b16 %v6642, %v6638
    %v6723 = vpack.c.b16 %v6643, %v6639
    %v6724 = vpack.c.b16 %v6644, %v6640
    %v6725 = vpack.c.b16 %v6645, %v6641
    %v6726 = vpack.c.b16 %v6650, %v6646
    %v6727 = vpack.c.b16 %v6651, %v6647
    %v6728 = vpack.c.b16 %v6652, %v6648
    %v6729 = vpack.c.b16 %v6653, %v6649
    %v6730 = vpack.c.b16 %v6658, %v6654
    %v6731 = vpack.c.b16 %v6659, %v6655
    %v6732 = vpack.c.b16 %v6660, %v6656
    %v6733 = vpack.c.b16 %v6661, %v6657
    %v6807 = vsel %vm1645, %v6438, 0
    %v6810 = vsel %vm1645, %v6441, 0
    %6812 = vmatpush.bf16.msra.mxu0 %v6690
    %6813 = vmatpush.bf16.msra.mxu0 %v6686
    %6814 = vmatpush.bf16.msra.mxu0 %v6682
    %6815 = vmatpush.bf16.msra.mxu0 %v6678
    %6816 = vmatpush.bf16.msra.mxu0 %v6674
    %6817 = vmatpush.bf16.msra.mxu0 %v6670
    %6818 = vmatpush.bf16.msra.mxu0 %v6666
    %6819 = vmatpush.bf16.msra.mxu0 %v6662
    %6820 = vmatmul.bf16.gmra.mxu0 %v6436
    %v6821 = vpop.f32.mrf.mxu0
    %v6822 = vadd.f32 %v6399, %v6821
    %v6823 = vpop.f32.mrf.mxu0
    %v6824 = vadd.f32 %v6404, %v6823
    %6825 = vmatmul.bf16.gmra.mxu0 %v6439
    %v6826 = vpop.f32.mrf.mxu0
    %v6827 = vadd.f32 %v6409, %v6826
    %v6828 = vpop.f32.mrf.mxu0
    %v6829 = vadd.f32 %v6414, %v6828
    %6830 = vdwg.mxu0
    %6831 = vmatpush.bf16.msra.mxu0 %v6722
    %6832 = vmatpush.bf16.msra.mxu0 %v6718
    %6833 = vmatpush.bf16.msra.mxu0 %v6714
    %6834 = vmatpush.bf16.msra.mxu0 %v6710
    %6835 = vmatpush.bf16.msra.mxu0 %v6706
    %6836 = vmatpush.bf16.msra.mxu0 %v6702
    %6837 = vmatpush.bf16.msra.mxu0 %v6698
    %6838 = vmatpush.bf16.msra.mxu0 %v6694
    %6839 = vmatmul.bf16.gmra.mxu0 %v6437
    %v6840 = vpop.f32.mrf.mxu0
    %v6841 = vadd.f32 %v6822, %v6840
    %v6842 = vpop.f32.mrf.mxu0
    %v6843 = vadd.f32 %v6824, %v6842
    %6844 = vmatmul.bf16.gmra.mxu0 %v6440
    %v6845 = vpop.f32.mrf.mxu0
    %v6846 = vadd.f32 %v6827, %v6845
    %v6847 = vpop.f32.mrf.mxu0
    %v6848 = vadd.f32 %v6829, %v6847
    %6849 = vdwg.mxu0
    %6850 = vmatpush.bf16.msra.mxu0 0
    %6851 = vmatpush.bf16.msra.mxu0 0
    %6852 = vmatpush.bf16.msra.mxu0 0
    %6853 = vmatpush.bf16.msra.mxu0 0
    %6854 = vmatpush.bf16.msra.mxu0 0
    %6855 = vmatpush.bf16.msra.mxu0 0
    %6856 = vmatpush.bf16.msra.mxu0 %v6730
    %6857 = vmatpush.bf16.msra.mxu0 %v6726
    %6858 = vmatmul.bf16.gmra.mxu0 %v6807
    %v6859 = vpop.f32.mrf.mxu0
    %v6860 = vadd.f32 %v6841, %v6859
    %v6861 = vpop.f32.mrf.mxu0
    %v6862 = vadd.f32 %v6843, %v6861
    %6863 = vmatmul.bf16.gmra.mxu0 %v6810
    %v6864 = vpop.f32.mrf.mxu0
    %v6865 = vadd.f32 %v6846, %v6864
    %v6866 = vpop.f32.mrf.mxu0
    %v6867 = vadd.f32 %v6848, %v6866
    %6868 = vdwg.mxu0
    %6869 = vmatpush.bf16.msra.mxu0 %v6691
    %6870 = vmatpush.bf16.msra.mxu0 %v6687
    %6871 = vmatpush.bf16.msra.mxu0 %v6683
    %6872 = vmatpush.bf16.msra.mxu0 %v6679
    %6873 = vmatpush.bf16.msra.mxu0 %v6675
    %6874 = vmatpush.bf16.msra.mxu0 %v6671
    %6875 = vmatpush.bf16.msra.mxu0 %v6667
    %6876 = vmatpush.bf16.msra.mxu0 %v6663
    %6877 = vmatmul.bf16.gmra.mxu0 %v6436
    %v6878 = vpop.f32.mrf.mxu0
    %v6879 = vadd.f32 %v6399, %v6878
    %v6880 = vpop.f32.mrf.mxu0
    %v6881 = vadd.f32 %v6404, %v6880
    %6882 = vmatmul.bf16.gmra.mxu0 %v6439
    %v6883 = vpop.f32.mrf.mxu0
    %v6884 = vadd.f32 %v6409, %v6883
    %v6885 = vpop.f32.mrf.mxu0
    %v6886 = vadd.f32 %v6414, %v6885
    %6887 = vdwg.mxu0
    %6888 = vmatpush.bf16.msra.mxu0 %v6723
    %6889 = vmatpush.bf16.msra.mxu0 %v6719
    %6890 = vmatpush.bf16.msra.mxu0 %v6715
    %6891 = vmatpush.bf16.msra.mxu0 %v6711
    %6892 = vmatpush.bf16.msra.mxu0 %v6707
    %6893 = vmatpush.bf16.msra.mxu0 %v6703
    %6894 = vmatpush.bf16.msra.mxu0 %v6699
    %6895 = vmatpush.bf16.msra.mxu0 %v6695
    %6896 = vmatmul.bf16.gmra.mxu0 %v6437
    %v6897 = vpop.f32.mrf.mxu0
    %v6898 = vadd.f32 %v6879, %v6897
    %v6899 = vpop.f32.mrf.mxu0
    %v6900 = vadd.f32 %v6881, %v6899
    %6901 = vmatmul.bf16.gmra.mxu0 %v6440
    %v6902 = vpop.f32.mrf.mxu0
    %v6903 = vadd.f32 %v6884, %v6902
    %v6904 = vpop.f32.mrf.mxu0
    %v6905 = vadd.f32 %v6886, %v6904
    %6906 = vdwg.mxu0
    %6907 = vmatpush.bf16.msra.mxu0 0
    %6908 = vmatpush.bf16.msra.mxu0 0
    %6909 = vmatpush.bf16.msra.mxu0 0
    %6910 = vmatpush.bf16.msra.mxu0 0
    %6911 = vmatpush.bf16.msra.mxu0 0
    %6912 = vmatpush.bf16.msra.mxu0 0
    %6913 = vmatpush.bf16.msra.mxu0 %v6731
    %6914 = vmatpush.bf16.msra.mxu0 %v6727
    %6915 = vmatmul.bf16.gmra.mxu0 %v6807
    %v6916 = vpop.f32.mrf.mxu0
    %v6917 = vadd.f32 %v6898, %v6916
    %v6918 = vpop.f32.mrf.mxu0
    %v6919 = vadd.f32 %v6900, %v6918
    %6920 = vmatmul.bf16.gmra.mxu0 %v6810
    %v6921 = vpop.f32.mrf.mxu0
    %v6922 = vadd.f32 %v6903, %v6921
    %v6923 = vpop.f32.mrf.mxu0
    %v6924 = vadd.f32 %v6905, %v6923
    %6925 = vdwg.mxu0
    %6926 = vmatpush.bf16.msra.mxu0 %v6692
    %6927 = vmatpush.bf16.msra.mxu0 %v6688
    %6928 = vmatpush.bf16.msra.mxu0 %v6684
    %6929 = vmatpush.bf16.msra.mxu0 %v6680
    %6930 = vmatpush.bf16.msra.mxu0 %v6676
    %6931 = vmatpush.bf16.msra.mxu0 %v6672
    %6932 = vmatpush.bf16.msra.mxu0 %v6668
    %6933 = vmatpush.bf16.msra.mxu0 %v6664
    %6934 = vmatmul.bf16.gmra.mxu0 %v6436
    %v6935 = vpop.f32.mrf.mxu0
    %v6936 = vadd.f32 %v6399, %v6935
    %v6937 = vpop.f32.mrf.mxu0
    %v6938 = vadd.f32 %v6404, %v6937
    %6939 = vmatmul.bf16.gmra.mxu0 %v6439
    %v6940 = vpop.f32.mrf.mxu0
    %v6941 = vadd.f32 %v6409, %v6940
    %v6942 = vpop.f32.mrf.mxu0
    %v6943 = vadd.f32 %v6414, %v6942
    %6944 = vdwg.mxu0
    %6945 = vmatpush.bf16.msra.mxu0 %v6724
    %6946 = vmatpush.bf16.msra.mxu0 %v6720
    %6947 = vmatpush.bf16.msra.mxu0 %v6716
    %6948 = vmatpush.bf16.msra.mxu0 %v6712
    %6949 = vmatpush.bf16.msra.mxu0 %v6708
    %6950 = vmatpush.bf16.msra.mxu0 %v6704
    %6951 = vmatpush.bf16.msra.mxu0 %v6700
    %6952 = vmatpush.bf16.msra.mxu0 %v6696
    %6953 = vmatmul.bf16.gmra.mxu0 %v6437
    %v6954 = vpop.f32.mrf.mxu0
    %v6955 = vadd.f32 %v6936, %v6954
    %v6956 = vpop.f32.mrf.mxu0
    %v6957 = vadd.f32 %v6938, %v6956
    %6958 = vmatmul.bf16.gmra.mxu0 %v6440
    %v6959 = vpop.f32.mrf.mxu0
    %v6960 = vadd.f32 %v6941, %v6959
    %v6961 = vpop.f32.mrf.mxu0
    %v6962 = vadd.f32 %v6943, %v6961
    %6963 = vdwg.mxu0
    %6964 = vmatpush.bf16.msra.mxu0 0
    %6965 = vmatpush.bf16.msra.mxu0 0
    %6966 = vmatpush.bf16.msra.mxu0 0
    %6967 = vmatpush.bf16.msra.mxu0 0
    %6968 = vmatpush.bf16.msra.mxu0 0
    %6969 = vmatpush.bf16.msra.mxu0 0
    %6970 = vmatpush.bf16.msra.mxu0 %v6732
    %6971 = vmatpush.bf16.msra.mxu0 %v6728
    %6972 = vmatmul.bf16.gmra.mxu0 %v6807
    %v6973 = vpop.f32.mrf.mxu0
    %v6974 = vadd.f32 %v6955, %v6973
    %v6975 = vpop.f32.mrf.mxu0
    %v6976 = vadd.f32 %v6957, %v6975
    %6977 = vmatmul.bf16.gmra.mxu0 %v6810
    %v6978 = vpop.f32.mrf.mxu0
    %v6979 = vadd.f32 %v6960, %v6978
    %v6980 = vpop.f32.mrf.mxu0
    %v6981 = vadd.f32 %v6962, %v6980
    %6982 = vdwg.mxu0
    %6983 = vmatpush.bf16.msra.mxu0 %v6693
    %6984 = vmatpush.bf16.msra.mxu0 %v6689
    %6985 = vmatpush.bf16.msra.mxu0 %v6685
    %6986 = vmatpush.bf16.msra.mxu0 %v6681
    %6987 = vmatpush.bf16.msra.mxu0 %v6677
    %6988 = vmatpush.bf16.msra.mxu0 %v6673
    %6989 = vmatpush.bf16.msra.mxu0 %v6669
    %6990 = vmatpush.bf16.msra.mxu0 %v6665
    %6991 = vmatmul.bf16.gmra.mxu0 %v6436
    %v6992 = vpop.f32.mrf.mxu0
    %v6993 = vadd.f32 %v6399, %v6992
    %v6994 = vpop.f32.mrf.mxu0
    %v6995 = vadd.f32 %v6404, %v6994
    %6996 = vmatmul.bf16.gmra.mxu0 %v6439
    %v6997 = vpop.f32.mrf.mxu0
    %v6998 = vadd.f32 %v6409, %v6997
    %v6999 = vpop.f32.mrf.mxu0
    %v7000 = vadd.f32 %v6414, %v6999
    %7001 = vdwg.mxu0
    %7002 = vmatpush.bf16.msra.mxu0 %v6725
    %7003 = vmatpush.bf16.msra.mxu0 %v6721
    %7004 = vmatpush.bf16.msra.mxu0 %v6717
    %7005 = vmatpush.bf16.msra.mxu0 %v6713
    %7006 = vmatpush.bf16.msra.mxu0 %v6709
    %7007 = vmatpush.bf16.msra.mxu0 %v6705
    %7008 = vmatpush.bf16.msra.mxu0 %v6701
    %7009 = vmatpush.bf16.msra.mxu0 %v6697
    %7010 = vmatmul.bf16.gmra.mxu0 %v6437
    %v7011 = vpop.f32.mrf.mxu0
    %v7012 = vadd.f32 %v6993, %v7011
    %v7013 = vpop.f32.mrf.mxu0
    %v7014 = vadd.f32 %v6995, %v7013
    %7015 = vmatmul.bf16.gmra.mxu0 %v6440
    %v7016 = vpop.f32.mrf.mxu0
    %v7017 = vadd.f32 %v6998, %v7016
    %v7018 = vpop.f32.mrf.mxu0
    %v7019 = vadd.f32 %v7000, %v7018
    %7020 = vdwg.mxu0
    %7021 = vmatpush.bf16.msra.mxu0 0
    %7022 = vmatpush.bf16.msra.mxu0 0
    %7023 = vmatpush.bf16.msra.mxu0 0
    %7024 = vmatpush.bf16.msra.mxu0 0
    %7025 = vmatpush.bf16.msra.mxu0 0
    %7026 = vmatpush.bf16.msra.mxu0 0
    %7027 = vmatpush.bf16.msra.mxu0 %v6733
    %7028 = vmatpush.bf16.msra.mxu0 %v6729
    %7029 = vmatmul.bf16.gmra.mxu0 %v6807
    %v7030 = vpop.f32.mrf.mxu0
    %v7031 = vadd.f32 %v7012, %v7030
    %v7032 = vpop.f32.mrf.mxu0
    %v7033 = vadd.f32 %v7014, %v7032
    %7034 = vmatmul.bf16.gmra.mxu0 %v6810
    %v7035 = vpop.f32.mrf.mxu0
    %v7036 = vadd.f32 %v7017, %v7035
    %v7037 = vpop.f32.mrf.mxu0
    %v7038 = vadd.f32 %v7019, %v7037
    %7039 = vdwg.mxu0
    %v7040 = vmax.f32 %v6860, 0.0
    %v7041 = vmax.f32 %v6917, 0.0
    %v7042 = vmax.f32 %v6974, 0.0
    %v7043 = vmax.f32 %v7031, 0.0
    %v7044 = vmax.f32 %v6862, 0.0
    %v7045 = vmax.f32 %v6919, 0.0
    %v7046 = vmax.f32 %v6976, 0.0
    %v7047 = vmax.f32 %v7033, 0.0
    %v7048 = vmax.f32 %v6865, 0.0
    %v7049 = vmax.f32 %v6922, 0.0
    %v7050 = vmax.f32 %v6979, 0.0
    %v7051 = vmax.f32 %v7036, 0.0
    %v7052 = vmax.f32 %v6867, 0.0
    %v7053 = vmax.f32 %v6924, 0.0
    %v7054 = vmax.f32 %v6981, 0.0
    %v7055 = vmax.f32 %v7038, 0.0
    %v7056 = vpack.c.bf16 %v7041, %v7040
    %v7057 = vpack.c.bf16 %v7043, %v7042
    %v7058 = vpack.c.bf16 %v7045, %v7044
    %v7059 = vpack.c.bf16 %v7047, %v7046
    %v7060 = vpack.c.bf16 %v7049, %v7048
    %v7061 = vpack.c.bf16 %v7051, %v7050
    %v7062 = vpack.c.bf16 %v7053, %v7052
    %v7063 = vpack.c.bf16 %v7055, %v7054
    %v7068 = vunpack.c.h.b16 %v7057
    %v7069 = vunpack.c.h.b16 %v7059
    %v7070 = vunpack.c.h.b16 %v7061
    %v7071 = vunpack.c.h.b16 %v7063
    %v7072 = vpack.c.b16 %v7069, %v7068
    %v7073 = vpack.c.b16 %v7071, %v7070
    %7074 = vrot.lane.b32.xlu0 %v7072, 17
    %v7075 = vpop.permute.xlu0 %7074
    %7076 = vrot.lane.b32.xlu0 %v7073, 17
    %v7077 = vpop.permute.xlu0 %7076
    %v7082 = vunpack.c.l.b16 %v7056
    %v7083 = vunpack.c.h.b16 %v7056
    %v7084 = vunpack.c.l.b16 %v7057
    %v7085 = vunpack.c.l.b16 %v7058
    %v7086 = vunpack.c.h.b16 %v7058
    %v7087 = vunpack.c.l.b16 %v7059
    %v7088 = vunpack.c.l.b16 %v7060
    %v7089 = vunpack.c.h.b16 %v7060
    %v7090 = vunpack.c.l.b16 %v7061
    %v7091 = vunpack.c.l.b16 %v7062
    %v7092 = vunpack.c.h.b16 %v7062
    %v7093 = vunpack.c.l.b16 %v7063
    %v7094 = vpack.c.b16 %v7085, %v7082
    %v7095 = vpack.c.b16 %v7086, %v7083
    %v7096 = vpack.c.b16 %v7087, %v7084
    %v7097 = vpack.c.b16 %v7091, %v7088
    %v7098 = vpack.c.b16 %v7092, %v7089
    %v7099 = vpack.c.b16 %v7093, %v7090
    %7100 = vrot.lane.b32.xlu0 %v7094, 17
    %v7101 = vpop.permute.xlu0 %7100
    %7102 = vrot.lane.b32.xlu0 %v7095, 17
    %v7103 = vpop.permute.xlu0 %7102
    %7104 = vrot.lane.b32.xlu0 %v7096, 17
    %v7105 = vpop.permute.xlu0 %7104
    %7106 = vrot.lane.b32.xlu0 %v7097, 17
    %v7107 = vpop.permute.xlu0 %7106
    %7108 = vrot.lane.b32.xlu0 %v7098, 17
    %v7109 = vpop.permute.xlu0 %7108
    %7110 = vrot.lane.b32.xlu0 %v7099, 17
    %v7111 = vpop.permute.xlu0 %7110
    %v7112 = vsel %vm215, %v7101, %v7103
    %v7113 = vsel %vm215, %v7103, %v7105
    %v7114 = vsel %vm215, %v7105, %v7075
    %v7115 = vsel %vm215, %v7107, %v7109
    %v7116 = vsel %vm215, %v7109, %v7111
    %v7117 = vsel %vm215, %v7111, %v7077
    %v7126 = vsel %vm228, %v7075, %v7101
    %v7130 = vsel %vm228, %v7077, %v7107
    %v7132 = vld [vmem:[#allocation3] sm:$0xff]
    %v7133 = vld [vmem:[#allocation3 + $0x8] sm:$0xff]
    %v7134 = vld [vmem:[#allocation3 + $0x10] sm:$0xff]
    %v7135 = vld [vmem:[#allocation3 + $0x18] sm:$0xff]
    %v7136 = vld [vmem:[#allocation3 + $0x20] sm:$0xff]
    %v7137 = vld [vmem:[#allocation3 + $0x28] sm:$0xff]
    %v7138 = vld [vmem:[#allocation3 + $0x30] sm:$0xff]
    %v7139 = vld [vmem:[#allocation3 + $0x38] sm:$0xff]
    %v7140 = vunpack.c.l.bf16 %v7126
    %v7141 = vunpack.c.l.bf16 %v7112
    %v7142 = vunpack.c.l.bf16 %v7113
    %v7143 = vunpack.c.l.bf16 %v7114
    %v7144 = vunpack.c.h.bf16 %v7126
    %v7145 = vunpack.c.h.bf16 %v7112
    %v7146 = vunpack.c.h.bf16 %v7113
    %v7147 = vunpack.c.h.bf16 %v7114
    %v7148 = vunpack.c.l.bf16 %v7130
    %v7149 = vunpack.c.l.bf16 %v7115
    %v7150 = vunpack.c.l.bf16 %v7116
    %v7151 = vunpack.c.l.bf16 %v7117
    %v7152 = vunpack.c.h.bf16 %v7130
    %v7153 = vunpack.c.h.bf16 %v7115
    %v7154 = vunpack.c.h.bf16 %v7116
    %v7155 = vunpack.c.h.bf16 %v7117
    %v7156 = vunpack.c.l.bf16 %v7132
    %v7157 = vunpack.c.h.bf16 %v7132
    %v7158 = vunpack.c.l.bf16 %v7133
    %v7159 = vunpack.c.h.bf16 %v7133
    %v7160 = vunpack.c.l.bf16 %v7134
    %v7161 = vunpack.c.h.bf16 %v7134
    %v7162 = vunpack.c.l.bf16 %v7135
    %v7163 = vunpack.c.h.bf16 %v7135
    %v7164 = vunpack.c.l.bf16 %v7136
    %v7165 = vunpack.c.h.bf16 %v7136
    %v7166 = vunpack.c.l.bf16 %v7137
    %v7167 = vunpack.c.h.bf16 %v7137
    %v7168 = vunpack.c.l.bf16 %v7138
    %v7169 = vunpack.c.h.bf16 %v7138
    %v7170 = vunpack.c.l.bf16 %v7139
    %v7171 = vunpack.c.h.bf16 %v7139
    %v7172 = vmul.f32 %v7140, %v7156
    %v7173 = vmul.f32 %v7141, %v7157
    %v7174 = vmul.f32 %v7142, %v7158
    %v7175 = vmul.f32 %v7143, %v7159
    %v7176 = vmul.f32 %v7144, %v7160
    %v7177 = vmul.f32 %v7145, %v7161
    %v7178 = vmul.f32 %v7146, %v7162
    %v7179 = vmul.f32 %v7147, %v7163
    %v7180 = vmul.f32 %v7148, %v7164
    %v7181 = vmul.f32 %v7149, %v7165
    %v7182 = vmul.f32 %v7150, %v7166
    %v7183 = vmul.f32 %v7151, %v7167
    %v7184 = vmul.f32 %v7152, %v7168
    %v7185 = vmul.f32 %v7153, %v7169
    %v7186 = vmul.f32 %v7154, %v7170
    %v7187 = vmul.f32 %v7155, %v7171
    %v7188 = vpack.c.bf16 %v7173, %v7172
    %v7189 = vpack.c.bf16 %v7175, %v7174
    %v7190 = vpack.c.bf16 %v7177, %v7176
    %v7191 = vpack.c.bf16 %v7179, %v7178
    %v7192 = vpack.c.bf16 %v7181, %v7180
    %v7193 = vpack.c.bf16 %v7183, %v7182
    %v7194 = vpack.c.bf16 %v7185, %v7184
    %v7195 = vpack.c.bf16 %v7187, %v7186
    %7196 = vst [vmem:[#allocation2] sm:$0xff] %v7188
    %7197 = vst [vmem:[#allocation2 + $0x8] sm:$0xff] %v7189
    %7198 = vst [vmem:[#allocation2 + $0x10] sm:$0xff] %v7190
    %7199 = vst [vmem:[#allocation2 + $0x18] sm:$0xff] %v7191
    %7200 = vst [vmem:[#allocation2 + $0x20] sm:$0xff] %v7192
    %7201 = vst [vmem:[#allocation2 + $0x28] sm:$0xff] %v7193
    %7202 = vst [vmem:[#allocation2 + $0x30] sm:$0xff] %v7194
    %7203 = vst [vmem:[#allocation2 + $0x38] sm:$0xff] %v7195
    %7204 = vrot.lane.b32.xlu0 %v7072, 16
    %v7205 = vpop.permute.xlu0 %7204
    %7206 = vrot.lane.b32.xlu0 %v7073, 16
    %v7207 = vpop.permute.xlu0 %7206
    %7208 = vrot.lane.b32.xlu0 %v7094, 16
    %v7209 = vpop.permute.xlu0 %7208
    %7210 = vrot.lane.b32.xlu0 %v7095, 16
    %v7211 = vpop.permute.xlu0 %7210
    %7212 = vrot.lane.b32.xlu0 %v7096, 16
    %v7213 = vpop.permute.xlu0 %7212
    %7214 = vrot.lane.b32.xlu0 %v7097, 16
    %v7215 = vpop.permute.xlu0 %7214
    %7216 = vrot.lane.b32.xlu0 %v7098, 16
    %v7217 = vpop.permute.xlu0 %7216
    %7218 = vrot.lane.b32.xlu0 %v7099, 16
    %v7219 = vpop.permute.xlu0 %7218
    %v7220 = vsel %vm325, %v7209, %v7211
    %v7221 = vsel %vm325, %v7211, %v7213
    %v7222 = vsel %vm325, %v7213, %v7205
    %v7223 = vsel %vm325, %v7215, %v7217
    %v7224 = vsel %vm325, %v7217, %v7219
    %v7225 = vsel %vm325, %v7219, %v7207
    %v7234 = vsel %vm338, %v7205, %v7209
    %v7238 = vsel %vm338, %v7207, %v7215
    %v7240 = vld [vmem:[#allocation3 + $0x40] sm:$0xff]
    %v7241 = vld [vmem:[#allocation3 + $0x48] sm:$0xff]
    %v7242 = vld [vmem:[#allocation3 + $0x50] sm:$0xff]
    %v7243 = vld [vmem:[#allocation3 + $0x58] sm:$0xff]
    %v7244 = vld [vmem:[#allocation3 + $0x60] sm:$0xff]
    %v7245 = vld [vmem:[#allocation3 + $0x68] sm:$0xff]
    %v7246 = vld [vmem:[#allocation3 + $0x70] sm:$0xff]
    %v7247 = vld [vmem:[#allocation3 + $0x78] sm:$0xff]
    %v7248 = vunpack.c.l.bf16 %v7234
    %v7249 = vunpack.c.l.bf16 %v7220
    %v7250 = vunpack.c.l.bf16 %v7221
    %v7251 = vunpack.c.l.bf16 %v7222
    %v7252 = vunpack.c.h.bf16 %v7234
    %v7253 = vunpack.c.h.bf16 %v7220
    %v7254 = vunpack.c.h.bf16 %v7221
    %v7255 = vunpack.c.h.bf16 %v7222
    %v7256 = vunpack.c.l.bf16 %v7238
    %v7257 = vunpack.c.l.bf16 %v7223
    %v7258 = vunpack.c.l.bf16 %v7224
    %v7259 = vunpack.c.l.bf16 %v7225
    %v7260 = vunpack.c.h.bf16 %v7238
    %v7261 = vunpack.c.h.bf16 %v7223
    %v7262 = vunpack.c.h.bf16 %v7224
    %v7263 = vunpack.c.h.bf16 %v7225
    %v7264 = vunpack.c.l.bf16 %v7240
    %v7265 = vunpack.c.h.bf16 %v7240
    %v7266 = vunpack.c.l.bf16 %v7241
    %v7267 = vunpack.c.h.bf16 %v7241
    %v7268 = vunpack.c.l.bf16 %v7242
    %v7269 = vunpack.c.h.bf16 %v7242
    %v7270 = vunpack.c.l.bf16 %v7243
    %v7271 = vunpack.c.h.bf16 %v7243
    %v7272 = vunpack.c.l.bf16 %v7244
    %v7273 = vunpack.c.h.bf16 %v7244
    %v7274 = vunpack.c.l.bf16 %v7245
    %v7275 = vunpack.c.h.bf16 %v7245
    %v7276 = vunpack.c.l.bf16 %v7246
    %v7277 = vunpack.c.h.bf16 %v7246
    %v7278 = vunpack.c.l.bf16 %v7247
    %v7279 = vunpack.c.h.bf16 %v7247
    %v7280 = vmul.f32 %v7248, %v7264
    %v7281 = vmul.f32 %v7249, %v7265
    %v7282 = vmul.f32 %v7250, %v7266
    %v7283 = vmul.f32 %v7251, %v7267
    %v7284 = vmul.f32 %v7252, %v7268
    %v7285 = vmul.f32 %v7253, %v7269
    %v7286 = vmul.f32 %v7254, %v7270
    %v7287 = vmul.f32 %v7255, %v7271
    %v7288 = vmul.f32 %v7256, %v7272
    %v7289 = vmul.f32 %v7257, %v7273
    %v7290 = vmul.f32 %v7258, %v7274
    %v7291 = vmul.f32 %v7259, %v7275
    %v7292 = vmul.f32 %v7260, %v7276
    %v7293 = vmul.f32 %v7261, %v7277
    %v7294 = vmul.f32 %v7262, %v7278
    %v7295 = vmul.f32 %v7263, %v7279
    %v7296 = vpack.c.bf16 %v7281, %v7280
    %v7297 = vpack.c.bf16 %v7283, %v7282
    %v7298 = vpack.c.bf16 %v7285, %v7284
    %v7299 = vpack.c.bf16 %v7287, %v7286
    %v7300 = vpack.c.bf16 %v7289, %v7288
    %v7301 = vpack.c.bf16 %v7291, %v7290
    %v7302 = vpack.c.bf16 %v7293, %v7292
    %v7303 = vpack.c.bf16 %v7295, %v7294
    %7304 = vst [vmem:[#allocation2 + $0x40] sm:$0xff] %v7296
    %7305 = vst [vmem:[#allocation2 + $0x48] sm:$0xff] %v7297
    %7306 = vst [vmem:[#allocation2 + $0x50] sm:$0xff] %v7298
    %7307 = vst [vmem:[#allocation2 + $0x58] sm:$0xff] %v7299
    %7308 = vst [vmem:[#allocation2 + $0x60] sm:$0xff] %v7300
    %7309 = vst [vmem:[#allocation2 + $0x68] sm:$0xff] %v7301
    %7310 = vst [vmem:[#allocation2 + $0x70] sm:$0xff] %v7302
    %7311 = vst [vmem:[#allocation2 + $0x78] sm:$0xff] %v7303
    %7312 = vrot.lane.b32.xlu0 %v7072, 15
    %v7313 = vpop.permute.xlu0 %7312
    %7314 = vrot.lane.b32.xlu0 %v7073, 15
    %v7315 = vpop.permute.xlu0 %7314
    %7316 = vrot.lane.b32.xlu0 %v7094, 15
    %v7317 = vpop.permute.xlu0 %7316
    %7318 = vrot.lane.b32.xlu0 %v7095, 15
    %v7319 = vpop.permute.xlu0 %7318
    %7320 = vrot.lane.b32.xlu0 %v7096, 15
    %v7321 = vpop.permute.xlu0 %7320
    %7322 = vrot.lane.b32.xlu0 %v7097, 15
    %v7323 = vpop.permute.xlu0 %7322
    %7324 = vrot.lane.b32.xlu0 %v7098, 15
    %v7325 = vpop.permute.xlu0 %7324
    %7326 = vrot.lane.b32.xlu0 %v7099, 15
    %v7327 = vpop.permute.xlu0 %7326
    %v7328 = vsel %vm435, %v7317, %v7319
    %v7329 = vsel %vm435, %v7319, %v7321
    %v7330 = vsel %vm435, %v7321, %v7313
    %v7331 = vsel %vm435, %v7323, %v7325
    %v7332 = vsel %vm435, %v7325, %v7327
    %v7333 = vsel %vm435, %v7327, %v7315
    %v7342 = vsel %vm448, %v7313, %v7317
    %v7346 = vsel %vm448, %v7315, %v7323
    %v7348 = vld [vmem:[#allocation3 + $0x80] sm:$0xff]
    %v7349 = vld [vmem:[#allocation3 + $0x88] sm:$0xff]
    %v7350 = vld [vmem:[#allocation3 + $0x90] sm:$0xff]
    %v7351 = vld [vmem:[#allocation3 + $0x98] sm:$0xff]
    %v7352 = vld [vmem:[#allocation3 + $0xa0] sm:$0xff]
    %v7353 = vld [vmem:[#allocation3 + $0xa8] sm:$0xff]
    %v7354 = vld [vmem:[#allocation3 + $0xb0] sm:$0xff]
    %v7355 = vld [vmem:[#allocation3 + $0xb8] sm:$0xff]
    %v7356 = vunpack.c.l.bf16 %v7342
    %v7357 = vunpack.c.l.bf16 %v7328
    %v7358 = vunpack.c.l.bf16 %v7329
    %v7359 = vunpack.c.l.bf16 %v7330
    %v7360 = vunpack.c.h.bf16 %v7342
    %v7361 = vunpack.c.h.bf16 %v7328
    %v7362 = vunpack.c.h.bf16 %v7329
    %v7363 = vunpack.c.h.bf16 %v7330
    %v7364 = vunpack.c.l.bf16 %v7346
    %v7365 = vunpack.c.l.bf16 %v7331
    %v7366 = vunpack.c.l.bf16 %v7332
    %v7367 = vunpack.c.l.bf16 %v7333
    %v7368 = vunpack.c.h.bf16 %v7346
    %v7369 = vunpack.c.h.bf16 %v7331
    %v7370 = vunpack.c.h.bf16 %v7332
    %v7371 = vunpack.c.h.bf16 %v7333
    %v7372 = vunpack.c.l.bf16 %v7348
    %v7373 = vunpack.c.h.bf16 %v7348
    %v7374 = vunpack.c.l.bf16 %v7349
    %v7375 = vunpack.c.h.bf16 %v7349
    %v7376 = vunpack.c.l.bf16 %v7350
    %v7377 = vunpack.c.h.bf16 %v7350
    %v7378 = vunpack.c.l.bf16 %v7351
    %v7379 = vunpack.c.h.bf16 %v7351
    %v7380 = vunpack.c.l.bf16 %v7352
    %v7381 = vunpack.c.h.bf16 %v7352
    %v7382 = vunpack.c.l.bf16 %v7353
    %v7383 = vunpack.c.h.bf16 %v7353
    %v7384 = vunpack.c.l.bf16 %v7354
    %v7385 = vunpack.c.h.bf16 %v7354
    %v7386 = vunpack.c.l.bf16 %v7355
    %v7387 = vunpack.c.h.bf16 %v7355
    %v7388 = vmul.f32 %v7356, %v7372
    %v7389 = vmul.f32 %v7357, %v7373
    %v7390 = vmul.f32 %v7358, %v7374
    %v7391 = vmul.f32 %v7359, %v7375
    %v7392 = vmul.f32 %v7360, %v7376
    %v7393 = vmul.f32 %v7361, %v7377
    %v7394 = vmul.f32 %v7362, %v7378
    %v7395 = vmul.f32 %v7363, %v7379
    %v7396 = vmul.f32 %v7364, %v7380
    %v7397 = vmul.f32 %v7365, %v7381
    %v7398 = vmul.f32 %v7366, %v7382
    %v7399 = vmul.f32 %v7367, %v7383
    %v7400 = vmul.f32 %v7368, %v7384
    %v7401 = vmul.f32 %v7369, %v7385
    %v7402 = vmul.f32 %v7370, %v7386
    %v7403 = vmul.f32 %v7371, %v7387
    %v7404 = vpack.c.bf16 %v7389, %v7388
    %v7405 = vpack.c.bf16 %v7391, %v7390
    %v7406 = vpack.c.bf16 %v7393, %v7392
    %v7407 = vpack.c.bf16 %v7395, %v7394
    %v7408 = vpack.c.bf16 %v7397, %v7396
    %v7409 = vpack.c.bf16 %v7399, %v7398
    %v7410 = vpack.c.bf16 %v7401, %v7400
    %v7411 = vpack.c.bf16 %v7403, %v7402
    %7412 = vst [vmem:[#allocation2 + $0x80] sm:$0xff] %v7404
    %7413 = vst [vmem:[#allocation2 + $0x88] sm:$0xff] %v7405
    %7414 = vst [vmem:[#allocation2 + $0x90] sm:$0xff] %v7406
    %7415 = vst [vmem:[#allocation2 + $0x98] sm:$0xff] %v7407
    %7416 = vst [vmem:[#allocation2 + $0xa0] sm:$0xff] %v7408
    %7417 = vst [vmem:[#allocation2 + $0xa8] sm:$0xff] %v7409
    %7418 = vst [vmem:[#allocation2 + $0xb0] sm:$0xff] %v7410
    %7419 = vst [vmem:[#allocation2 + $0xb8] sm:$0xff] %v7411
    %7420 = vrot.lane.b32.xlu0 %v7072, 1
    %v7421 = vpop.permute.xlu0 %7420
    %7422 = vrot.lane.b32.xlu0 %v7073, 1
    %v7423 = vpop.permute.xlu0 %7422
    %7424 = vrot.lane.b32.xlu0 %v7094, 1
    %v7425 = vpop.permute.xlu0 %7424
    %7426 = vrot.lane.b32.xlu0 %v7095, 1
    %v7427 = vpop.permute.xlu0 %7426
    %7428 = vrot.lane.b32.xlu0 %v7096, 1
    %v7429 = vpop.permute.xlu0 %7428
    %7430 = vrot.lane.b32.xlu0 %v7097, 1
    %v7431 = vpop.permute.xlu0 %7430
    %7432 = vrot.lane.b32.xlu0 %v7098, 1
    %v7433 = vpop.permute.xlu0 %7432
    %7434 = vrot.lane.b32.xlu0 %v7099, 1
    %v7435 = vpop.permute.xlu0 %7434
    %v7436 = vsel %vm545, %v7425, %v7427
    %v7437 = vsel %vm545, %v7427, %v7429
    %v7438 = vsel %vm545, %v7429, %v7421
    %v7439 = vsel %vm545, %v7431, %v7433
    %v7440 = vsel %vm545, %v7433, %v7435
    %v7441 = vsel %vm545, %v7435, %v7423
    %v7450 = vsel %vm558, %v7421, %v7425
    %v7454 = vsel %vm558, %v7423, %v7431
    %v7456 = vld [vmem:[#allocation3 + $0xc0] sm:$0xff]
    %v7457 = vld [vmem:[#allocation3 + $0xc8] sm:$0xff]
    %v7458 = vld [vmem:[#allocation3 + $0xd0] sm:$0xff]
    %v7459 = vld [vmem:[#allocation3 + $0xd8] sm:$0xff]
    %v7460 = vld [vmem:[#allocation3 + $0xe0] sm:$0xff]
    %v7461 = vld [vmem:[#allocation3 + $0xe8] sm:$0xff]
    %v7462 = vld [vmem:[#allocation3 + $0xf0] sm:$0xff]
    %v7463 = vld [vmem:[#allocation3 + $0xf8] sm:$0xff]
    %v7464 = vunpack.c.l.bf16 %v7450
    %v7465 = vunpack.c.l.bf16 %v7436
    %v7466 = vunpack.c.l.bf16 %v7437
    %v7467 = vunpack.c.l.bf16 %v7438
    %v7468 = vunpack.c.h.bf16 %v7450
    %v7469 = vunpack.c.h.bf16 %v7436
    %v7470 = vunpack.c.h.bf16 %v7437
    %v7471 = vunpack.c.h.bf16 %v7438
    %v7472 = vunpack.c.l.bf16 %v7454
    %v7473 = vunpack.c.l.bf16 %v7439
    %v7474 = vunpack.c.l.bf16 %v7440
    %v7475 = vunpack.c.l.bf16 %v7441
    %v7476 = vunpack.c.h.bf16 %v7454
    %v7477 = vunpack.c.h.bf16 %v7439
    %v7478 = vunpack.c.h.bf16 %v7440
    %v7479 = vunpack.c.h.bf16 %v7441
    %v7480 = vunpack.c.l.bf16 %v7456
    %v7481 = vunpack.c.h.bf16 %v7456
    %v7482 = vunpack.c.l.bf16 %v7457
    %v7483 = vunpack.c.h.bf16 %v7457
    %v7484 = vunpack.c.l.bf16 %v7458
    %v7485 = vunpack.c.h.bf16 %v7458
    %v7486 = vunpack.c.l.bf16 %v7459
    %v7487 = vunpack.c.h.bf16 %v7459
    %v7488 = vunpack.c.l.bf16 %v7460
    %v7489 = vunpack.c.h.bf16 %v7460
    %v7490 = vunpack.c.l.bf16 %v7461
    %v7491 = vunpack.c.h.bf16 %v7461
    %v7492 = vunpack.c.l.bf16 %v7462
    %v7493 = vunpack.c.h.bf16 %v7462
    %v7494 = vunpack.c.l.bf16 %v7463
    %v7495 = vunpack.c.h.bf16 %v7463
    %v7496 = vmul.f32 %v7464, %v7480
    %v7497 = vmul.f32 %v7465, %v7481
    %v7498 = vmul.f32 %v7466, %v7482
    %v7499 = vmul.f32 %v7467, %v7483
    %v7500 = vmul.f32 %v7468, %v7484
    %v7501 = vmul.f32 %v7469, %v7485
    %v7502 = vmul.f32 %v7470, %v7486
    %v7503 = vmul.f32 %v7471, %v7487
    %v7504 = vmul.f32 %v7472, %v7488
    %v7505 = vmul.f32 %v7473, %v7489
    %v7506 = vmul.f32 %v7474, %v7490
    %v7507 = vmul.f32 %v7475, %v7491
    %v7508 = vmul.f32 %v7476, %v7492
    %v7509 = vmul.f32 %v7477, %v7493
    %v7510 = vmul.f32 %v7478, %v7494
    %v7511 = vmul.f32 %v7479, %v7495
    %v7512 = vpack.c.bf16 %v7497, %v7496
    %v7513 = vpack.c.bf16 %v7499, %v7498
    %v7514 = vpack.c.bf16 %v7501, %v7500
    %v7515 = vpack.c.bf16 %v7503, %v7502
    %v7516 = vpack.c.bf16 %v7505, %v7504
    %v7517 = vpack.c.bf16 %v7507, %v7506
    %v7518 = vpack.c.bf16 %v7509, %v7508
    %v7519 = vpack.c.bf16 %v7511, %v7510
    %7520 = vst [vmem:[#allocation2 + $0xc0] sm:$0xff] %v7512
    %7521 = vst [vmem:[#allocation2 + $0xc8] sm:$0xff] %v7513
    %7522 = vst [vmem:[#allocation2 + $0xd0] sm:$0xff] %v7514
    %7523 = vst [vmem:[#allocation2 + $0xd8] sm:$0xff] %v7515
    %7524 = vst [vmem:[#allocation2 + $0xe0] sm:$0xff] %v7516
    %7525 = vst [vmem:[#allocation2 + $0xe8] sm:$0xff] %v7517
    %7526 = vst [vmem:[#allocation2 + $0xf0] sm:$0xff] %v7518
    %7527 = vst [vmem:[#allocation2 + $0xf8] sm:$0xff] %v7519
    %v7528 = vld [vmem:[#allocation3 + $0x100] sm:$0xff]
    %v7529 = vld [vmem:[#allocation3 + $0x108] sm:$0xff]
    %v7530 = vld [vmem:[#allocation3 + $0x110] sm:$0xff]
    %v7531 = vld [vmem:[#allocation3 + $0x118] sm:$0xff]
    %v7532 = vld [vmem:[#allocation3 + $0x120] sm:$0xff]
    %v7533 = vld [vmem:[#allocation3 + $0x128] sm:$0xff]
    %v7534 = vld [vmem:[#allocation3 + $0x130] sm:$0xff]
    %v7535 = vld [vmem:[#allocation3 + $0x138] sm:$0xff]
    %v7536 = vunpack.c.l.bf16 %v7056
    %v7537 = vunpack.c.h.bf16 %v7056
    %v7538 = vunpack.c.l.bf16 %v7057
    %v7539 = vunpack.c.h.bf16 %v7057
    %v7540 = vunpack.c.l.bf16 %v7058
    %v7541 = vunpack.c.h.bf16 %v7058
    %v7542 = vunpack.c.l.bf16 %v7059
    %v7543 = vunpack.c.h.bf16 %v7059
    %v7544 = vunpack.c.l.bf16 %v7060
    %v7545 = vunpack.c.h.bf16 %v7060
    %v7546 = vunpack.c.l.bf16 %v7061
    %v7547 = vunpack.c.h.bf16 %v7061
    %v7548 = vunpack.c.l.bf16 %v7062
    %v7549 = vunpack.c.h.bf16 %v7062
    %v7550 = vunpack.c.l.bf16 %v7063
    %v7551 = vunpack.c.h.bf16 %v7063
    %v7552 = vunpack.c.l.bf16 %v7528
    %v7553 = vunpack.c.h.bf16 %v7528
    %v7554 = vunpack.c.l.bf16 %v7529
    %v7555 = vunpack.c.h.bf16 %v7529
    %v7556 = vunpack.c.l.bf16 %v7530
    %v7557 = vunpack.c.h.bf16 %v7530
    %v7558 = vunpack.c.l.bf16 %v7531
    %v7559 = vunpack.c.h.bf16 %v7531
    %v7560 = vunpack.c.l.bf16 %v7532
    %v7561 = vunpack.c.h.bf16 %v7532
    %v7562 = vunpack.c.l.bf16 %v7533
    %v7563 = vunpack.c.h.bf16 %v7533
    %v7564 = vunpack.c.l.bf16 %v7534
    %v7565 = vunpack.c.h.bf16 %v7534
    %v7566 = vunpack.c.l.bf16 %v7535
    %v7567 = vunpack.c.h.bf16 %v7535
    %v7568 = vmul.f32 %v7536, %v7552
    %v7569 = vmul.f32 %v7537, %v7553
    %v7570 = vmul.f32 %v7538, %v7554
    %v7571 = vmul.f32 %v7539, %v7555
    %v7572 = vmul.f32 %v7540, %v7556
    %v7573 = vmul.f32 %v7541, %v7557
    %v7574 = vmul.f32 %v7542, %v7558
    %v7575 = vmul.f32 %v7543, %v7559
    %v7576 = vmul.f32 %v7544, %v7560
    %v7577 = vmul.f32 %v7545, %v7561
    %v7578 = vmul.f32 %v7546, %v7562
    %v7579 = vmul.f32 %v7547, %v7563
    %v7580 = vmul.f32 %v7548, %v7564
    %v7581 = vmul.f32 %v7549, %v7565
    %v7582 = vmul.f32 %v7550, %v7566
    %v7583 = vmul.f32 %v7551, %v7567
    %v7584 = vpack.c.bf16 %v7569, %v7568
    %v7585 = vpack.c.bf16 %v7571, %v7570
    %v7586 = vpack.c.bf16 %v7573, %v7572
    %v7587 = vpack.c.bf16 %v7575, %v7574
    %v7588 = vpack.c.bf16 %v7577, %v7576
    %v7589 = vpack.c.bf16 %v7579, %v7578
    %v7590 = vpack.c.bf16 %v7581, %v7580
    %v7591 = vpack.c.bf16 %v7583, %v7582
    %7592 = vst [vmem:[#allocation2 + $0x100] sm:$0xff] %v7584
    %7593 = vst [vmem:[#allocation2 + $0x108] sm:$0xff] %v7585
    %7594 = vst [vmem:[#allocation2 + $0x110] sm:$0xff] %v7586
    %7595 = vst [vmem:[#allocation2 + $0x118] sm:$0xff] %v7587
    %7596 = vst [vmem:[#allocation2 + $0x120] sm:$0xff] %v7588
    %7597 = vst [vmem:[#allocation2 + $0x128] sm:$0xff] %v7589
    %7598 = vst [vmem:[#allocation2 + $0x130] sm:$0xff] %v7590
    %7599 = vst [vmem:[#allocation2 + $0x138] sm:$0xff] %v7591
    %7600 = vrot.lane.b32.xlu0 %v7094, 127
    %v7601 = vpop.permute.xlu0 %7600
    %7602 = vrot.lane.b32.xlu0 %v7095, 127
    %v7603 = vpop.permute.xlu0 %7602
    %7604 = vrot.lane.b32.xlu0 %v7096, 127
    %v7605 = vpop.permute.xlu0 %7604
    %7606 = vrot.lane.b32.xlu0 %v7072, 127
    %v7607 = vpop.permute.xlu0 %7606
    %7608 = vrot.lane.b32.xlu0 %v7097, 127
    %v7609 = vpop.permute.xlu0 %7608
    %7610 = vrot.lane.b32.xlu0 %v7098, 127
    %v7611 = vpop.permute.xlu0 %7610
    %7612 = vrot.lane.b32.xlu0 %v7099, 127
    %v7613 = vpop.permute.xlu0 %7612
    %7614 = vrot.lane.b32.xlu0 %v7073, 127
    %v7615 = vpop.permute.xlu0 %7614
    %v7616 = vsel %vm727, %v7601, %v7603
    %v7617 = vsel %vm727, %v7603, %v7605
    %v7618 = vsel %vm727, %v7605, %v7607
    %v7619 = vsel %vm727, %v7609, %v7611
    %v7620 = vsel %vm727, %v7611, %v7613
    %v7621 = vsel %vm727, %v7613, %v7615
    %v7630 = vsel %vm740, %v7607, %v7601
    %v7634 = vsel %vm740, %v7615, %v7609
    %v7636 = vld [vmem:[#allocation3 + $0x140] sm:$0xff]
    %v7637 = vld [vmem:[#allocation3 + $0x148] sm:$0xff]
    %v7638 = vld [vmem:[#allocation3 + $0x150] sm:$0xff]
    %v7639 = vld [vmem:[#allocation3 + $0x158] sm:$0xff]
    %v7640 = vld [vmem:[#allocation3 + $0x160] sm:$0xff]
    %v7641 = vld [vmem:[#allocation3 + $0x168] sm:$0xff]
    %v7642 = vld [vmem:[#allocation3 + $0x170] sm:$0xff]
    %v7643 = vld [vmem:[#allocation3 + $0x178] sm:$0xff]
    %v7644 = vunpack.c.l.bf16 %v7616
    %v7645 = vunpack.c.l.bf16 %v7617
    %v7646 = vunpack.c.l.bf16 %v7618
    %v7647 = vunpack.c.l.bf16 %v7630
    %v7648 = vunpack.c.h.bf16 %v7616
    %v7649 = vunpack.c.h.bf16 %v7617
    %v7650 = vunpack.c.h.bf16 %v7618
    %v7651 = vunpack.c.h.bf16 %v7630
    %v7652 = vunpack.c.l.bf16 %v7619
    %v7653 = vunpack.c.l.bf16 %v7620
    %v7654 = vunpack.c.l.bf16 %v7621
    %v7655 = vunpack.c.l.bf16 %v7634
    %v7656 = vunpack.c.h.bf16 %v7619
    %v7657 = vunpack.c.h.bf16 %v7620
    %v7658 = vunpack.c.h.bf16 %v7621
    %v7659 = vunpack.c.h.bf16 %v7634
    %v7660 = vunpack.c.l.bf16 %v7636
    %v7661 = vunpack.c.h.bf16 %v7636
    %v7662 = vunpack.c.l.bf16 %v7637
    %v7663 = vunpack.c.h.bf16 %v7637
    %v7664 = vunpack.c.l.bf16 %v7638
    %v7665 = vunpack.c.h.bf16 %v7638
    %v7666 = vunpack.c.l.bf16 %v7639
    %v7667 = vunpack.c.h.bf16 %v7639
    %v7668 = vunpack.c.l.bf16 %v7640
    %v7669 = vunpack.c.h.bf16 %v7640
    %v7670 = vunpack.c.l.bf16 %v7641
    %v7671 = vunpack.c.h.bf16 %v7641
    %v7672 = vunpack.c.l.bf16 %v7642
    %v7673 = vunpack.c.h.bf16 %v7642
    %v7674 = vunpack.c.l.bf16 %v7643
    %v7675 = vunpack.c.h.bf16 %v7643
    %v7676 = vmul.f32 %v7644, %v7660
    %v7677 = vmul.f32 %v7645, %v7661
    %v7678 = vmul.f32 %v7646, %v7662
    %v7679 = vmul.f32 %v7647, %v7663
    %v7680 = vmul.f32 %v7648, %v7664
    %v7681 = vmul.f32 %v7649, %v7665
    %v7682 = vmul.f32 %v7650, %v7666
    %v7683 = vmul.f32 %v7651, %v7667
    %v7684 = vmul.f32 %v7652, %v7668
    %v7685 = vmul.f32 %v7653, %v7669
    %v7686 = vmul.f32 %v7654, %v7670
    %v7687 = vmul.f32 %v7655, %v7671
    %v7688 = vmul.f32 %v7656, %v7672
    %v7689 = vmul.f32 %v7657, %v7673
    %v7690 = vmul.f32 %v7658, %v7674
    %v7691 = vmul.f32 %v7659, %v7675
    %v7692 = vpack.c.bf16 %v7677, %v7676
    %v7693 = vpack.c.bf16 %v7679, %v7678
    %v7694 = vpack.c.bf16 %v7681, %v7680
    %v7695 = vpack.c.bf16 %v7683, %v7682
    %v7696 = vpack.c.bf16 %v7685, %v7684
    %v7697 = vpack.c.bf16 %v7687, %v7686
    %v7698 = vpack.c.bf16 %v7689, %v7688
    %v7699 = vpack.c.bf16 %v7691, %v7690
    %7700 = vst [vmem:[#allocation2 + $0x140] sm:$0xff] %v7692
    %7701 = vst [vmem:[#allocation2 + $0x148] sm:$0xff] %v7693
    %7702 = vst [vmem:[#allocation2 + $0x150] sm:$0xff] %v7694
    %7703 = vst [vmem:[#allocation2 + $0x158] sm:$0xff] %v7695
    %7704 = vst [vmem:[#allocation2 + $0x160] sm:$0xff] %v7696
    %7705 = vst [vmem:[#allocation2 + $0x168] sm:$0xff] %v7697
    %7706 = vst [vmem:[#allocation2 + $0x170] sm:$0xff] %v7698
    %7707 = vst [vmem:[#allocation2 + $0x178] sm:$0xff] %v7699
    %7708 = vrot.lane.b32.xlu0 %v7094, 113
    %v7709 = vpop.permute.xlu0 %7708
    %7710 = vrot.lane.b32.xlu0 %v7095, 113
    %v7711 = vpop.permute.xlu0 %7710
    %7712 = vrot.lane.b32.xlu0 %v7096, 113
    %v7713 = vpop.permute.xlu0 %7712
    %7714 = vrot.lane.b32.xlu0 %v7072, 113
    %v7715 = vpop.permute.xlu0 %7714
    %7716 = vrot.lane.b32.xlu0 %v7097, 113
    %v7717 = vpop.permute.xlu0 %7716
    %7718 = vrot.lane.b32.xlu0 %v7098, 113
    %v7719 = vpop.permute.xlu0 %7718
    %7720 = vrot.lane.b32.xlu0 %v7099, 113
    %v7721 = vpop.permute.xlu0 %7720
    %7722 = vrot.lane.b32.xlu0 %v7073, 113
    %v7723 = vpop.permute.xlu0 %7722
    %v7724 = vsel %vm837, %v7709, %v7711
    %v7725 = vsel %vm837, %v7711, %v7713
    %v7726 = vsel %vm837, %v7713, %v7715
    %v7727 = vsel %vm837, %v7717, %v7719
    %v7728 = vsel %vm837, %v7719, %v7721
    %v7729 = vsel %vm837, %v7721, %v7723
    %v7738 = vsel %vm850, %v7715, %v7709
    %v7742 = vsel %vm850, %v7723, %v7717
    %v7744 = vld [vmem:[#allocation3 + $0x180] sm:$0xff]
    %v7745 = vld [vmem:[#allocation3 + $0x188] sm:$0xff]
    %v7746 = vld [vmem:[#allocation3 + $0x190] sm:$0xff]
    %v7747 = vld [vmem:[#allocation3 + $0x198] sm:$0xff]
    %v7748 = vld [vmem:[#allocation3 + $0x1a0] sm:$0xff]
    %v7749 = vld [vmem:[#allocation3 + $0x1a8] sm:$0xff]
    %v7750 = vld [vmem:[#allocation3 + $0x1b0] sm:$0xff]
    %v7751 = vld [vmem:[#allocation3 + $0x1b8] sm:$0xff]
    %v7752 = vunpack.c.l.bf16 %v7724
    %v7753 = vunpack.c.l.bf16 %v7725
    %v7754 = vunpack.c.l.bf16 %v7726
    %v7755 = vunpack.c.l.bf16 %v7738
    %v7756 = vunpack.c.h.bf16 %v7724
    %v7757 = vunpack.c.h.bf16 %v7725
    %v7758 = vunpack.c.h.bf16 %v7726
    %v7759 = vunpack.c.h.bf16 %v7738
    %v7760 = vunpack.c.l.bf16 %v7727
    %v7761 = vunpack.c.l.bf16 %v7728
    %v7762 = vunpack.c.l.bf16 %v7729
    %v7763 = vunpack.c.l.bf16 %v7742
    %v7764 = vunpack.c.h.bf16 %v7727
    %v7765 = vunpack.c.h.bf16 %v7728
    %v7766 = vunpack.c.h.bf16 %v7729
    %v7767 = vunpack.c.h.bf16 %v7742
    %v7768 = vunpack.c.l.bf16 %v7744
    %v7769 = vunpack.c.h.bf16 %v7744
    %v7770 = vunpack.c.l.bf16 %v7745
    %v7771 = vunpack.c.h.bf16 %v7745
    %v7772 = vunpack.c.l.bf16 %v7746
    %v7773 = vunpack.c.h.bf16 %v7746
    %v7774 = vunpack.c.l.bf16 %v7747
    %v7775 = vunpack.c.h.bf16 %v7747
    %v7776 = vunpack.c.l.bf16 %v7748
    %v7777 = vunpack.c.h.bf16 %v7748
    %v7778 = vunpack.c.l.bf16 %v7749
    %v7779 = vunpack.c.h.bf16 %v7749
    %v7780 = vunpack.c.l.bf16 %v7750
    %v7781 = vunpack.c.h.bf16 %v7750
    %v7782 = vunpack.c.l.bf16 %v7751
    %v7783 = vunpack.c.h.bf16 %v7751
    %v7784 = vmul.f32 %v7752, %v7768
    %v7785 = vmul.f32 %v7753, %v7769
    %v7786 = vmul.f32 %v7754, %v7770
    %v7787 = vmul.f32 %v7755, %v7771
    %v7788 = vmul.f32 %v7756, %v7772
    %v7789 = vmul.f32 %v7757, %v7773
    %v7790 = vmul.f32 %v7758, %v7774
    %v7791 = vmul.f32 %v7759, %v7775
    %v7792 = vmul.f32 %v7760, %v7776
    %v7793 = vmul.f32 %v7761, %v7777
    %v7794 = vmul.f32 %v7762, %v7778
    %v7795 = vmul.f32 %v7763, %v7779
    %v7796 = vmul.f32 %v7764, %v7780
    %v7797 = vmul.f32 %v7765, %v7781
    %v7798 = vmul.f32 %v7766, %v7782
    %v7799 = vmul.f32 %v7767, %v7783
    %v7800 = vpack.c.bf16 %v7785, %v7784
    %v7801 = vpack.c.bf16 %v7787, %v7786
    %v7802 = vpack.c.bf16 %v7789, %v7788
    %v7803 = vpack.c.bf16 %v7791, %v7790
    %v7804 = vpack.c.bf16 %v7793, %v7792
    %v7805 = vpack.c.bf16 %v7795, %v7794
    %v7806 = vpack.c.bf16 %v7797, %v7796
    %v7807 = vpack.c.bf16 %v7799, %v7798
    %7808 = vst [vmem:[#allocation2 + $0x180] sm:$0xff] %v7800
    %7809 = vst [vmem:[#allocation2 + $0x188] sm:$0xff] %v7801
    %7810 = vst [vmem:[#allocation2 + $0x190] sm:$0xff] %v7802
    %7811 = vst [vmem:[#allocation2 + $0x198] sm:$0xff] %v7803
    %7812 = vst [vmem:[#allocation2 + $0x1a0] sm:$0xff] %v7804
    %7813 = vst [vmem:[#allocation2 + $0x1a8] sm:$0xff] %v7805
    %7814 = vst [vmem:[#allocation2 + $0x1b0] sm:$0xff] %v7806
    %7815 = vst [vmem:[#allocation2 + $0x1b8] sm:$0xff] %v7807
    %7816 = vrot.lane.b32.xlu0 %v7094, 112
    %v7817 = vpop.permute.xlu0 %7816
    %7818 = vrot.lane.b32.xlu0 %v7095, 112
    %v7819 = vpop.permute.xlu0 %7818
    %7820 = vrot.lane.b32.xlu0 %v7096, 112
    %v7821 = vpop.permute.xlu0 %7820
    %7822 = vrot.lane.b32.xlu0 %v7072, 112
    %v7823 = vpop.permute.xlu0 %7822
    %7824 = vrot.lane.b32.xlu0 %v7097, 112
    %v7825 = vpop.permute.xlu0 %7824
    %7826 = vrot.lane.b32.xlu0 %v7098, 112
    %v7827 = vpop.permute.xlu0 %7826
    %7828 = vrot.lane.b32.xlu0 %v7099, 112
    %v7829 = vpop.permute.xlu0 %7828
    %7830 = vrot.lane.b32.xlu0 %v7073, 112
    %v7831 = vpop.permute.xlu0 %7830
    %v7832 = vsel %vm947, %v7817, %v7819
    %v7833 = vsel %vm947, %v7819, %v7821
    %v7834 = vsel %vm947, %v7821, %v7823
    %v7835 = vsel %vm947, %v7825, %v7827
    %v7836 = vsel %vm947, %v7827, %v7829
    %v7837 = vsel %vm947, %v7829, %v7831
    %v7846 = vsel %vm960, %v7823, %v7817
    %v7850 = vsel %vm960, %v7831, %v7825
    %v7852 = vld [vmem:[#allocation3 + $0x1c0] sm:$0xff]
    %v7853 = vld [vmem:[#allocation3 + $0x1c8] sm:$0xff]
    %v7854 = vld [vmem:[#allocation3 + $0x1d0] sm:$0xff]
    %v7855 = vld [vmem:[#allocation3 + $0x1d8] sm:$0xff]
    %v7856 = vld [vmem:[#allocation3 + $0x1e0] sm:$0xff]
    %v7857 = vld [vmem:[#allocation3 + $0x1e8] sm:$0xff]
    %v7858 = vld [vmem:[#allocation3 + $0x1f0] sm:$0xff]
    %v7859 = vld [vmem:[#allocation3 + $0x1f8] sm:$0xff]
    %v7860 = vunpack.c.l.bf16 %v7832
    %v7861 = vunpack.c.l.bf16 %v7833
    %v7862 = vunpack.c.l.bf16 %v7834
    %v7863 = vunpack.c.l.bf16 %v7846
    %v7864 = vunpack.c.h.bf16 %v7832
    %v7865 = vunpack.c.h.bf16 %v7833
    %v7866 = vunpack.c.h.bf16 %v7834
    %v7867 = vunpack.c.h.bf16 %v7846
    %v7868 = vunpack.c.l.bf16 %v7835
    %v7869 = vunpack.c.l.bf16 %v7836
    %v7870 = vunpack.c.l.bf16 %v7837
    %v7871 = vunpack.c.l.bf16 %v7850
    %v7872 = vunpack.c.h.bf16 %v7835
    %v7873 = vunpack.c.h.bf16 %v7836
    %v7874 = vunpack.c.h.bf16 %v7837
    %v7875 = vunpack.c.h.bf16 %v7850
    %v7876 = vunpack.c.l.bf16 %v7852
    %v7877 = vunpack.c.h.bf16 %v7852
    %v7878 = vunpack.c.l.bf16 %v7853
    %v7879 = vunpack.c.h.bf16 %v7853
    %v7880 = vunpack.c.l.bf16 %v7854
    %v7881 = vunpack.c.h.bf16 %v7854
    %v7882 = vunpack.c.l.bf16 %v7855
    %v7883 = vunpack.c.h.bf16 %v7855
    %v7884 = vunpack.c.l.bf16 %v7856
    %v7885 = vunpack.c.h.bf16 %v7856
    %v7886 = vunpack.c.l.bf16 %v7857
    %v7887 = vunpack.c.h.bf16 %v7857
    %v7888 = vunpack.c.l.bf16 %v7858
    %v7889 = vunpack.c.h.bf16 %v7858
    %v7890 = vunpack.c.l.bf16 %v7859
    %v7891 = vunpack.c.h.bf16 %v7859
    %v7892 = vmul.f32 %v7860, %v7876
    %v7893 = vmul.f32 %v7861, %v7877
    %v7894 = vmul.f32 %v7862, %v7878
    %v7895 = vmul.f32 %v7863, %v7879
    %v7896 = vmul.f32 %v7864, %v7880
    %v7897 = vmul.f32 %v7865, %v7881
    %v7898 = vmul.f32 %v7866, %v7882
    %v7899 = vmul.f32 %v7867, %v7883
    %v7900 = vmul.f32 %v7868, %v7884
    %v7901 = vmul.f32 %v7869, %v7885
    %v7902 = vmul.f32 %v7870, %v7886
    %v7903 = vmul.f32 %v7871, %v7887
    %v7904 = vmul.f32 %v7872, %v7888
    %v7905 = vmul.f32 %v7873, %v7889
    %v7906 = vmul.f32 %v7874, %v7890
    %v7907 = vmul.f32 %v7875, %v7891
    %v7908 = vpack.c.bf16 %v7893, %v7892
    %v7909 = vpack.c.bf16 %v7895, %v7894
    %v7910 = vpack.c.bf16 %v7897, %v7896
    %v7911 = vpack.c.bf16 %v7899, %v7898
    %v7912 = vpack.c.bf16 %v7901, %v7900
    %v7913 = vpack.c.bf16 %v7903, %v7902
    %v7914 = vpack.c.bf16 %v7905, %v7904
    %v7915 = vpack.c.bf16 %v7907, %v7906
    %7916 = vst [vmem:[#allocation2 + $0x1c0] sm:$0xff] %v7908
    %7917 = vst [vmem:[#allocation2 + $0x1c8] sm:$0xff] %v7909
    %7918 = vst [vmem:[#allocation2 + $0x1d0] sm:$0xff] %v7910
    %7919 = vst [vmem:[#allocation2 + $0x1d8] sm:$0xff] %v7911
    %7920 = vst [vmem:[#allocation2 + $0x1e0] sm:$0xff] %v7912
    %7921 = vst [vmem:[#allocation2 + $0x1e8] sm:$0xff] %v7913
    %7922 = vst [vmem:[#allocation2 + $0x1f0] sm:$0xff] %v7914
    %7923 = vst [vmem:[#allocation2 + $0x1f8] sm:$0xff] %v7915
    %7924 = vrot.lane.b32.xlu0 %v7094, 111
    %v7925 = vpop.permute.xlu0 %7924
    %7926 = vrot.lane.b32.xlu0 %v7095, 111
    %v7927 = vpop.permute.xlu0 %7926
    %7928 = vrot.lane.b32.xlu0 %v7096, 111
    %v7929 = vpop.permute.xlu0 %7928
    %7930 = vrot.lane.b32.xlu0 %v7072, 111
    %v7931 = vpop.permute.xlu0 %7930
    %7932 = vrot.lane.b32.xlu0 %v7097, 111
    %v7933 = vpop.permute.xlu0 %7932
    %7934 = vrot.lane.b32.xlu0 %v7098, 111
    %v7935 = vpop.permute.xlu0 %7934
    %7936 = vrot.lane.b32.xlu0 %v7099, 111
    %v7937 = vpop.permute.xlu0 %7936
    %7938 = vrot.lane.b32.xlu0 %v7073, 111
    %v7939 = vpop.permute.xlu0 %7938
    %v7940 = vsel %vm1057, %v7925, %v7927
    %v7941 = vsel %vm1057, %v7927, %v7929
    %v7942 = vsel %vm1057, %v7929, %v7931
    %v7943 = vsel %vm1057, %v7933, %v7935
    %v7944 = vsel %vm1057, %v7935, %v7937
    %v7945 = vsel %vm1057, %v7937, %v7939
    %v7954 = vsel %vm1070, %v7931, %v7925
    %v7958 = vsel %vm1070, %v7939, %v7933
    %v7960 = vld [vmem:[#allocation3 + $0x200] sm:$0xff]
    %v7961 = vld [vmem:[#allocation3 + $0x208] sm:$0xff]
    %v7962 = vld [vmem:[#allocation3 + $0x210] sm:$0xff]
    %v7963 = vld [vmem:[#allocation3 + $0x218] sm:$0xff]
    %v7964 = vld [vmem:[#allocation3 + $0x220] sm:$0xff]
    %v7965 = vld [vmem:[#allocation3 + $0x228] sm:$0xff]
    %v7966 = vld [vmem:[#allocation3 + $0x230] sm:$0xff]
    %v7967 = vld [vmem:[#allocation3 + $0x238] sm:$0xff]
    %v7968 = vunpack.c.l.bf16 %v7940
    %v7969 = vunpack.c.l.bf16 %v7941
    %v7970 = vunpack.c.l.bf16 %v7942
    %v7971 = vunpack.c.l.bf16 %v7954
    %v7972 = vunpack.c.h.bf16 %v7940
    %v7973 = vunpack.c.h.bf16 %v7941
    %v7974 = vunpack.c.h.bf16 %v7942
    %v7975 = vunpack.c.h.bf16 %v7954
    %v7976 = vunpack.c.l.bf16 %v7943
    %v7977 = vunpack.c.l.bf16 %v7944
    %v7978 = vunpack.c.l.bf16 %v7945
    %v7979 = vunpack.c.l.bf16 %v7958
    %v7980 = vunpack.c.h.bf16 %v7943
    %v7981 = vunpack.c.h.bf16 %v7944
    %v7982 = vunpack.c.h.bf16 %v7945
    %v7983 = vunpack.c.h.bf16 %v7958
    %v7984 = vunpack.c.l.bf16 %v7960
    %v7985 = vunpack.c.h.bf16 %v7960
    %v7986 = vunpack.c.l.bf16 %v7961
    %v7987 = vunpack.c.h.bf16 %v7961
    %v7988 = vunpack.c.l.bf16 %v7962
    %v7989 = vunpack.c.h.bf16 %v7962
    %v7990 = vunpack.c.l.bf16 %v7963
    %v7991 = vunpack.c.h.bf16 %v7963
    %v7992 = vunpack.c.l.bf16 %v7964
    %v7993 = vunpack.c.h.bf16 %v7964
    %v7994 = vunpack.c.l.bf16 %v7965
    %v7995 = vunpack.c.h.bf16 %v7965
    %v7996 = vunpack.c.l.bf16 %v7966
    %v7997 = vunpack.c.h.bf16 %v7966
    %v7998 = vunpack.c.l.bf16 %v7967
    %v7999 = vunpack.c.h.bf16 %v7967
    %v8000 = vmul.f32 %v7968, %v7984
    %v8001 = vmul.f32 %v7969, %v7985
    %v8002 = vmul.f32 %v7970, %v7986
    %v8003 = vmul.f32 %v7971, %v7987
    %v8004 = vmul.f32 %v7972, %v7988
    %v8005 = vmul.f32 %v7973, %v7989
    %v8006 = vmul.f32 %v7974, %v7990
    %v8007 = vmul.f32 %v7975, %v7991
    %v8008 = vmul.f32 %v7976, %v7992
    %v8009 = vmul.f32 %v7977, %v7993
    %v8010 = vmul.f32 %v7978, %v7994
    %v8011 = vmul.f32 %v7979, %v7995
    %v8012 = vmul.f32 %v7980, %v7996
    %v8013 = vmul.f32 %v7981, %v7997
    %v8014 = vmul.f32 %v7982, %v7998
    %v8015 = vmul.f32 %v7983, %v7999
    %v8016 = vpack.c.bf16 %v8001, %v8000
    %v8017 = vpack.c.bf16 %v8003, %v8002
    %v8018 = vpack.c.bf16 %v8005, %v8004
    %v8019 = vpack.c.bf16 %v8007, %v8006
    %v8020 = vpack.c.bf16 %v8009, %v8008
    %v8021 = vpack.c.bf16 %v8011, %v8010
    %v8022 = vpack.c.bf16 %v8013, %v8012
    %v8023 = vpack.c.bf16 %v8015, %v8014
    %8024 = vst [vmem:[#allocation2 + $0x200] sm:$0xff] %v8016
    %8025 = vst [vmem:[#allocation2 + $0x208] sm:$0xff] %v8017
    %8026 = vst [vmem:[#allocation2 + $0x210] sm:$0xff] %v8018
    %8027 = vst [vmem:[#allocation2 + $0x218] sm:$0xff] %v8019
    %8028 = vst [vmem:[#allocation2 + $0x220] sm:$0xff] %v8020
    %8029 = vst [vmem:[#allocation2 + $0x228] sm:$0xff] %v8021
    %8030 = vst [vmem:[#allocation2 + $0x230] sm:$0xff] %v8022
    %8031 = vst [vmem:[#allocation2 + $0x238] sm:$0xff] %v8023
    %v8032 = vld [vmem:[#allocation11] sm:$0xff]
    %v8033 = vld [vmem:[#allocation11 + $0x8] sm:$0xf]
    %v8034 = vld [vmem:[#allocation11 + $0xc] sm:$0xff]
    %v8035 = vld [vmem:[#allocation11 + $0x14] sm:$0xf]
    %v8036 = vld [vmem:[#allocation11 + $0x18] sm:$0xff]
    %v8037 = vld [vmem:[#allocation11 + $0x20] sm:$0xf]
    %v8038 = vld [vmem:[#allocation11 + $0x24] sm:$0xff]
    %v8039 = vld [vmem:[#allocation11 + $0x2c] sm:$0xf]
    %v8040 = vld [vmem:[#allocation2] sm:$0xff]
    %v8041 = vld [vmem:[#allocation2 + $0x8] sm:$0xff]
    %v8042 = vld [vmem:[#allocation2 + $0x10] sm:$0xff]
    %v8043 = vld [vmem:[#allocation2 + $0x18] sm:$0xff]
    %v8044 = vld [vmem:[#allocation2 + $0x20] sm:$0xff]
    %v8045 = vld [vmem:[#allocation2 + $0x28] sm:$0xff]
    %v8046 = vld [vmem:[#allocation2 + $0x30] sm:$0xff]
    %v8047 = vld [vmem:[#allocation2 + $0x38] sm:$0xff]
    %v8048 = vld [vmem:[#allocation2 + $0x40] sm:$0xff]
    %v8049 = vld [vmem:[#allocation2 + $0x48] sm:$0xff]
    %v8050 = vld [vmem:[#allocation2 + $0x50] sm:$0xff]
    %v8051 = vld [vmem:[#allocation2 + $0x58] sm:$0xff]
    %v8052 = vld [vmem:[#allocation2 + $0x60] sm:$0xff]
    %v8053 = vld [vmem:[#allocation2 + $0x68] sm:$0xff]
    %v8054 = vld [vmem:[#allocation2 + $0x70] sm:$0xff]
    %v8055 = vld [vmem:[#allocation2 + $0x78] sm:$0xff]
    %v8056 = vld [vmem:[#allocation2 + $0x80] sm:$0xff]
    %v8057 = vld [vmem:[#allocation2 + $0x88] sm:$0xff]
    %v8058 = vld [vmem:[#allocation2 + $0x90] sm:$0xff]
    %v8059 = vld [vmem:[#allocation2 + $0x98] sm:$0xff]
    %v8060 = vld [vmem:[#allocation2 + $0xa0] sm:$0xff]
    %v8061 = vld [vmem:[#allocation2 + $0xa8] sm:$0xff]
    %v8062 = vld [vmem:[#allocation2 + $0xb0] sm:$0xff]
    %v8063 = vld [vmem:[#allocation2 + $0xb8] sm:$0xff]
    %v8064 = vld [vmem:[#allocation2 + $0xc0] sm:$0xff]
    %v8065 = vld [vmem:[#allocation2 + $0xc8] sm:$0xff]
    %v8066 = vld [vmem:[#allocation2 + $0xd0] sm:$0xff]
    %v8067 = vld [vmem:[#allocation2 + $0xd8] sm:$0xff]
    %v8068 = vld [vmem:[#allocation2 + $0xe0] sm:$0xff]
    %v8069 = vld [vmem:[#allocation2 + $0xe8] sm:$0xff]
    %v8070 = vld [vmem:[#allocation2 + $0xf0] sm:$0xff]
    %v8071 = vld [vmem:[#allocation2 + $0xf8] sm:$0xff]
    %v8072 = vld [vmem:[#allocation2 + $0x100] sm:$0xff]
    %v8073 = vld [vmem:[#allocation2 + $0x108] sm:$0xff]
    %v8074 = vld [vmem:[#allocation2 + $0x110] sm:$0xff]
    %v8075 = vld [vmem:[#allocation2 + $0x118] sm:$0xff]
    %v8076 = vld [vmem:[#allocation2 + $0x120] sm:$0xff]
    %v8077 = vld [vmem:[#allocation2 + $0x128] sm:$0xff]
    %v8078 = vld [vmem:[#allocation2 + $0x130] sm:$0xff]
    %v8079 = vld [vmem:[#allocation2 + $0x138] sm:$0xff]
    %v8080 = vld [vmem:[#allocation2 + $0x140] sm:$0xff]
    %v8081 = vld [vmem:[#allocation2 + $0x148] sm:$0xff]
    %v8082 = vld [vmem:[#allocation2 + $0x150] sm:$0xff]
    %v8083 = vld [vmem:[#allocation2 + $0x158] sm:$0xff]
    %v8084 = vld [vmem:[#allocation2 + $0x160] sm:$0xff]
    %v8085 = vld [vmem:[#allocation2 + $0x168] sm:$0xff]
    %v8086 = vld [vmem:[#allocation2 + $0x170] sm:$0xff]
    %v8087 = vld [vmem:[#allocation2 + $0x178] sm:$0xff]
    %v8088 = vld [vmem:[#allocation2 + $0x180] sm:$0xff]
    %v8089 = vld [vmem:[#allocation2 + $0x188] sm:$0xff]
    %v8090 = vld [vmem:[#allocation2 + $0x190] sm:$0xff]
    %v8091 = vld [vmem:[#allocation2 + $0x198] sm:$0xff]
    %v8092 = vld [vmem:[#allocation2 + $0x1a0] sm:$0xff]
    %v8093 = vld [vmem:[#allocation2 + $0x1a8] sm:$0xff]
    %v8094 = vld [vmem:[#allocation2 + $0x1b0] sm:$0xff]
    %v8095 = vld [vmem:[#allocation2 + $0x1b8] sm:$0xff]
    %v8096 = vld [vmem:[#allocation2 + $0x1c0] sm:$0xff]
    %v8097 = vld [vmem:[#allocation2 + $0x1c8] sm:$0xff]
    %v8098 = vld [vmem:[#allocation2 + $0x1d0] sm:$0xff]
    %v8099 = vld [vmem:[#allocation2 + $0x1d8] sm:$0xff]
    %v8100 = vld [vmem:[#allocation2 + $0x1e0] sm:$0xff]
    %v8101 = vld [vmem:[#allocation2 + $0x1e8] sm:$0xff]
    %v8102 = vld [vmem:[#allocation2 + $0x1f0] sm:$0xff]
    %v8103 = vld [vmem:[#allocation2 + $0x1f8] sm:$0xff]
    %v8104 = vld [vmem:[#allocation2 + $0x200] sm:$0xff]
    %v8105 = vld [vmem:[#allocation2 + $0x208] sm:$0xff]
    %v8106 = vld [vmem:[#allocation2 + $0x210] sm:$0xff]
    %v8107 = vld [vmem:[#allocation2 + $0x218] sm:$0xff]
    %v8108 = vld [vmem:[#allocation2 + $0x220] sm:$0xff]
    %v8109 = vld [vmem:[#allocation2 + $0x228] sm:$0xff]
    %v8110 = vld [vmem:[#allocation2 + $0x230] sm:$0xff]
    %v8111 = vld [vmem:[#allocation2 + $0x238] sm:$0xff]
    %v8112 = vld [vmem:[%s11] sm:$0xff]
    %v8113 = vld [vmem:[%s11 + $0x8] sm:$0xff]
    %v8114 = vld [vmem:[%s11 + $0x10] sm:$0xff]
    %v8115 = vld [vmem:[%s11 + $0x18] sm:$0xff]
    %8117 = vset.pattern.permute.xlu0 0
    %8118 = vperm.xlu0 %8117, %v8112
    %v8119 = vpop.permute.xlu0 %8118
    %8122 = vset.pattern.permute.xlu0 0
    %8123 = vperm.xlu0 %8122, %v8113
    %v8124 = vpop.permute.xlu0 %8123
    %8127 = vset.pattern.permute.xlu0 0
    %8128 = vperm.xlu0 %8127, %v8114
    %v8129 = vpop.permute.xlu0 %8128
    %8132 = vset.pattern.permute.xlu0 0
    %8133 = vperm.xlu0 %8132, %v8115
    %v8134 = vpop.permute.xlu0 %8133
    %v8144 = vunpack.c.l.b16 %v8032
    %v8145 = vunpack.c.h.b16 %v8032
    %v8146 = vunpack.c.l.b16 %v8033
    %v8147 = vunpack.c.l.b16 %v8034
    %v8148 = vunpack.c.h.b16 %v8034
    %v8149 = vunpack.c.l.b16 %v8035
    %v8150 = vunpack.c.l.b16 %v8036
    %v8151 = vunpack.c.h.b16 %v8036
    %v8152 = vunpack.c.l.b16 %v8037
    %v8153 = vunpack.c.l.b16 %v8038
    %v8154 = vunpack.c.h.b16 %v8038
    %v8155 = vunpack.c.l.b16 %v8039
    %v8156 = vpack.c.b16 %v8147, %v8144
    %v8157 = vpack.c.b16 %v8148, %v8145
    %v8158 = vpack.c.b16 %v8149, %v8146
    %v8159 = vpack.c.b16 %v8153, %v8150
    %v8160 = vpack.c.b16 %v8154, %v8151
    %v8161 = vpack.c.b16 %v8155, %v8152
    %v8238 = vunpack.c.l.b16 %v8040
    %v8239 = vunpack.c.h.b16 %v8040
    %v8240 = vunpack.c.l.b16 %v8041
    %v8241 = vunpack.c.h.b16 %v8041
    %v8242 = vunpack.c.l.b16 %v8042
    %v8243 = vunpack.c.h.b16 %v8042
    %v8244 = vunpack.c.l.b16 %v8043
    %v8245 = vunpack.c.h.b16 %v8043
    %v8246 = vunpack.c.l.b16 %v8044
    %v8247 = vunpack.c.h.b16 %v8044
    %v8248 = vunpack.c.l.b16 %v8045
    %v8249 = vunpack.c.h.b16 %v8045
    %v8250 = vunpack.c.l.b16 %v8046
    %v8251 = vunpack.c.h.b16 %v8046
    %v8252 = vunpack.c.l.b16 %v8047
    %v8253 = vunpack.c.h.b16 %v8047
    %v8254 = vunpack.c.l.b16 %v8048
    %v8255 = vunpack.c.h.b16 %v8048
    %v8256 = vunpack.c.l.b16 %v8049
    %v8257 = vunpack.c.h.b16 %v8049
    %v8258 = vunpack.c.l.b16 %v8050
    %v8259 = vunpack.c.h.b16 %v8050
    %v8260 = vunpack.c.l.b16 %v8051
    %v8261 = vunpack.c.h.b16 %v8051
    %v8262 = vunpack.c.l.b16 %v8052
    %v8263 = vunpack.c.h.b16 %v8052
    %v8264 = vunpack.c.l.b16 %v8053
    %v8265 = vunpack.c.h.b16 %v8053
    %v8266 = vunpack.c.l.b16 %v8054
    %v8267 = vunpack.c.h.b16 %v8054
    %v8268 = vunpack.c.l.b16 %v8055
    %v8269 = vunpack.c.h.b16 %v8055
    %v8270 = vunpack.c.l.b16 %v8056
    %v8271 = vunpack.c.h.b16 %v8056
    %v8272 = vunpack.c.l.b16 %v8057
    %v8273 = vunpack.c.h.b16 %v8057
    %v8274 = vunpack.c.l.b16 %v8058
    %v8275 = vunpack.c.h.b16 %v8058
    %v8276 = vunpack.c.l.b16 %v8059
    %v8277 = vunpack.c.h.b16 %v8059
    %v8278 = vunpack.c.l.b16 %v8060
    %v8279 = vunpack.c.h.b16 %v8060
    %v8280 = vunpack.c.l.b16 %v8061
    %v8281 = vunpack.c.h.b16 %v8061
    %v8282 = vunpack.c.l.b16 %v8062
    %v8283 = vunpack.c.h.b16 %v8062
    %v8284 = vunpack.c.l.b16 %v8063
    %v8285 = vunpack.c.h.b16 %v8063
    %v8286 = vunpack.c.l.b16 %v8064
    %v8287 = vunpack.c.h.b16 %v8064
    %v8288 = vunpack.c.l.b16 %v8065
    %v8289 = vunpack.c.h.b16 %v8065
    %v8290 = vunpack.c.l.b16 %v8066
    %v8291 = vunpack.c.h.b16 %v8066
    %v8292 = vunpack.c.l.b16 %v8067
    %v8293 = vunpack.c.h.b16 %v8067
    %v8294 = vunpack.c.l.b16 %v8068
    %v8295 = vunpack.c.h.b16 %v8068
    %v8296 = vunpack.c.l.b16 %v8069
    %v8297 = vunpack.c.h.b16 %v8069
    %v8298 = vunpack.c.l.b16 %v8070
    %v8299 = vunpack.c.h.b16 %v8070
    %v8300 = vunpack.c.l.b16 %v8071
    %v8301 = vunpack.c.h.b16 %v8071
    %v8302 = vunpack.c.l.b16 %v8072
    %v8303 = vunpack.c.h.b16 %v8072
    %v8304 = vunpack.c.l.b16 %v8073
    %v8305 = vunpack.c.h.b16 %v8073
    %v8306 = vunpack.c.l.b16 %v8074
    %v8307 = vunpack.c.h.b16 %v8074
    %v8308 = vunpack.c.l.b16 %v8075
    %v8309 = vunpack.c.h.b16 %v8075
    %v8310 = vunpack.c.l.b16 %v8076
    %v8311 = vunpack.c.h.b16 %v8076
    %v8312 = vunpack.c.l.b16 %v8077
    %v8313 = vunpack.c.h.b16 %v8077
    %v8314 = vunpack.c.l.b16 %v8078
    %v8315 = vunpack.c.h.b16 %v8078
    %v8316 = vunpack.c.l.b16 %v8079
    %v8317 = vunpack.c.h.b16 %v8079
    %v8318 = vunpack.c.l.b16 %v8080
    %v8319 = vunpack.c.h.b16 %v8080
    %v8320 = vunpack.c.l.b16 %v8081
    %v8321 = vunpack.c.h.b16 %v8081
    %v8322 = vunpack.c.l.b16 %v8082
    %v8323 = vunpack.c.h.b16 %v8082
    %v8324 = vunpack.c.l.b16 %v8083
    %v8325 = vunpack.c.h.b16 %v8083
    %v8326 = vunpack.c.l.b16 %v8084
    %v8327 = vunpack.c.h.b16 %v8084
    %v8328 = vunpack.c.l.b16 %v8085
    %v8329 = vunpack.c.h.b16 %v8085
    %v8330 = vunpack.c.l.b16 %v8086
    %v8331 = vunpack.c.h.b16 %v8086
    %v8332 = vunpack.c.l.b16 %v8087
    %v8333 = vunpack.c.h.b16 %v8087
    %v8334 = vunpack.c.l.b16 %v8088
    %v8335 = vunpack.c.h.b16 %v8088
    %v8336 = vunpack.c.l.b16 %v8089
    %v8337 = vunpack.c.h.b16 %v8089
    %v8338 = vunpack.c.l.b16 %v8090
    %v8339 = vunpack.c.h.b16 %v8090
    %v8340 = vunpack.c.l.b16 %v8091
    %v8341 = vunpack.c.h.b16 %v8091
    %v8342 = vunpack.c.l.b16 %v8092
    %v8343 = vunpack.c.h.b16 %v8092
    %v8344 = vunpack.c.l.b16 %v8093
    %v8345 = vunpack.c.h.b16 %v8093
    %v8346 = vunpack.c.l.b16 %v8094
    %v8347 = vunpack.c.h.b16 %v8094
    %v8348 = vunpack.c.l.b16 %v8095
    %v8349 = vunpack.c.h.b16 %v8095
    %v8350 = vunpack.c.l.b16 %v8096
    %v8351 = vunpack.c.h.b16 %v8096
    %v8352 = vunpack.c.l.b16 %v8097
    %v8353 = vunpack.c.h.b16 %v8097
    %v8354 = vunpack.c.l.b16 %v8098
    %v8355 = vunpack.c.h.b16 %v8098
    %v8356 = vunpack.c.l.b16 %v8099
    %v8357 = vunpack.c.h.b16 %v8099
    %v8358 = vunpack.c.l.b16 %v8100
    %v8359 = vunpack.c.h.b16 %v8100
    %v8360 = vunpack.c.l.b16 %v8101
    %v8361 = vunpack.c.h.b16 %v8101
    %v8362 = vunpack.c.l.b16 %v8102
    %v8363 = vunpack.c.h.b16 %v8102
    %v8364 = vunpack.c.l.b16 %v8103
    %v8365 = vunpack.c.h.b16 %v8103
    %v8366 = vunpack.c.l.b16 %v8104
    %v8367 = vunpack.c.h.b16 %v8104
    %v8368 = vunpack.c.l.b16 %v8105
    %v8369 = vunpack.c.h.b16 %v8105
    %v8370 = vunpack.c.l.b16 %v8106
    %v8371 = vunpack.c.h.b16 %v8106
    %v8372 = vunpack.c.l.b16 %v8107
    %v8373 = vunpack.c.h.b16 %v8107
    %v8374 = vunpack.c.l.b16 %v8108
    %v8375 = vunpack.c.h.b16 %v8108
    %v8376 = vunpack.c.l.b16 %v8109
    %v8377 = vunpack.c.h.b16 %v8109
    %v8378 = vunpack.c.l.b16 %v8110
    %v8379 = vunpack.c.h.b16 %v8110
    %v8380 = vunpack.c.l.b16 %v8111
    %v8381 = vunpack.c.h.b16 %v8111
    %v8382 = vpack.c.b16 %v8242, %v8238
    %v8383 = vpack.c.b16 %v8243, %v8239
    %v8384 = vpack.c.b16 %v8244, %v8240
    %v8385 = vpack.c.b16 %v8245, %v8241
    %v8386 = vpack.c.b16 %v8250, %v8246
    %v8387 = vpack.c.b16 %v8251, %v8247
    %v8388 = vpack.c.b16 %v8252, %v8248
    %v8389 = vpack.c.b16 %v8253, %v8249
    %v8390 = vpack.c.b16 %v8258, %v8254
    %v8391 = vpack.c.b16 %v8259, %v8255
    %v8392 = vpack.c.b16 %v8260, %v8256
    %v8393 = vpack.c.b16 %v8261, %v8257
    %v8394 = vpack.c.b16 %v8266, %v8262
    %v8395 = vpack.c.b16 %v8267, %v8263
    %v8396 = vpack.c.b16 %v8268, %v8264
    %v8397 = vpack.c.b16 %v8269, %v8265
    %v8398 = vpack.c.b16 %v8274, %v8270
    %v8399 = vpack.c.b16 %v8275, %v8271
    %v8400 = vpack.c.b16 %v8276, %v8272
    %v8401 = vpack.c.b16 %v8277, %v8273
    %v8402 = vpack.c.b16 %v8282, %v8278
    %v8403 = vpack.c.b16 %v8283, %v8279
    %v8404 = vpack.c.b16 %v8284, %v8280
    %v8405 = vpack.c.b16 %v8285, %v8281
    %v8406 = vpack.c.b16 %v8290, %v8286
    %v8407 = vpack.c.b16 %v8291, %v8287
    %v8408 = vpack.c.b16 %v8292, %v8288
    %v8409 = vpack.c.b16 %v8293, %v8289
    %v8410 = vpack.c.b16 %v8298, %v8294
    %v8411 = vpack.c.b16 %v8299, %v8295
    %v8412 = vpack.c.b16 %v8300, %v8296
    %v8413 = vpack.c.b16 %v8301, %v8297
    %v8414 = vpack.c.b16 %v8306, %v8302
    %v8415 = vpack.c.b16 %v8307, %v8303
    %v8416 = vpack.c.b16 %v8308, %v8304
    %v8417 = vpack.c.b16 %v8309, %v8305
    %v8418 = vpack.c.b16 %v8314, %v8310
    %v8419 = vpack.c.b16 %v8315, %v8311
    %v8420 = vpack.c.b16 %v8316, %v8312
    %v8421 = vpack.c.b16 %v8317, %v8313
    %v8422 = vpack.c.b16 %v8322, %v8318
    %v8423 = vpack.c.b16 %v8323, %v8319
    %v8424 = vpack.c.b16 %v8324, %v8320
    %v8425 = vpack.c.b16 %v8325, %v8321
    %v8426 = vpack.c.b16 %v8330, %v8326
    %v8427 = vpack.c.b16 %v8331, %v8327
    %v8428 = vpack.c.b16 %v8332, %v8328
    %v8429 = vpack.c.b16 %v8333, %v8329
    %v8430 = vpack.c.b16 %v8338, %v8334
    %v8431 = vpack.c.b16 %v8339, %v8335
    %v8432 = vpack.c.b16 %v8340, %v8336
    %v8433 = vpack.c.b16 %v8341, %v8337
    %v8434 = vpack.c.b16 %v8346, %v8342
    %v8435 = vpack.c.b16 %v8347, %v8343
    %v8436 = vpack.c.b16 %v8348, %v8344
    %v8437 = vpack.c.b16 %v8349, %v8345
    %v8438 = vpack.c.b16 %v8354, %v8350
    %v8439 = vpack.c.b16 %v8355, %v8351
    %v8440 = vpack.c.b16 %v8356, %v8352
    %v8441 = vpack.c.b16 %v8357, %v8353
    %v8442 = vpack.c.b16 %v8362, %v8358
    %v8443 = vpack.c.b16 %v8363, %v8359
    %v8444 = vpack.c.b16 %v8364, %v8360
    %v8445 = vpack.c.b16 %v8365, %v8361
    %v8446 = vpack.c.b16 %v8370, %v8366
    %v8447 = vpack.c.b16 %v8371, %v8367
    %v8448 = vpack.c.b16 %v8372, %v8368
    %v8449 = vpack.c.b16 %v8373, %v8369
    %v8450 = vpack.c.b16 %v8378, %v8374
    %v8451 = vpack.c.b16 %v8379, %v8375
    %v8452 = vpack.c.b16 %v8380, %v8376
    %v8453 = vpack.c.b16 %v8381, %v8377
    %v8527 = vsel %vm1645, %v8158, 0
    %v8530 = vsel %vm1645, %v8161, 0
    %8532 = vmatpush.bf16.msra.mxu0 %v8410
    %8533 = vmatpush.bf16.msra.mxu0 %v8406
    %8534 = vmatpush.bf16.msra.mxu0 %v8402
    %8535 = vmatpush.bf16.msra.mxu0 %v8398
    %8536 = vmatpush.bf16.msra.mxu0 %v8394
    %8537 = vmatpush.bf16.msra.mxu0 %v8390
    %8538 = vmatpush.bf16.msra.mxu0 %v8386
    %8539 = vmatpush.bf16.msra.mxu0 %v8382
    %8540 = vmatmul.bf16.gmra.mxu0 %v8156
    %v8541 = vpop.f32.mrf.mxu0
    %v8542 = vadd.f32 %v8119, %v8541
    %v8543 = vpop.f32.mrf.mxu0
    %v8544 = vadd.f32 %v8124, %v8543
    %8545 = vmatmul.bf16.gmra.mxu0 %v8159
    %v8546 = vpop.f32.mrf.mxu0
    %v8547 = vadd.f32 %v8129, %v8546
    %v8548 = vpop.f32.mrf.mxu0
    %v8549 = vadd.f32 %v8134, %v8548
    %8550 = vdwg.mxu0
    %8551 = vmatpush.bf16.msra.mxu0 %v8442
    %8552 = vmatpush.bf16.msra.mxu0 %v8438
    %8553 = vmatpush.bf16.msra.mxu0 %v8434
    %8554 = vmatpush.bf16.msra.mxu0 %v8430
    %8555 = vmatpush.bf16.msra.mxu0 %v8426
    %8556 = vmatpush.bf16.msra.mxu0 %v8422
    %8557 = vmatpush.bf16.msra.mxu0 %v8418
    %8558 = vmatpush.bf16.msra.mxu0 %v8414
    %8559 = vmatmul.bf16.gmra.mxu0 %v8157
    %v8560 = vpop.f32.mrf.mxu0
    %v8561 = vadd.f32 %v8542, %v8560
    %v8562 = vpop.f32.mrf.mxu0
    %v8563 = vadd.f32 %v8544, %v8562
    %8564 = vmatmul.bf16.gmra.mxu0 %v8160
    %v8565 = vpop.f32.mrf.mxu0
    %v8566 = vadd.f32 %v8547, %v8565
    %v8567 = vpop.f32.mrf.mxu0
    %v8568 = vadd.f32 %v8549, %v8567
    %8569 = vdwg.mxu0
    %8570 = vmatpush.bf16.msra.mxu0 0
    %8571 = vmatpush.bf16.msra.mxu0 0
    %8572 = vmatpush.bf16.msra.mxu0 0
    %8573 = vmatpush.bf16.msra.mxu0 0
    %8574 = vmatpush.bf16.msra.mxu0 0
    %8575 = vmatpush.bf16.msra.mxu0 0
    %8576 = vmatpush.bf16.msra.mxu0 %v8450
    %8577 = vmatpush.bf16.msra.mxu0 %v8446
    %8578 = vmatmul.bf16.gmra.mxu0 %v8527
    %v8579 = vpop.f32.mrf.mxu0
    %v8580 = vadd.f32 %v8561, %v8579
    %v8581 = vpop.f32.mrf.mxu0
    %v8582 = vadd.f32 %v8563, %v8581
    %8583 = vmatmul.bf16.gmra.mxu0 %v8530
    %v8584 = vpop.f32.mrf.mxu0
    %v8585 = vadd.f32 %v8566, %v8584
    %v8586 = vpop.f32.mrf.mxu0
    %v8587 = vadd.f32 %v8568, %v8586
    %8588 = vdwg.mxu0
    %8589 = vmatpush.bf16.msra.mxu0 %v8411
    %8590 = vmatpush.bf16.msra.mxu0 %v8407
    %8591 = vmatpush.bf16.msra.mxu0 %v8403
    %8592 = vmatpush.bf16.msra.mxu0 %v8399
    %8593 = vmatpush.bf16.msra.mxu0 %v8395
    %8594 = vmatpush.bf16.msra.mxu0 %v8391
    %8595 = vmatpush.bf16.msra.mxu0 %v8387
    %8596 = vmatpush.bf16.msra.mxu0 %v8383
    %8597 = vmatmul.bf16.gmra.mxu0 %v8156
    %v8598 = vpop.f32.mrf.mxu0
    %v8599 = vadd.f32 %v8119, %v8598
    %v8600 = vpop.f32.mrf.mxu0
    %v8601 = vadd.f32 %v8124, %v8600
    %8602 = vmatmul.bf16.gmra.mxu0 %v8159
    %v8603 = vpop.f32.mrf.mxu0
    %v8604 = vadd.f32 %v8129, %v8603
    %v8605 = vpop.f32.mrf.mxu0
    %v8606 = vadd.f32 %v8134, %v8605
    %8607 = vdwg.mxu0
    %8608 = vmatpush.bf16.msra.mxu0 %v8443
    %8609 = vmatpush.bf16.msra.mxu0 %v8439
    %8610 = vmatpush.bf16.msra.mxu0 %v8435
    %8611 = vmatpush.bf16.msra.mxu0 %v8431
    %8612 = vmatpush.bf16.msra.mxu0 %v8427
    %8613 = vmatpush.bf16.msra.mxu0 %v8423
    %8614 = vmatpush.bf16.msra.mxu0 %v8419
    %8615 = vmatpush.bf16.msra.mxu0 %v8415
    %8616 = vmatmul.bf16.gmra.mxu0 %v8157
    %v8617 = vpop.f32.mrf.mxu0
    %v8618 = vadd.f32 %v8599, %v8617
    %v8619 = vpop.f32.mrf.mxu0
    %v8620 = vadd.f32 %v8601, %v8619
    %8621 = vmatmul.bf16.gmra.mxu0 %v8160
    %v8622 = vpop.f32.mrf.mxu0
    %v8623 = vadd.f32 %v8604, %v8622
    %v8624 = vpop.f32.mrf.mxu0
    %v8625 = vadd.f32 %v8606, %v8624
    %8626 = vdwg.mxu0
    %8627 = vmatpush.bf16.msra.mxu0 0
    %8628 = vmatpush.bf16.msra.mxu0 0
    %8629 = vmatpush.bf16.msra.mxu0 0
    %8630 = vmatpush.bf16.msra.mxu0 0
    %8631 = vmatpush.bf16.msra.mxu0 0
    %8632 = vmatpush.bf16.msra.mxu0 0
    %8633 = vmatpush.bf16.msra.mxu0 %v8451
    %8634 = vmatpush.bf16.msra.mxu0 %v8447
    %8635 = vmatmul.bf16.gmra.mxu0 %v8527
    %v8636 = vpop.f32.mrf.mxu0
    %v8637 = vadd.f32 %v8618, %v8636
    %v8638 = vpop.f32.mrf.mxu0
    %v8639 = vadd.f32 %v8620, %v8638
    %8640 = vmatmul.bf16.gmra.mxu0 %v8530
    %v8641 = vpop.f32.mrf.mxu0
    %v8642 = vadd.f32 %v8623, %v8641
    %v8643 = vpop.f32.mrf.mxu0
    %v8644 = vadd.f32 %v8625, %v8643
    %8645 = vdwg.mxu0
    %8646 = vmatpush.bf16.msra.mxu0 %v8412
    %8647 = vmatpush.bf16.msra.mxu0 %v8408
    %8648 = vmatpush.bf16.msra.mxu0 %v8404
    %8649 = vmatpush.bf16.msra.mxu0 %v8400
    %8650 = vmatpush.bf16.msra.mxu0 %v8396
    %8651 = vmatpush.bf16.msra.mxu0 %v8392
    %8652 = vmatpush.bf16.msra.mxu0 %v8388
    %8653 = vmatpush.bf16.msra.mxu0 %v8384
    %8654 = vmatmul.bf16.gmra.mxu0 %v8156
    %v8655 = vpop.f32.mrf.mxu0
    %v8656 = vadd.f32 %v8119, %v8655
    %v8657 = vpop.f32.mrf.mxu0
    %v8658 = vadd.f32 %v8124, %v8657
    %8659 = vmatmul.bf16.gmra.mxu0 %v8159
    %v8660 = vpop.f32.mrf.mxu0
    %v8661 = vadd.f32 %v8129, %v8660
    %v8662 = vpop.f32.mrf.mxu0
    %v8663 = vadd.f32 %v8134, %v8662
    %8664 = vdwg.mxu0
    %8665 = vmatpush.bf16.msra.mxu0 %v8444
    %8666 = vmatpush.bf16.msra.mxu0 %v8440
    %8667 = vmatpush.bf16.msra.mxu0 %v8436
    %8668 = vmatpush.bf16.msra.mxu0 %v8432
    %8669 = vmatpush.bf16.msra.mxu0 %v8428
    %8670 = vmatpush.bf16.msra.mxu0 %v8424
    %8671 = vmatpush.bf16.msra.mxu0 %v8420
    %8672 = vmatpush.bf16.msra.mxu0 %v8416
    %8673 = vmatmul.bf16.gmra.mxu0 %v8157
    %v8674 = vpop.f32.mrf.mxu0
    %v8675 = vadd.f32 %v8656, %v8674
    %v8676 = vpop.f32.mrf.mxu0
    %v8677 = vadd.f32 %v8658, %v8676
    %8678 = vmatmul.bf16.gmra.mxu0 %v8160
    %v8679 = vpop.f32.mrf.mxu0
    %v8680 = vadd.f32 %v8661, %v8679
    %v8681 = vpop.f32.mrf.mxu0
    %v8682 = vadd.f32 %v8663, %v8681
    %8683 = vdwg.mxu0
    %8684 = vmatpush.bf16.msra.mxu0 0
    %8685 = vmatpush.bf16.msra.mxu0 0
    %8686 = vmatpush.bf16.msra.mxu0 0
    %8687 = vmatpush.bf16.msra.mxu0 0
    %8688 = vmatpush.bf16.msra.mxu0 0
    %8689 = vmatpush.bf16.msra.mxu0 0
    %8690 = vmatpush.bf16.msra.mxu0 %v8452
    %8691 = vmatpush.bf16.msra.mxu0 %v8448
    %8692 = vmatmul.bf16.gmra.mxu0 %v8527
    %v8693 = vpop.f32.mrf.mxu0
    %v8694 = vadd.f32 %v8675, %v8693
    %v8695 = vpop.f32.mrf.mxu0
    %v8696 = vadd.f32 %v8677, %v8695
    %8697 = vmatmul.bf16.gmra.mxu0 %v8530
    %v8698 = vpop.f32.mrf.mxu0
    %v8699 = vadd.f32 %v8680, %v8698
    %v8700 = vpop.f32.mrf.mxu0
    %v8701 = vadd.f32 %v8682, %v8700
    %8702 = vdwg.mxu0
    %8703 = vmatpush.bf16.msra.mxu0 %v8413
    %8704 = vmatpush.bf16.msra.mxu0 %v8409
    %8705 = vmatpush.bf16.msra.mxu0 %v8405
    %8706 = vmatpush.bf16.msra.mxu0 %v8401
    %8707 = vmatpush.bf16.msra.mxu0 %v8397
    %8708 = vmatpush.bf16.msra.mxu0 %v8393
    %8709 = vmatpush.bf16.msra.mxu0 %v8389
    %8710 = vmatpush.bf16.msra.mxu0 %v8385
    %8711 = vmatmul.bf16.gmra.mxu0 %v8156
    %v8712 = vpop.f32.mrf.mxu0
    %v8713 = vadd.f32 %v8119, %v8712
    %v8714 = vpop.f32.mrf.mxu0
    %v8715 = vadd.f32 %v8124, %v8714
    %8716 = vmatmul.bf16.gmra.mxu0 %v8159
    %v8717 = vpop.f32.mrf.mxu0
    %v8718 = vadd.f32 %v8129, %v8717
    %v8719 = vpop.f32.mrf.mxu0
    %v8720 = vadd.f32 %v8134, %v8719
    %8721 = vdwg.mxu0
    %8722 = vmatpush.bf16.msra.mxu0 %v8445
    %8723 = vmatpush.bf16.msra.mxu0 %v8441
    %8724 = vmatpush.bf16.msra.mxu0 %v8437
    %8725 = vmatpush.bf16.msra.mxu0 %v8433
    %8726 = vmatpush.bf16.msra.mxu0 %v8429
    %8727 = vmatpush.bf16.msra.mxu0 %v8425
    %8728 = vmatpush.bf16.msra.mxu0 %v8421
    %8729 = vmatpush.bf16.msra.mxu0 %v8417
    %8730 = vmatmul.bf16.gmra.mxu0 %v8157
    %v8731 = vpop.f32.mrf.mxu0
    %v8732 = vadd.f32 %v8713, %v8731
    %v8733 = vpop.f32.mrf.mxu0
    %v8734 = vadd.f32 %v8715, %v8733
    %8735 = vmatmul.bf16.gmra.mxu0 %v8160
    %v8736 = vpop.f32.mrf.mxu0
    %v8737 = vadd.f32 %v8718, %v8736
    %v8738 = vpop.f32.mrf.mxu0
    %v8739 = vadd.f32 %v8720, %v8738
    %8740 = vdwg.mxu0
    %8741 = vmatpush.bf16.msra.mxu0 0
    %8742 = vmatpush.bf16.msra.mxu0 0
    %8743 = vmatpush.bf16.msra.mxu0 0
    %8744 = vmatpush.bf16.msra.mxu0 0
    %8745 = vmatpush.bf16.msra.mxu0 0
    %8746 = vmatpush.bf16.msra.mxu0 0
    %8747 = vmatpush.bf16.msra.mxu0 %v8453
    %8748 = vmatpush.bf16.msra.mxu0 %v8449
    %8749 = vmatmul.bf16.gmra.mxu0 %v8527
    %v8750 = vpop.f32.mrf.mxu0
    %v8751 = vadd.f32 %v8732, %v8750
    %v8752 = vpop.f32.mrf.mxu0
    %v8753 = vadd.f32 %v8734, %v8752
    %8754 = vmatmul.bf16.gmra.mxu0 %v8530
    %v8755 = vpop.f32.mrf.mxu0
    %v8756 = vadd.f32 %v8737, %v8755
    %v8757 = vpop.f32.mrf.mxu0
    %v8758 = vadd.f32 %v8739, %v8757
    %8759 = vdwg.mxu0
    %v8760 = vmax.f32 %v8580, 0.0
    %v8761 = vmax.f32 %v8637, 0.0
    %v8762 = vmax.f32 %v8694, 0.0
    %v8763 = vmax.f32 %v8751, 0.0
    %v8764 = vmax.f32 %v8582, 0.0
    %v8765 = vmax.f32 %v8639, 0.0
    %v8766 = vmax.f32 %v8696, 0.0
    %v8767 = vmax.f32 %v8753, 0.0
    %v8768 = vmax.f32 %v8585, 0.0
    %v8769 = vmax.f32 %v8642, 0.0
    %v8770 = vmax.f32 %v8699, 0.0
    %v8771 = vmax.f32 %v8756, 0.0
    %v8772 = vmax.f32 %v8587, 0.0
    %v8773 = vmax.f32 %v8644, 0.0
    %v8774 = vmax.f32 %v8701, 0.0
    %v8775 = vmax.f32 %v8758, 0.0
    %v8776 = vpack.c.bf16 %v8761, %v8760
    %v8777 = vpack.c.bf16 %v8763, %v8762
    %v8778 = vpack.c.bf16 %v8765, %v8764
    %v8779 = vpack.c.bf16 %v8767, %v8766
    %v8780 = vpack.c.bf16 %v8769, %v8768
    %v8781 = vpack.c.bf16 %v8771, %v8770
    %v8782 = vpack.c.bf16 %v8773, %v8772
    %v8783 = vpack.c.bf16 %v8775, %v8774
    %v8788 = vunpack.c.h.b16 %v8777
    %v8789 = vunpack.c.h.b16 %v8779
    %v8790 = vunpack.c.h.b16 %v8781
    %v8791 = vunpack.c.h.b16 %v8783
    %v8792 = vpack.c.b16 %v8789, %v8788
    %v8793 = vpack.c.b16 %v8791, %v8790
    %8794 = vrot.lane.b32.xlu0 %v8792, 17
    %v8795 = vpop.permute.xlu0 %8794
    %8796 = vrot.lane.b32.xlu0 %v8793, 17
    %v8797 = vpop.permute.xlu0 %8796
    %v8802 = vunpack.c.l.b16 %v8776
    %v8803 = vunpack.c.h.b16 %v8776
    %v8804 = vunpack.c.l.b16 %v8777
    %v8805 = vunpack.c.l.b16 %v8778
    %v8806 = vunpack.c.h.b16 %v8778
    %v8807 = vunpack.c.l.b16 %v8779
    %v8808 = vunpack.c.l.b16 %v8780
    %v8809 = vunpack.c.h.b16 %v8780
    %v8810 = vunpack.c.l.b16 %v8781
    %v8811 = vunpack.c.l.b16 %v8782
    %v8812 = vunpack.c.h.b16 %v8782
    %v8813 = vunpack.c.l.b16 %v8783
    %v8814 = vpack.c.b16 %v8805, %v8802
    %v8815 = vpack.c.b16 %v8806, %v8803
    %v8816 = vpack.c.b16 %v8807, %v8804
    %v8817 = vpack.c.b16 %v8811, %v8808
    %v8818 = vpack.c.b16 %v8812, %v8809
    %v8819 = vpack.c.b16 %v8813, %v8810
    %8820 = vrot.lane.b32.xlu0 %v8814, 17
    %v8821 = vpop.permute.xlu0 %8820
    %8822 = vrot.lane.b32.xlu0 %v8815, 17
    %v8823 = vpop.permute.xlu0 %8822
    %8824 = vrot.lane.b32.xlu0 %v8816, 17
    %v8825 = vpop.permute.xlu0 %8824
    %8826 = vrot.lane.b32.xlu0 %v8817, 17
    %v8827 = vpop.permute.xlu0 %8826
    %8828 = vrot.lane.b32.xlu0 %v8818, 17
    %v8829 = vpop.permute.xlu0 %8828
    %8830 = vrot.lane.b32.xlu0 %v8819, 17
    %v8831 = vpop.permute.xlu0 %8830
    %v8832 = vsel %vm215, %v8821, %v8823
    %v8833 = vsel %vm215, %v8823, %v8825
    %v8834 = vsel %vm215, %v8825, %v8795
    %v8835 = vsel %vm215, %v8827, %v8829
    %v8836 = vsel %vm215, %v8829, %v8831
    %v8837 = vsel %vm215, %v8831, %v8797
    %v8846 = vsel %vm228, %v8795, %v8821
    %v8850 = vsel %vm228, %v8797, %v8827
    %v8852 = vld [vmem:[#allocation3] sm:$0xff]
    %v8853 = vld [vmem:[#allocation3 + $0x8] sm:$0xff]
    %v8854 = vld [vmem:[#allocation3 + $0x10] sm:$0xff]
    %v8855 = vld [vmem:[#allocation3 + $0x18] sm:$0xff]
    %v8856 = vld [vmem:[#allocation3 + $0x20] sm:$0xff]
    %v8857 = vld [vmem:[#allocation3 + $0x28] sm:$0xff]
    %v8858 = vld [vmem:[#allocation3 + $0x30] sm:$0xff]
    %v8859 = vld [vmem:[#allocation3 + $0x38] sm:$0xff]
    %v8860 = vunpack.c.l.bf16 %v8846
    %v8861 = vunpack.c.l.bf16 %v8832
    %v8862 = vunpack.c.l.bf16 %v8833
    %v8863 = vunpack.c.l.bf16 %v8834
    %v8864 = vunpack.c.h.bf16 %v8846
    %v8865 = vunpack.c.h.bf16 %v8832
    %v8866 = vunpack.c.h.bf16 %v8833
    %v8867 = vunpack.c.h.bf16 %v8834
    %v8868 = vunpack.c.l.bf16 %v8850
    %v8869 = vunpack.c.l.bf16 %v8835
    %v8870 = vunpack.c.l.bf16 %v8836
    %v8871 = vunpack.c.l.bf16 %v8837
    %v8872 = vunpack.c.h.bf16 %v8850
    %v8873 = vunpack.c.h.bf16 %v8835
    %v8874 = vunpack.c.h.bf16 %v8836
    %v8875 = vunpack.c.h.bf16 %v8837
    %v8876 = vunpack.c.l.bf16 %v8852
    %v8877 = vunpack.c.h.bf16 %v8852
    %v8878 = vunpack.c.l.bf16 %v8853
    %v8879 = vunpack.c.h.bf16 %v8853
    %v8880 = vunpack.c.l.bf16 %v8854
    %v8881 = vunpack.c.h.bf16 %v8854
    %v8882 = vunpack.c.l.bf16 %v8855
    %v8883 = vunpack.c.h.bf16 %v8855
    %v8884 = vunpack.c.l.bf16 %v8856
    %v8885 = vunpack.c.h.bf16 %v8856
    %v8886 = vunpack.c.l.bf16 %v8857
    %v8887 = vunpack.c.h.bf16 %v8857
    %v8888 = vunpack.c.l.bf16 %v8858
    %v8889 = vunpack.c.h.bf16 %v8858
    %v8890 = vunpack.c.l.bf16 %v8859
    %v8891 = vunpack.c.h.bf16 %v8859
    %v8892 = vmul.f32 %v8860, %v8876
    %v8893 = vmul.f32 %v8861, %v8877
    %v8894 = vmul.f32 %v8862, %v8878
    %v8895 = vmul.f32 %v8863, %v8879
    %v8896 = vmul.f32 %v8864, %v8880
    %v8897 = vmul.f32 %v8865, %v8881
    %v8898 = vmul.f32 %v8866, %v8882
    %v8899 = vmul.f32 %v8867, %v8883
    %v8900 = vmul.f32 %v8868, %v8884
    %v8901 = vmul.f32 %v8869, %v8885
    %v8902 = vmul.f32 %v8870, %v8886
    %v8903 = vmul.f32 %v8871, %v8887
    %v8904 = vmul.f32 %v8872, %v8888
    %v8905 = vmul.f32 %v8873, %v8889
    %v8906 = vmul.f32 %v8874, %v8890
    %v8907 = vmul.f32 %v8875, %v8891
    %v8908 = vpack.c.bf16 %v8893, %v8892
    %v8909 = vpack.c.bf16 %v8895, %v8894
    %v8910 = vpack.c.bf16 %v8897, %v8896
    %v8911 = vpack.c.bf16 %v8899, %v8898
    %v8912 = vpack.c.bf16 %v8901, %v8900
    %v8913 = vpack.c.bf16 %v8903, %v8902
    %v8914 = vpack.c.bf16 %v8905, %v8904
    %v8915 = vpack.c.bf16 %v8907, %v8906
    %8916 = vst [vmem:[#allocation2] sm:$0xff] %v8908
    %8917 = vst [vmem:[#allocation2 + $0x8] sm:$0xff] %v8909
    %8918 = vst [vmem:[#allocation2 + $0x10] sm:$0xff] %v8910
    %8919 = vst [vmem:[#allocation2 + $0x18] sm:$0xff] %v8911
    %8920 = vst [vmem:[#allocation2 + $0x20] sm:$0xff] %v8912
    %8921 = vst [vmem:[#allocation2 + $0x28] sm:$0xff] %v8913
    %8922 = vst [vmem:[#allocation2 + $0x30] sm:$0xff] %v8914
    %8923 = vst [vmem:[#allocation2 + $0x38] sm:$0xff] %v8915
    %8924 = vrot.lane.b32.xlu0 %v8792, 16
    %v8925 = vpop.permute.xlu0 %8924
    %8926 = vrot.lane.b32.xlu0 %v8793, 16
    %v8927 = vpop.permute.xlu0 %8926
    %8928 = vrot.lane.b32.xlu0 %v8814, 16
    %v8929 = vpop.permute.xlu0 %8928
    %8930 = vrot.lane.b32.xlu0 %v8815, 16
    %v8931 = vpop.permute.xlu0 %8930
    %8932 = vrot.lane.b32.xlu0 %v8816, 16
    %v8933 = vpop.permute.xlu0 %8932
    %8934 = vrot.lane.b32.xlu0 %v8817, 16
    %v8935 = vpop.permute.xlu0 %8934
    %8936 = vrot.lane.b32.xlu0 %v8818, 16
    %v8937 = vpop.permute.xlu0 %8936
    %8938 = vrot.lane.b32.xlu0 %v8819, 16
    %v8939 = vpop.permute.xlu0 %8938
    %v8940 = vsel %vm325, %v8929, %v8931
    %v8941 = vsel %vm325, %v8931, %v8933
    %v8942 = vsel %vm325, %v8933, %v8925
    %v8943 = vsel %vm325, %v8935, %v8937
    %v8944 = vsel %vm325, %v8937, %v8939
    %v8945 = vsel %vm325, %v8939, %v8927
    %v8954 = vsel %vm338, %v8925, %v8929
    %v8958 = vsel %vm338, %v8927, %v8935
    %v8960 = vld [vmem:[#allocation3 + $0x40] sm:$0xff]
    %v8961 = vld [vmem:[#allocation3 + $0x48] sm:$0xff]
    %v8962 = vld [vmem:[#allocation3 + $0x50] sm:$0xff]
    %v8963 = vld [vmem:[#allocation3 + $0x58] sm:$0xff]
    %v8964 = vld [vmem:[#allocation3 + $0x60] sm:$0xff]
    %v8965 = vld [vmem:[#allocation3 + $0x68] sm:$0xff]
    %v8966 = vld [vmem:[#allocation3 + $0x70] sm:$0xff]
    %v8967 = vld [vmem:[#allocation3 + $0x78] sm:$0xff]
    %v8968 = vunpack.c.l.bf16 %v8954
    %v8969 = vunpack.c.l.bf16 %v8940
    %v8970 = vunpack.c.l.bf16 %v8941
    %v8971 = vunpack.c.l.bf16 %v8942
    %v8972 = vunpack.c.h.bf16 %v8954
    %v8973 = vunpack.c.h.bf16 %v8940
    %v8974 = vunpack.c.h.bf16 %v8941
    %v8975 = vunpack.c.h.bf16 %v8942
    %v8976 = vunpack.c.l.bf16 %v8958
    %v8977 = vunpack.c.l.bf16 %v8943
    %v8978 = vunpack.c.l.bf16 %v8944
    %v8979 = vunpack.c.l.bf16 %v8945
    %v8980 = vunpack.c.h.bf16 %v8958
    %v8981 = vunpack.c.h.bf16 %v8943
    %v8982 = vunpack.c.h.bf16 %v8944
    %v8983 = vunpack.c.h.bf16 %v8945
    %v8984 = vunpack.c.l.bf16 %v8960
    %v8985 = vunpack.c.h.bf16 %v8960
    %v8986 = vunpack.c.l.bf16 %v8961
    %v8987 = vunpack.c.h.bf16 %v8961
    %v8988 = vunpack.c.l.bf16 %v8962
    %v8989 = vunpack.c.h.bf16 %v8962
    %v8990 = vunpack.c.l.bf16 %v8963
    %v8991 = vunpack.c.h.bf16 %v8963
    %v8992 = vunpack.c.l.bf16 %v8964
    %v8993 = vunpack.c.h.bf16 %v8964
    %v8994 = vunpack.c.l.bf16 %v8965
    %v8995 = vunpack.c.h.bf16 %v8965
    %v8996 = vunpack.c.l.bf16 %v8966
    %v8997 = vunpack.c.h.bf16 %v8966
    %v8998 = vunpack.c.l.bf16 %v8967
    %v8999 = vunpack.c.h.bf16 %v8967
    %v9000 = vmul.f32 %v8968, %v8984
    %v9001 = vmul.f32 %v8969, %v8985
    %v9002 = vmul.f32 %v8970, %v8986
    %v9003 = vmul.f32 %v8971, %v8987
    %v9004 = vmul.f32 %v8972, %v8988
    %v9005 = vmul.f32 %v8973, %v8989
    %v9006 = vmul.f32 %v8974, %v8990
    %v9007 = vmul.f32 %v8975, %v8991
    %v9008 = vmul.f32 %v8976, %v8992
    %v9009 = vmul.f32 %v8977, %v8993
    %v9010 = vmul.f32 %v8978, %v8994
    %v9011 = vmul.f32 %v8979, %v8995
    %v9012 = vmul.f32 %v8980, %v8996
    %v9013 = vmul.f32 %v8981, %v8997
    %v9014 = vmul.f32 %v8982, %v8998
    %v9015 = vmul.f32 %v8983, %v8999
    %v9016 = vpack.c.bf16 %v9001, %v9000
    %v9017 = vpack.c.bf16 %v9003, %v9002
    %v9018 = vpack.c.bf16 %v9005, %v9004
    %v9019 = vpack.c.bf16 %v9007, %v9006
    %v9020 = vpack.c.bf16 %v9009, %v9008
    %v9021 = vpack.c.bf16 %v9011, %v9010
    %v9022 = vpack.c.bf16 %v9013, %v9012
    %v9023 = vpack.c.bf16 %v9015, %v9014
    %9024 = vst [vmem:[#allocation2 + $0x40] sm:$0xff] %v9016
    %9025 = vst [vmem:[#allocation2 + $0x48] sm:$0xff] %v9017
    %9026 = vst [vmem:[#allocation2 + $0x50] sm:$0xff] %v9018
    %9027 = vst [vmem:[#allocation2 + $0x58] sm:$0xff] %v9019
    %9028 = vst [vmem:[#allocation2 + $0x60] sm:$0xff] %v9020
    %9029 = vst [vmem:[#allocation2 + $0x68] sm:$0xff] %v9021
    %9030 = vst [vmem:[#allocation2 + $0x70] sm:$0xff] %v9022
    %9031 = vst [vmem:[#allocation2 + $0x78] sm:$0xff] %v9023
    %9032 = vrot.lane.b32.xlu0 %v8792, 15
    %v9033 = vpop.permute.xlu0 %9032
    %9034 = vrot.lane.b32.xlu0 %v8793, 15
    %v9035 = vpop.permute.xlu0 %9034
    %9036 = vrot.lane.b32.xlu0 %v8814, 15
    %v9037 = vpop.permute.xlu0 %9036
    %9038 = vrot.lane.b32.xlu0 %v8815, 15
    %v9039 = vpop.permute.xlu0 %9038
    %9040 = vrot.lane.b32.xlu0 %v8816, 15
    %v9041 = vpop.permute.xlu0 %9040
    %9042 = vrot.lane.b32.xlu0 %v8817, 15
    %v9043 = vpop.permute.xlu0 %9042
    %9044 = vrot.lane.b32.xlu0 %v8818, 15
    %v9045 = vpop.permute.xlu0 %9044
    %9046 = vrot.lane.b32.xlu0 %v8819, 15
    %v9047 = vpop.permute.xlu0 %9046
    %v9048 = vsel %vm435, %v9037, %v9039
    %v9049 = vsel %vm435, %v9039, %v9041
    %v9050 = vsel %vm435, %v9041, %v9033
    %v9051 = vsel %vm435, %v9043, %v9045
    %v9052 = vsel %vm435, %v9045, %v9047
    %v9053 = vsel %vm435, %v9047, %v9035
    %v9062 = vsel %vm448, %v9033, %v9037
    %v9066 = vsel %vm448, %v9035, %v9043
    %v9068 = vld [vmem:[#allocation3 + $0x80] sm:$0xff]
    %v9069 = vld [vmem:[#allocation3 + $0x88] sm:$0xff]
    %v9070 = vld [vmem:[#allocation3 + $0x90] sm:$0xff]
    %v9071 = vld [vmem:[#allocation3 + $0x98] sm:$0xff]
    %v9072 = vld [vmem:[#allocation3 + $0xa0] sm:$0xff]
    %v9073 = vld [vmem:[#allocation3 + $0xa8] sm:$0xff]
    %v9074 = vld [vmem:[#allocation3 + $0xb0] sm:$0xff]
    %v9075 = vld [vmem:[#allocation3 + $0xb8] sm:$0xff]
    %v9076 = vunpack.c.l.bf16 %v9062
    %v9077 = vunpack.c.l.bf16 %v9048
    %v9078 = vunpack.c.l.bf16 %v9049
    %v9079 = vunpack.c.l.bf16 %v9050
    %v9080 = vunpack.c.h.bf16 %v9062
    %v9081 = vunpack.c.h.bf16 %v9048
    %v9082 = vunpack.c.h.bf16 %v9049
    %v9083 = vunpack.c.h.bf16 %v9050
    %v9084 = vunpack.c.l.bf16 %v9066
    %v9085 = vunpack.c.l.bf16 %v9051
    %v9086 = vunpack.c.l.bf16 %v9052
    %v9087 = vunpack.c.l.bf16 %v9053
    %v9088 = vunpack.c.h.bf16 %v9066
    %v9089 = vunpack.c.h.bf16 %v9051
    %v9090 = vunpack.c.h.bf16 %v9052
    %v9091 = vunpack.c.h.bf16 %v9053
    %v9092 = vunpack.c.l.bf16 %v9068
    %v9093 = vunpack.c.h.bf16 %v9068
    %v9094 = vunpack.c.l.bf16 %v9069
    %v9095 = vunpack.c.h.bf16 %v9069
    %v9096 = vunpack.c.l.bf16 %v9070
    %v9097 = vunpack.c.h.bf16 %v9070
    %v9098 = vunpack.c.l.bf16 %v9071
    %v9099 = vunpack.c.h.bf16 %v9071
    %v9100 = vunpack.c.l.bf16 %v9072
    %v9101 = vunpack.c.h.bf16 %v9072
    %v9102 = vunpack.c.l.bf16 %v9073
    %v9103 = vunpack.c.h.bf16 %v9073
    %v9104 = vunpack.c.l.bf16 %v9074
    %v9105 = vunpack.c.h.bf16 %v9074
    %v9106 = vunpack.c.l.bf16 %v9075
    %v9107 = vunpack.c.h.bf16 %v9075
    %v9108 = vmul.f32 %v9076, %v9092
    %v9109 = vmul.f32 %v9077, %v9093
    %v9110 = vmul.f32 %v9078, %v9094
    %v9111 = vmul.f32 %v9079, %v9095
    %v9112 = vmul.f32 %v9080, %v9096
    %v9113 = vmul.f32 %v9081, %v9097
    %v9114 = vmul.f32 %v9082, %v9098
    %v9115 = vmul.f32 %v9083, %v9099
    %v9116 = vmul.f32 %v9084, %v9100
    %v9117 = vmul.f32 %v9085, %v9101
    %v9118 = vmul.f32 %v9086, %v9102
    %v9119 = vmul.f32 %v9087, %v9103
    %v9120 = vmul.f32 %v9088, %v9104
    %v9121 = vmul.f32 %v9089, %v9105
    %v9122 = vmul.f32 %v9090, %v9106
    %v9123 = vmul.f32 %v9091, %v9107
    %v9124 = vpack.c.bf16 %v9109, %v9108
    %v9125 = vpack.c.bf16 %v9111, %v9110
    %v9126 = vpack.c.bf16 %v9113, %v9112
    %v9127 = vpack.c.bf16 %v9115, %v9114
    %v9128 = vpack.c.bf16 %v9117, %v9116
    %v9129 = vpack.c.bf16 %v9119, %v9118
    %v9130 = vpack.c.bf16 %v9121, %v9120
    %v9131 = vpack.c.bf16 %v9123, %v9122
    %9132 = vst [vmem:[#allocation2 + $0x80] sm:$0xff] %v9124
    %9133 = vst [vmem:[#allocation2 + $0x88] sm:$0xff] %v9125
    %9134 = vst [vmem:[#allocation2 + $0x90] sm:$0xff] %v9126
    %9135 = vst [vmem:[#allocation2 + $0x98] sm:$0xff] %v9127
    %9136 = vst [vmem:[#allocation2 + $0xa0] sm:$0xff] %v9128
    %9137 = vst [vmem:[#allocation2 + $0xa8] sm:$0xff] %v9129
    %9138 = vst [vmem:[#allocation2 + $0xb0] sm:$0xff] %v9130
    %9139 = vst [vmem:[#allocation2 + $0xb8] sm:$0xff] %v9131
    %9140 = vrot.lane.b32.xlu0 %v8792, 1
    %v9141 = vpop.permute.xlu0 %9140
    %9142 = vrot.lane.b32.xlu0 %v8793, 1
    %v9143 = vpop.permute.xlu0 %9142
    %9144 = vrot.lane.b32.xlu0 %v8814, 1
    %v9145 = vpop.permute.xlu0 %9144
    %9146 = vrot.lane.b32.xlu0 %v8815, 1
    %v9147 = vpop.permute.xlu0 %9146
    %9148 = vrot.lane.b32.xlu0 %v8816, 1
    %v9149 = vpop.permute.xlu0 %9148
    %9150 = vrot.lane.b32.xlu0 %v8817, 1
    %v9151 = vpop.permute.xlu0 %9150
    %9152 = vrot.lane.b32.xlu0 %v8818, 1
    %v9153 = vpop.permute.xlu0 %9152
    %9154 = vrot.lane.b32.xlu0 %v8819, 1
    %v9155 = vpop.permute.xlu0 %9154
    %v9156 = vsel %vm545, %v9145, %v9147
    %v9157 = vsel %vm545, %v9147, %v9149
    %v9158 = vsel %vm545, %v9149, %v9141
    %v9159 = vsel %vm545, %v9151, %v9153
    %v9160 = vsel %vm545, %v9153, %v9155
    %v9161 = vsel %vm545, %v9155, %v9143
    %v9170 = vsel %vm558, %v9141, %v9145
    %v9174 = vsel %vm558, %v9143, %v9151
    %v9176 = vld [vmem:[#allocation3 + $0xc0] sm:$0xff]
    %v9177 = vld [vmem:[#allocation3 + $0xc8] sm:$0xff]
    %v9178 = vld [vmem:[#allocation3 + $0xd0] sm:$0xff]
    %v9179 = vld [vmem:[#allocation3 + $0xd8] sm:$0xff]
    %v9180 = vld [vmem:[#allocation3 + $0xe0] sm:$0xff]
    %v9181 = vld [vmem:[#allocation3 + $0xe8] sm:$0xff]
    %v9182 = vld [vmem:[#allocation3 + $0xf0] sm:$0xff]
    %v9183 = vld [vmem:[#allocation3 + $0xf8] sm:$0xff]
    %v9184 = vunpack.c.l.bf16 %v9170
    %v9185 = vunpack.c.l.bf16 %v9156
    %v9186 = vunpack.c.l.bf16 %v9157
    %v9187 = vunpack.c.l.bf16 %v9158
    %v9188 = vunpack.c.h.bf16 %v9170
    %v9189 = vunpack.c.h.bf16 %v9156
    %v9190 = vunpack.c.h.bf16 %v9157
    %v9191 = vunpack.c.h.bf16 %v9158
    %v9192 = vunpack.c.l.bf16 %v9174
    %v9193 = vunpack.c.l.bf16 %v9159
    %v9194 = vunpack.c.l.bf16 %v9160
    %v9195 = vunpack.c.l.bf16 %v9161
    %v9196 = vunpack.c.h.bf16 %v9174
    %v9197 = vunpack.c.h.bf16 %v9159
    %v9198 = vunpack.c.h.bf16 %v9160
    %v9199 = vunpack.c.h.bf16 %v9161
    %v9200 = vunpack.c.l.bf16 %v9176
    %v9201 = vunpack.c.h.bf16 %v9176
    %v9202 = vunpack.c.l.bf16 %v9177
    %v9203 = vunpack.c.h.bf16 %v9177
    %v9204 = vunpack.c.l.bf16 %v9178
    %v9205 = vunpack.c.h.bf16 %v9178
    %v9206 = vunpack.c.l.bf16 %v9179
    %v9207 = vunpack.c.h.bf16 %v9179
    %v9208 = vunpack.c.l.bf16 %v9180
    %v9209 = vunpack.c.h.bf16 %v9180
    %v9210 = vunpack.c.l.bf16 %v9181
    %v9211 = vunpack.c.h.bf16 %v9181
    %v9212 = vunpack.c.l.bf16 %v9182
    %v9213 = vunpack.c.h.bf16 %v9182
    %v9214 = vunpack.c.l.bf16 %v9183
    %v9215 = vunpack.c.h.bf16 %v9183
    %v9216 = vmul.f32 %v9184, %v9200
    %v9217 = vmul.f32 %v9185, %v9201
    %v9218 = vmul.f32 %v9186, %v9202
    %v9219 = vmul.f32 %v9187, %v9203
    %v9220 = vmul.f32 %v9188, %v9204
    %v9221 = vmul.f32 %v9189, %v9205
    %v9222 = vmul.f32 %v9190, %v9206
    %v9223 = vmul.f32 %v9191, %v9207
    %v9224 = vmul.f32 %v9192, %v9208
    %v9225 = vmul.f32 %v9193, %v9209
    %v9226 = vmul.f32 %v9194, %v9210
    %v9227 = vmul.f32 %v9195, %v9211
    %v9228 = vmul.f32 %v9196, %v9212
    %v9229 = vmul.f32 %v9197, %v9213
    %v9230 = vmul.f32 %v9198, %v9214
    %v9231 = vmul.f32 %v9199, %v9215
    %v9232 = vpack.c.bf16 %v9217, %v9216
    %v9233 = vpack.c.bf16 %v9219, %v9218
    %v9234 = vpack.c.bf16 %v9221, %v9220
    %v9235 = vpack.c.bf16 %v9223, %v9222
    %v9236 = vpack.c.bf16 %v9225, %v9224
    %v9237 = vpack.c.bf16 %v9227, %v9226
    %v9238 = vpack.c.bf16 %v9229, %v9228
    %v9239 = vpack.c.bf16 %v9231, %v9230
    %9240 = vst [vmem:[#allocation2 + $0xc0] sm:$0xff] %v9232
    %9241 = vst [vmem:[#allocation2 + $0xc8] sm:$0xff] %v9233
    %9242 = vst [vmem:[#allocation2 + $0xd0] sm:$0xff] %v9234
    %9243 = vst [vmem:[#allocation2 + $0xd8] sm:$0xff] %v9235
    %9244 = vst [vmem:[#allocation2 + $0xe0] sm:$0xff] %v9236
    %9245 = vst [vmem:[#allocation2 + $0xe8] sm:$0xff] %v9237
    %9246 = vst [vmem:[#allocation2 + $0xf0] sm:$0xff] %v9238
    %9247 = vst [vmem:[#allocation2 + $0xf8] sm:$0xff] %v9239
    %v9248 = vld [vmem:[#allocation3 + $0x100] sm:$0xff]
    %v9249 = vld [vmem:[#allocation3 + $0x108] sm:$0xff]
    %v9250 = vld [vmem:[#allocation3 + $0x110] sm:$0xff]
    %v9251 = vld [vmem:[#allocation3 + $0x118] sm:$0xff]
    %v9252 = vld [vmem:[#allocation3 + $0x120] sm:$0xff]
    %v9253 = vld [vmem:[#allocation3 + $0x128] sm:$0xff]
    %v9254 = vld [vmem:[#allocation3 + $0x130] sm:$0xff]
    %v9255 = vld [vmem:[#allocation3 + $0x138] sm:$0xff]
    %v9256 = vunpack.c.l.bf16 %v8776
    %v9257 = vunpack.c.h.bf16 %v8776
    %v9258 = vunpack.c.l.bf16 %v8777
    %v9259 = vunpack.c.h.bf16 %v8777
    %v9260 = vunpack.c.l.bf16 %v8778
    %v9261 = vunpack.c.h.bf16 %v8778
    %v9262 = vunpack.c.l.bf16 %v8779
    %v9263 = vunpack.c.h.bf16 %v8779
    %v9264 = vunpack.c.l.bf16 %v8780
    %v9265 = vunpack.c.h.bf16 %v8780
    %v9266 = vunpack.c.l.bf16 %v8781
    %v9267 = vunpack.c.h.bf16 %v8781
    %v9268 = vunpack.c.l.bf16 %v8782
    %v9269 = vunpack.c.h.bf16 %v8782
    %v9270 = vunpack.c.l.bf16 %v8783
    %v9271 = vunpack.c.h.bf16 %v8783
    %v9272 = vunpack.c.l.bf16 %v9248
    %v9273 = vunpack.c.h.bf16 %v9248
    %v9274 = vunpack.c.l.bf16 %v9249
    %v9275 = vunpack.c.h.bf16 %v9249
    %v9276 = vunpack.c.l.bf16 %v9250
    %v9277 = vunpack.c.h.bf16 %v9250
    %v9278 = vunpack.c.l.bf16 %v9251
    %v9279 = vunpack.c.h.bf16 %v9251
    %v9280 = vunpack.c.l.bf16 %v9252
    %v9281 = vunpack.c.h.bf16 %v9252
    %v9282 = vunpack.c.l.bf16 %v9253
    %v9283 = vunpack.c.h.bf16 %v9253
    %v9284 = vunpack.c.l.bf16 %v9254
    %v9285 = vunpack.c.h.bf16 %v9254
    %v9286 = vunpack.c.l.bf16 %v9255
    %v9287 = vunpack.c.h.bf16 %v9255
    %v9288 = vmul.f32 %v9256, %v9272
    %v9289 = vmul.f32 %v9257, %v9273
    %v9290 = vmul.f32 %v9258, %v9274
    %v9291 = vmul.f32 %v9259, %v9275
    %v9292 = vmul.f32 %v9260, %v9276
    %v9293 = vmul.f32 %v9261, %v9277
    %v9294 = vmul.f32 %v9262, %v9278
    %v9295 = vmul.f32 %v9263, %v9279
    %v9296 = vmul.f32 %v9264, %v9280
    %v9297 = vmul.f32 %v9265, %v9281
    %v9298 = vmul.f32 %v9266, %v9282
    %v9299 = vmul.f32 %v9267, %v9283
    %v9300 = vmul.f32 %v9268, %v9284
    %v9301 = vmul.f32 %v9269, %v9285
    %v9302 = vmul.f32 %v9270, %v9286
    %v9303 = vmul.f32 %v9271, %v9287
    %v9304 = vpack.c.bf16 %v9289, %v9288
    %v9305 = vpack.c.bf16 %v9291, %v9290
    %v9306 = vpack.c.bf16 %v9293, %v9292
    %v9307 = vpack.c.bf16 %v9295, %v9294
    %v9308 = vpack.c.bf16 %v9297, %v9296
    %v9309 = vpack.c.bf16 %v9299, %v9298
    %v9310 = vpack.c.bf16 %v9301, %v9300
    %v9311 = vpack.c.bf16 %v9303, %v9302
    %9312 = vst [vmem:[#allocation2 + $0x100] sm:$0xff] %v9304
    %9313 = vst [vmem:[#allocation2 + $0x108] sm:$0xff] %v9305
    %9314 = vst [vmem:[#allocation2 + $0x110] sm:$0xff] %v9306
    %9315 = vst [vmem:[#allocation2 + $0x118] sm:$0xff] %v9307
    %9316 = vst [vmem:[#allocation2 + $0x120] sm:$0xff] %v9308
    %9317 = vst [vmem:[#allocation2 + $0x128] sm:$0xff] %v9309
    %9318 = vst [vmem:[#allocation2 + $0x130] sm:$0xff] %v9310
    %9319 = vst [vmem:[#allocation2 + $0x138] sm:$0xff] %v9311
    %9320 = vrot.lane.b32.xlu0 %v8814, 127
    %v9321 = vpop.permute.xlu0 %9320
    %9322 = vrot.lane.b32.xlu0 %v8815, 127
    %v9323 = vpop.permute.xlu0 %9322
    %9324 = vrot.lane.b32.xlu0 %v8816, 127
    %v9325 = vpop.permute.xlu0 %9324
    %9326 = vrot.lane.b32.xlu0 %v8792, 127
    %v9327 = vpop.permute.xlu0 %9326
    %9328 = vrot.lane.b32.xlu0 %v8817, 127
    %v9329 = vpop.permute.xlu0 %9328
    %9330 = vrot.lane.b32.xlu0 %v8818, 127
    %v9331 = vpop.permute.xlu0 %9330
    %9332 = vrot.lane.b32.xlu0 %v8819, 127
    %v9333 = vpop.permute.xlu0 %9332
    %9334 = vrot.lane.b32.xlu0 %v8793, 127
    %v9335 = vpop.permute.xlu0 %9334
    %v9336 = vsel %vm727, %v9321, %v9323
    %v9337 = vsel %vm727, %v9323, %v9325
    %v9338 = vsel %vm727, %v9325, %v9327
    %v9339 = vsel %vm727, %v9329, %v9331
    %v9340 = vsel %vm727, %v9331, %v9333
    %v9341 = vsel %vm727, %v9333, %v9335
    %v9350 = vsel %vm740, %v9327, %v9321
    %v9354 = vsel %vm740, %v9335, %v9329
    %v9356 = vld [vmem:[#allocation3 + $0x140] sm:$0xff]
    %v9357 = vld [vmem:[#allocation3 + $0x148] sm:$0xff]
    %v9358 = vld [vmem:[#allocation3 + $0x150] sm:$0xff]
    %v9359 = vld [vmem:[#allocation3 + $0x158] sm:$0xff]
    %v9360 = vld [vmem:[#allocation3 + $0x160] sm:$0xff]
    %v9361 = vld [vmem:[#allocation3 + $0x168] sm:$0xff]
    %v9362 = vld [vmem:[#allocation3 + $0x170] sm:$0xff]
    %v9363 = vld [vmem:[#allocation3 + $0x178] sm:$0xff]
    %v9364 = vunpack.c.l.bf16 %v9336
    %v9365 = vunpack.c.l.bf16 %v9337
    %v9366 = vunpack.c.l.bf16 %v9338
    %v9367 = vunpack.c.l.bf16 %v9350
    %v9368 = vunpack.c.h.bf16 %v9336
    %v9369 = vunpack.c.h.bf16 %v9337
    %v9370 = vunpack.c.h.bf16 %v9338
    %v9371 = vunpack.c.h.bf16 %v9350
    %v9372 = vunpack.c.l.bf16 %v9339
    %v9373 = vunpack.c.l.bf16 %v9340
    %v9374 = vunpack.c.l.bf16 %v9341
    %v9375 = vunpack.c.l.bf16 %v9354
    %v9376 = vunpack.c.h.bf16 %v9339
    %v9377 = vunpack.c.h.bf16 %v9340
    %v9378 = vunpack.c.h.bf16 %v9341
    %v9379 = vunpack.c.h.bf16 %v9354
    %v9380 = vunpack.c.l.bf16 %v9356
    %v9381 = vunpack.c.h.bf16 %v9356
    %v9382 = vunpack.c.l.bf16 %v9357
    %v9383 = vunpack.c.h.bf16 %v9357
    %v9384 = vunpack.c.l.bf16 %v9358
    %v9385 = vunpack.c.h.bf16 %v9358
    %v9386 = vunpack.c.l.bf16 %v9359
    %v9387 = vunpack.c.h.bf16 %v9359
    %v9388 = vunpack.c.l.bf16 %v9360
    %v9389 = vunpack.c.h.bf16 %v9360
    %v9390 = vunpack.c.l.bf16 %v9361
    %v9391 = vunpack.c.h.bf16 %v9361
    %v9392 = vunpack.c.l.bf16 %v9362
    %v9393 = vunpack.c.h.bf16 %v9362
    %v9394 = vunpack.c.l.bf16 %v9363
    %v9395 = vunpack.c.h.bf16 %v9363
    %v9396 = vmul.f32 %v9364, %v9380
    %v9397 = vmul.f32 %v9365, %v9381
    %v9398 = vmul.f32 %v9366, %v9382
    %v9399 = vmul.f32 %v9367, %v9383
    %v9400 = vmul.f32 %v9368, %v9384
    %v9401 = vmul.f32 %v9369, %v9385
    %v9402 = vmul.f32 %v9370, %v9386
    %v9403 = vmul.f32 %v9371, %v9387
    %v9404 = vmul.f32 %v9372, %v9388
    %v9405 = vmul.f32 %v9373, %v9389
    %v9406 = vmul.f32 %v9374, %v9390
    %v9407 = vmul.f32 %v9375, %v9391
    %v9408 = vmul.f32 %v9376, %v9392
    %v9409 = vmul.f32 %v9377, %v9393
    %v9410 = vmul.f32 %v9378, %v9394
    %v9411 = vmul.f32 %v9379, %v9395
    %v9412 = vpack.c.bf16 %v9397, %v9396
    %v9413 = vpack.c.bf16 %v9399, %v9398
    %v9414 = vpack.c.bf16 %v9401, %v9400
    %v9415 = vpack.c.bf16 %v9403, %v9402
    %v9416 = vpack.c.bf16 %v9405, %v9404
    %v9417 = vpack.c.bf16 %v9407, %v9406
    %v9418 = vpack.c.bf16 %v9409, %v9408
    %v9419 = vpack.c.bf16 %v9411, %v9410
    %9420 = vst [vmem:[#allocation2 + $0x140] sm:$0xff] %v9412
    %9421 = vst [vmem:[#allocation2 + $0x148] sm:$0xff] %v9413
    %9422 = vst [vmem:[#allocation2 + $0x150] sm:$0xff] %v9414
    %9423 = vst [vmem:[#allocation2 + $0x158] sm:$0xff] %v9415
    %9424 = vst [vmem:[#allocation2 + $0x160] sm:$0xff] %v9416
    %9425 = vst [vmem:[#allocation2 + $0x168] sm:$0xff] %v9417
    %9426 = vst [vmem:[#allocation2 + $0x170] sm:$0xff] %v9418
    %9427 = vst [vmem:[#allocation2 + $0x178] sm:$0xff] %v9419
    %9428 = vrot.lane.b32.xlu0 %v8814, 113
    %v9429 = vpop.permute.xlu0 %9428
    %9430 = vrot.lane.b32.xlu0 %v8815, 113
    %v9431 = vpop.permute.xlu0 %9430
    %9432 = vrot.lane.b32.xlu0 %v8816, 113
    %v9433 = vpop.permute.xlu0 %9432
    %9434 = vrot.lane.b32.xlu0 %v8792, 113
    %v9435 = vpop.permute.xlu0 %9434
    %9436 = vrot.lane.b32.xlu0 %v8817, 113
    %v9437 = vpop.permute.xlu0 %9436
    %9438 = vrot.lane.b32.xlu0 %v8818, 113
    %v9439 = vpop.permute.xlu0 %9438
    %9440 = vrot.lane.b32.xlu0 %v8819, 113
    %v9441 = vpop.permute.xlu0 %9440
    %9442 = vrot.lane.b32.xlu0 %v8793, 113
    %v9443 = vpop.permute.xlu0 %9442
    %v9444 = vsel %vm837, %v9429, %v9431
    %v9445 = vsel %vm837, %v9431, %v9433
    %v9446 = vsel %vm837, %v9433, %v9435
    %v9447 = vsel %vm837, %v9437, %v9439
    %v9448 = vsel %vm837, %v9439, %v9441
    %v9449 = vsel %vm837, %v9441, %v9443
    %v9458 = vsel %vm850, %v9435, %v9429
    %v9462 = vsel %vm850, %v9443, %v9437
    %v9464 = vld [vmem:[#allocation3 + $0x180] sm:$0xff]
    %v9465 = vld [vmem:[#allocation3 + $0x188] sm:$0xff]
    %v9466 = vld [vmem:[#allocation3 + $0x190] sm:$0xff]
    %v9467 = vld [vmem:[#allocation3 + $0x198] sm:$0xff]
    %v9468 = vld [vmem:[#allocation3 + $0x1a0] sm:$0xff]
    %v9469 = vld [vmem:[#allocation3 + $0x1a8] sm:$0xff]
    %v9470 = vld [vmem:[#allocation3 + $0x1b0] sm:$0xff]
    %v9471 = vld [vmem:[#allocation3 + $0x1b8] sm:$0xff]
    %v9472 = vunpack.c.l.bf16 %v9444
    %v9473 = vunpack.c.l.bf16 %v9445
    %v9474 = vunpack.c.l.bf16 %v9446
    %v9475 = vunpack.c.l.bf16 %v9458
    %v9476 = vunpack.c.h.bf16 %v9444
    %v9477 = vunpack.c.h.bf16 %v9445
    %v9478 = vunpack.c.h.bf16 %v9446
    %v9479 = vunpack.c.h.bf16 %v9458
    %v9480 = vunpack.c.l.bf16 %v9447
    %v9481 = vunpack.c.l.bf16 %v9448
    %v9482 = vunpack.c.l.bf16 %v9449
    %v9483 = vunpack.c.l.bf16 %v9462
    %v9484 = vunpack.c.h.bf16 %v9447
    %v9485 = vunpack.c.h.bf16 %v9448
    %v9486 = vunpack.c.h.bf16 %v9449
    %v9487 = vunpack.c.h.bf16 %v9462
    %v9488 = vunpack.c.l.bf16 %v9464
    %v9489 = vunpack.c.h.bf16 %v9464
    %v9490 = vunpack.c.l.bf16 %v9465
    %v9491 = vunpack.c.h.bf16 %v9465
    %v9492 = vunpack.c.l.bf16 %v9466
    %v9493 = vunpack.c.h.bf16 %v9466
    %v9494 = vunpack.c.l.bf16 %v9467
    %v9495 = vunpack.c.h.bf16 %v9467
    %v9496 = vunpack.c.l.bf16 %v9468
    %v9497 = vunpack.c.h.bf16 %v9468
    %v9498 = vunpack.c.l.bf16 %v9469
    %v9499 = vunpack.c.h.bf16 %v9469
    %v9500 = vunpack.c.l.bf16 %v9470
    %v9501 = vunpack.c.h.bf16 %v9470
    %v9502 = vunpack.c.l.bf16 %v9471
    %v9503 = vunpack.c.h.bf16 %v9471
    %v9504 = vmul.f32 %v9472, %v9488
    %v9505 = vmul.f32 %v9473, %v9489
    %v9506 = vmul.f32 %v9474, %v9490
    %v9507 = vmul.f32 %v9475, %v9491
    %v9508 = vmul.f32 %v9476, %v9492
    %v9509 = vmul.f32 %v9477, %v9493
    %v9510 = vmul.f32 %v9478, %v9494
    %v9511 = vmul.f32 %v9479, %v9495
    %v9512 = vmul.f32 %v9480, %v9496
    %v9513 = vmul.f32 %v9481, %v9497
    %v9514 = vmul.f32 %v9482, %v9498
    %v9515 = vmul.f32 %v9483, %v9499
    %v9516 = vmul.f32 %v9484, %v9500
    %v9517 = vmul.f32 %v9485, %v9501
    %v9518 = vmul.f32 %v9486, %v9502
    %v9519 = vmul.f32 %v9487, %v9503
    %v9520 = vpack.c.bf16 %v9505, %v9504
    %v9521 = vpack.c.bf16 %v9507, %v9506
    %v9522 = vpack.c.bf16 %v9509, %v9508
    %v9523 = vpack.c.bf16 %v9511, %v9510
    %v9524 = vpack.c.bf16 %v9513, %v9512
    %v9525 = vpack.c.bf16 %v9515, %v9514
    %v9526 = vpack.c.bf16 %v9517, %v9516
    %v9527 = vpack.c.bf16 %v9519, %v9518
    %9528 = vst [vmem:[#allocation2 + $0x180] sm:$0xff] %v9520
    %9529 = vst [vmem:[#allocation2 + $0x188] sm:$0xff] %v9521
    %9530 = vst [vmem:[#allocation2 + $0x190] sm:$0xff] %v9522
    %9531 = vst [vmem:[#allocation2 + $0x198] sm:$0xff] %v9523
    %9532 = vst [vmem:[#allocation2 + $0x1a0] sm:$0xff] %v9524
    %9533 = vst [vmem:[#allocation2 + $0x1a8] sm:$0xff] %v9525
    %9534 = vst [vmem:[#allocation2 + $0x1b0] sm:$0xff] %v9526
    %9535 = vst [vmem:[#allocation2 + $0x1b8] sm:$0xff] %v9527
    %9536 = vrot.lane.b32.xlu0 %v8814, 112
    %v9537 = vpop.permute.xlu0 %9536
    %9538 = vrot.lane.b32.xlu0 %v8815, 112
    %v9539 = vpop.permute.xlu0 %9538
    %9540 = vrot.lane.b32.xlu0 %v8816, 112
    %v9541 = vpop.permute.xlu0 %9540
    %9542 = vrot.lane.b32.xlu0 %v8792, 112
    %v9543 = vpop.permute.xlu0 %9542
    %9544 = vrot.lane.b32.xlu0 %v8817, 112
    %v9545 = vpop.permute.xlu0 %9544
    %9546 = vrot.lane.b32.xlu0 %v8818, 112
    %v9547 = vpop.permute.xlu0 %9546
    %9548 = vrot.lane.b32.xlu0 %v8819, 112
    %v9549 = vpop.permute.xlu0 %9548
    %9550 = vrot.lane.b32.xlu0 %v8793, 112
    %v9551 = vpop.permute.xlu0 %9550
    %v9552 = vsel %vm947, %v9537, %v9539
    %v9553 = vsel %vm947, %v9539, %v9541
    %v9554 = vsel %vm947, %v9541, %v9543
    %v9555 = vsel %vm947, %v9545, %v9547
    %v9556 = vsel %vm947, %v9547, %v9549
    %v9557 = vsel %vm947, %v9549, %v9551
    %v9566 = vsel %vm960, %v9543, %v9537
    %v9570 = vsel %vm960, %v9551, %v9545
    %v9572 = vld [vmem:[#allocation3 + $0x1c0] sm:$0xff]
    %v9573 = vld [vmem:[#allocation3 + $0x1c8] sm:$0xff]
    %v9574 = vld [vmem:[#allocation3 + $0x1d0] sm:$0xff]
    %v9575 = vld [vmem:[#allocation3 + $0x1d8] sm:$0xff]
    %v9576 = vld [vmem:[#allocation3 + $0x1e0] sm:$0xff]
    %v9577 = vld [vmem:[#allocation3 + $0x1e8] sm:$0xff]
    %v9578 = vld [vmem:[#allocation3 + $0x1f0] sm:$0xff]
    %v9579 = vld [vmem:[#allocation3 + $0x1f8] sm:$0xff]
    %v9580 = vunpack.c.l.bf16 %v9552
    %v9581 = vunpack.c.l.bf16 %v9553
    %v9582 = vunpack.c.l.bf16 %v9554
    %v9583 = vunpack.c.l.bf16 %v9566
    %v9584 = vunpack.c.h.bf16 %v9552
    %v9585 = vunpack.c.h.bf16 %v9553
    %v9586 = vunpack.c.h.bf16 %v9554
    %v9587 = vunpack.c.h.bf16 %v9566
    %v9588 = vunpack.c.l.bf16 %v9555
    %v9589 = vunpack.c.l.bf16 %v9556
    %v9590 = vunpack.c.l.bf16 %v9557
    %v9591 = vunpack.c.l.bf16 %v9570
    %v9592 = vunpack.c.h.bf16 %v9555
    %v9593 = vunpack.c.h.bf16 %v9556
    %v9594 = vunpack.c.h.bf16 %v9557
    %v9595 = vunpack.c.h.bf16 %v9570
    %v9596 = vunpack.c.l.bf16 %v9572
    %v9597 = vunpack.c.h.bf16 %v9572
    %v9598 = vunpack.c.l.bf16 %v9573
    %v9599 = vunpack.c.h.bf16 %v9573
    %v9600 = vunpack.c.l.bf16 %v9574
    %v9601 = vunpack.c.h.bf16 %v9574
    %v9602 = vunpack.c.l.bf16 %v9575
    %v9603 = vunpack.c.h.bf16 %v9575
    %v9604 = vunpack.c.l.bf16 %v9576
    %v9605 = vunpack.c.h.bf16 %v9576
    %v9606 = vunpack.c.l.bf16 %v9577
    %v9607 = vunpack.c.h.bf16 %v9577
    %v9608 = vunpack.c.l.bf16 %v9578
    %v9609 = vunpack.c.h.bf16 %v9578
    %v9610 = vunpack.c.l.bf16 %v9579
    %v9611 = vunpack.c.h.bf16 %v9579
    %v9612 = vmul.f32 %v9580, %v9596
    %v9613 = vmul.f32 %v9581, %v9597
    %v9614 = vmul.f32 %v9582, %v9598
    %v9615 = vmul.f32 %v9583, %v9599
    %v9616 = vmul.f32 %v9584, %v9600
    %v9617 = vmul.f32 %v9585, %v9601
    %v9618 = vmul.f32 %v9586, %v9602
    %v9619 = vmul.f32 %v9587, %v9603
    %v9620 = vmul.f32 %v9588, %v9604
    %v9621 = vmul.f32 %v9589, %v9605
    %v9622 = vmul.f32 %v9590, %v9606
    %v9623 = vmul.f32 %v9591, %v9607
    %v9624 = vmul.f32 %v9592, %v9608
    %v9625 = vmul.f32 %v9593, %v9609
    %v9626 = vmul.f32 %v9594, %v9610
    %v9627 = vmul.f32 %v9595, %v9611
    %v9628 = vpack.c.bf16 %v9613, %v9612
    %v9629 = vpack.c.bf16 %v9615, %v9614
    %v9630 = vpack.c.bf16 %v9617, %v9616
    %v9631 = vpack.c.bf16 %v9619, %v9618
    %v9632 = vpack.c.bf16 %v9621, %v9620
    %v9633 = vpack.c.bf16 %v9623, %v9622
    %v9634 = vpack.c.bf16 %v9625, %v9624
    %v9635 = vpack.c.bf16 %v9627, %v9626
    %9636 = vst [vmem:[#allocation2 + $0x1c0] sm:$0xff] %v9628
    %9637 = vst [vmem:[#allocation2 + $0x1c8] sm:$0xff] %v9629
    %9638 = vst [vmem:[#allocation2 + $0x1d0] sm:$0xff] %v9630
    %9639 = vst [vmem:[#allocation2 + $0x1d8] sm:$0xff] %v9631
    %9640 = vst [vmem:[#allocation2 + $0x1e0] sm:$0xff] %v9632
    %9641 = vst [vmem:[#allocation2 + $0x1e8] sm:$0xff] %v9633
    %9642 = vst [vmem:[#allocation2 + $0x1f0] sm:$0xff] %v9634
    %9643 = vst [vmem:[#allocation2 + $0x1f8] sm:$0xff] %v9635
    %9644 = vrot.lane.b32.xlu0 %v8814, 111
    %v9645 = vpop.permute.xlu0 %9644
    %9646 = vrot.lane.b32.xlu0 %v8815, 111
    %v9647 = vpop.permute.xlu0 %9646
    %9648 = vrot.lane.b32.xlu0 %v8816, 111
    %v9649 = vpop.permute.xlu0 %9648
    %9650 = vrot.lane.b32.xlu0 %v8792, 111
    %v9651 = vpop.permute.xlu0 %9650
    %9652 = vrot.lane.b32.xlu0 %v8817, 111
    %v9653 = vpop.permute.xlu0 %9652
    %9654 = vrot.lane.b32.xlu0 %v8818, 111
    %v9655 = vpop.permute.xlu0 %9654
    %9656 = vrot.lane.b32.xlu0 %v8819, 111
    %v9657 = vpop.permute.xlu0 %9656
    %9658 = vrot.lane.b32.xlu0 %v8793, 111
    %v9659 = vpop.permute.xlu0 %9658
    %v9660 = vsel %vm1057, %v9645, %v9647
    %v9661 = vsel %vm1057, %v9647, %v9649
    %v9662 = vsel %vm1057, %v9649, %v9651
    %v9663 = vsel %vm1057, %v9653, %v9655
    %v9664 = vsel %vm1057, %v9655, %v9657
    %v9665 = vsel %vm1057, %v9657, %v9659
    %v9674 = vsel %vm1070, %v9651, %v9645
    %v9678 = vsel %vm1070, %v9659, %v9653
    %v9680 = vld [vmem:[#allocation3 + $0x200] sm:$0xff]
    %v9681 = vld [vmem:[#allocation3 + $0x208] sm:$0xff]
    %v9682 = vld [vmem:[#allocation3 + $0x210] sm:$0xff]
    %v9683 = vld [vmem:[#allocation3 + $0x218] sm:$0xff]
    %v9684 = vld [vmem:[#allocation3 + $0x220] sm:$0xff]
    %v9685 = vld [vmem:[#allocation3 + $0x228] sm:$0xff]
    %v9686 = vld [vmem:[#allocation3 + $0x230] sm:$0xff]
    %v9687 = vld [vmem:[#allocation3 + $0x238] sm:$0xff]
    %v9688 = vunpack.c.l.bf16 %v9660
    %v9689 = vunpack.c.l.bf16 %v9661
    %v9690 = vunpack.c.l.bf16 %v9662
    %v9691 = vunpack.c.l.bf16 %v9674
    %v9692 = vunpack.c.h.bf16 %v9660
    %v9693 = vunpack.c.h.bf16 %v9661
    %v9694 = vunpack.c.h.bf16 %v9662
    %v9695 = vunpack.c.h.bf16 %v9674
    %v9696 = vunpack.c.l.bf16 %v9663
    %v9697 = vunpack.c.l.bf16 %v9664
    %v9698 = vunpack.c.l.bf16 %v9665
    %v9699 = vunpack.c.l.bf16 %v9678
    %v9700 = vunpack.c.h.bf16 %v9663
    %v9701 = vunpack.c.h.bf16 %v9664
    %v9702 = vunpack.c.h.bf16 %v9665
    %v9703 = vunpack.c.h.bf16 %v9678
    %v9704 = vunpack.c.l.bf16 %v9680
    %v9705 = vunpack.c.h.bf16 %v9680
    %v9706 = vunpack.c.l.bf16 %v9681
    %v9707 = vunpack.c.h.bf16 %v9681
    %v9708 = vunpack.c.l.bf16 %v9682
    %v9709 = vunpack.c.h.bf16 %v9682
    %v9710 = vunpack.c.l.bf16 %v9683
    %v9711 = vunpack.c.h.bf16 %v9683
    %v9712 = vunpack.c.l.bf16 %v9684
    %v9713 = vunpack.c.h.bf16 %v9684
    %v9714 = vunpack.c.l.bf16 %v9685
    %v9715 = vunpack.c.h.bf16 %v9685
    %v9716 = vunpack.c.l.bf16 %v9686
    %v9717 = vunpack.c.h.bf16 %v9686
    %v9718 = vunpack.c.l.bf16 %v9687
    %v9719 = vunpack.c.h.bf16 %v9687
    %v9720 = vmul.f32 %v9688, %v9704
    %v9721 = vmul.f32 %v9689, %v9705
    %v9722 = vmul.f32 %v9690, %v9706
    %v9723 = vmul.f32 %v9691, %v9707
    %v9724 = vmul.f32 %v9692, %v9708
    %v9725 = vmul.f32 %v9693, %v9709
    %v9726 = vmul.f32 %v9694, %v9710
    %v9727 = vmul.f32 %v9695, %v9711
    %v9728 = vmul.f32 %v9696, %v9712
    %v9729 = vmul.f32 %v9697, %v9713
    %v9730 = vmul.f32 %v9698, %v9714
    %v9731 = vmul.f32 %v9699, %v9715
    %v9732 = vmul.f32 %v9700, %v9716
    %v9733 = vmul.f32 %v9701, %v9717
    %v9734 = vmul.f32 %v9702, %v9718
    %v9735 = vmul.f32 %v9703, %v9719
    %v9736 = vpack.c.bf16 %v9721, %v9720
    %v9737 = vpack.c.bf16 %v9723, %v9722
    %v9738 = vpack.c.bf16 %v9725, %v9724
    %v9739 = vpack.c.bf16 %v9727, %v9726
    %v9740 = vpack.c.bf16 %v9729, %v9728
    %v9741 = vpack.c.bf16 %v9731, %v9730
    %v9742 = vpack.c.bf16 %v9733, %v9732
    %v9743 = vpack.c.bf16 %v9735, %v9734
    %9744 = vst [vmem:[#allocation2 + $0x200] sm:$0xff] %v9736
    %9745 = vst [vmem:[#allocation2 + $0x208] sm:$0xff] %v9737
    %9746 = vst [vmem:[#allocation2 + $0x210] sm:$0xff] %v9738
    %9747 = vst [vmem:[#allocation2 + $0x218] sm:$0xff] %v9739
    %9748 = vst [vmem:[#allocation2 + $0x220] sm:$0xff] %v9740
    %9749 = vst [vmem:[#allocation2 + $0x228] sm:$0xff] %v9741
    %9750 = vst [vmem:[#allocation2 + $0x230] sm:$0xff] %v9742
    %9751 = vst [vmem:[#allocation2 + $0x238] sm:$0xff] %v9743
    %v9752 = vld [vmem:[#allocation12] sm:$0xff]
    %v9753 = vld [vmem:[#allocation12 + $0x8] sm:$0xf]
    %v9754 = vld [vmem:[#allocation12 + $0xc] sm:$0xff]
    %v9755 = vld [vmem:[#allocation12 + $0x14] sm:$0xf]
    %v9756 = vld [vmem:[#allocation12 + $0x18] sm:$0xff]
    %v9757 = vld [vmem:[#allocation12 + $0x20] sm:$0xf]
    %v9758 = vld [vmem:[#allocation12 + $0x24] sm:$0xff]
    %v9759 = vld [vmem:[#allocation12 + $0x2c] sm:$0xf]
    %v9760 = vld [vmem:[#allocation2] sm:$0xff]
    %v9761 = vld [vmem:[#allocation2 + $0x8] sm:$0xff]
    %v9762 = vld [vmem:[#allocation2 + $0x10] sm:$0xff]
    %v9763 = vld [vmem:[#allocation2 + $0x18] sm:$0xff]
    %v9764 = vld [vmem:[#allocation2 + $0x20] sm:$0xff]
    %v9765 = vld [vmem:[#allocation2 + $0x28] sm:$0xff]
    %v9766 = vld [vmem:[#allocation2 + $0x30] sm:$0xff]
    %v9767 = vld [vmem:[#allocation2 + $0x38] sm:$0xff]
    %v9768 = vld [vmem:[#allocation2 + $0x40] sm:$0xff]
    %v9769 = vld [vmem:[#allocation2 + $0x48] sm:$0xff]
    %v9770 = vld [vmem:[#allocation2 + $0x50] sm:$0xff]
    %v9771 = vld [vmem:[#allocation2 + $0x58] sm:$0xff]
    %v9772 = vld [vmem:[#allocation2 + $0x60] sm:$0xff]
    %v9773 = vld [vmem:[#allocation2 + $0x68] sm:$0xff]
    %v9774 = vld [vmem:[#allocation2 + $0x70] sm:$0xff]
    %v9775 = vld [vmem:[#allocation2 + $0x78] sm:$0xff]
    %v9776 = vld [vmem:[#allocation2 + $0x80] sm:$0xff]
    %v9777 = vld [vmem:[#allocation2 + $0x88] sm:$0xff]
    %v9778 = vld [vmem:[#allocation2 + $0x90] sm:$0xff]
    %v9779 = vld [vmem:[#allocation2 + $0x98] sm:$0xff]
    %v9780 = vld [vmem:[#allocation2 + $0xa0] sm:$0xff]
    %v9781 = vld [vmem:[#allocation2 + $0xa8] sm:$0xff]
    %v9782 = vld [vmem:[#allocation2 + $0xb0] sm:$0xff]
    %v9783 = vld [vmem:[#allocation2 + $0xb8] sm:$0xff]
    %v9784 = vld [vmem:[#allocation2 + $0xc0] sm:$0xff]
    %v9785 = vld [vmem:[#allocation2 + $0xc8] sm:$0xff]
    %v9786 = vld [vmem:[#allocation2 + $0xd0] sm:$0xff]
    %v9787 = vld [vmem:[#allocation2 + $0xd8] sm:$0xff]
    %v9788 = vld [vmem:[#allocation2 + $0xe0] sm:$0xff]
    %v9789 = vld [vmem:[#allocation2 + $0xe8] sm:$0xff]
    %v9790 = vld [vmem:[#allocation2 + $0xf0] sm:$0xff]
    %v9791 = vld [vmem:[#allocation2 + $0xf8] sm:$0xff]
    %v9792 = vld [vmem:[#allocation2 + $0x100] sm:$0xff]
    %v9793 = vld [vmem:[#allocation2 + $0x108] sm:$0xff]
    %v9794 = vld [vmem:[#allocation2 + $0x110] sm:$0xff]
    %v9795 = vld [vmem:[#allocation2 + $0x118] sm:$0xff]
    %v9796 = vld [vmem:[#allocation2 + $0x120] sm:$0xff]
    %v9797 = vld [vmem:[#allocation2 + $0x128] sm:$0xff]
    %v9798 = vld [vmem:[#allocation2 + $0x130] sm:$0xff]
    %v9799 = vld [vmem:[#allocation2 + $0x138] sm:$0xff]
    %v9800 = vld [vmem:[#allocation2 + $0x140] sm:$0xff]
    %v9801 = vld [vmem:[#allocation2 + $0x148] sm:$0xff]
    %v9802 = vld [vmem:[#allocation2 + $0x150] sm:$0xff]
    %v9803 = vld [vmem:[#allocation2 + $0x158] sm:$0xff]
    %v9804 = vld [vmem:[#allocation2 + $0x160] sm:$0xff]
    %v9805 = vld [vmem:[#allocation2 + $0x168] sm:$0xff]
    %v9806 = vld [vmem:[#allocation2 + $0x170] sm:$0xff]
    %v9807 = vld [vmem:[#allocation2 + $0x178] sm:$0xff]
    %v9808 = vld [vmem:[#allocation2 + $0x180] sm:$0xff]
    %v9809 = vld [vmem:[#allocation2 + $0x188] sm:$0xff]
    %v9810 = vld [vmem:[#allocation2 + $0x190] sm:$0xff]
    %v9811 = vld [vmem:[#allocation2 + $0x198] sm:$0xff]
    %v9812 = vld [vmem:[#allocation2 + $0x1a0] sm:$0xff]
    %v9813 = vld [vmem:[#allocation2 + $0x1a8] sm:$0xff]
    %v9814 = vld [vmem:[#allocation2 + $0x1b0] sm:$0xff]
    %v9815 = vld [vmem:[#allocation2 + $0x1b8] sm:$0xff]
    %v9816 = vld [vmem:[#allocation2 + $0x1c0] sm:$0xff]
    %v9817 = vld [vmem:[#allocation2 + $0x1c8] sm:$0xff]
    %v9818 = vld [vmem:[#allocation2 + $0x1d0] sm:$0xff]
    %v9819 = vld [vmem:[#allocation2 + $0x1d8] sm:$0xff]
    %v9820 = vld [vmem:[#allocation2 + $0x1e0] sm:$0xff]
    %v9821 = vld [vmem:[#allocation2 + $0x1e8] sm:$0xff]
    %v9822 = vld [vmem:[#allocation2 + $0x1f0] sm:$0xff]
    %v9823 = vld [vmem:[#allocation2 + $0x1f8] sm:$0xff]
    %v9824 = vld [vmem:[#allocation2 + $0x200] sm:$0xff]
    %v9825 = vld [vmem:[#allocation2 + $0x208] sm:$0xff]
    %v9826 = vld [vmem:[#allocation2 + $0x210] sm:$0xff]
    %v9827 = vld [vmem:[#allocation2 + $0x218] sm:$0xff]
    %v9828 = vld [vmem:[#allocation2 + $0x220] sm:$0xff]
    %v9829 = vld [vmem:[#allocation2 + $0x228] sm:$0xff]
    %v9830 = vld [vmem:[#allocation2 + $0x230] sm:$0xff]
    %v9831 = vld [vmem:[#allocation2 + $0x238] sm:$0xff]
    %v9832 = vld [vmem:[%s13] sm:$0xff]
    %v9833 = vld [vmem:[%s13 + $0x8] sm:$0xff]
    %v9834 = vld [vmem:[%s13 + $0x10] sm:$0xff]
    %v9835 = vld [vmem:[%s13 + $0x18] sm:$0xff]
    %9837 = vset.pattern.permute.xlu0 0
    %9838 = vperm.xlu0 %9837, %v9832
    %v9839 = vpop.permute.xlu0 %9838
    %9842 = vset.pattern.permute.xlu0 0
    %9843 = vperm.xlu0 %9842, %v9833
    %v9844 = vpop.permute.xlu0 %9843
    %9847 = vset.pattern.permute.xlu0 0
    %9848 = vperm.xlu0 %9847, %v9834
    %v9849 = vpop.permute.xlu0 %9848
    %9852 = vset.pattern.permute.xlu0 0
    %9853 = vperm.xlu0 %9852, %v9835
    %v9854 = vpop.permute.xlu0 %9853
    %v9864 = vunpack.c.l.b16 %v9752
    %v9865 = vunpack.c.h.b16 %v9752
    %v9866 = vunpack.c.l.b16 %v9753
    %v9867 = vunpack.c.l.b16 %v9754
    %v9868 = vunpack.c.h.b16 %v9754
    %v9869 = vunpack.c.l.b16 %v9755
    %v9870 = vunpack.c.l.b16 %v9756
    %v9871 = vunpack.c.h.b16 %v9756
    %v9872 = vunpack.c.l.b16 %v9757
    %v9873 = vunpack.c.l.b16 %v9758
    %v9874 = vunpack.c.h.b16 %v9758
    %v9875 = vunpack.c.l.b16 %v9759
    %v9876 = vpack.c.b16 %v9867, %v9864
    %v9877 = vpack.c.b16 %v9868, %v9865
    %v9878 = vpack.c.b16 %v9869, %v9866
    %v9879 = vpack.c.b16 %v9873, %v9870
    %v9880 = vpack.c.b16 %v9874, %v9871
    %v9881 = vpack.c.b16 %v9875, %v9872
    %v9958 = vunpack.c.l.b16 %v9760
    %v9959 = vunpack.c.h.b16 %v9760
    %v9960 = vunpack.c.l.b16 %v9761
    %v9961 = vunpack.c.h.b16 %v9761
    %v9962 = vunpack.c.l.b16 %v9762
    %v9963 = vunpack.c.h.b16 %v9762
    %v9964 = vunpack.c.l.b16 %v9763
    %v9965 = vunpack.c.h.b16 %v9763
    %v9966 = vunpack.c.l.b16 %v9764
    %v9967 = vunpack.c.h.b16 %v9764
    %v9968 = vunpack.c.l.b16 %v9765
    %v9969 = vunpack.c.h.b16 %v9765
    %v9970 = vunpack.c.l.b16 %v9766
    %v9971 = vunpack.c.h.b16 %v9766
    %v9972 = vunpack.c.l.b16 %v9767
    %v9973 = vunpack.c.h.b16 %v9767
    %v9974 = vunpack.c.l.b16 %v9768
    %v9975 = vunpack.c.h.b16 %v9768
    %v9976 = vunpack.c.l.b16 %v9769
    %v9977 = vunpack.c.h.b16 %v9769
    %v9978 = vunpack.c.l.b16 %v9770
    %v9979 = vunpack.c.h.b16 %v9770
    %v9980 = vunpack.c.l.b16 %v9771
    %v9981 = vunpack.c.h.b16 %v9771
    %v9982 = vunpack.c.l.b16 %v9772
    %v9983 = vunpack.c.h.b16 %v9772
    %v9984 = vunpack.c.l.b16 %v9773
    %v9985 = vunpack.c.h.b16 %v9773
    %v9986 = vunpack.c.l.b16 %v9774
    %v9987 = vunpack.c.h.b16 %v9774
    %v9988 = vunpack.c.l.b16 %v9775
    %v9989 = vunpack.c.h.b16 %v9775
    %v9990 = vunpack.c.l.b16 %v9776
    %v9991 = vunpack.c.h.b16 %v9776
    %v9992 = vunpack.c.l.b16 %v9777
    %v9993 = vunpack.c.h.b16 %v9777
    %v9994 = vunpack.c.l.b16 %v9778
    %v9995 = vunpack.c.h.b16 %v9778
    %v9996 = vunpack.c.l.b16 %v9779
    %v9997 = vunpack.c.h.b16 %v9779
    %v9998 = vunpack.c.l.b16 %v9780
    %v9999 = vunpack.c.h.b16 %v9780
    %v10000 = vunpack.c.l.b16 %v9781
    %v10001 = vunpack.c.h.b16 %v9781
    %v10002 = vunpack.c.l.b16 %v9782
    %v10003 = vunpack.c.h.b16 %v9782
    %v10004 = vunpack.c.l.b16 %v9783
    %v10005 = vunpack.c.h.b16 %v9783
    %v10006 = vunpack.c.l.b16 %v9784
    %v10007 = vunpack.c.h.b16 %v9784
    %v10008 = vunpack.c.l.b16 %v9785
    %v10009 = vunpack.c.h.b16 %v9785
    %v10010 = vunpack.c.l.b16 %v9786
    %v10011 = vunpack.c.h.b16 %v9786
    %v10012 = vunpack.c.l.b16 %v9787
    %v10013 = vunpack.c.h.b16 %v9787
    %v10014 = vunpack.c.l.b16 %v9788
    %v10015 = vunpack.c.h.b16 %v9788
    %v10016 = vunpack.c.l.b16 %v9789
    %v10017 = vunpack.c.h.b16 %v9789
    %v10018 = vunpack.c.l.b16 %v9790
    %v10019 = vunpack.c.h.b16 %v9790
    %v10020 = vunpack.c.l.b16 %v9791
    %v10021 = vunpack.c.h.b16 %v9791
    %v10022 = vunpack.c.l.b16 %v9792
    %v10023 = vunpack.c.h.b16 %v9792
    %v10024 = vunpack.c.l.b16 %v9793
    %v10025 = vunpack.c.h.b16 %v9793
    %v10026 = vunpack.c.l.b16 %v9794
    %v10027 = vunpack.c.h.b16 %v9794
    %v10028 = vunpack.c.l.b16 %v9795
    %v10029 = vunpack.c.h.b16 %v9795
    %v10030 = vunpack.c.l.b16 %v9796
    %v10031 = vunpack.c.h.b16 %v9796
    %v10032 = vunpack.c.l.b16 %v9797
    %v10033 = vunpack.c.h.b16 %v9797
    %v10034 = vunpack.c.l.b16 %v9798
    %v10035 = vunpack.c.h.b16 %v9798
    %v10036 = vunpack.c.l.b16 %v9799
    %v10037 = vunpack.c.h.b16 %v9799
    %v10038 = vunpack.c.l.b16 %v9800
    %v10039 = vunpack.c.h.b16 %v9800
    %v10040 = vunpack.c.l.b16 %v9801
    %v10041 = vunpack.c.h.b16 %v9801
    %v10042 = vunpack.c.l.b16 %v9802
    %v10043 = vunpack.c.h.b16 %v9802
    %v10044 = vunpack.c.l.b16 %v9803
    %v10045 = vunpack.c.h.b16 %v9803
    %v10046 = vunpack.c.l.b16 %v9804
    %v10047 = vunpack.c.h.b16 %v9804
    %v10048 = vunpack.c.l.b16 %v9805
    %v10049 = vunpack.c.h.b16 %v9805
    %v10050 = vunpack.c.l.b16 %v9806
    %v10051 = vunpack.c.h.b16 %v9806
    %v10052 = vunpack.c.l.b16 %v9807
    %v10053 = vunpack.c.h.b16 %v9807
    %v10054 = vunpack.c.l.b16 %v9808
    %v10055 = vunpack.c.h.b16 %v9808
    %v10056 = vunpack.c.l.b16 %v9809
    %v10057 = vunpack.c.h.b16 %v9809
    %v10058 = vunpack.c.l.b16 %v9810
    %v10059 = vunpack.c.h.b16 %v9810
    %v10060 = vunpack.c.l.b16 %v9811
    %v10061 = vunpack.c.h.b16 %v9811
    %v10062 = vunpack.c.l.b16 %v9812
    %v10063 = vunpack.c.h.b16 %v9812
    %v10064 = vunpack.c.l.b16 %v9813
    %v10065 = vunpack.c.h.b16 %v9813
    %v10066 = vunpack.c.l.b16 %v9814
    %v10067 = vunpack.c.h.b16 %v9814
    %v10068 = vunpack.c.l.b16 %v9815
    %v10069 = vunpack.c.h.b16 %v9815
    %v10070 = vunpack.c.l.b16 %v9816
    %v10071 = vunpack.c.h.b16 %v9816
    %v10072 = vunpack.c.l.b16 %v9817
    %v10073 = vunpack.c.h.b16 %v9817
    %v10074 = vunpack.c.l.b16 %v9818
    %v10075 = vunpack.c.h.b16 %v9818
    %v10076 = vunpack.c.l.b16 %v9819
    %v10077 = vunpack.c.h.b16 %v9819
    %v10078 = vunpack.c.l.b16 %v9820
    %v10079 = vunpack.c.h.b16 %v9820
    %v10080 = vunpack.c.l.b16 %v9821
    %v10081 = vunpack.c.h.b16 %v9821
    %v10082 = vunpack.c.l.b16 %v9822
    %v10083 = vunpack.c.h.b16 %v9822
    %v10084 = vunpack.c.l.b16 %v9823
    %v10085 = vunpack.c.h.b16 %v9823
    %v10086 = vunpack.c.l.b16 %v9824
    %v10087 = vunpack.c.h.b16 %v9824
    %v10088 = vunpack.c.l.b16 %v9825
    %v10089 = vunpack.c.h.b16 %v9825
    %v10090 = vunpack.c.l.b16 %v9826
    %v10091 = vunpack.c.h.b16 %v9826
    %v10092 = vunpack.c.l.b16 %v9827
    %v10093 = vunpack.c.h.b16 %v9827
    %v10094 = vunpack.c.l.b16 %v9828
    %v10095 = vunpack.c.h.b16 %v9828
    %v10096 = vunpack.c.l.b16 %v9829
    %v10097 = vunpack.c.h.b16 %v9829
    %v10098 = vunpack.c.l.b16 %v9830
    %v10099 = vunpack.c.h.b16 %v9830
    %v10100 = vunpack.c.l.b16 %v9831
    %v10101 = vunpack.c.h.b16 %v9831
    %v10102 = vpack.c.b16 %v9962, %v9958
    %v10103 = vpack.c.b16 %v9963, %v9959
    %v10104 = vpack.c.b16 %v9964, %v9960
    %v10105 = vpack.c.b16 %v9965, %v9961
    %v10106 = vpack.c.b16 %v9970, %v9966
    %v10107 = vpack.c.b16 %v9971, %v9967
    %v10108 = vpack.c.b16 %v9972, %v9968
    %v10109 = vpack.c.b16 %v9973, %v9969
    %v10110 = vpack.c.b16 %v9978, %v9974
    %v10111 = vpack.c.b16 %v9979, %v9975
    %v10112 = vpack.c.b16 %v9980, %v9976
    %v10113 = vpack.c.b16 %v9981, %v9977
    %v10114 = vpack.c.b16 %v9986, %v9982
    %v10115 = vpack.c.b16 %v9987, %v9983
    %v10116 = vpack.c.b16 %v9988, %v9984
    %v10117 = vpack.c.b16 %v9989, %v9985
    %v10118 = vpack.c.b16 %v9994, %v9990
    %v10119 = vpack.c.b16 %v9995, %v9991
    %v10120 = vpack.c.b16 %v9996, %v9992
    %v10121 = vpack.c.b16 %v9997, %v9993
    %v10122 = vpack.c.b16 %v10002, %v9998
    %v10123 = vpack.c.b16 %v10003, %v9999
    %v10124 = vpack.c.b16 %v10004, %v10000
    %v10125 = vpack.c.b16 %v10005, %v10001
    %v10126 = vpack.c.b16 %v10010, %v10006
    %v10127 = vpack.c.b16 %v10011, %v10007
    %v10128 = vpack.c.b16 %v10012, %v10008
    %v10129 = vpack.c.b16 %v10013, %v10009
    %v10130 = vpack.c.b16 %v10018, %v10014
    %v10131 = vpack.c.b16 %v10019, %v10015
    %v10132 = vpack.c.b16 %v10020, %v10016
    %v10133 = vpack.c.b16 %v10021, %v10017
    %v10134 = vpack.c.b16 %v10026, %v10022
    %v10135 = vpack.c.b16 %v10027, %v10023
    %v10136 = vpack.c.b16 %v10028, %v10024
    %v10137 = vpack.c.b16 %v10029, %v10025
    %v10138 = vpack.c.b16 %v10034, %v10030
    %v10139 = vpack.c.b16 %v10035, %v10031
    %v10140 = vpack.c.b16 %v10036, %v10032
    %v10141 = vpack.c.b16 %v10037, %v10033
    %v10142 = vpack.c.b16 %v10042, %v10038
    %v10143 = vpack.c.b16 %v10043, %v10039
    %v10144 = vpack.c.b16 %v10044, %v10040
    %v10145 = vpack.c.b16 %v10045, %v10041
    %v10146 = vpack.c.b16 %v10050, %v10046
    %v10147 = vpack.c.b16 %v10051, %v10047
    %v10148 = vpack.c.b16 %v10052, %v10048
    %v10149 = vpack.c.b16 %v10053, %v10049
    %v10150 = vpack.c.b16 %v10058, %v10054
    %v10151 = vpack.c.b16 %v10059, %v10055
    %v10152 = vpack.c.b16 %v10060, %v10056
    %v10153 = vpack.c.b16 %v10061, %v10057
    %v10154 = vpack.c.b16 %v10066, %v10062
    %v10155 = vpack.c.b16 %v10067, %v10063
    %v10156 = vpack.c.b16 %v10068, %v10064
    %v10157 = vpack.c.b16 %v10069, %v10065
    %v10158 = vpack.c.b16 %v10074, %v10070
    %v10159 = vpack.c.b16 %v10075, %v10071
    %v10160 = vpack.c.b16 %v10076, %v10072
    %v10161 = vpack.c.b16 %v10077, %v10073
    %v10162 = vpack.c.b16 %v10082, %v10078
    %v10163 = vpack.c.b16 %v10083, %v10079
    %v10164 = vpack.c.b16 %v10084, %v10080
    %v10165 = vpack.c.b16 %v10085, %v10081
    %v10166 = vpack.c.b16 %v10090, %v10086
    %v10167 = vpack.c.b16 %v10091, %v10087
    %v10168 = vpack.c.b16 %v10092, %v10088
    %v10169 = vpack.c.b16 %v10093, %v10089
    %v10170 = vpack.c.b16 %v10098, %v10094
    %v10171 = vpack.c.b16 %v10099, %v10095
    %v10172 = vpack.c.b16 %v10100, %v10096
    %v10173 = vpack.c.b16 %v10101, %v10097
    %v10247 = vsel %vm1645, %v9878, 0
    %v10250 = vsel %vm1645, %v9881, 0
    %10252 = vmatpush.bf16.msra.mxu0 %v10130
    %10253 = vmatpush.bf16.msra.mxu0 %v10126
    %10254 = vmatpush.bf16.msra.mxu0 %v10122
    %10255 = vmatpush.bf16.msra.mxu0 %v10118
    %10256 = vmatpush.bf16.msra.mxu0 %v10114
    %10257 = vmatpush.bf16.msra.mxu0 %v10110
    %10258 = vmatpush.bf16.msra.mxu0 %v10106
    %10259 = vmatpush.bf16.msra.mxu0 %v10102
    %10260 = vmatmul.bf16.gmra.mxu0 %v9876
    %v10261 = vpop.f32.mrf.mxu0
    %v10262 = vadd.f32 %v9839, %v10261
    %v10263 = vpop.f32.mrf.mxu0
    %v10264 = vadd.f32 %v9844, %v10263
    %10265 = vmatmul.bf16.gmra.mxu0 %v9879
    %v10266 = vpop.f32.mrf.mxu0
    %v10267 = vadd.f32 %v9849, %v10266
    %v10268 = vpop.f32.mrf.mxu0
    %v10269 = vadd.f32 %v9854, %v10268
    %10270 = vdwg.mxu0
    %10271 = vmatpush.bf16.msra.mxu0 %v10162
    %10272 = vmatpush.bf16.msra.mxu0 %v10158
    %10273 = vmatpush.bf16.msra.mxu0 %v10154
    %10274 = vmatpush.bf16.msra.mxu0 %v10150
    %10275 = vmatpush.bf16.msra.mxu0 %v10146
    %10276 = vmatpush.bf16.msra.mxu0 %v10142
    %10277 = vmatpush.bf16.msra.mxu0 %v10138
    %10278 = vmatpush.bf16.msra.mxu0 %v10134
    %10279 = vmatmul.bf16.gmra.mxu0 %v9877
    %v10280 = vpop.f32.mrf.mxu0
    %v10281 = vadd.f32 %v10262, %v10280
    %v10282 = vpop.f32.mrf.mxu0
    %v10283 = vadd.f32 %v10264, %v10282
    %10284 = vmatmul.bf16.gmra.mxu0 %v9880
    %v10285 = vpop.f32.mrf.mxu0
    %v10286 = vadd.f32 %v10267, %v10285
    %v10287 = vpop.f32.mrf.mxu0
    %v10288 = vadd.f32 %v10269, %v10287
    %10289 = vdwg.mxu0
    %10290 = vmatpush.bf16.msra.mxu0 0
    %10291 = vmatpush.bf16.msra.mxu0 0
    %10292 = vmatpush.bf16.msra.mxu0 0
    %10293 = vmatpush.bf16.msra.mxu0 0
    %10294 = vmatpush.bf16.msra.mxu0 0
    %10295 = vmatpush.bf16.msra.mxu0 0
    %10296 = vmatpush.bf16.msra.mxu0 %v10170
    %10297 = vmatpush.bf16.msra.mxu0 %v10166
    %10298 = vmatmul.bf16.gmra.mxu0 %v10247
    %v10299 = vpop.f32.mrf.mxu0
    %v10300 = vadd.f32 %v10281, %v10299
    %v10301 = vpop.f32.mrf.mxu0
    %v10302 = vadd.f32 %v10283, %v10301
    %10303 = vmatmul.bf16.gmra.mxu0 %v10250
    %v10304 = vpop.f32.mrf.mxu0
    %v10305 = vadd.f32 %v10286, %v10304
    %v10306 = vpop.f32.mrf.mxu0
    %v10307 = vadd.f32 %v10288, %v10306
    %10308 = vdwg.mxu0
    %10309 = vmatpush.bf16.msra.mxu0 %v10131
    %10310 = vmatpush.bf16.msra.mxu0 %v10127
    %10311 = vmatpush.bf16.msra.mxu0 %v10123
    %10312 = vmatpush.bf16.msra.mxu0 %v10119
    %10313 = vmatpush.bf16.msra.mxu0 %v10115
    %10314 = vmatpush.bf16.msra.mxu0 %v10111
    %10315 = vmatpush.bf16.msra.mxu0 %v10107
    %10316 = vmatpush.bf16.msra.mxu0 %v10103
    %10317 = vmatmul.bf16.gmra.mxu0 %v9876
    %v10318 = vpop.f32.mrf.mxu0
    %v10319 = vadd.f32 %v9839, %v10318
    %v10320 = vpop.f32.mrf.mxu0
    %v10321 = vadd.f32 %v9844, %v10320
    %10322 = vmatmul.bf16.gmra.mxu0 %v9879
    %v10323 = vpop.f32.mrf.mxu0
    %v10324 = vadd.f32 %v9849, %v10323
    %v10325 = vpop.f32.mrf.mxu0
    %v10326 = vadd.f32 %v9854, %v10325
    %10327 = vdwg.mxu0
    %10328 = vmatpush.bf16.msra.mxu0 %v10163
    %10329 = vmatpush.bf16.msra.mxu0 %v10159
    %10330 = vmatpush.bf16.msra.mxu0 %v10155
    %10331 = vmatpush.bf16.msra.mxu0 %v10151
    %10332 = vmatpush.bf16.msra.mxu0 %v10147
    %10333 = vmatpush.bf16.msra.mxu0 %v10143
    %10334 = vmatpush.bf16.msra.mxu0 %v10139
    %10335 = vmatpush.bf16.msra.mxu0 %v10135
    %10336 = vmatmul.bf16.gmra.mxu0 %v9877
    %v10337 = vpop.f32.mrf.mxu0
    %v10338 = vadd.f32 %v10319, %v10337
    %v10339 = vpop.f32.mrf.mxu0
    %v10340 = vadd.f32 %v10321, %v10339
    %10341 = vmatmul.bf16.gmra.mxu0 %v9880
    %v10342 = vpop.f32.mrf.mxu0
    %v10343 = vadd.f32 %v10324, %v10342
    %v10344 = vpop.f32.mrf.mxu0
    %v10345 = vadd.f32 %v10326, %v10344
    %10346 = vdwg.mxu0
    %10347 = vmatpush.bf16.msra.mxu0 0
    %10348 = vmatpush.bf16.msra.mxu0 0
    %10349 = vmatpush.bf16.msra.mxu0 0
    %10350 = vmatpush.bf16.msra.mxu0 0
    %10351 = vmatpush.bf16.msra.mxu0 0
    %10352 = vmatpush.bf16.msra.mxu0 0
    %10353 = vmatpush.bf16.msra.mxu0 %v10171
    %10354 = vmatpush.bf16.msra.mxu0 %v10167
    %10355 = vmatmul.bf16.gmra.mxu0 %v10247
    %v10356 = vpop.f32.mrf.mxu0
    %v10357 = vadd.f32 %v10338, %v10356
    %v10358 = vpop.f32.mrf.mxu0
    %v10359 = vadd.f32 %v10340, %v10358
    %10360 = vmatmul.bf16.gmra.mxu0 %v10250
    %v10361 = vpop.f32.mrf.mxu0
    %v10362 = vadd.f32 %v10343, %v10361
    %v10363 = vpop.f32.mrf.mxu0
    %v10364 = vadd.f32 %v10345, %v10363
    %10365 = vdwg.mxu0
    %10366 = vmatpush.bf16.msra.mxu0 %v10132
    %10367 = vmatpush.bf16.msra.mxu0 %v10128
    %10368 = vmatpush.bf16.msra.mxu0 %v10124
    %10369 = vmatpush.bf16.msra.mxu0 %v10120
    %10370 = vmatpush.bf16.msra.mxu0 %v10116
    %10371 = vmatpush.bf16.msra.mxu0 %v10112
    %10372 = vmatpush.bf16.msra.mxu0 %v10108
    %10373 = vmatpush.bf16.msra.mxu0 %v10104
    %10374 = vmatmul.bf16.gmra.mxu0 %v9876
    %v10375 = vpop.f32.mrf.mxu0
    %v10376 = vadd.f32 %v9839, %v10375
    %v10377 = vpop.f32.mrf.mxu0
    %v10378 = vadd.f32 %v9844, %v10377
    %10379 = vmatmul.bf16.gmra.mxu0 %v9879
    %v10380 = vpop.f32.mrf.mxu0
    %v10381 = vadd.f32 %v9849, %v10380
    %v10382 = vpop.f32.mrf.mxu0
    %v10383 = vadd.f32 %v9854, %v10382
    %10384 = vdwg.mxu0
    %10385 = vmatpush.bf16.msra.mxu0 %v10164
    %10386 = vmatpush.bf16.msra.mxu0 %v10160
    %10387 = vmatpush.bf16.msra.mxu0 %v10156
    %10388 = vmatpush.bf16.msra.mxu0 %v10152
    %10389 = vmatpush.bf16.msra.mxu0 %v10148
    %10390 = vmatpush.bf16.msra.mxu0 %v10144
    %10391 = vmatpush.bf16.msra.mxu0 %v10140
    %10392 = vmatpush.bf16.msra.mxu0 %v10136
    %10393 = vmatmul.bf16.gmra.mxu0 %v9877
    %v10394 = vpop.f32.mrf.mxu0
    %v10395 = vadd.f32 %v10376, %v10394
    %v10396 = vpop.f32.mrf.mxu0
    %v10397 = vadd.f32 %v10378, %v10396
    %10398 = vmatmul.bf16.gmra.mxu0 %v9880
    %v10399 = vpop.f32.mrf.mxu0
    %v10400 = vadd.f32 %v10381, %v10399
    %v10401 = vpop.f32.mrf.mxu0
    %v10402 = vadd.f32 %v10383, %v10401
    %10403 = vdwg.mxu0
    %10404 = vmatpush.bf16.msra.mxu0 0
    %10405 = vmatpush.bf16.msra.mxu0 0
    %10406 = vmatpush.bf16.msra.mxu0 0
    %10407 = vmatpush.bf16.msra.mxu0 0
    %10408 = vmatpush.bf16.msra.mxu0 0
    %10409 = vmatpush.bf16.msra.mxu0 0
    %10410 = vmatpush.bf16.msra.mxu0 %v10172
    %10411 = vmatpush.bf16.msra.mxu0 %v10168
    %10412 = vmatmul.bf16.gmra.mxu0 %v10247
    %v10413 = vpop.f32.mrf.mxu0
    %v10414 = vadd.f32 %v10395, %v10413
    %v10415 = vpop.f32.mrf.mxu0
    %v10416 = vadd.f32 %v10397, %v10415
    %10417 = vmatmul.bf16.gmra.mxu0 %v10250
    %v10418 = vpop.f32.mrf.mxu0
    %v10419 = vadd.f32 %v10400, %v10418
    %v10420 = vpop.f32.mrf.mxu0
    %v10421 = vadd.f32 %v10402, %v10420
    %10422 = vdwg.mxu0
    %10423 = vmatpush.bf16.msra.mxu0 %v10133
    %10424 = vmatpush.bf16.msra.mxu0 %v10129
    %10425 = vmatpush.bf16.msra.mxu0 %v10125
    %10426 = vmatpush.bf16.msra.mxu0 %v10121
    %10427 = vmatpush.bf16.msra.mxu0 %v10117
    %10428 = vmatpush.bf16.msra.mxu0 %v10113
    %10429 = vmatpush.bf16.msra.mxu0 %v10109
    %10430 = vmatpush.bf16.msra.mxu0 %v10105
    %10431 = vmatmul.bf16.gmra.mxu0 %v9876
    %v10432 = vpop.f32.mrf.mxu0
    %v10433 = vadd.f32 %v9839, %v10432
    %v10434 = vpop.f32.mrf.mxu0
    %v10435 = vadd.f32 %v9844, %v10434
    %10436 = vmatmul.bf16.gmra.mxu0 %v9879
    %v10437 = vpop.f32.mrf.mxu0
    %v10438 = vadd.f32 %v9849, %v10437
    %v10439 = vpop.f32.mrf.mxu0
    %v10440 = vadd.f32 %v9854, %v10439
    %10441 = vdwg.mxu0
    %10442 = vmatpush.bf16.msra.mxu0 %v10165
    %10443 = vmatpush.bf16.msra.mxu0 %v10161
    %10444 = vmatpush.bf16.msra.mxu0 %v10157
    %10445 = vmatpush.bf16.msra.mxu0 %v10153
    %10446 = vmatpush.bf16.msra.mxu0 %v10149
    %10447 = vmatpush.bf16.msra.mxu0 %v10145
    %10448 = vmatpush.bf16.msra.mxu0 %v10141
    %10449 = vmatpush.bf16.msra.mxu0 %v10137
    %10450 = vmatmul.bf16.gmra.mxu0 %v9877
    %v10451 = vpop.f32.mrf.mxu0
    %v10452 = vadd.f32 %v10433, %v10451
    %v10453 = vpop.f32.mrf.mxu0
    %v10454 = vadd.f32 %v10435, %v10453
    %10455 = vmatmul.bf16.gmra.mxu0 %v9880
    %v10456 = vpop.f32.mrf.mxu0
    %v10457 = vadd.f32 %v10438, %v10456
    %v10458 = vpop.f32.mrf.mxu0
    %v10459 = vadd.f32 %v10440, %v10458
    %10460 = vdwg.mxu0
    %10461 = vmatpush.bf16.msra.mxu0 0
    %10462 = vmatpush.bf16.msra.mxu0 0
    %10463 = vmatpush.bf16.msra.mxu0 0
    %10464 = vmatpush.bf16.msra.mxu0 0
    %10465 = vmatpush.bf16.msra.mxu0 0
    %10466 = vmatpush.bf16.msra.mxu0 0
    %10467 = vmatpush.bf16.msra.mxu0 %v10173
    %10468 = vmatpush.bf16.msra.mxu0 %v10169
    %10469 = vmatmul.bf16.gmra.mxu0 %v10247
    %v10470 = vpop.f32.mrf.mxu0
    %v10471 = vadd.f32 %v10452, %v10470
    %v10472 = vpop.f32.mrf.mxu0
    %v10473 = vadd.f32 %v10454, %v10472
    %10474 = vmatmul.bf16.gmra.mxu0 %v10250
    %v10475 = vpop.f32.mrf.mxu0
    %v10476 = vadd.f32 %v10457, %v10475
    %v10477 = vpop.f32.mrf.mxu0
    %v10478 = vadd.f32 %v10459, %v10477
    %10479 = vdwg.mxu0
    %v10480 = vsub.f32 %v5320, %v10300
    %v10481 = vsub.f32 %v5321, %v10357
    %v10482 = vsub.f32 %v5322, %v10414
    %v10483 = vsub.f32 %v5323, %v10471
    %v10484 = vsub.f32 %v5324, %v10302
    %v10485 = vsub.f32 %v5325, %v10359
    %v10486 = vsub.f32 %v5326, %v10416
    %v10487 = vsub.f32 %v5327, %v10473
    %v10488 = vsub.f32 %v5328, %v10305
    %v10489 = vsub.f32 %v5329, %v10362
    %v10490 = vsub.f32 %v5330, %v10419
    %v10491 = vsub.f32 %v5331, %v10476
    %v10492 = vsub.f32 %v5332, %v10307
    %v10493 = vsub.f32 %v5333, %v10364
    %v10494 = vsub.f32 %v5334, %v10421
    %v10495 = vsub.f32 %v5335, %v10478
    %10496 = vst [vmem:[#allocation14] sm:$0xff] %v10480
    %10497 = vst [vmem:[#allocation14 + $0x8] sm:$0xff] %v10481
    %10498 = vst [vmem:[#allocation14 + $0x10] sm:$0xff] %v10482
    %10499 = vst [vmem:[#allocation14 + $0x18] sm:$0xff] %v10483
    %10500 = vst [vmem:[#allocation14 + $0x20] sm:$0xff] %v10484
    %10501 = vst [vmem:[#allocation14 + $0x28] sm:$0xff] %v10485
    %10502 = vst [vmem:[#allocation14 + $0x30] sm:$0xff] %v10486
    %10503 = vst [vmem:[#allocation14 + $0x38] sm:$0xff] %v10487
    %10504 = vst [vmem:[#allocation14 + $0x40] sm:$0xff] %v10488
    %10505 = vst [vmem:[#allocation14 + $0x48] sm:$0xff] %v10489
    %10506 = vst [vmem:[#allocation14 + $0x50] sm:$0xff] %v10490
    %10507 = vst [vmem:[#allocation14 + $0x58] sm:$0xff] %v10491
    %10508 = vst [vmem:[#allocation14 + $0x60] sm:$0xff] %v10492
    %10509 = vst [vmem:[#allocation14 + $0x68] sm:$0xff] %v10493
    %10510 = vst [vmem:[#allocation14 + $0x70] sm:$0xff] %v10494
    %10511 = vst [vmem:[#allocation14 + $0x78] sm:$0xff] %v10495
    // Predicated region
    $region82: #{tpu_custom_call.1} parent=1 // pred_check
      _
    $region83: #{tpu_custom_call.1} parent=1 // pred_check_branch
      %10513 = sbr.rel (0) target = $region85
    $region84: #{tpu_custom_call.1} parent=1 // pred_region
      %10515 = vsyncadd [#allocation5], 0
      %s10516 = sshll.u32 [#allocation14], 4
      %s10517 = int_to_ptr.vmem [resolvable:$true] %s10516
      %s10518 = sshll.u32 %s14, 4
      %s10519 = int_to_ptr.hbm [resolvable:$true] %s10518
      %10524 = dma.vmem_to_hbm [thread:$0]  %s10517, 2048, %s10519, [#allocation5], 512, 512, 32
    $region85: #{tpu_custom_call.1} parent=1 // pred_fallthru
      _
    // Predicated region
    $region86: #{tpu_custom_call.1} parent=1 // pred_check
      _
    $region87: #{tpu_custom_call.1} parent=1 // pred_check_branch
      %10526 = sbr.rel (0) target = $region89
    $region88: #{tpu_custom_call.1} parent=1 // pred_region
      %10528 = dma.done [#allocation5], 2048
    $region89: #{tpu_custom_call.1} parent=1 // pred_fallthru
      _
    %10529 = vsyncpa [#allocation4], 1
    %10530 = vsyncpa [#allocation7], 1
    %10531 = vsyncpa [#allocation10], 1
    %10532 = vsyncpa [#allocation13], 1
    %10533 = vsyncpa [#allocation5], 1

</llo_original>
